<compile_context>
chip_gen: v7x
topology: tpu7x:2x2x1
jax: 0.10.0
libtpu: 0.0.40
codegen_flags: <defaults>
</compile_context>

<pallas_src>
import functools

import jax
import jax.numpy as jnp
from jax.experimental import pallas as pl
from jax.experimental.pallas import tpu as pltpu


# ----------------------------------------------------------------------------
# Kernel 1: tiled matmul + bias  (bf16 MXU operands, f32 accumulation)
# used for: 1x1 reduce conv, 1x1 assignment conv, LSTM input projection, lin2
# ----------------------------------------------------------------------------
def _matmul_bias_kernel(x_ref, w_ref, b_ref, o_ref):
    acc = jnp.dot(x_ref[...].astype(jnp.bfloat16), w_ref[...],
                  preferred_element_type=jnp.float32) + b_ref[...]
    o_ref[...] = acc.astype(o_ref.dtype)


def matmul_bias(x, w, b, *, out_dtype=jnp.float32, tm=256, tn=256):
    # x: [M, K], w: [K, N], b: [N]  ->  [M, N] out_dtype
    M, K = x.shape
    N = w.shape[1]
    # Full-extent blocks for small dims (legal regardless of divisibility),
    # otherwise MXU-friendly tiles; partial edge blocks are masked by Pallas.
    tm = M if M <= tm else tm                     # 256 is a multiple of 16
    tn = N if N <= 512 else tn                    # N<=512: weight DMA'd once

    wb = w.astype(jnp.bfloat16)                   # weights are tiny; cast once
    bf = b.astype(jnp.float32).reshape(1, N)

    out = pl.pallas_call(
        _matmul_bias_kernel,
        out_shape=jax.ShapeDtypeStruct((M, N), out_dtype),
        grid=(pl.cdiv(M, tm), pl.cdiv(N, tn)),
        in_specs=[
            pl.BlockSpec((tm, K), lambda i, j: (i, 0)),
            pl.BlockSpec((K, tn), lambda i, j: (0, j)),
            pl.BlockSpec((1, tn), lambda i, j: (0, j)),
        ],
        out_specs=pl.BlockSpec((tm, tn), lambda i, j: (i, j)),
        compiler_params=pltpu.CompilerParams(
            dimension_semantics=("parallel", "parallel"),
            vmem_limit_bytes=32 * 1024 * 1024),
    )(x, wb, bf)
    return out


# ----------------------------------------------------------------------------
# Kernel 2: fused ConvGRU recurrence (SeqVLAD assignment generator)
# Hidden state lives in VMEM scratch as a zero-padded, batch-chunk-stacked
# flattened image [Pc, K].  A 3x3 "same" conv is one bf16 MXU matmul of a
# [L, 9K] window slab (9 shifted views concatenated along lanes) against the
# tap-stacked weights.  Padding rows stay exactly zero; interior is masked.
# Grid = (batch_chunks, T): chunks are independent ("parallel" -> both v7x
# TensorCores), T is the serial recurrence ("arbitrary").
# ----------------------------------------------------------------------------
def _convgru_kernel(wx_ref, mask_ref, uzr_ref, uh_ref, o_ref, hp, rhp, *,
                    q0, wp, L):
    t = pl.program_id(1)
    K = uh_ref.shape[1]

    @pl.when(t == 0)
    def _():
        hp[...] = jnp.zeros_like(hp)
        rhp[...] = jnp.zeros_like(rhp)

    def slab(src_ref):
        parts = []
        for i in range(9):
            s = q0 + (i // 3 - 1) * wp + (i % 3 - 1)   # static row offset
            parts.append(src_ref[s:s + L, :].astype(jnp.bfloat16))
        return jnp.concatenate(parts, axis=1)          # [L, 9K] bf16

    wx = wx_ref[0, 0][q0:q0 + L, :].astype(jnp.float32)    # [L, K] shared term
    mask = mask_ref[...]                                   # [L, 1]
    h_prev = hp[q0:q0 + L, :]                              # [L, K]

    zr = jnp.dot(slab(hp), uzr_ref[...],
                 preferred_element_type=jnp.float32)       # [L, 2K]  U_z|U_r
    z = jax.nn.sigmoid(wx + zr[:, :K])
    r = jax.nn.sigmoid(wx + zr[:, K:])

    rhp[q0:q0 + L, :] = r * h_prev            # padding rows stay 0 (h_prev==0)
    h_cand = jnp.tanh(wx + jnp.dot(slab(rhp), uh_ref[...],
                                   preferred_element_type=jnp.float32))
    h_new = ((1.0 - z) * h_prev + z * h_cand) * mask

    hp[q0:q0 + L, :] = h_new                  # keep padding positions zero
    o_ref[0, 0] = hp[...].astype(o_ref.dtype)


def convgru_assign(wx_flat, U_z, U_r, U_h, B, T, Hf, Wf, *, num_chunks=2):
    # wx_flat: [B*T*Hf*Wf, K] (b-major, then t, y, x) -> logits [B*T, K, Hf*Wf]
    K = U_z.shape[0]
    Hp, Wp = Hf + 2, Wf + 2
    P_img = Hp * Wp
    nb = num_chunks if (num_chunks >= 1 and B % num_chunks == 0) else 1
    Bc = B // nb
    Pc = Bc * P_img
    q0 = Wp + 1                    # flat index of the first interior pixel
    L = Pc - 2 * (Wp + 1)          # computed range (all tap reads stay in [0,Pc))

    wx5 = wx_flat.reshape(B, T, Hf, Wf, K)
    wx5 = jnp.pad(wx5, ((0, 0), (0, 0), (1, 1), (1, 1), (0, 0)))
    wx_in = (wx5.reshape(nb, Bc, T, Hp, Wp, K)
                 .transpose(0, 2, 1, 3, 4, 5)
                 .reshape(nb, T, Pc, K))                      # [nb, T, Pc, K]

    # interior mask over the computed range (1 = real pixel, 0 = zero padding)
    qs = q0 + jnp.arange(L)
    mloc = qs % P_img
    yy = mloc // Wp
    xx = mloc % Wp
    mask = ((yy >= 1) & (yy <= Hf) & (xx >= 1) & (xx <= Wf))
    mask = mask.astype(jnp.float32)[:, None]                  # [L, 1]

    # torch conv weight [Cout, Cin, 3, 3] -> tap-stacked [9*Cin, Cout]
    def prep(u):
        return jnp.transpose(u, (2, 3, 1, 0)).reshape(9 * K, u.shape[0])

    uzr = jnp.concatenate([prep(U_z), prep(U_r)], axis=1).astype(jnp.bfloat16)
    uh = prep(U_h).astype(jnp.bfloat16)                       # [9K, K]

    h_seq = pl.pallas_call(
        functools.partial(_convgru_kernel, q0=q0, wp=Wp, L=L),
        out_shape=jax.ShapeDtypeStruct((nb, T, Pc, K), jnp.bfloat16),
        grid=(nb, T),
        in_specs=[
            pl.BlockSpec((1, 1, Pc, K), lambda c, t: (c, t, 0, 0)),
            pl.BlockSpec((L, 1), lambda c, t: (0, 0)),
            pl.BlockSpec((9 * K, 2 * K), lambda c, t: (0, 0)),
            pl.BlockSpec((9 * K, K), lambda c, t: (0, 0)),
        ],
        out_specs=pl.BlockSpec((1, 1, Pc, K), lambda c, t: (c, t, 0, 0)),
        scratch_shapes=[pltpu.VMEM((Pc, K), jnp.float32),
                        pltpu.VMEM((Pc, K), jnp.float32)],
        compiler_params=pltpu.CompilerParams(
            dimension_semantics=("parallel", "arbitrary"),
            vmem_limit_bytes=32 * 1024 * 1024),
    )(wx_in, mask, uzr, uh)

    h6 = h_seq.reshape(nb, T, Bc, Hp, Wp, K)[:, :, :, 1:1 + Hf, 1:1 + Wf, :]
    logits = h6.transpose(0, 2, 1, 5, 3, 4).reshape(B * T, K, Hf * Wf)
    return logits


# ----------------------------------------------------------------------------
# Kernel 3: fused softmax-over-centers + VLAD + intra-norm + linear1,
# blocked over BT (tb rows per grid step).
# ----------------------------------------------------------------------------
def _vlad_lin1_kernel(logit_ref, x_ref, cent_ref, w1_ref, o_ref):
    logits = logit_ref[...].astype(jnp.float32)               # [tb, K, HW]
    m = jnp.max(logits, axis=1, keepdims=True)
    e = jnp.exp(logits - m)
    inv_den = pl.reciprocal(jnp.sum(e, axis=1, keepdims=True), approx=True)
    assign = e * inv_den                                      # softmax over K
    a_sum = jnp.sum(assign, axis=2, keepdims=True)            # [tb, K, 1]
    vlad = jnp.einsum('bkh,bhd->bkd', assign.astype(jnp.bfloat16),
                      x_ref[...].astype(jnp.bfloat16),
                      preferred_element_type=jnp.float32)     # [tb, K, D]
    vlad = vlad - a_sum * cent_ref[...][None, :, :]
    inv_norm = jax.lax.rsqrt(jnp.sum(vlad * vlad, axis=2, keepdims=True)
                             + 1e-12)
    vlad = vlad * inv_norm                                    # intra-norm
    # fused linear1 over centers (avoids a lane-width-1 matmul output)
    o_ref[...] = jnp.sum(vlad * w1_ref[...][None, :, :],
                         axis=1).astype(o_ref.dtype)          # [tb, D]


def vlad_lin1(logits, x, centers, w1, *, tb=32):
    # logits: [BT, K, HW], x: [BT, HW, D], centers: [K, D], w1: [K, 1] -> [BT, D]
    BT, K, HW = logits.shape
    D = x.shape[2]
    tb = BT if BT <= tb else tb
    out = pl.pallas_call(
        _vlad_lin1_kernel,
        out_shape=jax.ShapeDtypeStruct((BT, D), jnp.float32),
        grid=(pl.cdiv(BT, tb),),
        in_specs=[
            pl.BlockSpec((tb, K, HW), lambda i: (i, 0, 0)),
            pl.BlockSpec((tb, HW, D), lambda i: (i, 0, 0)),
            pl.BlockSpec((K, D), lambda i: (0, 0)),
            pl.BlockSpec((K, 1), lambda i: (0, 0)),
        ],
        out_specs=pl.BlockSpec((tb, D), lambda i: (i, 0)),
        compiler_params=pltpu.CompilerParams(
            dimension_semantics=("parallel",),
            vmem_limit_bytes=32 * 1024 * 1024),
    )(logits, x, centers.astype(jnp.float32), w1.astype(jnp.float32))
    return out


# ----------------------------------------------------------------------------
# Kernel 4: LSTM recurrence (input projection hoisted outside).
# One fused bf16 [B,H] @ [H,4H] MXU push per step; gate slices are free when
# H % 128 == 0 (real config) and trivially small otherwise.
# ----------------------------------------------------------------------------
def _lstm_kernel(xp_ref, tag_ref, wh_ref, o_ref, h_sc, c_sc, *, H):
    t = pl.program_id(0)

    @pl.when(t == 0)
    def _():
        h_sc[...] = tag_ref[...]
        c_sc[...] = jnp.zeros_like(c_sc)

    h = h_sc[...]
    zz = xp_ref[0] + jnp.dot(h.astype(jnp.bfloat16), wh_ref[...],
                             preferred_element_type=jnp.float32)   # [B, 4H]
    i = jax.nn.sigmoid(zz[:, 0:H])
    f = jax.nn.sigmoid(zz[:, H:2 * H])
    g = jnp.tanh(zz[:, 2 * H:3 * H])
    o = jax.nn.sigmoid(zz[:, 3 * H:4 * H])
    c = f * c_sc[...] + i * g
    h_new = o * jnp.tanh(c)
    c_sc[...] = c
    h_sc[...] = h_new
    o_ref[0] = h_new


def slstm(cap, tag, wx, wh, b):
    # cap: [B, T, 2H], tag: [B, H] -> [B, T, H]
    # TODO(synk): SLSTM definition not provided in the reference; standard LSTM
    # with `tag` as the initial hidden state.
    B, T, twoH = cap.shape
    H = wh.shape[0]
    xp = matmul_bias(cap.reshape(B * T, twoH), wx, b)        # hoisted x@Wx + b
    xp = xp.reshape(B, T, 4 * H).transpose(1, 0, 2)          # [T, B, 4H] f32
    whb = wh.astype(jnp.bfloat16)                            # [H, 4H]
    h_seq = pl.pallas_call(
        functools.partial(_lstm_kernel, H=H),
        out_shape=jax.ShapeDtypeStruct((T, B, H), jnp.float32),
        grid=(T,),
        in_specs=[
            pl.BlockSpec((1, B, 4 * H), lambda t: (t, 0, 0)),
            pl.BlockSpec((B, H), lambda t: (0, 0)),
            pl.BlockSpec((H, 4 * H), lambda t: (0, 0)),
        ],
        out_specs=pl.BlockSpec((1, B, H), lambda t: (t, 0, 0)),
        scratch_shapes=[pltpu.VMEM((B, H), jnp.float32),
                        pltpu.VMEM((B, H), jnp.float32)],
        compiler_params=pltpu.CompilerParams(
            dimension_semantics=("arbitrary",),
            vmem_limit_bytes=32 * 1024 * 1024),
    )(xp, tag.astype(jnp.float32), whb)
    return jnp.transpose(h_seq, (1, 0, 2))


# ----------------------------------------------------------------------------
# SeqVLAD: reduce conv -> assignment conv -> fused ConvGRU -> fused VLAD+lin1
# ----------------------------------------------------------------------------
def seqvlad_vidout(vid_btchw, params, B, T):
    BT, C, Hf, Wf = vid_btchw.shape
    HW = Hf * Wf
    D = params["redu_w"].shape[1]

    # NCHW -> NHWC and the bf16 convert fuse into a single XLA copy pass.
    v = jnp.transpose(vid_btchw, (0, 2, 3, 1)).reshape(BT * HW, C)
    v = v.astype(jnp.bfloat16)
    x_red = matmul_bias(v, params["redu_w"], params["redu_b"],
                        out_dtype=jnp.bfloat16)                     # [BT*HW, D]
    wx = matmul_bias(x_red, params["share_w"], params["share_b"],
                     out_dtype=jnp.bfloat16)                        # [BT*HW, K]

    logits = convgru_assign(wx, params["U_z"], params["U_r"], params["U_h"],
                            B, T, Hf, Wf)                           # [BT, K, HW]

    vid_out = vlad_lin1(logits, x_red.reshape(BT, HW, D),
                        params["centers"], params["lin1_w"])        # [BT, D]
    vid_out = vid_out + params["lin1_b"][0]
    return vid_out.reshape(B, T, D)


# ----------------------------------------------------------------------------
# CSA_SR forward (training path of the reference module)
# ----------------------------------------------------------------------------
def csa_sr_forward(params, video, tag, caption, cfg):
    B = cfg["batch_size"]
    n_step = cfg["n_step"]
    H = cfg["hidden"]
    C, Hf, Wf = cfg["feats_c"], cfg["feats_h"], cfg["feats_w"]
    T = 2 * n_step - 1

    pad = jnp.zeros((B, n_step - 1, C, Hf, Wf), jnp.float32)
    vid = jnp.concatenate([video.astype(jnp.float32), pad], axis=1)
    vid = vid.reshape(B * T, C, Hf, Wf)
    # TODO(synk): nn.Dropout(p=0.5) in the torch training forward is treated as
    # identity (inference-mode dropout).

    vid_out = seqvlad_vidout(vid, params, B, T)                      # [B, T, D]

    emb = params["embedding"][caption[:, 0:n_step - 1]]              # [B,n-1,H]
    cap = jnp.concatenate([jnp.zeros((B, n_step, H), jnp.float32), emb], axis=1)
    cap = jnp.concatenate([cap, vid_out], axis=2)                    # [B, T, 2H]

    cap_out = slstm(cap, tag, params["lstm_wx"], params["lstm_wh"],
                    params["lstm_b"])                                # [B, T, H]
    cap_out = cap_out[:, n_step:, :].reshape(-1, H)
    return matmul_bias(cap_out, params["lin2_w"], params["lin2_b"])  # [B*(n-1),V]


# ----------------------------------------------------------------------------
# deterministic parameter init
# ----------------------------------------------------------------------------
def init_params(key, cfg):
    C, D, K = cfg["feats_c"], cfg["redu_dim"], cfg["num_centers"]
    H, V = cfg["hidden"], cfg["vocab_size"]
    ks = jax.random.split(key, 11)

    def nrm(k, shape, scale=0.05):
        return scale * jax.random.normal(k, shape, jnp.float32)

    return dict(
        redu_w=nrm(ks[0], (C, D)), redu_b=jnp.zeros((D,), jnp.float32),
        share_w=nrm(ks[1], (D, K)), share_b=jnp.zeros((K,), jnp.float32),
        centers=nrm(ks[2], (K, D)),
        U_z=nrm(ks[3], (K, K, 3, 3)),
        U_r=nrm(ks[4], (K, K, 3, 3)),
        U_h=nrm(ks[5], (K, K, 3, 3)),
        lin1_w=nrm(ks[6], (K, 1)), lin1_b=jnp.zeros((1,), jnp.float32),
        lin2_w=nrm(ks[7], (H, V)), lin2_b=jnp.zeros((V,), jnp.float32),
        lstm_wx=nrm(ks[8], (2 * H, 4 * H)),
        lstm_wh=nrm(ks[9], (H, 4 * H)),
        lstm_b=jnp.zeros((4 * H,), jnp.float32),
        embedding=nrm(ks[10], (V, H)),
    )


if __name__ == "__main__":
    cfg = dict(batch_size=2, hidden=32, n_step=4, feats_c=48, feats_h=8,
               feats_w=8, num_centers=8, redu_dim=32, vocab_size=64)
    key = jax.random.PRNGKey(0)
    k_vid, k_tag, k_cap, k_par = jax.random.split(key, 4)
    B, n_step = cfg["batch_size"], cfg["n_step"]

    video = jax.random.normal(
        k_vid, (B, n_step, cfg["feats_c"], cfg["feats_h"], cfg["feats_w"]),
        jnp.float32)
    tag = jax.random.normal(k_tag, (B, cfg["hidden"]), jnp.float32)
    caption = jax.random.randint(k_cap, (B, n_step), 0, cfg["vocab_size"])

    params = init_params(k_par, cfg)
    fwd = jax.jit(functools.partial(csa_sr_forward, cfg=cfg))
    out = fwd(params, video, tag, caption)
    jax.block_until_ready(out)
    assert out.shape == (B * (n_step - 1), cfg["vocab_size"])
    assert bool(jnp.all(jnp.isfinite(out)))
    print("KERNEL_OK")
</pallas_src>

<mosaic_0001>
module attributes {stable_mosaic.version = 11 : i64} {
  func.func @_matmul_bias_kernel(%arg0: i32, %arg1: i32, %arg2: memref<256x48xbf16, #tpu.memory_space<vmem>>, %arg3: memref<48x32xbf16, #tpu.memory_space<vmem>>, %arg4: memref<1x32xf32, #tpu.memory_space<vmem>>, %arg5: memref<256x32xbf16, #tpu.memory_space<vmem>>) attributes {dimension_semantics = [#tpu.dimension_semantics<parallel>, #tpu.dimension_semantics<parallel>], iteration_bounds = array<i64: 4, 1>, scalar_prefetch = 0 : i64, scratch_operands = 0 : i64, tpu.core_type = #tpu.core_type<tc>, window_params = [{transform_indices = @transform_0, window_bounds = array<i64: 256, 48>}, {transform_indices = @transform_1, window_bounds = array<i64: 48, 32>}, {transform_indices = @transform_2, window_bounds = array<i64: 1, 32>}, {transform_indices = @transform_3, window_bounds = array<i64: 256, 32>}]} {
    %c0 = arith.constant 0 : index
    %c0_0 = arith.constant 0 : index
    %0 = vector.load %arg2[%c0, %c0_0] : memref<256x48xbf16, #tpu.memory_space<vmem>>, vector<256x48xbf16>
    %c0_1 = arith.constant 0 : index
    %c0_2 = arith.constant 0 : index
    %1 = vector.load %arg3[%c0_1, %c0_2] : memref<48x32xbf16, #tpu.memory_space<vmem>>, vector<48x32xbf16>
    %cst = arith.constant dense<0.000000e+00> : vector<256x32xf32>
    %2 = tpu.matmul %0, %1, %cst {dimension_numbers = #tpu.dot_dimension_numbers<[1], [0], [0], [1], [0, 0, 1, 1], [], []>} : vector<256x48xbf16>, vector<48x32xbf16>, vector<256x32xf32> -> vector<256x32xf32>
    %c0_3 = arith.constant 0 : index
    %c0_4 = arith.constant 0 : index
    %3 = vector.load %arg4[%c0_3, %c0_4] : memref<1x32xf32, #tpu.memory_space<vmem>>, vector<1x32xf32>
    %4 = vector.broadcast %3 : vector<1x32xf32> to vector<256x32xf32>
    %5 = arith.addf %2, %4 : vector<256x32xf32>
    %6 = arith.truncf %5 : vector<256x32xf32> to vector<256x32xbf16>
    %c0_5 = arith.constant 0 : index
    %c0_6 = arith.constant 0 : index
    %7 = vector.load %arg5[%c0_5, %c0_6] : memref<256x32xbf16, #tpu.memory_space<vmem>>, vector<256x32xbf16>
    tpu.vector_store %arg5[%c0_5, %c0_6], %6 {strides = array<i32>} : memref<256x32xbf16, #tpu.memory_space<vmem>>, vector<256x32xbf16>,
    return
  }
  func.func @transform_0(%arg0: i32, %arg1: i32) -> (i32, i32) {
    %c0_i32 = arith.constant 0 : i32
    %c0_i32_0 = arith.constant 0 : i32
    return %arg0, %c0_i32 : i32, i32
  }
  func.func @transform_1(%arg0: i32, %arg1: i32) -> (i32, i32) {
    %c0_i32 = arith.constant 0 : i32
    %c0_i32_0 = arith.constant 0 : i32
    return %c0_i32, %arg1 : i32, i32
  }
  func.func @transform_2(%arg0: i32, %arg1: i32) -> (i32, i32) {
    %c0_i32 = arith.constant 0 : i32
    %c0_i32_0 = arith.constant 0 : i32
    return %c0_i32, %arg1 : i32, i32
  }
  func.func @transform_3(%arg0: i32, %arg1: i32) -> (i32, i32) {
    %c0_i32 = arith.constant 0 : i32
    return %arg0, %arg1 : i32, i32
  }
}

module attributes {stable_mosaic.version = 11 : i64} {
  func.func @_matmul_bias_kernel(%arg0: i32, %arg1: i32, %arg2: memref<256x32xbf16, #tpu.memory_space<vmem>>, %arg3: memref<32x8xbf16, #tpu.memory_space<vmem>>, %arg4: memref<1x8xf32, #tpu.memory_space<vmem>>, %arg5: memref<256x8xbf16, #tpu.memory_space<vmem>>) attributes {dimension_semantics = [#tpu.dimension_semantics<parallel>, #tpu.dimension_semantics<parallel>], iteration_bounds = array<i64: 4, 1>, scalar_prefetch = 0 : i64, scratch_operands = 0 : i64, tpu.core_type = #tpu.core_type<tc>, window_params = [{transform_indices = @transform_0, window_bounds = array<i64: 256, 32>}, {transform_indices = @transform_1, window_bounds = array<i64: 32, 8>}, {transform_indices = @transform_2, window_bounds = array<i64: 1, 8>}, {transform_indices = @transform_3, window_bounds = array<i64: 256, 8>}]} {
    %c0 = arith.constant 0 : index
    %c0_0 = arith.constant 0 : index
    %0 = vector.load %arg2[%c0, %c0_0] : memref<256x32xbf16, #tpu.memory_space<vmem>>, vector<256x32xbf16>
    %c0_1 = arith.constant 0 : index
    %c0_2 = arith.constant 0 : index
    %1 = vector.load %arg3[%c0_1, %c0_2] : memref<32x8xbf16, #tpu.memory_space<vmem>>, vector<32x8xbf16>
    %cst = arith.constant dense<0.000000e+00> : vector<256x8xf32>
    %2 = tpu.matmul %0, %1, %cst {dimension_numbers = #tpu.dot_dimension_numbers<[1], [0], [0], [1], [0, 0, 1, 1], [], []>} : vector<256x32xbf16>, vector<32x8xbf16>, vector<256x8xf32> -> vector<256x8xf32>
    %c0_3 = arith.constant 0 : index
    %c0_4 = arith.constant 0 : index
    %3 = vector.load %arg4[%c0_3, %c0_4] : memref<1x8xf32, #tpu.memory_space<vmem>>, vector<1x8xf32>
    %4 = vector.broadcast %3 : vector<1x8xf32> to vector<256x8xf32>
    %5 = arith.addf %2, %4 : vector<256x8xf32>
    %6 = arith.truncf %5 : vector<256x8xf32> to vector<256x8xbf16>
    %c0_5 = arith.constant 0 : index
    %c0_6 = arith.constant 0 : index
    %7 = vector.load %arg5[%c0_5, %c0_6] : memref<256x8xbf16, #tpu.memory_space<vmem>>, vector<256x8xbf16>
    tpu.vector_store %arg5[%c0_5, %c0_6], %6 {strides = array<i32>} : memref<256x8xbf16, #tpu.memory_space<vmem>>, vector<256x8xbf16>,
    return
  }
  func.func @transform_0(%arg0: i32, %arg1: i32) -> (i32, i32) {
    %c0_i32 = arith.constant 0 : i32
    %c0_i32_0 = arith.constant 0 : i32
    return %arg0, %c0_i32 : i32, i32
  }
  func.func @transform_1(%arg0: i32, %arg1: i32) -> (i32, i32) {
    %c0_i32 = arith.constant 0 : i32
    %c0_i32_0 = arith.constant 0 : i32
    return %c0_i32, %arg1 : i32, i32
  }
  func.func @transform_2(%arg0: i32, %arg1: i32) -> (i32, i32) {
    %c0_i32 = arith.constant 0 : i32
    %c0_i32_0 = arith.constant 0 : i32
    return %c0_i32, %arg1 : i32, i32
  }
  func.func @transform_3(%arg0: i32, %arg1: i32) -> (i32, i32) {
    %c0_i32 = arith.constant 0 : i32
    return %arg0, %arg1 : i32, i32
  }
}

module attributes {stable_mosaic.version = 11 : i64} {
  func.func @_convgru_kernel(%arg0: i32, %arg1: i32, %arg2: memref<1x1x100x8xbf16, #tpu.memory_space<vmem>>, %arg3: memref<78x1xf32, #tpu.memory_space<vmem>>, %arg4: memref<72x16xbf16, #tpu.memory_space<vmem>>, %arg5: memref<72x8xbf16, #tpu.memory_space<vmem>>, %arg6: memref<1x1x100x8xbf16, #tpu.memory_space<vmem>>, %arg7: memref<100x8xf32, #tpu.memory_space<vmem>>, %arg8: memref<100x8xf32, #tpu.memory_space<vmem>>) attributes {dimension_semantics = [#tpu.dimension_semantics<parallel>, #tpu.dimension_semantics<arbitrary>], iteration_bounds = array<i64: 2, 7>, scalar_prefetch = 0 : i64, scratch_operands = 2 : i64, tpu.core_type = #tpu.core_type<tc>, window_params = [{transform_indices = @transform_0, window_bounds = array<i64: 1, 1, 100, 8>}, {pipeline_mode = #tpu.pipeline_mode<synchronous>, transform_indices = @transform_1, window_bounds = array<i64: 78, 1>}, {pipeline_mode = #tpu.pipeline_mode<synchronous>, transform_indices = @transform_2, window_bounds = array<i64: 72, 16>}, {pipeline_mode = #tpu.pipeline_mode<synchronous>, transform_indices = @transform_3, window_bounds = array<i64: 72, 8>}, {transform_indices = @transform_4, window_bounds = array<i64: 1, 1, 100, 8>}]} {
    %c0_i32 = arith.constant 0 : i32
    %0 = arith.cmpi eq, %arg1, %c0_i32 : i32
    %1 = arith.extui %0 : i1 to i32
    %c0_i32_0 = arith.constant 0 : i32
    %2 = arith.cmpi ne, %1, %c0_i32_0 : i32
    scf.if %2 {
      %cst_54 = arith.constant 0.000000e+00 : f32
      %82 = vector.broadcast %cst_54 : f32 to vector<100x8xf32>
      %c0_55 = arith.constant 0 : index
      %c0_56 = arith.constant 0 : index
      %83 = vector.load %arg7[%c0_55, %c0_56] : memref<100x8xf32, #tpu.memory_space<vmem>>, vector<100x8xf32>
      tpu.vector_store %arg7[%c0_55, %c0_56], %82 {strides = array<i32>} : memref<100x8xf32, #tpu.memory_space<vmem>>, vector<100x8xf32>,
      %cst_57 = arith.constant 0.000000e+00 : f32
      %84 = vector.broadcast %cst_57 : f32 to vector<100x8xf32>
      %c0_58 = arith.constant 0 : index
      %c0_59 = arith.constant 0 : index
      %85 = vector.load %arg8[%c0_58, %c0_59] : memref<100x8xf32, #tpu.memory_space<vmem>>, vector<100x8xf32>
      tpu.vector_store %arg8[%c0_58, %c0_59], %84 {strides = array<i32>} : memref<100x8xf32, #tpu.memory_space<vmem>>, vector<100x8xf32>,
    } else {
    }
    %c0 = arith.constant 0 : index
    %c0_1 = arith.constant 0 : index
    %c0_2 = arith.constant 0 : index
    %c0_3 = arith.constant 0 : index
    %3 = vector.load %arg2[%c0, %c0_1, %c0_2, %c0_3] : memref<1x1x100x8xbf16, #tpu.memory_space<vmem>>, vector<1x1x100x8xbf16>
    %4 = vector.shape_cast %3 : vector<1x1x100x8xbf16> to vector<100x8xbf16>
    %5 = vector.extract_strided_slice %4 {offsets = [11, 0], sizes = [78, 8], strides = [1, 1]} : vector<100x8xbf16> to vector<78x8xbf16>
    %6 = arith.extf %5 : vector<78x8xbf16> to vector<78x8xf32>
    %c0_4 = arith.constant 0 : index
    %c0_5 = arith.constant 0 : index
    %7 = vector.load %arg3[%c0_4, %c0_5] : memref<78x1xf32, #tpu.memory_space<vmem>>, vector<78x1xf32>
    %c11 = arith.constant 11 : index
    %c0_6 = arith.constant 0 : index
    %8 = vector.load %arg7[%c11, %c0_6] : memref<100x8xf32, #tpu.memory_space<vmem>>, vector<78x8xf32>
    %c0_7 = arith.constant 0 : index
    %c0_8 = arith.constant 0 : index
    %9 = vector.load %arg7[%c0_7, %c0_8] : memref<100x8xf32, #tpu.memory_space<vmem>>, vector<78x8xf32>
    %10 = arith.truncf %9 : vector<78x8xf32> to vector<78x8xbf16>
    %c1 = arith.constant 1 : index
    %c0_9 = arith.constant 0 : index
    %11 = vector.load %arg7[%c1, %c0_9] : memref<100x8xf32, #tpu.memory_space<vmem>>, vector<78x8xf32>
    %12 = arith.truncf %11 : vector<78x8xf32> to vector<78x8xbf16>
    %c2 = arith.constant 2 : index
    %c0_10 = arith.constant 0 : index
    %13 = vector.load %arg7[%c2, %c0_10] : memref<100x8xf32, #tpu.memory_space<vmem>>, vector<78x8xf32>
    %14 = arith.truncf %13 : vector<78x8xf32> to vector<78x8xbf16>
    %c10 = arith.constant 10 : index
    %c0_11 = arith.constant 0 : index
    %15 = vector.load %arg7[%c10, %c0_11] : memref<100x8xf32, #tpu.memory_space<vmem>>, vector<78x8xf32>
    %16 = arith.truncf %15 : vector<78x8xf32> to vector<78x8xbf16>
    %c11_12 = arith.constant 11 : index
    %c0_13 = arith.constant 0 : index
    %17 = vector.load %arg7[%c11_12, %c0_13] : memref<100x8xf32, #tpu.memory_space<vmem>>, vector<78x8xf32>
    %18 = arith.truncf %17 : vector<78x8xf32> to vector<78x8xbf16>
    %c12 = arith.constant 12 : index
    %c0_14 = arith.constant 0 : index
    %19 = vector.load %arg7[%c12, %c0_14] : memref<100x8xf32, #tpu.memory_space<vmem>>, vector<78x8xf32>
    %20 = arith.truncf %19 : vector<78x8xf32> to vector<78x8xbf16>
    %c20 = arith.constant 20 : index
    %c0_15 = arith.constant 0 : index
    %21 = vector.load %arg7[%c20, %c0_15] : memref<100x8xf32, #tpu.memory_space<vmem>>, vector<78x8xf32>
    %22 = arith.truncf %21 : vector<78x8xf32> to vector<78x8xbf16>
    %c21 = arith.constant 21 : index
    %c0_16 = arith.constant 0 : index
    %23 = vector.load %arg7[%c21, %c0_16] : memref<100x8xf32, #tpu.memory_space<vmem>>, vector<78x8xf32>
    %24 = arith.truncf %23 : vector<78x8xf32> to vector<78x8xbf16>
    %c22 = arith.constant 22 : index
    %c0_17 = arith.constant 0 : index
    %25 = vector.load %arg7[%c22, %c0_17] : memref<100x8xf32, #tpu.memory_space<vmem>>, vector<78x8xf32>
    %26 = arith.truncf %25 : vector<78x8xf32> to vector<78x8xbf16>
    %27 = tpu.concatenate %10, %12, %14, %16, %18, %20, %22, %24, %26 in 1 : vector<78x8xbf16>, vector<78x8xbf16>, vector<78x8xbf16>, vector<78x8xbf16>, vector<78x8xbf16>, vector<78x8xbf16>, vector<78x8xbf16>, vector<78x8xbf16>, vector<78x8xbf16> -> vector<78x72xbf16>
    %c0_18 = arith.constant 0 : index
    %c0_19 = arith.constant 0 : index
    %28 = vector.load %arg4[%c0_18, %c0_19] : memref<72x16xbf16, #tpu.memory_space<vmem>>, vector<72x16xbf16>
    %cst = arith.constant dense<0.000000e+00> : vector<78x16xf32>
    %29 = tpu.matmul %27, %28, %cst {dimension_numbers = #tpu.dot_dimension_numbers<[1], [0], [0], [1], [0, 0, 1, 1], [], []>} : vector<78x72xbf16>, vector<72x16xbf16>, vector<78x16xf32> -> vector<78x16xf32>
    %30 = vector.extract_strided_slice %29 {offsets = [0, 0], sizes = [78, 8], strides = [1, 1]} : vector<78x16xf32> to vector<78x8xf32>
    %31 = arith.addf %6, %30 : vector<78x8xf32>
    %32 = arith.negf %31 : vector<78x8xf32>
    %33 = math.exp %32 : vector<78x8xf32>
    %cst_20 = arith.constant 1.000000e+00 : f32
    %34 = vector.broadcast %cst_20 : f32 to vector<78x8xf32>
    %35 = arith.addf %34, %33 : vector<78x8xf32>
    %36 = arith.divf %34, %35 : vector<78x8xf32>
    %37 = vector.extract_strided_slice %29 {offsets = [0, 8], sizes = [78, 8], strides = [1, 1]} : vector<78x16xf32> to vector<78x8xf32>
    %38 = arith.addf %6, %37 : vector<78x8xf32>
    %39 = arith.negf %38 : vector<78x8xf32>
    %40 = math.exp %39 : vector<78x8xf32>
    %cst_21 = arith.constant 1.000000e+00 : f32
    %41 = vector.broadcast %cst_21 : f32 to vector<78x8xf32>
    %42 = arith.addf %41, %40 : vector<78x8xf32>
    %43 = arith.divf %41, %42 : vector<78x8xf32>
    %44 = arith.mulf %43, %8 : vector<78x8xf32>
    %c11_22 = arith.constant 11 : index
    %c0_23 = arith.constant 0 : index
    %45 = vector.load %arg8[%c11_22, %c0_23] : memref<100x8xf32, #tpu.memory_space<vmem>>, vector<78x8xf32>
    tpu.vector_store %arg8[%c11_22, %c0_23], %44 {strides = array<i32>} : memref<100x8xf32, #tpu.memory_space<vmem>>, vector<78x8xf32>,
    %c0_24 = arith.constant 0 : index
    %c0_25 = arith.constant 0 : index
    %46 = vector.load %arg8[%c0_24, %c0_25] : memref<100x8xf32, #tpu.memory_space<vmem>>, vector<78x8xf32>
    %47 = arith.truncf %46 : vector<78x8xf32> to vector<78x8xbf16>
    %c1_26 = arith.constant 1 : index
    %c0_27 = arith.constant 0 : index
    %48 = vector.load %arg8[%c1_26, %c0_27] : memref<100x8xf32, #tpu.memory_space<vmem>>, vector<78x8xf32>
    %49 = arith.truncf %48 : vector<78x8xf32> to vector<78x8xbf16>
    %c2_28 = arith.constant 2 : index
    %c0_29 = arith.constant 0 : index
    %50 = vector.load %arg8[%c2_28, %c0_29] : memref<100x8xf32, #tpu.memory_space<vmem>>, vector<78x8xf32>
    %51 = arith.truncf %50 : vector<78x8xf32> to vector<78x8xbf16>
    %c10_30 = arith.constant 10 : index
    %c0_31 = arith.constant 0 : index
    %52 = vector.load %arg8[%c10_30, %c0_31] : memref<100x8xf32, #tpu.memory_space<vmem>>, vector<78x8xf32>
    %53 = arith.truncf %52 : vector<78x8xf32> to vector<78x8xbf16>
    %c11_32 = arith.constant 11 : index
    %c0_33 = arith.constant 0 : index
    %54 = vector.load %arg8[%c11_32, %c0_33] : memref<100x8xf32, #tpu.memory_space<vmem>>, vector<78x8xf32>
    %55 = arith.truncf %54 : vector<78x8xf32> to vector<78x8xbf16>
    %c12_34 = arith.constant 12 : index
    %c0_35 = arith.constant 0 : index
    %56 = vector.load %arg8[%c12_34, %c0_35] : memref<100x8xf32, #tpu.memory_space<vmem>>, vector<78x8xf32>
    %57 = arith.truncf %56 : vector<78x8xf32> to vector<78x8xbf16>
    %c20_36 = arith.constant 20 : index
    %c0_37 = arith.constant 0 : index
    %58 = vector.load %arg8[%c20_36, %c0_37] : memref<100x8xf32, #tpu.memory_space<vmem>>, vector<78x8xf32>
    %59 = arith.truncf %58 : vector<78x8xf32> to vector<78x8xbf16>
    %c21_38 = arith.constant 21 : index
    %c0_39 = arith.constant 0 : index
    %60 = vector.load %arg8[%c21_38, %c0_39] : memref<100x8xf32, #tpu.memory_space<vmem>>, vector<78x8xf32>
    %61 = arith.truncf %60 : vector<78x8xf32> to vector<78x8xbf16>
    %c22_40 = arith.constant 22 : index
    %c0_41 = arith.constant 0 : index
    %62 = vector.load %arg8[%c22_40, %c0_41] : memref<100x8xf32, #tpu.memory_space<vmem>>, vector<78x8xf32>
    %63 = arith.truncf %62 : vector<78x8xf32> to vector<78x8xbf16>
    %64 = tpu.concatenate %47, %49, %51, %53, %55, %57, %59, %61, %63 in 1 : vector<78x8xbf16>, vector<78x8xbf16>, vector<78x8xbf16>, vector<78x8xbf16>, vector<78x8xbf16>, vector<78x8xbf16>, vector<78x8xbf16>, vector<78x8xbf16>, vector<78x8xbf16> -> vector<78x72xbf16>
    %c0_42 = arith.constant 0 : index
    %c0_43 = arith.constant 0 : index
    %65 = vector.load %arg5[%c0_42, %c0_43] : memref<72x8xbf16, #tpu.memory_space<vmem>>, vector<72x8xbf16>
    %cst_44 = arith.constant dense<0.000000e+00> : vector<78x8xf32>
    %66 = tpu.matmul %64, %65, %cst_44 {dimension_numbers = #tpu.dot_dimension_numbers<[1], [0], [0], [1], [0, 0, 1, 1], [], []>} : vector<78x72xbf16>, vector<72x8xbf16>, vector<78x8xf32> -> vector<78x8xf32>
    %67 = arith.addf %6, %66 : vector<78x8xf32>
    %68 = math.tanh %67 : vector<78x8xf32>
    %cst_45 = arith.constant 1.000000e+00 : f32
    %69 = vector.broadcast %cst_45 : f32 to vector<78x8xf32>
    %70 = arith.subf %69, %36 : vector<78x8xf32>
    %71 = arith.mulf %70, %8 : vector<78x8xf32>
    %72 = arith.mulf %36, %68 : vector<78x8xf32>
    %73 = arith.addf %71, %72 : vector<78x8xf32>
    %74 = vector.broadcast %7 : vector<78x1xf32> to vector<78x8xf32>
    %75 = arith.mulf %73, %74 : vector<78x8xf32>
    %c11_46 = arith.constant 11 : index
    %c0_47 = arith.constant 0 : index
    %76 = vector.load %arg7[%c11_46, %c0_47] : memref<100x8xf32, #tpu.memory_space<vmem>>, vector<78x8xf32>
    tpu.vector_store %arg7[%c11_46, %c0_47], %75 {strides = array<i32>} : memref<100x8xf32, #tpu.memory_space<vmem>>, vector<78x8xf32>,
    %c0_48 = arith.constant 0 : index
    %c0_49 = arith.constant 0 : index
    %77 = vector.load %arg7[%c0_48, %c0_49] : memref<100x8xf32, #tpu.memory_space<vmem>>, vector<100x8xf32>
    %78 = arith.truncf %77 : vector<100x8xf32> to vector<100x8xbf16>
    %c0_50 = arith.constant 0 : index
    %c0_51 = arith.constant 0 : index
    %c0_52 = arith.constant 0 : index
    %c0_53 = arith.constant 0 : index
    %79 = vector.load %arg6[%c0_50, %c0_51, %c0_52, %c0_53] : memref<1x1x100x8xbf16, #tpu.memory_space<vmem>>, vector<1x1x100x8xbf16>
    %80 = vector.shape_cast %79 : vector<1x1x100x8xbf16> to vector<100x8xbf16>
    %81 = vector.shape_cast %78 : vector<100x8xbf16> to vector<1x1x100x8xbf16>
    tpu.vector_store %arg6[%c0_50, %c0_51, %c0_52, %c0_53], %81 {strides = array<i32>} : memref<1x1x100x8xbf16, #tpu.memory_space<vmem>>, vector<1x1x100x8xbf16>,
    return
  }
  func.func @transform_0(%arg0: i32, %arg1: i32) -> (i32, i32, i32, i32) {
    %c0_i32 = arith.constant 0 : i32
    %c0_i32_0 = arith.constant 0 : i32
    %c0_i32_1 = arith.constant 0 : i32
    return %arg0, %arg1, %c0_i32, %c0_i32_0 : i32, i32, i32, i32
  }
  func.func @transform_1(%arg0: i32, %arg1: i32) -> (i32, i32) {
    %c0_i32 = arith.constant 0 : i32
    %c0_i32_0 = arith.constant 0 : i32
    %c0_i32_1 = arith.constant 0 : i32
    return %c0_i32, %c0_i32_0 : i32, i32
  }
  func.func @transform_2(%arg0: i32, %arg1: i32) -> (i32, i32) {
    %c0_i32 = arith.constant 0 : i32
    %c0_i32_0 = arith.constant 0 : i32
    %c0_i32_1 = arith.constant 0 : i32
    return %c0_i32, %c0_i32_0 : i32, i32
  }
  func.func @transform_3(%arg0: i32, %arg1: i32) -> (i32, i32) {
    %c0_i32 = arith.constant 0 : i32
    %c0_i32_0 = arith.constant 0 : i32
    %c0_i32_1 = arith.constant 0 : i32
    return %c0_i32, %c0_i32_0 : i32, i32
  }
  func.func @transform_4(%arg0: i32, %arg1: i32) -> (i32, i32, i32, i32) {
    %c0_i32 = arith.constant 0 : i32
    %c0_i32_0 = arith.constant 0 : i32
    %c0_i32_1 = arith.constant 0 : i32
    return %arg0, %arg1, %c0_i32, %c0_i32_0 : i32, i32, i32, i32
  }
}

module attributes {stable_mosaic.version = 11 : i64} {
  func.func @_vlad_lin1_kernel(%arg0: i32, %arg1: memref<14x8x64xbf16, #tpu.memory_space<vmem>>, %arg2: memref<14x64x32xbf16, #tpu.memory_space<vmem>>, %arg3: memref<8x32xf32, #tpu.memory_space<vmem>>, %arg4: memref<8x1xf32, #tpu.memory_space<vmem>>, %arg5: memref<14x32xf32, #tpu.memory_space<vmem>>) attributes {dimension_semantics = [#tpu.dimension_semantics<parallel>], iteration_bounds = array<i64: 1>, scalar_prefetch = 0 : i64, scratch_operands = 0 : i64, tpu.core_type = #tpu.core_type<tc>, window_params = [{transform_indices = @transform_0, window_bounds = array<i64: 14, 8, 64>}, {transform_indices = @transform_1, window_bounds = array<i64: 14, 64, 32>}, {pipeline_mode = #tpu.pipeline_mode<synchronous>, transform_indices = @transform_2, window_bounds = array<i64: 8, 32>}, {pipeline_mode = #tpu.pipeline_mode<synchronous>, transform_indices = @transform_3, window_bounds = array<i64: 8, 1>}, {transform_indices = @transform_4, window_bounds = array<i64: 14, 32>}]} {
    %c0 = arith.constant 0 : index
    %c0_0 = arith.constant 0 : index
    %c0_1 = arith.constant 0 : index
    %0 = vector.load %arg1[%c0, %c0_0, %c0_1] : memref<14x8x64xbf16, #tpu.memory_space<vmem>>, vector<14x8x64xbf16>
    %1 = arith.extf %0 : vector<14x8x64xbf16> to vector<14x8x64xf32>
    %cst = arith.constant dense<0xFF800000> : vector<14x64xf32>
    %2 = vector.multi_reduction <maximumf>, %1, %cst [1] : vector<14x8x64xf32> to vector<14x64xf32>
    %3 = vector.shape_cast %2 : vector<14x64xf32> to vector<14x1x64xf32>
    %4 = vector.broadcast %3 : vector<14x1x64xf32> to vector<14x8x64xf32>
    %5 = arith.subf %1, %4 : vector<14x8x64xf32>
    %6 = math.exp %5 : vector<14x8x64xf32>
    %cst_2 = arith.constant dense<0.000000e+00> : vector<14x64xf32>
    %7 = vector.multi_reduction <add>, %6, %cst_2 [1] : vector<14x8x64xf32> to vector<14x64xf32>
    %8 = vector.shape_cast %7 : vector<14x64xf32> to vector<14x1x64xf32>
    %9 = tpu.reciprocal %8 {approx = true} : vector<14x1x64xf32> -> vector<14x1x64xf32>
    %10 = vector.broadcast %9 : vector<14x1x64xf32> to vector<14x8x64xf32>
    %11 = arith.mulf %6, %10 : vector<14x8x64xf32>
    %cst_3 = arith.constant dense<0.000000e+00> : vector<14x8xf32>
    %12 = vector.multi_reduction <add>, %11, %cst_3 [2] : vector<14x8x64xf32> to vector<14x8xf32>
    %13 = vector.shape_cast %12 : vector<14x8xf32> to vector<14x8x1xf32>
    %14 = arith.truncf %11 : vector<14x8x64xf32> to vector<14x8x64xbf16>
    %c0_4 = arith.constant 0 : index
    %c0_5 = arith.constant 0 : index
    %c0_6 = arith.constant 0 : index
    %15 = vector.load %arg2[%c0_4, %c0_5, %c0_6] : memref<14x64x32xbf16, #tpu.memory_space<vmem>>, vector<14x64x32xbf16>
    "tpu.trace_start"() <{level = 10 : i32, message = "bkh,bhd->bkd"}> : () -> ()
    %cst_7 = arith.constant dense<0.000000e+00> : vector<14x8x32xf32>
    %16 = tpu.matmul %14, %15, %cst_7 {dimension_numbers = #tpu.dot_dimension_numbers<[2], [1], [1], [2], [0, 0, 0, 1, 1, 2], [0], [0]>} : vector<14x8x64xbf16>, vector<14x64x32xbf16>, vector<14x8x32xf32> -> vector<14x8x32xf32>
    "tpu.trace_stop"() : () -> ()
    %c0_8 = arith.constant 0 : index
    %c0_9 = arith.constant 0 : index
    %17 = vector.load %arg3[%c0_8, %c0_9] : memref<8x32xf32, #tpu.memory_space<vmem>>, vector<8x32xf32>
    %18 = vector.shape_cast %17 : vector<8x32xf32> to vector<1x8x32xf32>
    %19 = vector.broadcast %13 : vector<14x8x1xf32> to vector<14x8x32xf32>
    %20 = vector.broadcast %18 : vector<1x8x32xf32> to vector<14x8x32xf32>
    %21 = arith.mulf %19, %20 : vector<14x8x32xf32>
    %22 = arith.subf %16, %21 : vector<14x8x32xf32>
    %23 = arith.mulf %22, %22 : vector<14x8x32xf32>
    %cst_10 = arith.constant dense<0.000000e+00> : vector<14x8xf32>
    %24 = vector.multi_reduction <add>, %23, %cst_10 [2] : vector<14x8x32xf32> to vector<14x8xf32>
    %25 = vector.shape_cast %24 : vector<14x8xf32> to vector<14x8x1xf32>
    %cst_11 = arith.constant 9.99999996E-13 : f32
    %26 = vector.broadcast %cst_11 : f32 to vector<14x8x1xf32>
    %27 = arith.addf %25, %26 : vector<14x8x1xf32>
    %28 = math.rsqrt %27 : vector<14x8x1xf32>
    %29 = vector.broadcast %28 : vector<14x8x1xf32> to vector<14x8x32xf32>
    %30 = arith.mulf %22, %29 : vector<14x8x32xf32>
    %c0_12 = arith.constant 0 : index
    %c0_13 = arith.constant 0 : index
    %31 = vector.load %arg4[%c0_12, %c0_13] : memref<8x1xf32, #tpu.memory_space<vmem>>, vector<8x1xf32>
    %32 = vector.shape_cast %31 : vector<8x1xf32> to vector<1x8x1xf32>
    %33 = vector.broadcast %32 : vector<1x8x1xf32> to vector<14x8x32xf32>
    %34 = arith.mulf %30, %33 : vector<14x8x32xf32>
    %cst_14 = arith.constant dense<0.000000e+00> : vector<14x32xf32>
    %35 = vector.multi_reduction <add>, %34, %cst_14 [1] : vector<14x8x32xf32> to vector<14x32xf32>
    %c0_15 = arith.constant 0 : index
    %c0_16 = arith.constant 0 : index
    %36 = vector.load %arg5[%c0_15, %c0_16] : memref<14x32xf32, #tpu.memory_space<vmem>>, vector<14x32xf32>
    tpu.vector_store %arg5[%c0_15, %c0_16], %35 {strides = array<i32>} : memref<14x32xf32, #tpu.memory_space<vmem>>, vector<14x32xf32>,
    return
  }
  func.func @transform_0(%arg0: i32) -> (i32, i32, i32) {
    %c0_i32 = arith.constant 0 : i32
    %c0_i32_0 = arith.constant 0 : i32
    %c0_i32_1 = arith.constant 0 : i32
    return %arg0, %c0_i32, %c0_i32_0 : i32, i32, i32
  }
  func.func @transform_1(%arg0: i32) -> (i32, i32, i32) {
    %c0_i32 = arith.constant 0 : i32
    %c0_i32_0 = arith.constant 0 : i32
    %c0_i32_1 = arith.constant 0 : i32
    return %arg0, %c0_i32, %c0_i32_0 : i32, i32, i32
  }
  func.func @transform_2(%arg0: i32) -> (i32, i32) {
    %c0_i32 = arith.constant 0 : i32
    %c0_i32_0 = arith.constant 0 : i32
    %c0_i32_1 = arith.constant 0 : i32
    return %c0_i32, %c0_i32_0 : i32, i32
  }
  func.func @transform_3(%arg0: i32) -> (i32, i32) {
    %c0_i32 = arith.constant 0 : i32
    %c0_i32_0 = arith.constant 0 : i32
    %c0_i32_1 = arith.constant 0 : i32
    return %c0_i32, %c0_i32_0 : i32, i32
  }
  func.func @transform_4(%arg0: i32) -> (i32, i32) {
    %c0_i32 = arith.constant 0 : i32
    %c0_i32_0 = arith.constant 0 : i32
    return %arg0, %c0_i32 : i32, i32
  }
}

module attributes {stable_mosaic.version = 11 : i64} {
  func.func @_matmul_bias_kernel(%arg0: i32, %arg1: i32, %arg2: memref<14x64xf32, #tpu.memory_space<vmem>>, %arg3: memref<64x128xbf16, #tpu.memory_space<vmem>>, %arg4: memref<1x128xf32, #tpu.memory_space<vmem>>, %arg5: memref<14x128xf32, #tpu.memory_space<vmem>>) attributes {dimension_semantics = [#tpu.dimension_semantics<parallel>, #tpu.dimension_semantics<parallel>], iteration_bounds = array<i64: 1, 1>, scalar_prefetch = 0 : i64, scratch_operands = 0 : i64, tpu.core_type = #tpu.core_type<tc>, window_params = [{transform_indices = @transform_0, window_bounds = array<i64: 14, 64>}, {transform_indices = @transform_1, window_bounds = array<i64: 64, 128>}, {transform_indices = @transform_2, window_bounds = array<i64: 1, 128>}, {transform_indices = @transform_3, window_bounds = array<i64: 14, 128>}]} {
    %c0 = arith.constant 0 : index
    %c0_0 = arith.constant 0 : index
    %0 = vector.load %arg2[%c0, %c0_0] : memref<14x64xf32, #tpu.memory_space<vmem>>, vector<14x64xf32>
    %1 = arith.truncf %0 : vector<14x64xf32> to vector<14x64xbf16>
    %c0_1 = arith.constant 0 : index
    %c0_2 = arith.constant 0 : index
    %2 = vector.load %arg3[%c0_1, %c0_2] : memref<64x128xbf16, #tpu.memory_space<vmem>>, vector<64x128xbf16>
    %cst = arith.constant dense<0.000000e+00> : vector<14x128xf32>
    %3 = tpu.matmul %1, %2, %cst {dimension_numbers = #tpu.dot_dimension_numbers<[1], [0], [0], [1], [0, 0, 1, 1], [], []>} : vector<14x64xbf16>, vector<64x128xbf16>, vector<14x128xf32> -> vector<14x128xf32>
    %c0_3 = arith.constant 0 : index
    %c0_4 = arith.constant 0 : index
    %4 = vector.load %arg4[%c0_3, %c0_4] : memref<1x128xf32, #tpu.memory_space<vmem>>, vector<1x128xf32>
    %5 = vector.broadcast %4 : vector<1x128xf32> to vector<14x128xf32>
    %6 = arith.addf %3, %5 : vector<14x128xf32>
    %c0_5 = arith.constant 0 : index
    %c0_6 = arith.constant 0 : index
    %7 = vector.load %arg5[%c0_5, %c0_6] : memref<14x128xf32, #tpu.memory_space<vmem>>, vector<14x128xf32>
    tpu.vector_store %arg5[%c0_5, %c0_6], %6 {strides = array<i32>} : memref<14x128xf32, #tpu.memory_space<vmem>>, vector<14x128xf32>,
    return
  }
  func.func @transform_0(%arg0: i32, %arg1: i32) -> (i32, i32) {
    %c0_i32 = arith.constant 0 : i32
    %c0_i32_0 = arith.constant 0 : i32
    return %arg0, %c0_i32 : i32, i32
  }
  func.func @transform_1(%arg0: i32, %arg1: i32) -> (i32, i32) {
    %c0_i32 = arith.constant 0 : i32
    %c0_i32_0 = arith.constant 0 : i32
    return %c0_i32, %arg1 : i32, i32
  }
  func.func @transform_2(%arg0: i32, %arg1: i32) -> (i32, i32) {
    %c0_i32 = arith.constant 0 : i32
    %c0_i32_0 = arith.constant 0 : i32
    return %c0_i32, %arg1 : i32, i32
  }
  func.func @transform_3(%arg0: i32, %arg1: i32) -> (i32, i32) {
    %c0_i32 = arith.constant 0 : i32
    return %arg0, %arg1 : i32, i32
  }
}

module attributes {stable_mosaic.version = 11 : i64} {
  func.func @_matmul_bias_kernel(%arg0: i32, %arg1: i32, %arg2: memref<6x32xf32, #tpu.memory_space<vmem>>, %arg3: memref<32x64xbf16, #tpu.memory_space<vmem>>, %arg4: memref<1x64xf32, #tpu.memory_space<vmem>>, %arg5: memref<6x64xf32, #tpu.memory_space<vmem>>) attributes {dimension_semantics = [#tpu.dimension_semantics<parallel>, #tpu.dimension_semantics<parallel>], iteration_bounds = array<i64: 1, 1>, scalar_prefetch = 0 : i64, scratch_operands = 0 : i64, tpu.core_type = #tpu.core_type<tc>, window_params = [{transform_indices = @transform_0, window_bounds = array<i64: 6, 32>}, {transform_indices = @transform_1, window_bounds = array<i64: 32, 64>}, {transform_indices = @transform_2, window_bounds = array<i64: 1, 64>}, {transform_indices = @transform_3, window_bounds = array<i64: 6, 64>}]} {
    %c0 = arith.constant 0 : index
    %c0_0 = arith.constant 0 : index
    %0 = vector.load %arg2[%c0, %c0_0] : memref<6x32xf32, #tpu.memory_space<vmem>>, vector<6x32xf32>
    %1 = arith.truncf %0 : vector<6x32xf32> to vector<6x32xbf16>
    %c0_1 = arith.constant 0 : index
    %c0_2 = arith.constant 0 : index
    %2 = vector.load %arg3[%c0_1, %c0_2] : memref<32x64xbf16, #tpu.memory_space<vmem>>, vector<32x64xbf16>
    %cst = arith.constant dense<0.000000e+00> : vector<6x64xf32>
    %3 = tpu.matmul %1, %2, %cst {dimension_numbers = #tpu.dot_dimension_numbers<[1], [0], [0], [1], [0, 0, 1, 1], [], []>} : vector<6x32xbf16>, vector<32x64xbf16>, vector<6x64xf32> -> vector<6x64xf32>
    %c0_3 = arith.constant 0 : index
    %c0_4 = arith.constant 0 : index
    %4 = vector.load %arg4[%c0_3, %c0_4] : memref<1x64xf32, #tpu.memory_space<vmem>>, vector<1x64xf32>
    %5 = vector.broadcast %4 : vector<1x64xf32> to vector<6x64xf32>
    %6 = arith.addf %3, %5 : vector<6x64xf32>
    %c0_5 = arith.constant 0 : index
    %c0_6 = arith.constant 0 : index
    %7 = vector.load %arg5[%c0_5, %c0_6] : memref<6x64xf32, #tpu.memory_space<vmem>>, vector<6x64xf32>
    tpu.vector_store %arg5[%c0_5, %c0_6], %6 {strides = array<i32>} : memref<6x64xf32, #tpu.memory_space<vmem>>, vector<6x64xf32>,
    return
  }
  func.func @transform_0(%arg0: i32, %arg1: i32) -> (i32, i32) {
    %c0_i32 = arith.constant 0 : i32
    %c0_i32_0 = arith.constant 0 : i32
    return %arg0, %c0_i32 : i32, i32
  }
  func.func @transform_1(%arg0: i32, %arg1: i32) -> (i32, i32) {
    %c0_i32 = arith.constant 0 : i32
    %c0_i32_0 = arith.constant 0 : i32
    return %c0_i32, %arg1 : i32, i32
  }
  func.func @transform_2(%arg0: i32, %arg1: i32) -> (i32, i32) {
    %c0_i32 = arith.constant 0 : i32
    %c0_i32_0 = arith.constant 0 : i32
    return %c0_i32, %arg1 : i32, i32
  }
  func.func @transform_3(%arg0: i32, %arg1: i32) -> (i32, i32) {
    %c0_i32 = arith.constant 0 : i32
    return %arg0, %arg1 : i32, i32
  }
}

module attributes {stable_mosaic.version = 11 : i64} {
  func.func @_lstm_kernel(%arg0: i32, %arg1: memref<1x2x128xf32, #tpu.memory_space<vmem>>, %arg2: memref<2x32xf32, #tpu.memory_space<vmem>>, %arg3: memref<32x128xbf16, #tpu.memory_space<vmem>>, %arg4: memref<1x2x32xf32, #tpu.memory_space<vmem>>, %arg5: memref<2x32xf32, #tpu.memory_space<vmem>>, %arg6: memref<2x32xf32, #tpu.memory_space<vmem>>) attributes {dimension_semantics = [#tpu.dimension_semantics<arbitrary>], iteration_bounds = array<i64: 7>, scalar_prefetch = 0 : i64, scratch_operands = 2 : i64, tpu.core_type = #tpu.core_type<tc>, window_params = [{transform_indices = @transform_0, window_bounds = array<i64: 1, 2, 128>}, {pipeline_mode = #tpu.pipeline_mode<synchronous>, transform_indices = @transform_1, window_bounds = array<i64: 2, 32>}, {pipeline_mode = #tpu.pipeline_mode<synchronous>, transform_indices = @transform_2, window_bounds = array<i64: 32, 128>}, {transform_indices = @transform_3, window_bounds = array<i64: 1, 2, 32>}]} {
    %c0_i32 = arith.constant 0 : i32
    %0 = arith.cmpi eq, %arg0, %c0_i32 : i32
    %1 = arith.extui %0 : i1 to i32
    %c0_i32_0 = arith.constant 0 : i32
    %2 = arith.cmpi ne, %1, %c0_i32_0 : i32
    scf.if %2 {
      %c0_19 = arith.constant 0 : index
      %c0_20 = arith.constant 0 : index
      %41 = vector.load %arg2[%c0_19, %c0_20] : memref<2x32xf32, #tpu.memory_space<vmem>>, vector<2x32xf32>
      %c0_21 = arith.constant 0 : index
      %c0_22 = arith.constant 0 : index
      %42 = vector.load %arg5[%c0_21, %c0_22] : memref<2x32xf32, #tpu.memory_space<vmem>>, vector<2x32xf32>
      tpu.vector_store %arg5[%c0_21, %c0_22], %41 {strides = array<i32>} : memref<2x32xf32, #tpu.memory_space<vmem>>, vector<2x32xf32>,
      %cst_23 = arith.constant 0.000000e+00 : f32
      %43 = vector.broadcast %cst_23 : f32 to vector<2x32xf32>
      %c0_24 = arith.constant 0 : index
      %c0_25 = arith.constant 0 : index
      %44 = vector.load %arg6[%c0_24, %c0_25] : memref<2x32xf32, #tpu.memory_space<vmem>>, vector<2x32xf32>
      tpu.vector_store %arg6[%c0_24, %c0_25], %43 {strides = array<i32>} : memref<2x32xf32, #tpu.memory_space<vmem>>, vector<2x32xf32>,
    } else {
    }
    %c0 = arith.constant 0 : index
    %c0_1 = arith.constant 0 : index
    %3 = vector.load %arg5[%c0, %c0_1] : memref<2x32xf32, #tpu.memory_space<vmem>>, vector<2x32xf32>
    %c0_2 = arith.constant 0 : index
    %c0_3 = arith.constant 0 : index
    %c0_4 = arith.constant 0 : index
    %4 = vector.load %arg1[%c0_2, %c0_3, %c0_4] : memref<1x2x128xf32, #tpu.memory_space<vmem>>, vector<1x2x128xf32>
    %5 = vector.shape_cast %4 : vector<1x2x128xf32> to vector<2x128xf32>
    %6 = arith.truncf %3 : vector<2x32xf32> to vector<2x32xbf16>
    %c0_5 = arith.constant 0 : index
    %c0_6 = arith.constant 0 : index
    %7 = vector.load %arg3[%c0_5, %c0_6] : memref<32x128xbf16, #tpu.memory_space<vmem>>, vector<32x128xbf16>
    %cst = arith.constant dense<0.000000e+00> : vector<2x128xf32>
    %8 = tpu.matmul %6, %7, %cst {dimension_numbers = #tpu.dot_dimension_numbers<[1], [0], [0], [1], [0, 0, 1, 1], [], []>} : vector<2x32xbf16>, vector<32x128xbf16>, vector<2x128xf32> -> vector<2x128xf32>
    %9 = arith.addf %5, %8 : vector<2x128xf32>
    %10 = vector.extract_strided_slice %9 {offsets = [0, 0], sizes = [2, 32], strides = [1, 1]} : vector<2x128xf32> to vector<2x32xf32>
    %11 = arith.negf %10 : vector<2x32xf32>
    %12 = math.exp %11 : vector<2x32xf32>
    %cst_7 = arith.constant 1.000000e+00 : f32
    %13 = vector.broadcast %cst_7 : f32 to vector<2x32xf32>
    %14 = arith.addf %13, %12 : vector<2x32xf32>
    %15 = arith.divf %13, %14 : vector<2x32xf32>
    %16 = vector.extract_strided_slice %9 {offsets = [0, 32], sizes = [2, 32], strides = [1, 1]} : vector<2x128xf32> to vector<2x32xf32>
    %17 = arith.negf %16 : vector<2x32xf32>
    %18 = math.exp %17 : vector<2x32xf32>
    %cst_8 = arith.constant 1.000000e+00 : f32
    %19 = vector.broadcast %cst_8 : f32 to vector<2x32xf32>
    %20 = arith.addf %19, %18 : vector<2x32xf32>
    %21 = arith.divf %19, %20 : vector<2x32xf32>
    %22 = vector.extract_strided_slice %9 {offsets = [0, 64], sizes = [2, 32], strides = [1, 1]} : vector<2x128xf32> to vector<2x32xf32>
    %23 = math.tanh %22 : vector<2x32xf32>
    %24 = vector.extract_strided_slice %9 {offsets = [0, 96], sizes = [2, 32], strides = [1, 1]} : vector<2x128xf32> to vector<2x32xf32>
    %25 = arith.negf %24 : vector<2x32xf32>
    %26 = math.exp %25 : vector<2x32xf32>
    %cst_9 = arith.constant 1.000000e+00 : f32
    %27 = vector.broadcast %cst_9 : f32 to vector<2x32xf32>
    %28 = arith.addf %27, %26 : vector<2x32xf32>
    %29 = arith.divf %27, %28 : vector<2x32xf32>
    %c0_10 = arith.constant 0 : index
    %c0_11 = arith.constant 0 : index
    %30 = vector.load %arg6[%c0_10, %c0_11] : memref<2x32xf32, #tpu.memory_space<vmem>>, vector<2x32xf32>
    %31 = arith.mulf %21, %30 : vector<2x32xf32>
    %32 = arith.mulf %15, %23 : vector<2x32xf32>
    %33 = arith.addf %31, %32 : vector<2x32xf32>
    %34 = math.tanh %33 : vector<2x32xf32>
    %35 = arith.mulf %29, %34 : vector<2x32xf32>
    %c0_12 = arith.constant 0 : index
    %c0_13 = arith.constant 0 : index
    %36 = vector.load %arg6[%c0_12, %c0_13] : memref<2x32xf32, #tpu.memory_space<vmem>>, vector<2x32xf32>
    tpu.vector_store %arg6[%c0_12, %c0_13], %33 {strides = array<i32>} : memref<2x32xf32, #tpu.memory_space<vmem>>, vector<2x32xf32>,
    %c0_14 = arith.constant 0 : index
    %c0_15 = arith.constant 0 : index
    %37 = vector.load %arg5[%c0_14, %c0_15] : memref<2x32xf32, #tpu.memory_space<vmem>>, vector<2x32xf32>
    tpu.vector_store %arg5[%c0_14, %c0_15], %35 {strides = array<i32>} : memref<2x32xf32, #tpu.memory_space<vmem>>, vector<2x32xf32>,
    %c0_16 = arith.constant 0 : index
    %c0_17 = arith.constant 0 : index
    %c0_18 = arith.constant 0 : index
    %38 = vector.load %arg4[%c0_16, %c0_17, %c0_18] : memref<1x2x32xf32, #tpu.memory_space<vmem>>, vector<1x2x32xf32>
    %39 = vector.shape_cast %38 : vector<1x2x32xf32> to vector<2x32xf32>
    %40 = vector.shape_cast %35 : vector<2x32xf32> to vector<1x2x32xf32>
    tpu.vector_store %arg4[%c0_16, %c0_17, %c0_18], %40 {strides = array<i32>} : memref<1x2x32xf32, #tpu.memory_space<vmem>>, vector<1x2x32xf32>,
    return
  }
  func.func @transform_0(%arg0: i32) -> (i32, i32, i32) {
    %c0_i32 = arith.constant 0 : i32
    %c0_i32_0 = arith.constant 0 : i32
    %c0_i32_1 = arith.constant 0 : i32
    return %arg0, %c0_i32, %c0_i32_0 : i32, i32, i32
  }
  func.func @transform_1(%arg0: i32) -> (i32, i32) {
    %c0_i32 = arith.constant 0 : i32
    %c0_i32_0 = arith.constant 0 : i32
    %c0_i32_1 = arith.constant 0 : i32
    return %c0_i32, %c0_i32_0 : i32, i32
  }
  func.func @transform_2(%arg0: i32) -> (i32, i32) {
    %c0_i32 = arith.constant 0 : i32
    %c0_i32_0 = arith.constant 0 : i32
    %c0_i32_1 = arith.constant 0 : i32
    return %c0_i32, %c0_i32_0 : i32, i32
  }
  func.func @transform_3(%arg0: i32) -> (i32, i32, i32) {
    %c0_i32 = arith.constant 0 : i32
    %c0_i32_0 = arith.constant 0 : i32
    %c0_i32_1 = arith.constant 0 : i32
    return %arg0, %c0_i32, %c0_i32_0 : i32, i32, i32
  }
}

</mosaic_0001>

<llo_original>
// kernel: csa_sr_forward.8
$region0: #{csa_sr_forward.8}
  #allocation0 [shape = 'u32[]', space=smem, size = 0x4, offset = 0x4, fixed_abs, tag = 'smem constant byte address 0x4 - core index']
  #allocation1 [shape = 'u32[144,128]{1,0:T(1,128)}', space=vmem, size = 0x12000, scoped, tag = 'internal scratch']
  %s0 = inlined_call_operand.vmem [shape: bf16[896,32], index: 0, kind: input, shape index: {}]
  %s1 = inlined_call_operand.vmem [shape: bf16[32,8], index: 1, kind: input, shape index: {}]
  %s2 = inlined_call_operand.vmem [shape: f32[1,8], index: 2, kind: input, shape index: {}]
  %s3 = inlined_call_operand.vmem [shape: bf16[896,8], index: 3, kind: output, shape index: {}]
  %s4 = sld [smem:[#allocation0]]
  $region89: #{csa_sr_forward.8} parent=0
    _
  %s6 = ssub.s32 1, %s4
  %s7 = scalar_select 0, %s6, %s4
  $region1: #{csa_sr_forward.8} parent=0
    #allocation2 [shape = 'u8[131072]{0}', space=vmem, size = 0x20000, scoped, tag = 'output window, operand 0']
    loop: start=0, step=1, limit=6
    $region2: #{csa_sr_forward.8} parent=1 // loop_pre_header
      _
    $region3: #{csa_sr_forward.8} parent=1 // loop_header
      %s9 = sphi 0, %s13
      %p10 = scmp.ge.s32.totalorder %s9, 6
      %s16 = sphi 0, %s28
      %s17 = sphi 0, %s24
      %s18 = sphi 0, %s16
      %s19 = sphi 0, %s17
      %s20 = sphi 0, %s18
      %s21 = sphi 0, %s19
      %s31 = sphi 0, %s33
      %s34 = sphi 0, %s31
      %s35 = sphi 0, %s34
      %s51 = sphi 0, %s35
      %s57 = sphi 0, %s59
      %s60 = sphi 0, %s57
      %s61 = sphi 0, %s60
      %s77 = sphi 0, %s61
      %s83 = sphi 0, %s85
      %s86 = sphi 0, %s83
      %s87 = sphi 0, %s86
      %s103 = sphi 0, %s87
      %s111 = sphi 0, %s113
      %s114 = sphi 0, %s111
      %s115 = sphi 0, %s114
      %s131 = sphi 0, %s115
    $region4: #{csa_sr_forward.8} parent=1 // loop_header_branch
      %12 = sbr.rel (%p10) target = $region8
    $region5: #{csa_sr_forward.8} parent=1 // loop_body
      %s14 = ssub.s32 %s9, 1
      %s15 = ssub.s32 %s9, 2
      %s22 = sadd.s32 1, %s17
      %p23 = scmp.ge.s32.totalorder %s22, 1
      %s24 = scalar_select %p23, 0, %s22
      %s25 = sadd.s32 1, %s16
      %s26 = scalar_select %p23, %s25, %s16
      %p27 = scmp.ge.s32.totalorder %s26, 4
      %s28 = scalar_select %p27, 0, %s26
      %s29 = ssub.s32 %s16, %s28
      %p30 = scmp.eq.s32.totalorder %s29, 0
      %s32 = sadd.s32 %s31, 1
      %s33 = scalar_select %p30, %s31, %s32
      %p36 = pneg %p30
      %p37 = scmp.eq.s32.totalorder %s9, 3
      %p38 = por %p36, %p37
      %p39 = scmp.ne.s32.totalorder %s31, %s34
      %p40 = scmp.eq.s32.totalorder %s9, 0
      %p41 = por %p39, %p40
      %p42 = scmp.ne.s32.totalorder %s31, %s34
      %p43 = scmp.eq.s32.totalorder %s14, 3
      %p44 = por %p42, %p43
      %p45 = scmp.ne.s32.totalorder %s34, %s35
      %p46 = scmp.eq.s32.totalorder %s14, 0
      %p47 = por %p45, %p46
      %p48 = scmp.ne.s32.totalorder %s34, %s35
      %p49 = scmp.eq.s32.totalorder %s15, 3
      %p50 = por %p48, %p49
      %p52 = scmp.ne.s32.totalorder %s35, %s51
      %p53 = scmp.eq.s32.totalorder %s15, 0
      %p54 = por %p52, %p53
      %s55 = ssub.s32 %s17, %s24
      %p56 = scmp.eq.s32.totalorder %s55, 0
      %s58 = sadd.s32 %s57, 1
      %s59 = scalar_select %p56, %s57, %s58
      %p62 = pneg %p56
      %p63 = scmp.eq.s32.totalorder %s9, 3
      %p64 = por %p62, %p63
      %p65 = scmp.ne.s32.totalorder %s57, %s60
      %p66 = scmp.eq.s32.totalorder %s9, 0
      %p67 = por %p65, %p66
      %p68 = scmp.ne.s32.totalorder %s57, %s60
      %p69 = scmp.eq.s32.totalorder %s14, 3
      %p70 = por %p68, %p69
      %p71 = scmp.ne.s32.totalorder %s60, %s61
      %p72 = scmp.eq.s32.totalorder %s14, 0
      %p73 = por %p71, %p72
      %p74 = scmp.ne.s32.totalorder %s60, %s61
      %p75 = scmp.eq.s32.totalorder %s15, 3
      %p76 = por %p74, %p75
      %p78 = scmp.ne.s32.totalorder %s61, %s77
      %p79 = scmp.eq.s32.totalorder %s15, 0
      %p80 = por %p78, %p79
      %s81 = ssub.s32 %s17, %s24
      %p82 = scmp.eq.s32.totalorder %s81, 0
      %s84 = sadd.s32 %s83, 1
      %s85 = scalar_select %p82, %s83, %s84
      %p88 = pneg %p82
      %p89 = scmp.eq.s32.totalorder %s9, 3
      %p90 = por %p88, %p89
      %p91 = scmp.ne.s32.totalorder %s83, %s86
      %p92 = scmp.eq.s32.totalorder %s9, 0
      %p93 = por %p91, %p92
      %p94 = scmp.ne.s32.totalorder %s83, %s86
      %p95 = scmp.eq.s32.totalorder %s14, 3
      %p96 = por %p94, %p95
      %p97 = scmp.ne.s32.totalorder %s86, %s87
      %p98 = scmp.eq.s32.totalorder %s14, 0
      %p99 = por %p97, %p98
      %p100 = scmp.ne.s32.totalorder %s86, %s87
      %p101 = scmp.eq.s32.totalorder %s15, 3
      %p102 = por %p100, %p101
      %p104 = scmp.ne.s32.totalorder %s87, %s103
      %p105 = scmp.eq.s32.totalorder %s15, 0
      %p106 = por %p104, %p105
      %s107 = ssub.s32 %s16, %s28
      %s108 = ssub.s32 %s17, %s24
      %s109 = sor.u32 %s107, %s108
      %p110 = scmp.eq.s32.totalorder %s109, 0
      %s112 = sadd.s32 %s111, 1
      %s113 = scalar_select %p110, %s111, %s112
      %p116 = pneg %p110
      %p117 = scmp.eq.s32.totalorder %s9, 3
      %p118 = por %p116, %p117
      %p119 = scmp.ne.s32.totalorder %s111, %s114
      %p120 = scmp.eq.s32.totalorder %s9, 0
      %p121 = por %p119, %p120
      %p122 = scmp.ne.s32.totalorder %s111, %s114
      %p123 = scmp.eq.s32.totalorder %s14, 3
      %p124 = por %p122, %p123
      %p125 = scmp.ne.s32.totalorder %s114, %s115
      %p126 = scmp.eq.s32.totalorder %s14, 0
      %p127 = por %p125, %p126
      %p128 = scmp.ne.s32.totalorder %s114, %s115
      %p129 = scmp.eq.s32.totalorder %s15, 3
      %p130 = por %p128, %p129
      %p132 = scmp.ne.s32.totalorder %s115, %s131
      %p133 = scmp.eq.s32.totalorder %s15, 0
      %p134 = por %p132, %p133
      %p135 = scmp.le.s32.totalorder 1, %s9
      %p136 = scmp.lt.s32.totalorder %s9, 5
      %p137 = pnand %p135, %p136
      %p138 = pneg %p137
      // Predicated region
      $region9: #{csa_sr_forward.8} parent=5 // pred_check
        _
      $region10: #{csa_sr_forward.8} parent=5 // pred_check_branch
        %140 = sbr.rel (%p137) target = $region12
      $region11: #{csa_sr_forward.8} parent=5 // pred_region
        %s141 = ssub.s32 %s9, 1
        // Predicated region
        $region13: #{csa_sr_forward.8} parent=11 // pred_check
          %p142 = pneg %p73
        $region14: #{csa_sr_forward.8} parent=11 // pred_check_branch
          %144 = sbr.rel (%p142) target = $region16
        $region15: #{csa_sr_forward.8} parent=11 // pred_region
          %p145 = scmp.lt.s32.totalorder %s19, 0
          %s146 = scalar_select %p145, %s19, 0
          %s147 = smul.addr %s146, 4
          %s148 = scalar_lea.vmem %s1, %s147
        $region16: #{csa_sr_forward.8} parent=11 // pred_fallthru
          _
        // Predicated region
        $region17: #{csa_sr_forward.8} parent=11 // pred_check
          %p149 = pneg %p99
        $region18: #{csa_sr_forward.8} parent=11 // pred_check_branch
          %151 = sbr.rel (%p149) target = $region20
        $region19: #{csa_sr_forward.8} parent=11 // pred_region
          %p152 = scmp.lt.s32.totalorder %s19, 0
          %s153 = scalar_select %p152, %s19, 0
          %s154 = scalar_lea.vmem %s2, %s153
        $region20: #{csa_sr_forward.8} parent=11 // pred_fallthru
          _
      $region12: #{csa_sr_forward.8} parent=5 // pred_fallthru
        _
      %p155 = scmp.lt.s32.totalorder %s9, 4
      // Predicated region
      $region21: #{csa_sr_forward.8} parent=5 // pred_check
        %p156 = pneg %p155
      $region22: #{csa_sr_forward.8} parent=5 // pred_check_branch
        %158 = sbr.rel (%p156) target = $region24
      $region23: #{csa_sr_forward.8} parent=5 // pred_region
        // Predicated region
        $region25: #{csa_sr_forward.8} parent=23 // pred_check
          %p159 = pneg %p41
        $region26: #{csa_sr_forward.8} parent=23 // pred_check_branch
          %161 = sbr.rel (%p159) target = $region28
        $region27: #{csa_sr_forward.8} parent=23 // pred_region
          %s162 = smul.u32 32, %s16
          %s163 = ssub.s32 112, %s162
          %p164 = scmp.lt.s32.totalorder %s163, 32
          %s165 = scalar_select %p164, %s163, 32
          %s166 = smul.u32 64, %s165
          %p167 = scmp.lt.s32.totalorder %s162, 111
          %s168 = scalar_select %p167, %s162, 111
          %s169 = smul.addr %s168, 4
          %s170 = scalar_lea.vmem %s0, %s169
          %s171 = smul.u32 32, %s16
          %s172 = ssub.s32 112, %s171
          %p173 = scmp.lt.s32.totalorder %s172, 32
          %s174 = scalar_select %p173, %s172, 32
          %s175 = smul.u32 64, %s174
        $region28: #{csa_sr_forward.8} parent=23 // pred_fallthru
          _
      $region24: #{csa_sr_forward.8} parent=5 // pred_fallthru
        _
      %p176 = scmp.le.s32.totalorder 1, %s9
      %p177 = scmp.lt.s32.totalorder %s9, 5
      %p178 = pnand %p176, %p177
      %p179 = pneg %p178
      // Predicated region
      $region29: #{csa_sr_forward.8} parent=5 // pred_check
        _
      $region30: #{csa_sr_forward.8} parent=5 // pred_check_branch
        %181 = sbr.rel (%p178) target = $region32
      $region31: #{csa_sr_forward.8} parent=5 // pred_region
        %s182 = ssub.s32 %s9, 1
        %s183 = smul.u32 32, %s18
        %s184 = ssub.s32 112, %s183
        %p185 = scmp.lt.s32.totalorder %s184, 32
        %s186 = scalar_select %p185, %s184, 32
        %s187 = smul.u32 64, %s186
        %p188 = scmp.lt.s32.totalorder %s183, 111
        %s189 = scalar_select %p188, %s183, 111
        %s190 = smul.addr %s189, 4
        %s191 = scalar_lea.vmem %s0, %s190
        %p192 = pneg %p47
        %p193 = pneg %p44
        %p194 = scmp.lt.s32.totalorder %s19, 0
        %s195 = scalar_select %p194, %s19, 0
        %s196 = smul.addr %s195, 4
        %s197 = scalar_lea.vmem %s1, %s196
        %p198 = pneg %p73
        %p199 = pneg %p70
        %p200 = scmp.lt.s32.totalorder %s19, 0
        %s201 = scalar_select %p200, %s19, 0
        %s202 = scalar_lea.vmem %s2, %s201
        %p203 = pneg %p99
        %p204 = pneg %p96
        %p205 = pneg %p127
        %p206 = pneg %p124
        %s207 = sand.u32 %s114, 1
        %s208 = sand.u32 %s114, 1
        %s209 = smul.addr %s208, 128
        %s210 = scalar_lea.vmem [#allocation2], %s209
        %s211 = smul.u32 32, %s18
        %s212 = ssub.s32 112, %s211
        %p213 = scmp.lt.s32.totalorder %s212, 32
        %s214 = scalar_select %p213, %s212, 32
        %s215 = smul.u32 64, %s214
        %p216 = scmp.lt.s32.totalorder %s211, 111
        %s217 = scalar_select %p216, %s211, 111
        %s218 = smul.addr %s217, 4
        %s219 = scalar_lea.vmem %s0, %s218
        %s220 = smul.u32 32, %s18
        %s221 = ssub.s32 112, %s220
        %p222 = scmp.lt.s32.totalorder %s221, 32
        %s223 = scalar_select %p222, %s221, 32
        %s224 = smul.u32 64, %s223
        %p225 = scmp.lt.s32.totalorder %s19, 0
        %s226 = scalar_select %p225, %s19, 0
        %s227 = smul.addr %s226, 4
        %s228 = scalar_lea.vmem %s1, %s227
        %p229 = scmp.lt.s32.totalorder %s19, 0
        %s230 = scalar_select %p229, %s19, 0
        %s231 = scalar_lea.vmem %s2, %s230
        %s232 = smul.u32 32, %s18
        %s233 = ssub.s32 112, %s232
        %p234 = scmp.lt.s32.totalorder %s233, 32
        %s235 = scalar_select %p234, %s233, 32
        %s236 = smul.u32 64, %s235
        %v238 = vld [vmem:[%s219] sm:$0xf]
        %v239 = vld [vmem:[%s219 + $0x4] sm:$0xf]
        %v240 = vld [vmem:[%s219 + $0x8] sm:$0xf]
        %v241 = vld [vmem:[%s219 + $0xc] sm:$0xf]
        %v242 = vld [vmem:[%s219 + $0x10] sm:$0xf]
        %v243 = vld [vmem:[%s219 + $0x14] sm:$0xf]
        %v244 = vld [vmem:[%s219 + $0x18] sm:$0xf]
        %v245 = vld [vmem:[%s219 + $0x1c] sm:$0xf]
        %v246 = vld [vmem:[%s219 + $0x20] sm:$0xf]
        %v247 = vld [vmem:[%s219 + $0x24] sm:$0xf]
        %v248 = vld [vmem:[%s219 + $0x28] sm:$0xf]
        %v249 = vld [vmem:[%s219 + $0x2c] sm:$0xf]
        %v250 = vld [vmem:[%s219 + $0x30] sm:$0xf]
        %v251 = vld [vmem:[%s219 + $0x34] sm:$0xf]
        %v252 = vld [vmem:[%s219 + $0x38] sm:$0xf]
        %v253 = vld [vmem:[%s219 + $0x3c] sm:$0xf]
        %v254 = vld [vmem:[%s219 + $0x40] sm:$0xf]
        %v255 = vld [vmem:[%s219 + $0x44] sm:$0xf]
        %v256 = vld [vmem:[%s219 + $0x48] sm:$0xf]
        %v257 = vld [vmem:[%s219 + $0x4c] sm:$0xf]
        %v258 = vld [vmem:[%s219 + $0x50] sm:$0xf]
        %v259 = vld [vmem:[%s219 + $0x54] sm:$0xf]
        %v260 = vld [vmem:[%s219 + $0x58] sm:$0xf]
        %v261 = vld [vmem:[%s219 + $0x5c] sm:$0xf]
        %v262 = vld [vmem:[%s219 + $0x60] sm:$0xf]
        %v263 = vld [vmem:[%s219 + $0x64] sm:$0xf]
        %v264 = vld [vmem:[%s219 + $0x68] sm:$0xf]
        %v265 = vld [vmem:[%s219 + $0x6c] sm:$0xf]
        %v266 = vld [vmem:[%s219 + $0x70] sm:$0xf]
        %v267 = vld [vmem:[%s219 + $0x74] sm:$0xf]
        %v268 = vld [vmem:[%s219 + $0x78] sm:$0xf]
        %v269 = vld [vmem:[%s219 + $0x7c] sm:$0xf]
        %v270 = vld [vmem:[%s228] sm:$0xf]
        %v271 = vld [vmem:[%s228 + $0x4] sm:$0xf]
        %v272 = vld [vmem:[%s228 + $0x8] sm:$0xf]
        %v273 = vld [vmem:[%s228 + $0xc] sm:$0xf]
        %v274 = vld [vmem:[%s231] sm:$0x1]
        %v276 = vlaneseq
        %v277 = vshrl.u32 %v276, 7
        %v278 = vsub.s32 0, %v277
        %v279 = vrot.slane %v274, %v278
        %v313 = vunpack.c.l.b16 %v238
        %v314 = vunpack.c.l.b16 %v239
        %v315 = vunpack.c.l.b16 %v240
        %v316 = vunpack.c.l.b16 %v241
        %v317 = vunpack.c.l.b16 %v242
        %v318 = vunpack.c.l.b16 %v243
        %v319 = vunpack.c.l.b16 %v244
        %v320 = vunpack.c.l.b16 %v245
        %v321 = vunpack.c.l.b16 %v246
        %v322 = vunpack.c.l.b16 %v247
        %v323 = vunpack.c.l.b16 %v248
        %v324 = vunpack.c.l.b16 %v249
        %v325 = vunpack.c.l.b16 %v250
        %v326 = vunpack.c.l.b16 %v251
        %v327 = vunpack.c.l.b16 %v252
        %v328 = vunpack.c.l.b16 %v253
        %v329 = vunpack.c.l.b16 %v254
        %v330 = vunpack.c.l.b16 %v255
        %v331 = vunpack.c.l.b16 %v256
        %v332 = vunpack.c.l.b16 %v257
        %v333 = vunpack.c.l.b16 %v258
        %v334 = vunpack.c.l.b16 %v259
        %v335 = vunpack.c.l.b16 %v260
        %v336 = vunpack.c.l.b16 %v261
        %v337 = vunpack.c.l.b16 %v262
        %v338 = vunpack.c.l.b16 %v263
        %v339 = vunpack.c.l.b16 %v264
        %v340 = vunpack.c.l.b16 %v265
        %v341 = vunpack.c.l.b16 %v266
        %v342 = vunpack.c.l.b16 %v267
        %v343 = vunpack.c.l.b16 %v268
        %v344 = vunpack.c.l.b16 %v269
        %v345 = vpack.c.b16 %v314, %v313
        %v346 = vpack.c.b16 %v316, %v315
        %v347 = vpack.c.b16 %v318, %v317
        %v348 = vpack.c.b16 %v320, %v319
        %v349 = vpack.c.b16 %v322, %v321
        %v350 = vpack.c.b16 %v324, %v323
        %v351 = vpack.c.b16 %v326, %v325
        %v352 = vpack.c.b16 %v328, %v327
        %v353 = vpack.c.b16 %v330, %v329
        %v354 = vpack.c.b16 %v332, %v331
        %v355 = vpack.c.b16 %v334, %v333
        %v356 = vpack.c.b16 %v336, %v335
        %v357 = vpack.c.b16 %v338, %v337
        %v358 = vpack.c.b16 %v340, %v339
        %v359 = vpack.c.b16 %v342, %v341
        %v360 = vpack.c.b16 %v344, %v343
        %v365 = vunpack.c.l.b16 %v270
        %v366 = vunpack.c.l.b16 %v271
        %v367 = vunpack.c.l.b16 %v272
        %v368 = vunpack.c.l.b16 %v273
        %v369 = vpack.c.b16 %v366, %v365
        %v370 = vpack.c.b16 %v368, %v367
        %vm373 = vcmask 261120
        %v375 = vsel %vm373, %v345, 0
        %v378 = vsel %vm373, %v346, 0
        %v381 = vsel %vm373, %v347, 0
        %v384 = vsel %vm373, %v348, 0
        %v387 = vsel %vm373, %v349, 0
        %v390 = vsel %vm373, %v350, 0
        %v393 = vsel %vm373, %v351, 0
        %v396 = vsel %vm373, %v352, 0
        %v399 = vsel %vm373, %v353, 0
        %v402 = vsel %vm373, %v354, 0
        %v405 = vsel %vm373, %v355, 0
        %v408 = vsel %vm373, %v356, 0
        %v411 = vsel %vm373, %v357, 0
        %v414 = vsel %vm373, %v358, 0
        %v417 = vsel %vm373, %v359, 0
        %v420 = vsel %vm373, %v360, 0
        %422 = vmatprep.subr.bf16.mxu0 0
        %423 = vmatpush1.bf16.msra.mxu0 %v369
        %424 = vmatprep.subr.bf16.mxu0 0
        %425 = vmatpush1.bf16.msra.mxu0 %v370
        %426 = vmatprep.subr.bf16.mxu0 0
        %427 = vmatpush1.bf16.msra.mxu0 0
        %428 = vmatprep.subr.bf16.mxu0 0
        %429 = vmatpush1.bf16.msra.mxu0 0
        %430 = vmatprep.subr.bf16.mxu0 0
        %431 = vmatpush1.bf16.msra.mxu0 0
        %432 = vmatprep.subr.bf16.mxu0 0
        %433 = vmatpush1.bf16.msra.mxu0 0
        %434 = vmatprep.subr.bf16.mxu0 0
        %435 = vmatpush1.bf16.msra.mxu0 0
        %436 = vmatprep.subr.bf16.mxu0 0
        %437 = vmatpush1.bf16.msra.mxu0 0
        %438 = vmatprep.subr.bf16.mxu0 0
        %439 = vmatpush1.bf16.msra.mxu0 0
        %440 = vmatprep.subr.bf16.mxu0 0
        %441 = vmatpush1.bf16.msra.mxu0 0
        %442 = vmatprep.subr.bf16.mxu0 0
        %443 = vmatpush1.bf16.msra.mxu0 0
        %444 = vmatprep.subr.bf16.mxu0 0
        %445 = vmatpush1.bf16.msra.mxu0 0
        %446 = vmatprep.subr.bf16.mxu0 0
        %447 = vmatpush1.bf16.msra.mxu0 0
        %448 = vmatprep.subr.bf16.mxu0 0
        %449 = vmatpush1.bf16.msra.mxu0 0
        %450 = vmatprep.subr.bf16.mxu0 0
        %451 = vmatpush1.bf16.msra.mxu0 0
        %452 = vmatprep.subr.bf16.mxu0 0
        %453 = vmatpush1.bf16.msra.mxu0 0
        %454 = vmatprep.mubr.bf16.mxu0 0
        %455 = vmatmul.mubr.bf16.gmra.mrb[0].mxu0 %v375
        %v456 = vpop.f32.mrb[0].mxu0
        %v457 = vadd.f32 %v279, %v456
        %v458 = vpop.f32.mrb[0].mxu0
        %v459 = vpop.f32.mrb[0].mxu0
        %v460 = vadd.f32 %v279, %v459
        %v461 = vpop.f32.mrb[0].mxu0
        %462 = vmatprep.mubr.bf16.mxu0 0
        %463 = vmatmul.mubr.bf16.gmra.mrb[0].mxu0 %v378
        %v464 = vpop.f32.mrb[0].mxu0
        %v465 = vadd.f32 %v279, %v464
        %v466 = vpop.f32.mrb[0].mxu0
        %v467 = vpop.f32.mrb[0].mxu0
        %v468 = vadd.f32 %v279, %v467
        %v469 = vpop.f32.mrb[0].mxu0
        %470 = vmatprep.mubr.bf16.mxu0 0
        %471 = vmatmul.mubr.bf16.gmra.mrb[0].mxu0 %v381
        %v472 = vpop.f32.mrb[0].mxu0
        %v473 = vadd.f32 %v279, %v472
        %v474 = vpop.f32.mrb[0].mxu0
        %v475 = vpop.f32.mrb[0].mxu0
        %v476 = vadd.f32 %v279, %v475
        %v477 = vpop.f32.mrb[0].mxu0
        %478 = vmatprep.mubr.bf16.mxu0 0
        %479 = vmatmul.mubr.bf16.gmra.mrb[0].mxu0 %v384
        %v480 = vpop.f32.mrb[0].mxu0
        %v481 = vadd.f32 %v279, %v480
        %v482 = vpop.f32.mrb[0].mxu0
        %v483 = vpop.f32.mrb[0].mxu0
        %v484 = vadd.f32 %v279, %v483
        %v485 = vpop.f32.mrb[0].mxu0
        %486 = vmatprep.mubr.bf16.mxu0 0
        %487 = vmatmul.mubr.bf16.gmra.mrb[0].mxu0 %v387
        %v488 = vpop.f32.mrb[0].mxu0
        %v489 = vadd.f32 %v279, %v488
        %v490 = vpop.f32.mrb[0].mxu0
        %v491 = vpop.f32.mrb[0].mxu0
        %v492 = vadd.f32 %v279, %v491
        %v493 = vpop.f32.mrb[0].mxu0
        %494 = vmatprep.mubr.bf16.mxu0 0
        %495 = vmatmul.mubr.bf16.gmra.mrb[0].mxu0 %v390
        %v496 = vpop.f32.mrb[0].mxu0
        %v497 = vadd.f32 %v279, %v496
        %v498 = vpop.f32.mrb[0].mxu0
        %v499 = vpop.f32.mrb[0].mxu0
        %v500 = vadd.f32 %v279, %v499
        %v501 = vpop.f32.mrb[0].mxu0
        %502 = vmatprep.mubr.bf16.mxu0 0
        %503 = vmatmul.mubr.bf16.gmra.mrb[0].mxu0 %v393
        %v504 = vpop.f32.mrb[0].mxu0
        %v505 = vadd.f32 %v279, %v504
        %v506 = vpop.f32.mrb[0].mxu0
        %v507 = vpop.f32.mrb[0].mxu0
        %v508 = vadd.f32 %v279, %v507
        %v509 = vpop.f32.mrb[0].mxu0
        %510 = vmatprep.mubr.bf16.mxu0 0
        %511 = vmatmul.mubr.bf16.gmra.mrb[0].mxu0 %v396
        %v512 = vpop.f32.mrb[0].mxu0
        %v513 = vadd.f32 %v279, %v512
        %v514 = vpop.f32.mrb[0].mxu0
        %v515 = vpop.f32.mrb[0].mxu0
        %v516 = vadd.f32 %v279, %v515
        %v517 = vpop.f32.mrb[0].mxu0
        %518 = vmatprep.mubr.bf16.mxu0 0
        %519 = vmatmul.mubr.bf16.gmra.mrb[0].mxu0 %v399
        %v520 = vpop.f32.mrb[0].mxu0
        %v521 = vadd.f32 %v279, %v520
        %v522 = vpop.f32.mrb[0].mxu0
        %v523 = vpop.f32.mrb[0].mxu0
        %v524 = vadd.f32 %v279, %v523
        %v525 = vpop.f32.mrb[0].mxu0
        %526 = vmatprep.mubr.bf16.mxu0 0
        %527 = vmatmul.mubr.bf16.gmra.mrb[0].mxu0 %v402
        %v528 = vpop.f32.mrb[0].mxu0
        %v529 = vadd.f32 %v279, %v528
        %v530 = vpop.f32.mrb[0].mxu0
        %v531 = vpop.f32.mrb[0].mxu0
        %v532 = vadd.f32 %v279, %v531
        %v533 = vpop.f32.mrb[0].mxu0
        %534 = vmatprep.mubr.bf16.mxu0 0
        %535 = vmatmul.mubr.bf16.gmra.mrb[0].mxu0 %v405
        %v536 = vpop.f32.mrb[0].mxu0
        %v537 = vadd.f32 %v279, %v536
        %v538 = vpop.f32.mrb[0].mxu0
        %v539 = vpop.f32.mrb[0].mxu0
        %v540 = vadd.f32 %v279, %v539
        %v541 = vpop.f32.mrb[0].mxu0
        %542 = vmatprep.mubr.bf16.mxu0 0
        %543 = vmatmul.mubr.bf16.gmra.mrb[0].mxu0 %v408
        %v544 = vpop.f32.mrb[0].mxu0
        %v545 = vadd.f32 %v279, %v544
        %v546 = vpop.f32.mrb[0].mxu0
        %v547 = vpop.f32.mrb[0].mxu0
        %v548 = vadd.f32 %v279, %v547
        %v549 = vpop.f32.mrb[0].mxu0
        %550 = vmatprep.mubr.bf16.mxu0 0
        %551 = vmatmul.mubr.bf16.gmra.mrb[0].mxu0 %v411
        %v552 = vpop.f32.mrb[0].mxu0
        %v553 = vadd.f32 %v279, %v552
        %v554 = vpop.f32.mrb[0].mxu0
        %v555 = vpop.f32.mrb[0].mxu0
        %v556 = vadd.f32 %v279, %v555
        %v557 = vpop.f32.mrb[0].mxu0
        %558 = vmatprep.mubr.bf16.mxu0 0
        %559 = vmatmul.mubr.bf16.gmra.mrb[0].mxu0 %v414
        %v560 = vpop.f32.mrb[0].mxu0
        %v561 = vadd.f32 %v279, %v560
        %v562 = vpop.f32.mrb[0].mxu0
        %v563 = vpop.f32.mrb[0].mxu0
        %v564 = vadd.f32 %v279, %v563
        %v565 = vpop.f32.mrb[0].mxu0
        %566 = vmatprep.mubr.bf16.mxu0 0
        %567 = vmatmul.mubr.bf16.gmra.mrb[0].mxu0 %v417
        %v568 = vpop.f32.mrb[0].mxu0
        %v569 = vadd.f32 %v279, %v568
        %v570 = vpop.f32.mrb[0].mxu0
        %v571 = vpop.f32.mrb[0].mxu0
        %v572 = vadd.f32 %v279, %v571
        %v573 = vpop.f32.mrb[0].mxu0
        %574 = vmatprep.mubr.bf16.mxu0 0
        %575 = vmatmul.mubr.bf16.gmra.mrb[0].mxu0 %v420
        %v576 = vpop.f32.mrb[0].mxu0
        %v577 = vadd.f32 %v279, %v576
        %v578 = vpop.f32.mrb[0].mxu0
        %v579 = vpop.f32.mrb[0].mxu0
        %v580 = vadd.f32 %v279, %v579
        %v581 = vpop.f32.mrb[0].mxu0
        %582 = vdwg.mxu0
        %v583 = vpack.c.bf16 %v460, %v457
        %v584 = vpack.c.bf16 %v468, %v465
        %v585 = vpack.c.bf16 %v476, %v473
        %v586 = vpack.c.bf16 %v484, %v481
        %v587 = vpack.c.bf16 %v492, %v489
        %v588 = vpack.c.bf16 %v500, %v497
        %v589 = vpack.c.bf16 %v508, %v505
        %v590 = vpack.c.bf16 %v516, %v513
        %v591 = vpack.c.bf16 %v524, %v521
        %v592 = vpack.c.bf16 %v532, %v529
        %v593 = vpack.c.bf16 %v540, %v537
        %v594 = vpack.c.bf16 %v548, %v545
        %v595 = vpack.c.bf16 %v556, %v553
        %v596 = vpack.c.bf16 %v564, %v561
        %v597 = vpack.c.bf16 %v572, %v569
        %v598 = vpack.c.bf16 %v580, %v577
        %v615 = vunpack.c.l.b16 %v583
        %v616 = vunpack.c.h.b16 %v583
        %v617 = vunpack.c.l.b16 %v584
        %v618 = vunpack.c.h.b16 %v584
        %v619 = vunpack.c.l.b16 %v585
        %v620 = vunpack.c.h.b16 %v585
        %v621 = vunpack.c.l.b16 %v586
        %v622 = vunpack.c.h.b16 %v586
        %v623 = vunpack.c.l.b16 %v587
        %v624 = vunpack.c.h.b16 %v587
        %v625 = vunpack.c.l.b16 %v588
        %v626 = vunpack.c.h.b16 %v588
        %v627 = vunpack.c.l.b16 %v589
        %v628 = vunpack.c.h.b16 %v589
        %v629 = vunpack.c.l.b16 %v590
        %v630 = vunpack.c.h.b16 %v590
        %v631 = vunpack.c.l.b16 %v591
        %v632 = vunpack.c.h.b16 %v591
        %v633 = vunpack.c.l.b16 %v592
        %v634 = vunpack.c.h.b16 %v592
        %v635 = vunpack.c.l.b16 %v593
        %v636 = vunpack.c.h.b16 %v593
        %v637 = vunpack.c.l.b16 %v594
        %v638 = vunpack.c.h.b16 %v594
        %v639 = vunpack.c.l.b16 %v595
        %v640 = vunpack.c.h.b16 %v595
        %v641 = vunpack.c.l.b16 %v596
        %v642 = vunpack.c.h.b16 %v596
        %v643 = vunpack.c.l.b16 %v597
        %v644 = vunpack.c.h.b16 %v597
        %v645 = vunpack.c.l.b16 %v598
        %v646 = vunpack.c.h.b16 %v598
        %v647 = vpack.c.b16 %v615, %v615
        %v648 = vpack.c.b16 %v616, %v616
        %v649 = vpack.c.b16 %v617, %v617
        %v650 = vpack.c.b16 %v618, %v618
        %v651 = vpack.c.b16 %v619, %v619
        %v652 = vpack.c.b16 %v620, %v620
        %v653 = vpack.c.b16 %v621, %v621
        %v654 = vpack.c.b16 %v622, %v622
        %v655 = vpack.c.b16 %v623, %v623
        %v656 = vpack.c.b16 %v624, %v624
        %v657 = vpack.c.b16 %v625, %v625
        %v658 = vpack.c.b16 %v626, %v626
        %v659 = vpack.c.b16 %v627, %v627
        %v660 = vpack.c.b16 %v628, %v628
        %v661 = vpack.c.b16 %v629, %v629
        %v662 = vpack.c.b16 %v630, %v630
        %v663 = vpack.c.b16 %v631, %v631
        %v664 = vpack.c.b16 %v632, %v632
        %v665 = vpack.c.b16 %v633, %v633
        %v666 = vpack.c.b16 %v634, %v634
        %v667 = vpack.c.b16 %v635, %v635
        %v668 = vpack.c.b16 %v636, %v636
        %v669 = vpack.c.b16 %v637, %v637
        %v670 = vpack.c.b16 %v638, %v638
        %v671 = vpack.c.b16 %v639, %v639
        %v672 = vpack.c.b16 %v640, %v640
        %v673 = vpack.c.b16 %v641, %v641
        %v674 = vpack.c.b16 %v642, %v642
        %v675 = vpack.c.b16 %v643, %v643
        %v676 = vpack.c.b16 %v644, %v644
        %v677 = vpack.c.b16 %v645, %v645
        %v678 = vpack.c.b16 %v646, %v646
        %vm711 = vcmask 60416
        %712 = vst.msk [vmem:[%s210] sm:$0xf] %vm711, %v647
        %713 = vst.msk [vmem:[%s210 + $0x4] sm:$0xf] %vm711, %v648
        %714 = vst.msk [vmem:[%s210 + $0x8] sm:$0xf] %vm711, %v649
        %715 = vst.msk [vmem:[%s210 + $0xc] sm:$0xf] %vm711, %v650
        %716 = vst.msk [vmem:[%s210 + $0x10] sm:$0xf] %vm711, %v651
        %717 = vst.msk [vmem:[%s210 + $0x14] sm:$0xf] %vm711, %v652
        %718 = vst.msk [vmem:[%s210 + $0x18] sm:$0xf] %vm711, %v653
        %719 = vst.msk [vmem:[%s210 + $0x1c] sm:$0xf] %vm711, %v654
        %720 = vst.msk [vmem:[%s210 + $0x20] sm:$0xf] %vm711, %v655
        %721 = vst.msk [vmem:[%s210 + $0x24] sm:$0xf] %vm711, %v656
        %722 = vst.msk [vmem:[%s210 + $0x28] sm:$0xf] %vm711, %v657
        %723 = vst.msk [vmem:[%s210 + $0x2c] sm:$0xf] %vm711, %v658
        %724 = vst.msk [vmem:[%s210 + $0x30] sm:$0xf] %vm711, %v659
        %725 = vst.msk [vmem:[%s210 + $0x34] sm:$0xf] %vm711, %v660
        %726 = vst.msk [vmem:[%s210 + $0x38] sm:$0xf] %vm711, %v661
        %727 = vst.msk [vmem:[%s210 + $0x3c] sm:$0xf] %vm711, %v662
        %728 = vst.msk [vmem:[%s210 + $0x40] sm:$0xf] %vm711, %v663
        %729 = vst.msk [vmem:[%s210 + $0x44] sm:$0xf] %vm711, %v664
        %730 = vst.msk [vmem:[%s210 + $0x48] sm:$0xf] %vm711, %v665
        %731 = vst.msk [vmem:[%s210 + $0x4c] sm:$0xf] %vm711, %v666
        %732 = vst.msk [vmem:[%s210 + $0x50] sm:$0xf] %vm711, %v667
        %733 = vst.msk [vmem:[%s210 + $0x54] sm:$0xf] %vm711, %v668
        %734 = vst.msk [vmem:[%s210 + $0x58] sm:$0xf] %vm711, %v669
        %735 = vst.msk [vmem:[%s210 + $0x5c] sm:$0xf] %vm711, %v670
        %736 = vst.msk [vmem:[%s210 + $0x60] sm:$0xf] %vm711, %v671
        %737 = vst.msk [vmem:[%s210 + $0x64] sm:$0xf] %vm711, %v672
        %738 = vst.msk [vmem:[%s210 + $0x68] sm:$0xf] %vm711, %v673
        %739 = vst.msk [vmem:[%s210 + $0x6c] sm:$0xf] %vm711, %v674
        %740 = vst.msk [vmem:[%s210 + $0x70] sm:$0xf] %vm711, %v675
        %741 = vst.msk [vmem:[%s210 + $0x74] sm:$0xf] %vm711, %v676
        %742 = vst.msk [vmem:[%s210 + $0x78] sm:$0xf] %vm711, %v677
        %743 = vst.msk [vmem:[%s210 + $0x7c] sm:$0xf] %vm711, %v678
        %s744 = sand.u32 %s114, 1
        %s745 = sand.u32 %s114, 1
        %s746 = smul.addr %s745, 128
        %s747 = scalar_lea.vmem [#allocation2], %s746
        // Predicated region
        $region33: #{csa_sr_forward.8} parent=31 // pred_check
          %p748 = pneg %p124
        $region34: #{csa_sr_forward.8} parent=31 // pred_check_branch
          %750 = sbr.rel (%p748) target = $region36
        $region35: #{csa_sr_forward.8} parent=31 // pred_region
          %s751 = smul.u32 32, %s18
          %s752 = ssub.s32 112, %s751
          %p753 = scmp.lt.s32.totalorder %s752, 32
          %s754 = scalar_select %p753, %s752, 32
          %s755 = smul.u32 64, %s754
          %p756 = scmp.ne.s32.totalorder 0, %s755
          %s757 = sadd.s32 %s19, %s751
          %s758 = smul.addr %s757, 4
          %s759 = scalar_lea.vmem %s3, %s758
          // Predicated region
          $region37: #{csa_sr_forward.8} parent=35 // pred_check
            %p760 = pneg %p756
          $region38: #{csa_sr_forward.8} parent=35 // pred_check_branch
            %762 = sbr.rel (%p760) target = $region40
          $region39: #{csa_sr_forward.8} parent=35 // pred_region
            // Predicated region
            $region41: #{csa_sr_forward.8} parent=39 // pred_check
              _
            $region42: #{csa_sr_forward.8} parent=39 // pred_check_branch
              %764 = sbr.rel target = $region44
            $region43: #{csa_sr_forward.8} parent=39 // pred_region
              // Predicated region
              $region63: #{csa_sr_forward.8} parent=43 // pred_check
                _
              $region64: #{csa_sr_forward.8} parent=43 // pred_check_branch
                %875 = sbr.rel (0) target = $region66
              $region65: #{csa_sr_forward.8} parent=43 // pred_region
                %s877 = sshrl.u32 %s754, 5
                // While loop
                $region67: #{csa_sr_forward.8} parent=65 // loop_pre_header
                  _
                $region68: #{csa_sr_forward.8} parent=65 // loop_header
                  %s879 = sphi 0, %s881
                  %p880 = scmp.ge.s32.totalorder %s879, %s877
                  %s884 = sphi 0, %s953
                  %s885 = sphi %s747, %s956
                  %s886 = sphi %s759, %s957
                $region69: #{csa_sr_forward.8} parent=65 // loop_header_branch
                  %883 = sbr.rel (%p880) target = $region73
                $region70: #{csa_sr_forward.8} parent=65 // loop_body
                  %v887 = vld [vmem:[%s885] sm:$0xf]
                  %888 = vst [vmem:[%s886] sm:$0xf] %v887
                  %v889 = vld [vmem:[%s885 + $0x4] sm:$0xf]
                  %890 = vst [vmem:[%s886 + $0x4] sm:$0xf] %v889
                  %v891 = vld [vmem:[%s885 + $0x8] sm:$0xf]
                  %892 = vst [vmem:[%s886 + $0x8] sm:$0xf] %v891
                  %v893 = vld [vmem:[%s885 + $0xc] sm:$0xf]
                  %894 = vst [vmem:[%s886 + $0xc] sm:$0xf] %v893
                  %v895 = vld [vmem:[%s885 + $0x10] sm:$0xf]
                  %896 = vst [vmem:[%s886 + $0x10] sm:$0xf] %v895
                  %v897 = vld [vmem:[%s885 + $0x14] sm:$0xf]
                  %898 = vst [vmem:[%s886 + $0x14] sm:$0xf] %v897
                  %v899 = vld [vmem:[%s885 + $0x18] sm:$0xf]
                  %900 = vst [vmem:[%s886 + $0x18] sm:$0xf] %v899
                  %v901 = vld [vmem:[%s885 + $0x1c] sm:$0xf]
                  %902 = vst [vmem:[%s886 + $0x1c] sm:$0xf] %v901
                  %v903 = vld [vmem:[%s885 + $0x20] sm:$0xf]
                  %904 = vst [vmem:[%s886 + $0x20] sm:$0xf] %v903
                  %v905 = vld [vmem:[%s885 + $0x24] sm:$0xf]
                  %906 = vst [vmem:[%s886 + $0x24] sm:$0xf] %v905
                  %v907 = vld [vmem:[%s885 + $0x28] sm:$0xf]
                  %908 = vst [vmem:[%s886 + $0x28] sm:$0xf] %v907
                  %v909 = vld [vmem:[%s885 + $0x2c] sm:$0xf]
                  %910 = vst [vmem:[%s886 + $0x2c] sm:$0xf] %v909
                  %v911 = vld [vmem:[%s885 + $0x30] sm:$0xf]
                  %912 = vst [vmem:[%s886 + $0x30] sm:$0xf] %v911
                  %v913 = vld [vmem:[%s885 + $0x34] sm:$0xf]
                  %914 = vst [vmem:[%s886 + $0x34] sm:$0xf] %v913
                  %v915 = vld [vmem:[%s885 + $0x38] sm:$0xf]
                  %916 = vst [vmem:[%s886 + $0x38] sm:$0xf] %v915
                  %v917 = vld [vmem:[%s885 + $0x3c] sm:$0xf]
                  %918 = vst [vmem:[%s886 + $0x3c] sm:$0xf] %v917
                  %v919 = vld [vmem:[%s885 + $0x40] sm:$0xf]
                  %920 = vst [vmem:[%s886 + $0x40] sm:$0xf] %v919
                  %v921 = vld [vmem:[%s885 + $0x44] sm:$0xf]
                  %922 = vst [vmem:[%s886 + $0x44] sm:$0xf] %v921
                  %v923 = vld [vmem:[%s885 + $0x48] sm:$0xf]
                  %924 = vst [vmem:[%s886 + $0x48] sm:$0xf] %v923
                  %v925 = vld [vmem:[%s885 + $0x4c] sm:$0xf]
                  %926 = vst [vmem:[%s886 + $0x4c] sm:$0xf] %v925
                  %v927 = vld [vmem:[%s885 + $0x50] sm:$0xf]
                  %928 = vst [vmem:[%s886 + $0x50] sm:$0xf] %v927
                  %v929 = vld [vmem:[%s885 + $0x54] sm:$0xf]
                  %930 = vst [vmem:[%s886 + $0x54] sm:$0xf] %v929
                  %v931 = vld [vmem:[%s885 + $0x58] sm:$0xf]
                  %932 = vst [vmem:[%s886 + $0x58] sm:$0xf] %v931
                  %v933 = vld [vmem:[%s885 + $0x5c] sm:$0xf]
                  %934 = vst [vmem:[%s886 + $0x5c] sm:$0xf] %v933
                  %v935 = vld [vmem:[%s885 + $0x60] sm:$0xf]
                  %936 = vst [vmem:[%s886 + $0x60] sm:$0xf] %v935
                  %v937 = vld [vmem:[%s885 + $0x64] sm:$0xf]
                  %938 = vst [vmem:[%s886 + $0x64] sm:$0xf] %v937
                  %v939 = vld [vmem:[%s885 + $0x68] sm:$0xf]
                  %940 = vst [vmem:[%s886 + $0x68] sm:$0xf] %v939
                  %v941 = vld [vmem:[%s885 + $0x6c] sm:$0xf]
                  %942 = vst [vmem:[%s886 + $0x6c] sm:$0xf] %v941
                  %v943 = vld [vmem:[%s885 + $0x70] sm:$0xf]
                  %944 = vst [vmem:[%s886 + $0x70] sm:$0xf] %v943
                  %v945 = vld [vmem:[%s885 + $0x74] sm:$0xf]
                  %946 = vst [vmem:[%s886 + $0x74] sm:$0xf] %v945
                  %v947 = vld [vmem:[%s885 + $0x78] sm:$0xf]
                  %948 = vst [vmem:[%s886 + $0x78] sm:$0xf] %v947
                  %v949 = vld [vmem:[%s885 + $0x7c] sm:$0xf]
                  %950 = vst [vmem:[%s886 + $0x7c] sm:$0xf] %v949
                  %s951 = sadd.s32 1, %s884
                  %p952 = scmp.ge.s32.totalorder %s951, %s877
                  %s953 = scalar_select %p952, 0, %s951
                  %s954 = smul.u32 %s953, 128
                  %s955 = smul.u32 %s953, 128
                  %s956 = scalar_lea.vmem %s747, %s954 [#allocation2]
                  %s957 = scalar_lea.vmem %s759, %s955
                $region71: #{csa_sr_forward.8} parent=65 // loop_footer
                  %s881 = sadd.s32 %s879, 1
                $region72: #{csa_sr_forward.8} parent=65 // loop_footer_branch
                  %878 = sbr.rel target = $region68
                $region73: #{csa_sr_forward.8} parent=65 // loop_exit
                  _
                %s958 = sshrl.u32 %s754, 5
                %s959 = sand.u32 %s754, 31
                %s960 = smul.u32 %s958, 32
                %s961 = smul.u32 4, %s960
                %s962 = scalar_lea.vmem %s747, %s961 [#allocation2]
                %s963 = smul.u32 4, %s960
                %s964 = scalar_lea.vmem %s759, %s963
                // While loop
                $region74: #{csa_sr_forward.8} parent=65 // loop_pre_header
                  _
                $region75: #{csa_sr_forward.8} parent=65 // loop_header
                  %s966 = sphi 0, %s968
                  %p967 = scmp.ge.s32.totalorder %s966, %s959
                  %s971 = sphi 0, %s978
                  %s972 = sphi %s962, %s981
                  %s973 = sphi %s964, %s982
                $region76: #{csa_sr_forward.8} parent=65 // loop_header_branch
                  %970 = sbr.rel (%p967) target = $region80
                $region77: #{csa_sr_forward.8} parent=65 // loop_body
                  %v974 = vld [vmem:[%s972] sm:$0xf]
                  %975 = vst [vmem:[%s973] sm:$0xf] %v974
                  %s976 = sadd.s32 1, %s971
                  %p977 = scmp.ge.s32.totalorder %s976, %s959
                  %s978 = scalar_select %p977, 0, %s976
                  %s979 = smul.u32 %s978, 4
                  %s980 = smul.u32 %s978, 4
                  %s981 = scalar_lea.vmem %s962, %s979 [#allocation2]
                  %s982 = scalar_lea.vmem %s964, %s980
                $region78: #{csa_sr_forward.8} parent=65 // loop_footer
                  %s968 = sadd.s32 %s966, 1
                $region79: #{csa_sr_forward.8} parent=65 // loop_footer_branch
                  %965 = sbr.rel target = $region75
                $region80: #{csa_sr_forward.8} parent=65 // loop_exit
                  _
              $region66: #{csa_sr_forward.8} parent=43 // pred_fallthru
                _
            $region44: #{csa_sr_forward.8} parent=39 // pred_fallthru
              _
            // Predicated region
            $region45: #{csa_sr_forward.8} parent=39 // pred_check
              _
            $region46: #{csa_sr_forward.8} parent=39 // pred_check_branch
              %766 = sbr.rel (0) target = $region48
            $region47: #{csa_sr_forward.8} parent=39 // pred_region
              %s768 = sshrl.u32 %s754, 5
              // While loop
              $region49: #{csa_sr_forward.8} parent=47 // loop_pre_header
                _
              $region50: #{csa_sr_forward.8} parent=47 // loop_header
                %s770 = sphi 0, %s772
                %p771 = scmp.ge.s32.totalorder %s770, %s768
                %s775 = sphi 0, %s844
                %s776 = sphi %s747, %s847
                %s777 = sphi %s759, %s848
              $region51: #{csa_sr_forward.8} parent=47 // loop_header_branch
                %774 = sbr.rel (%p771) target = $region55
              $region52: #{csa_sr_forward.8} parent=47 // loop_body
                %v778 = vld [vmem:[%s776] sm:$0xf]
                %779 = vst [vmem:[%s777] sm:$0xf] %v778
                %v780 = vld [vmem:[%s776 + $0x4] sm:$0xf]
                %781 = vst [vmem:[%s777 + $0x4] sm:$0xf] %v780
                %v782 = vld [vmem:[%s776 + $0x8] sm:$0xf]
                %783 = vst [vmem:[%s777 + $0x8] sm:$0xf] %v782
                %v784 = vld [vmem:[%s776 + $0xc] sm:$0xf]
                %785 = vst [vmem:[%s777 + $0xc] sm:$0xf] %v784
                %v786 = vld [vmem:[%s776 + $0x10] sm:$0xf]
                %787 = vst [vmem:[%s777 + $0x10] sm:$0xf] %v786
                %v788 = vld [vmem:[%s776 + $0x14] sm:$0xf]
                %789 = vst [vmem:[%s777 + $0x14] sm:$0xf] %v788
                %v790 = vld [vmem:[%s776 + $0x18] sm:$0xf]
                %791 = vst [vmem:[%s777 + $0x18] sm:$0xf] %v790
                %v792 = vld [vmem:[%s776 + $0x1c] sm:$0xf]
                %793 = vst [vmem:[%s777 + $0x1c] sm:$0xf] %v792
                %v794 = vld [vmem:[%s776 + $0x20] sm:$0xf]
                %795 = vst [vmem:[%s777 + $0x20] sm:$0xf] %v794
                %v796 = vld [vmem:[%s776 + $0x24] sm:$0xf]
                %797 = vst [vmem:[%s777 + $0x24] sm:$0xf] %v796
                %v798 = vld [vmem:[%s776 + $0x28] sm:$0xf]
                %799 = vst [vmem:[%s777 + $0x28] sm:$0xf] %v798
                %v800 = vld [vmem:[%s776 + $0x2c] sm:$0xf]
                %801 = vst [vmem:[%s777 + $0x2c] sm:$0xf] %v800
                %v802 = vld [vmem:[%s776 + $0x30] sm:$0xf]
                %803 = vst [vmem:[%s777 + $0x30] sm:$0xf] %v802
                %v804 = vld [vmem:[%s776 + $0x34] sm:$0xf]
                %805 = vst [vmem:[%s777 + $0x34] sm:$0xf] %v804
                %v806 = vld [vmem:[%s776 + $0x38] sm:$0xf]
                %807 = vst [vmem:[%s777 + $0x38] sm:$0xf] %v806
                %v808 = vld [vmem:[%s776 + $0x3c] sm:$0xf]
                %809 = vst [vmem:[%s777 + $0x3c] sm:$0xf] %v808
                %v810 = vld [vmem:[%s776 + $0x40] sm:$0xf]
                %811 = vst [vmem:[%s777 + $0x40] sm:$0xf] %v810
                %v812 = vld [vmem:[%s776 + $0x44] sm:$0xf]
                %813 = vst [vmem:[%s777 + $0x44] sm:$0xf] %v812
                %v814 = vld [vmem:[%s776 + $0x48] sm:$0xf]
                %815 = vst [vmem:[%s777 + $0x48] sm:$0xf] %v814
                %v816 = vld [vmem:[%s776 + $0x4c] sm:$0xf]
                %817 = vst [vmem:[%s777 + $0x4c] sm:$0xf] %v816
                %v818 = vld [vmem:[%s776 + $0x50] sm:$0xf]
                %819 = vst [vmem:[%s777 + $0x50] sm:$0xf] %v818
                %v820 = vld [vmem:[%s776 + $0x54] sm:$0xf]
                %821 = vst [vmem:[%s777 + $0x54] sm:$0xf] %v820
                %v822 = vld [vmem:[%s776 + $0x58] sm:$0xf]
                %823 = vst [vmem:[%s777 + $0x58] sm:$0xf] %v822
                %v824 = vld [vmem:[%s776 + $0x5c] sm:$0xf]
                %825 = vst [vmem:[%s777 + $0x5c] sm:$0xf] %v824
                %v826 = vld [vmem:[%s776 + $0x60] sm:$0xf]
                %827 = vst [vmem:[%s777 + $0x60] sm:$0xf] %v826
                %v828 = vld [vmem:[%s776 + $0x64] sm:$0xf]
                %829 = vst [vmem:[%s777 + $0x64] sm:$0xf] %v828
                %v830 = vld [vmem:[%s776 + $0x68] sm:$0xf]
                %831 = vst [vmem:[%s777 + $0x68] sm:$0xf] %v830
                %v832 = vld [vmem:[%s776 + $0x6c] sm:$0xf]
                %833 = vst [vmem:[%s777 + $0x6c] sm:$0xf] %v832
                %v834 = vld [vmem:[%s776 + $0x70] sm:$0xf]
                %835 = vst [vmem:[%s777 + $0x70] sm:$0xf] %v834
                %v836 = vld [vmem:[%s776 + $0x74] sm:$0xf]
                %837 = vst [vmem:[%s777 + $0x74] sm:$0xf] %v836
                %v838 = vld [vmem:[%s776 + $0x78] sm:$0xf]
                %839 = vst [vmem:[%s777 + $0x78] sm:$0xf] %v838
                %v840 = vld [vmem:[%s776 + $0x7c] sm:$0xf]
                %841 = vst [vmem:[%s777 + $0x7c] sm:$0xf] %v840
                %s842 = sadd.s32 1, %s775
                %p843 = scmp.ge.s32.totalorder %s842, %s768
                %s844 = scalar_select %p843, 0, %s842
                %s845 = smul.u32 %s844, 128
                %s846 = smul.u32 %s844, 128
                %s847 = scalar_lea.vmem %s747, %s845 [#allocation2]
                %s848 = scalar_lea.vmem %s759, %s846
              $region53: #{csa_sr_forward.8} parent=47 // loop_footer
                %s772 = sadd.s32 %s770, 1
              $region54: #{csa_sr_forward.8} parent=47 // loop_footer_branch
                %769 = sbr.rel target = $region50
              $region55: #{csa_sr_forward.8} parent=47 // loop_exit
                _
              %s849 = sshrl.u32 %s754, 5
              %s850 = sand.u32 %s754, 31
              %s851 = smul.u32 %s849, 32
              %s852 = smul.u32 4, %s851
              %s853 = scalar_lea.vmem %s747, %s852 [#allocation2]
              %s854 = smul.u32 4, %s851
              %s855 = scalar_lea.vmem %s759, %s854
              // While loop
              $region56: #{csa_sr_forward.8} parent=47 // loop_pre_header
                _
              $region57: #{csa_sr_forward.8} parent=47 // loop_header
                %s857 = sphi 0, %s859
                %p858 = scmp.ge.s32.totalorder %s857, %s850
                %s862 = sphi 0, %s869
                %s863 = sphi %s853, %s872
                %s864 = sphi %s855, %s873
              $region58: #{csa_sr_forward.8} parent=47 // loop_header_branch
                %861 = sbr.rel (%p858) target = $region62
              $region59: #{csa_sr_forward.8} parent=47 // loop_body
                %v865 = vld [vmem:[%s863] sm:$0xf]
                %866 = vst [vmem:[%s864] sm:$0xf] %v865
                %s867 = sadd.s32 1, %s862
                %p868 = scmp.ge.s32.totalorder %s867, %s850
                %s869 = scalar_select %p868, 0, %s867
                %s870 = smul.u32 %s869, 4
                %s871 = smul.u32 %s869, 4
                %s872 = scalar_lea.vmem %s853, %s870 [#allocation2]
                %s873 = scalar_lea.vmem %s855, %s871
              $region60: #{csa_sr_forward.8} parent=47 // loop_footer
                %s859 = sadd.s32 %s857, 1
              $region61: #{csa_sr_forward.8} parent=47 // loop_footer_branch
                %856 = sbr.rel target = $region57
              $region62: #{csa_sr_forward.8} parent=47 // loop_exit
                _
            $region48: #{csa_sr_forward.8} parent=39 // pred_fallthru
              _
          $region40: #{csa_sr_forward.8} parent=35 // pred_fallthru
            _
          %983 = vnop
        $region36: #{csa_sr_forward.8} parent=31 // pred_fallthru
          _
      $region32: #{csa_sr_forward.8} parent=5 // pred_fallthru
        _
      %p984 = scmp.le.s32.totalorder 2, %s9
      // Predicated region
      $region81: #{csa_sr_forward.8} parent=5 // pred_check
        %p985 = pneg %p984
      $region82: #{csa_sr_forward.8} parent=5 // pred_check_branch
        %987 = sbr.rel (%p985) target = $region84
      $region83: #{csa_sr_forward.8} parent=5 // pred_region
        %s988 = ssub.s32 %s9, 2
        // Predicated region
        $region85: #{csa_sr_forward.8} parent=83 // pred_check
          %p989 = pneg %p130
        $region86: #{csa_sr_forward.8} parent=83 // pred_check_branch
          %991 = sbr.rel (%p989) target = $region88
        $region87: #{csa_sr_forward.8} parent=83 // pred_region
          %s992 = sand.u32 %s115, 1
          %s993 = sand.u32 %s115, 1
          %s994 = smul.addr %s993, 128
          %s995 = scalar_lea.vmem [#allocation2], %s994
        $region88: #{csa_sr_forward.8} parent=83 // pred_fallthru
          _
      $region84: #{csa_sr_forward.8} parent=5 // pred_fallthru
        _
    $region6: #{csa_sr_forward.8} parent=1 // loop_footer
      %s13 = sadd.s32 1, %s9
    $region7: #{csa_sr_forward.8} parent=1 // loop_footer_branch
      %8 = sbr.rel target = $region3
    $region8: #{csa_sr_forward.8} parent=1 // loop_exit
      _

// kernel: csa_sr_forward.7
$region0: #{csa_sr_forward.7}
  #allocation0 [shape = 'u32[]', space=smem, size = 0x4, offset = 0x4, fixed_abs, tag = 'smem constant byte address 0x4 - core index']
  #allocation1 [shape = 'u32[144,128]{1,0:T(1,128)}', space=vmem, size = 0x12000, scoped, tag = 'internal scratch']
  %s0 = inlined_call_operand.vmem [shape: bf16[896,48], index: 0, kind: input, shape index: {}]
  %s1 = inlined_call_operand.vmem [shape: bf16[48,32], index: 1, kind: input, shape index: {}]
  %s2 = inlined_call_operand.vmem [shape: f32[1,32], index: 2, kind: input, shape index: {}]
  %s3 = inlined_call_operand.vmem [shape: bf16[896,32], index: 3, kind: output, shape index: {}]
  %s4 = sld [smem:[#allocation0]]
  $region89: #{csa_sr_forward.7} parent=0
    _
  %s6 = ssub.s32 1, %s4
  %s7 = scalar_select 0, %s6, %s4
  $region1: #{csa_sr_forward.7} parent=0
    #allocation2 [shape = 'u8[131072]{0}', space=vmem, size = 0x20000, scoped, tag = 'output window, operand 0']
    loop: start=0, step=1, limit=6
    $region2: #{csa_sr_forward.7} parent=1 // loop_pre_header
      _
    $region3: #{csa_sr_forward.7} parent=1 // loop_header
      %s9 = sphi 0, %s13
      %p10 = scmp.ge.s32.totalorder %s9, 6
      %s16 = sphi 0, %s28
      %s17 = sphi 0, %s24
      %s18 = sphi 0, %s16
      %s19 = sphi 0, %s17
      %s20 = sphi 0, %s18
      %s21 = sphi 0, %s19
      %s31 = sphi 0, %s33
      %s34 = sphi 0, %s31
      %s35 = sphi 0, %s34
      %s51 = sphi 0, %s35
      %s57 = sphi 0, %s59
      %s60 = sphi 0, %s57
      %s61 = sphi 0, %s60
      %s77 = sphi 0, %s61
      %s83 = sphi 0, %s85
      %s86 = sphi 0, %s83
      %s87 = sphi 0, %s86
      %s103 = sphi 0, %s87
      %s111 = sphi 0, %s113
      %s114 = sphi 0, %s111
      %s115 = sphi 0, %s114
      %s131 = sphi 0, %s115
    $region4: #{csa_sr_forward.7} parent=1 // loop_header_branch
      %12 = sbr.rel (%p10) target = $region8
    $region5: #{csa_sr_forward.7} parent=1 // loop_body
      %s14 = ssub.s32 %s9, 1
      %s15 = ssub.s32 %s9, 2
      %s22 = sadd.s32 1, %s17
      %p23 = scmp.ge.s32.totalorder %s22, 1
      %s24 = scalar_select %p23, 0, %s22
      %s25 = sadd.s32 1, %s16
      %s26 = scalar_select %p23, %s25, %s16
      %p27 = scmp.ge.s32.totalorder %s26, 4
      %s28 = scalar_select %p27, 0, %s26
      %s29 = ssub.s32 %s16, %s28
      %p30 = scmp.eq.s32.totalorder %s29, 0
      %s32 = sadd.s32 %s31, 1
      %s33 = scalar_select %p30, %s31, %s32
      %p36 = pneg %p30
      %p37 = scmp.eq.s32.totalorder %s9, 3
      %p38 = por %p36, %p37
      %p39 = scmp.ne.s32.totalorder %s31, %s34
      %p40 = scmp.eq.s32.totalorder %s9, 0
      %p41 = por %p39, %p40
      %p42 = scmp.ne.s32.totalorder %s31, %s34
      %p43 = scmp.eq.s32.totalorder %s14, 3
      %p44 = por %p42, %p43
      %p45 = scmp.ne.s32.totalorder %s34, %s35
      %p46 = scmp.eq.s32.totalorder %s14, 0
      %p47 = por %p45, %p46
      %p48 = scmp.ne.s32.totalorder %s34, %s35
      %p49 = scmp.eq.s32.totalorder %s15, 3
      %p50 = por %p48, %p49
      %p52 = scmp.ne.s32.totalorder %s35, %s51
      %p53 = scmp.eq.s32.totalorder %s15, 0
      %p54 = por %p52, %p53
      %s55 = ssub.s32 %s17, %s24
      %p56 = scmp.eq.s32.totalorder %s55, 0
      %s58 = sadd.s32 %s57, 1
      %s59 = scalar_select %p56, %s57, %s58
      %p62 = pneg %p56
      %p63 = scmp.eq.s32.totalorder %s9, 3
      %p64 = por %p62, %p63
      %p65 = scmp.ne.s32.totalorder %s57, %s60
      %p66 = scmp.eq.s32.totalorder %s9, 0
      %p67 = por %p65, %p66
      %p68 = scmp.ne.s32.totalorder %s57, %s60
      %p69 = scmp.eq.s32.totalorder %s14, 3
      %p70 = por %p68, %p69
      %p71 = scmp.ne.s32.totalorder %s60, %s61
      %p72 = scmp.eq.s32.totalorder %s14, 0
      %p73 = por %p71, %p72
      %p74 = scmp.ne.s32.totalorder %s60, %s61
      %p75 = scmp.eq.s32.totalorder %s15, 3
      %p76 = por %p74, %p75
      %p78 = scmp.ne.s32.totalorder %s61, %s77
      %p79 = scmp.eq.s32.totalorder %s15, 0
      %p80 = por %p78, %p79
      %s81 = ssub.s32 %s17, %s24
      %p82 = scmp.eq.s32.totalorder %s81, 0
      %s84 = sadd.s32 %s83, 1
      %s85 = scalar_select %p82, %s83, %s84
      %p88 = pneg %p82
      %p89 = scmp.eq.s32.totalorder %s9, 3
      %p90 = por %p88, %p89
      %p91 = scmp.ne.s32.totalorder %s83, %s86
      %p92 = scmp.eq.s32.totalorder %s9, 0
      %p93 = por %p91, %p92
      %p94 = scmp.ne.s32.totalorder %s83, %s86
      %p95 = scmp.eq.s32.totalorder %s14, 3
      %p96 = por %p94, %p95
      %p97 = scmp.ne.s32.totalorder %s86, %s87
      %p98 = scmp.eq.s32.totalorder %s14, 0
      %p99 = por %p97, %p98
      %p100 = scmp.ne.s32.totalorder %s86, %s87
      %p101 = scmp.eq.s32.totalorder %s15, 3
      %p102 = por %p100, %p101
      %p104 = scmp.ne.s32.totalorder %s87, %s103
      %p105 = scmp.eq.s32.totalorder %s15, 0
      %p106 = por %p104, %p105
      %s107 = ssub.s32 %s16, %s28
      %s108 = ssub.s32 %s17, %s24
      %s109 = sor.u32 %s107, %s108
      %p110 = scmp.eq.s32.totalorder %s109, 0
      %s112 = sadd.s32 %s111, 1
      %s113 = scalar_select %p110, %s111, %s112
      %p116 = pneg %p110
      %p117 = scmp.eq.s32.totalorder %s9, 3
      %p118 = por %p116, %p117
      %p119 = scmp.ne.s32.totalorder %s111, %s114
      %p120 = scmp.eq.s32.totalorder %s9, 0
      %p121 = por %p119, %p120
      %p122 = scmp.ne.s32.totalorder %s111, %s114
      %p123 = scmp.eq.s32.totalorder %s14, 3
      %p124 = por %p122, %p123
      %p125 = scmp.ne.s32.totalorder %s114, %s115
      %p126 = scmp.eq.s32.totalorder %s14, 0
      %p127 = por %p125, %p126
      %p128 = scmp.ne.s32.totalorder %s114, %s115
      %p129 = scmp.eq.s32.totalorder %s15, 3
      %p130 = por %p128, %p129
      %p132 = scmp.ne.s32.totalorder %s115, %s131
      %p133 = scmp.eq.s32.totalorder %s15, 0
      %p134 = por %p132, %p133
      %p135 = scmp.le.s32.totalorder 1, %s9
      %p136 = scmp.lt.s32.totalorder %s9, 5
      %p137 = pnand %p135, %p136
      %p138 = pneg %p137
      // Predicated region
      $region9: #{csa_sr_forward.7} parent=5 // pred_check
        _
      $region10: #{csa_sr_forward.7} parent=5 // pred_check_branch
        %140 = sbr.rel (%p137) target = $region12
      $region11: #{csa_sr_forward.7} parent=5 // pred_region
        %s141 = ssub.s32 %s9, 1
        // Predicated region
        $region13: #{csa_sr_forward.7} parent=11 // pred_check
          %p142 = pneg %p73
        $region14: #{csa_sr_forward.7} parent=11 // pred_check_branch
          %144 = sbr.rel (%p142) target = $region16
        $region15: #{csa_sr_forward.7} parent=11 // pred_region
          %p145 = scmp.lt.s32.totalorder %s19, 0
          %s146 = scalar_select %p145, %s19, 0
          %s147 = smul.addr %s146, 4
          %s148 = scalar_lea.vmem %s1, %s147
        $region16: #{csa_sr_forward.7} parent=11 // pred_fallthru
          _
        // Predicated region
        $region17: #{csa_sr_forward.7} parent=11 // pred_check
          %p149 = pneg %p99
        $region18: #{csa_sr_forward.7} parent=11 // pred_check_branch
          %151 = sbr.rel (%p149) target = $region20
        $region19: #{csa_sr_forward.7} parent=11 // pred_region
          %p152 = scmp.lt.s32.totalorder %s19, 0
          %s153 = scalar_select %p152, %s19, 0
          %s154 = scalar_lea.vmem %s2, %s153
        $region20: #{csa_sr_forward.7} parent=11 // pred_fallthru
          _
      $region12: #{csa_sr_forward.7} parent=5 // pred_fallthru
        _
      %p155 = scmp.lt.s32.totalorder %s9, 4
      // Predicated region
      $region21: #{csa_sr_forward.7} parent=5 // pred_check
        %p156 = pneg %p155
      $region22: #{csa_sr_forward.7} parent=5 // pred_check_branch
        %158 = sbr.rel (%p156) target = $region24
      $region23: #{csa_sr_forward.7} parent=5 // pred_region
        // Predicated region
        $region25: #{csa_sr_forward.7} parent=23 // pred_check
          %p159 = pneg %p41
        $region26: #{csa_sr_forward.7} parent=23 // pred_check_branch
          %161 = sbr.rel (%p159) target = $region28
        $region27: #{csa_sr_forward.7} parent=23 // pred_region
          %s162 = smul.u32 32, %s16
          %s163 = ssub.s32 112, %s162
          %p164 = scmp.lt.s32.totalorder %s163, 32
          %s165 = scalar_select %p164, %s163, 32
          %s166 = smul.u32 64, %s165
          %p167 = scmp.lt.s32.totalorder %s162, 111
          %s168 = scalar_select %p167, %s162, 111
          %s169 = smul.addr %s168, 4
          %s170 = scalar_lea.vmem %s0, %s169
          %s171 = smul.u32 32, %s16
          %s172 = ssub.s32 112, %s171
          %p173 = scmp.lt.s32.totalorder %s172, 32
          %s174 = scalar_select %p173, %s172, 32
          %s175 = smul.u32 64, %s174
        $region28: #{csa_sr_forward.7} parent=23 // pred_fallthru
          _
      $region24: #{csa_sr_forward.7} parent=5 // pred_fallthru
        _
      %p176 = scmp.le.s32.totalorder 1, %s9
      %p177 = scmp.lt.s32.totalorder %s9, 5
      %p178 = pnand %p176, %p177
      %p179 = pneg %p178
      // Predicated region
      $region29: #{csa_sr_forward.7} parent=5 // pred_check
        _
      $region30: #{csa_sr_forward.7} parent=5 // pred_check_branch
        %181 = sbr.rel (%p178) target = $region32
      $region31: #{csa_sr_forward.7} parent=5 // pred_region
        %s182 = ssub.s32 %s9, 1
        %s183 = smul.u32 32, %s18
        %s184 = ssub.s32 112, %s183
        %p185 = scmp.lt.s32.totalorder %s184, 32
        %s186 = scalar_select %p185, %s184, 32
        %s187 = smul.u32 64, %s186
        %p188 = scmp.lt.s32.totalorder %s183, 111
        %s189 = scalar_select %p188, %s183, 111
        %s190 = smul.addr %s189, 4
        %s191 = scalar_lea.vmem %s0, %s190
        %p192 = pneg %p47
        %p193 = pneg %p44
        %p194 = scmp.lt.s32.totalorder %s19, 0
        %s195 = scalar_select %p194, %s19, 0
        %s196 = smul.addr %s195, 4
        %s197 = scalar_lea.vmem %s1, %s196
        %p198 = pneg %p73
        %p199 = pneg %p70
        %p200 = scmp.lt.s32.totalorder %s19, 0
        %s201 = scalar_select %p200, %s19, 0
        %s202 = scalar_lea.vmem %s2, %s201
        %p203 = pneg %p99
        %p204 = pneg %p96
        %p205 = pneg %p127
        %p206 = pneg %p124
        %s207 = sand.u32 %s114, 1
        %s208 = sand.u32 %s114, 1
        %s209 = smul.addr %s208, 128
        %s210 = scalar_lea.vmem [#allocation2], %s209
        %s211 = smul.u32 32, %s18
        %s212 = ssub.s32 112, %s211
        %p213 = scmp.lt.s32.totalorder %s212, 32
        %s214 = scalar_select %p213, %s212, 32
        %s215 = smul.u32 64, %s214
        %p216 = scmp.lt.s32.totalorder %s211, 111
        %s217 = scalar_select %p216, %s211, 111
        %s218 = smul.addr %s217, 4
        %s219 = scalar_lea.vmem %s0, %s218
        %s220 = smul.u32 32, %s18
        %s221 = ssub.s32 112, %s220
        %p222 = scmp.lt.s32.totalorder %s221, 32
        %s223 = scalar_select %p222, %s221, 32
        %s224 = smul.u32 64, %s223
        %p225 = scmp.lt.s32.totalorder %s19, 0
        %s226 = scalar_select %p225, %s19, 0
        %s227 = smul.addr %s226, 4
        %s228 = scalar_lea.vmem %s1, %s227
        %p229 = scmp.lt.s32.totalorder %s19, 0
        %s230 = scalar_select %p229, %s19, 0
        %s231 = scalar_lea.vmem %s2, %s230
        %s232 = smul.u32 32, %s18
        %s233 = ssub.s32 112, %s232
        %p234 = scmp.lt.s32.totalorder %s233, 32
        %s235 = scalar_select %p234, %s233, 32
        %s236 = smul.u32 64, %s235
        %v238 = vld [vmem:[%s219] sm:$0xf]
        %v239 = vld [vmem:[%s219 + $0x4] sm:$0xf]
        %v240 = vld [vmem:[%s219 + $0x8] sm:$0xf]
        %v241 = vld [vmem:[%s219 + $0xc] sm:$0xf]
        %v242 = vld [vmem:[%s219 + $0x10] sm:$0xf]
        %v243 = vld [vmem:[%s219 + $0x14] sm:$0xf]
        %v244 = vld [vmem:[%s219 + $0x18] sm:$0xf]
        %v245 = vld [vmem:[%s219 + $0x1c] sm:$0xf]
        %v246 = vld [vmem:[%s219 + $0x20] sm:$0xf]
        %v247 = vld [vmem:[%s219 + $0x24] sm:$0xf]
        %v248 = vld [vmem:[%s219 + $0x28] sm:$0xf]
        %v249 = vld [vmem:[%s219 + $0x2c] sm:$0xf]
        %v250 = vld [vmem:[%s219 + $0x30] sm:$0xf]
        %v251 = vld [vmem:[%s219 + $0x34] sm:$0xf]
        %v252 = vld [vmem:[%s219 + $0x38] sm:$0xf]
        %v253 = vld [vmem:[%s219 + $0x3c] sm:$0xf]
        %v254 = vld [vmem:[%s219 + $0x40] sm:$0xf]
        %v255 = vld [vmem:[%s219 + $0x44] sm:$0xf]
        %v256 = vld [vmem:[%s219 + $0x48] sm:$0xf]
        %v257 = vld [vmem:[%s219 + $0x4c] sm:$0xf]
        %v258 = vld [vmem:[%s219 + $0x50] sm:$0xf]
        %v259 = vld [vmem:[%s219 + $0x54] sm:$0xf]
        %v260 = vld [vmem:[%s219 + $0x58] sm:$0xf]
        %v261 = vld [vmem:[%s219 + $0x5c] sm:$0xf]
        %v262 = vld [vmem:[%s219 + $0x60] sm:$0xf]
        %v263 = vld [vmem:[%s219 + $0x64] sm:$0xf]
        %v264 = vld [vmem:[%s219 + $0x68] sm:$0xf]
        %v265 = vld [vmem:[%s219 + $0x6c] sm:$0xf]
        %v266 = vld [vmem:[%s219 + $0x70] sm:$0xf]
        %v267 = vld [vmem:[%s219 + $0x74] sm:$0xf]
        %v268 = vld [vmem:[%s219 + $0x78] sm:$0xf]
        %v269 = vld [vmem:[%s219 + $0x7c] sm:$0xf]
        %v270 = vld [vmem:[%s228] sm:$0xf]
        %v271 = vld [vmem:[%s228 + $0x4] sm:$0xf]
        %v272 = vld [vmem:[%s228 + $0x8] sm:$0xf]
        %v273 = vld [vmem:[%s228 + $0xc] sm:$0xf]
        %v274 = vld [vmem:[%s228 + $0x10] sm:$0xf]
        %v275 = vld [vmem:[%s228 + $0x14] sm:$0xf]
        %v276 = vld [vmem:[%s231] sm:$0x1]
        %v278 = vlaneseq
        %v279 = vshrl.u32 %v278, 7
        %v280 = vsub.s32 0, %v279
        %v281 = vrot.slane %v276, %v280
        %v315 = vunpack.c.l.b16 %v238
        %v316 = vunpack.c.l.b16 %v239
        %v317 = vunpack.c.l.b16 %v240
        %v318 = vunpack.c.l.b16 %v241
        %v319 = vunpack.c.l.b16 %v242
        %v320 = vunpack.c.l.b16 %v243
        %v321 = vunpack.c.l.b16 %v244
        %v322 = vunpack.c.l.b16 %v245
        %v323 = vunpack.c.l.b16 %v246
        %v324 = vunpack.c.l.b16 %v247
        %v325 = vunpack.c.l.b16 %v248
        %v326 = vunpack.c.l.b16 %v249
        %v327 = vunpack.c.l.b16 %v250
        %v328 = vunpack.c.l.b16 %v251
        %v329 = vunpack.c.l.b16 %v252
        %v330 = vunpack.c.l.b16 %v253
        %v331 = vunpack.c.l.b16 %v254
        %v332 = vunpack.c.l.b16 %v255
        %v333 = vunpack.c.l.b16 %v256
        %v334 = vunpack.c.l.b16 %v257
        %v335 = vunpack.c.l.b16 %v258
        %v336 = vunpack.c.l.b16 %v259
        %v337 = vunpack.c.l.b16 %v260
        %v338 = vunpack.c.l.b16 %v261
        %v339 = vunpack.c.l.b16 %v262
        %v340 = vunpack.c.l.b16 %v263
        %v341 = vunpack.c.l.b16 %v264
        %v342 = vunpack.c.l.b16 %v265
        %v343 = vunpack.c.l.b16 %v266
        %v344 = vunpack.c.l.b16 %v267
        %v345 = vunpack.c.l.b16 %v268
        %v346 = vunpack.c.l.b16 %v269
        %v347 = vpack.c.b16 %v316, %v315
        %v348 = vpack.c.b16 %v318, %v317
        %v349 = vpack.c.b16 %v320, %v319
        %v350 = vpack.c.b16 %v322, %v321
        %v351 = vpack.c.b16 %v324, %v323
        %v352 = vpack.c.b16 %v326, %v325
        %v353 = vpack.c.b16 %v328, %v327
        %v354 = vpack.c.b16 %v330, %v329
        %v355 = vpack.c.b16 %v332, %v331
        %v356 = vpack.c.b16 %v334, %v333
        %v357 = vpack.c.b16 %v336, %v335
        %v358 = vpack.c.b16 %v338, %v337
        %v359 = vpack.c.b16 %v340, %v339
        %v360 = vpack.c.b16 %v342, %v341
        %v361 = vpack.c.b16 %v344, %v343
        %v362 = vpack.c.b16 %v346, %v345
        %v369 = vunpack.c.l.b16 %v270
        %v370 = vunpack.c.l.b16 %v271
        %v371 = vunpack.c.l.b16 %v272
        %v372 = vunpack.c.l.b16 %v273
        %v373 = vunpack.c.l.b16 %v274
        %v374 = vunpack.c.l.b16 %v275
        %v375 = vpack.c.b16 %v370, %v369
        %v376 = vpack.c.b16 %v372, %v371
        %v377 = vpack.c.b16 %v374, %v373
        %vm381 = vcmask 392192
        %v383 = vsel %vm381, %v347, 0
        %v386 = vsel %vm381, %v348, 0
        %v389 = vsel %vm381, %v349, 0
        %v392 = vsel %vm381, %v350, 0
        %v395 = vsel %vm381, %v351, 0
        %v398 = vsel %vm381, %v352, 0
        %v401 = vsel %vm381, %v353, 0
        %v404 = vsel %vm381, %v354, 0
        %v407 = vsel %vm381, %v355, 0
        %v410 = vsel %vm381, %v356, 0
        %v413 = vsel %vm381, %v357, 0
        %v416 = vsel %vm381, %v358, 0
        %v419 = vsel %vm381, %v359, 0
        %v422 = vsel %vm381, %v360, 0
        %v425 = vsel %vm381, %v361, 0
        %v428 = vsel %vm381, %v362, 0
        %430 = vmatprep.subr.bf16.mxu0 0
        %431 = vmatpush1.bf16.msra.mxu0 %v375
        %432 = vmatprep.subr.bf16.mxu0 0
        %433 = vmatpush1.bf16.msra.mxu0 %v376
        %434 = vmatprep.subr.bf16.mxu0 0
        %435 = vmatpush1.bf16.msra.mxu0 %v377
        %436 = vmatprep.subr.bf16.mxu0 0
        %437 = vmatpush1.bf16.msra.mxu0 0
        %438 = vmatprep.subr.bf16.mxu0 0
        %439 = vmatpush1.bf16.msra.mxu0 0
        %440 = vmatprep.subr.bf16.mxu0 0
        %441 = vmatpush1.bf16.msra.mxu0 0
        %442 = vmatprep.subr.bf16.mxu0 0
        %443 = vmatpush1.bf16.msra.mxu0 0
        %444 = vmatprep.subr.bf16.mxu0 0
        %445 = vmatpush1.bf16.msra.mxu0 0
        %446 = vmatprep.subr.bf16.mxu0 0
        %447 = vmatpush1.bf16.msra.mxu0 0
        %448 = vmatprep.subr.bf16.mxu0 0
        %449 = vmatpush1.bf16.msra.mxu0 0
        %450 = vmatprep.subr.bf16.mxu0 0
        %451 = vmatpush1.bf16.msra.mxu0 0
        %452 = vmatprep.subr.bf16.mxu0 0
        %453 = vmatpush1.bf16.msra.mxu0 0
        %454 = vmatprep.subr.bf16.mxu0 0
        %455 = vmatpush1.bf16.msra.mxu0 0
        %456 = vmatprep.subr.bf16.mxu0 0
        %457 = vmatpush1.bf16.msra.mxu0 0
        %458 = vmatprep.subr.bf16.mxu0 0
        %459 = vmatpush1.bf16.msra.mxu0 0
        %460 = vmatprep.subr.bf16.mxu0 0
        %461 = vmatpush1.bf16.msra.mxu0 0
        %462 = vmatprep.mubr.bf16.mxu0 0
        %463 = vmatmul.mubr.bf16.gmra.mrb[0].mxu0 %v383
        %v464 = vpop.f32.mrb[0].mxu0
        %v465 = vadd.f32 %v281, %v464
        %v466 = vpop.f32.mrb[0].mxu0
        %v467 = vpop.f32.mrb[0].mxu0
        %v468 = vadd.f32 %v281, %v467
        %v469 = vpop.f32.mrb[0].mxu0
        %470 = vmatprep.mubr.bf16.mxu0 0
        %471 = vmatmul.mubr.bf16.gmra.mrb[0].mxu0 %v386
        %v472 = vpop.f32.mrb[0].mxu0
        %v473 = vadd.f32 %v281, %v472
        %v474 = vpop.f32.mrb[0].mxu0
        %v475 = vpop.f32.mrb[0].mxu0
        %v476 = vadd.f32 %v281, %v475
        %v477 = vpop.f32.mrb[0].mxu0
        %478 = vmatprep.mubr.bf16.mxu0 0
        %479 = vmatmul.mubr.bf16.gmra.mrb[0].mxu0 %v389
        %v480 = vpop.f32.mrb[0].mxu0
        %v481 = vadd.f32 %v281, %v480
        %v482 = vpop.f32.mrb[0].mxu0
        %v483 = vpop.f32.mrb[0].mxu0
        %v484 = vadd.f32 %v281, %v483
        %v485 = vpop.f32.mrb[0].mxu0
        %486 = vmatprep.mubr.bf16.mxu0 0
        %487 = vmatmul.mubr.bf16.gmra.mrb[0].mxu0 %v392
        %v488 = vpop.f32.mrb[0].mxu0
        %v489 = vadd.f32 %v281, %v488
        %v490 = vpop.f32.mrb[0].mxu0
        %v491 = vpop.f32.mrb[0].mxu0
        %v492 = vadd.f32 %v281, %v491
        %v493 = vpop.f32.mrb[0].mxu0
        %494 = vmatprep.mubr.bf16.mxu0 0
        %495 = vmatmul.mubr.bf16.gmra.mrb[0].mxu0 %v395
        %v496 = vpop.f32.mrb[0].mxu0
        %v497 = vadd.f32 %v281, %v496
        %v498 = vpop.f32.mrb[0].mxu0
        %v499 = vpop.f32.mrb[0].mxu0
        %v500 = vadd.f32 %v281, %v499
        %v501 = vpop.f32.mrb[0].mxu0
        %502 = vmatprep.mubr.bf16.mxu0 0
        %503 = vmatmul.mubr.bf16.gmra.mrb[0].mxu0 %v398
        %v504 = vpop.f32.mrb[0].mxu0
        %v505 = vadd.f32 %v281, %v504
        %v506 = vpop.f32.mrb[0].mxu0
        %v507 = vpop.f32.mrb[0].mxu0
        %v508 = vadd.f32 %v281, %v507
        %v509 = vpop.f32.mrb[0].mxu0
        %510 = vmatprep.mubr.bf16.mxu0 0
        %511 = vmatmul.mubr.bf16.gmra.mrb[0].mxu0 %v401
        %v512 = vpop.f32.mrb[0].mxu0
        %v513 = vadd.f32 %v281, %v512
        %v514 = vpop.f32.mrb[0].mxu0
        %v515 = vpop.f32.mrb[0].mxu0
        %v516 = vadd.f32 %v281, %v515
        %v517 = vpop.f32.mrb[0].mxu0
        %518 = vmatprep.mubr.bf16.mxu0 0
        %519 = vmatmul.mubr.bf16.gmra.mrb[0].mxu0 %v404
        %v520 = vpop.f32.mrb[0].mxu0
        %v521 = vadd.f32 %v281, %v520
        %v522 = vpop.f32.mrb[0].mxu0
        %v523 = vpop.f32.mrb[0].mxu0
        %v524 = vadd.f32 %v281, %v523
        %v525 = vpop.f32.mrb[0].mxu0
        %526 = vmatprep.mubr.bf16.mxu0 0
        %527 = vmatmul.mubr.bf16.gmra.mrb[0].mxu0 %v407
        %v528 = vpop.f32.mrb[0].mxu0
        %v529 = vadd.f32 %v281, %v528
        %v530 = vpop.f32.mrb[0].mxu0
        %v531 = vpop.f32.mrb[0].mxu0
        %v532 = vadd.f32 %v281, %v531
        %v533 = vpop.f32.mrb[0].mxu0
        %534 = vmatprep.mubr.bf16.mxu0 0
        %535 = vmatmul.mubr.bf16.gmra.mrb[0].mxu0 %v410
        %v536 = vpop.f32.mrb[0].mxu0
        %v537 = vadd.f32 %v281, %v536
        %v538 = vpop.f32.mrb[0].mxu0
        %v539 = vpop.f32.mrb[0].mxu0
        %v540 = vadd.f32 %v281, %v539
        %v541 = vpop.f32.mrb[0].mxu0
        %542 = vmatprep.mubr.bf16.mxu0 0
        %543 = vmatmul.mubr.bf16.gmra.mrb[0].mxu0 %v413
        %v544 = vpop.f32.mrb[0].mxu0
        %v545 = vadd.f32 %v281, %v544
        %v546 = vpop.f32.mrb[0].mxu0
        %v547 = vpop.f32.mrb[0].mxu0
        %v548 = vadd.f32 %v281, %v547
        %v549 = vpop.f32.mrb[0].mxu0
        %550 = vmatprep.mubr.bf16.mxu0 0
        %551 = vmatmul.mubr.bf16.gmra.mrb[0].mxu0 %v416
        %v552 = vpop.f32.mrb[0].mxu0
        %v553 = vadd.f32 %v281, %v552
        %v554 = vpop.f32.mrb[0].mxu0
        %v555 = vpop.f32.mrb[0].mxu0
        %v556 = vadd.f32 %v281, %v555
        %v557 = vpop.f32.mrb[0].mxu0
        %558 = vmatprep.mubr.bf16.mxu0 0
        %559 = vmatmul.mubr.bf16.gmra.mrb[0].mxu0 %v419
        %v560 = vpop.f32.mrb[0].mxu0
        %v561 = vadd.f32 %v281, %v560
        %v562 = vpop.f32.mrb[0].mxu0
        %v563 = vpop.f32.mrb[0].mxu0
        %v564 = vadd.f32 %v281, %v563
        %v565 = vpop.f32.mrb[0].mxu0
        %566 = vmatprep.mubr.bf16.mxu0 0
        %567 = vmatmul.mubr.bf16.gmra.mrb[0].mxu0 %v422
        %v568 = vpop.f32.mrb[0].mxu0
        %v569 = vadd.f32 %v281, %v568
        %v570 = vpop.f32.mrb[0].mxu0
        %v571 = vpop.f32.mrb[0].mxu0
        %v572 = vadd.f32 %v281, %v571
        %v573 = vpop.f32.mrb[0].mxu0
        %574 = vmatprep.mubr.bf16.mxu0 0
        %575 = vmatmul.mubr.bf16.gmra.mrb[0].mxu0 %v425
        %v576 = vpop.f32.mrb[0].mxu0
        %v577 = vadd.f32 %v281, %v576
        %v578 = vpop.f32.mrb[0].mxu0
        %v579 = vpop.f32.mrb[0].mxu0
        %v580 = vadd.f32 %v281, %v579
        %v581 = vpop.f32.mrb[0].mxu0
        %582 = vmatprep.mubr.bf16.mxu0 0
        %583 = vmatmul.mubr.bf16.gmra.mrb[0].mxu0 %v428
        %v584 = vpop.f32.mrb[0].mxu0
        %v585 = vadd.f32 %v281, %v584
        %v586 = vpop.f32.mrb[0].mxu0
        %v587 = vpop.f32.mrb[0].mxu0
        %v588 = vadd.f32 %v281, %v587
        %v589 = vpop.f32.mrb[0].mxu0
        %590 = vdwg.mxu0
        %v591 = vpack.c.bf16 %v468, %v465
        %v592 = vpack.c.bf16 %v476, %v473
        %v593 = vpack.c.bf16 %v484, %v481
        %v594 = vpack.c.bf16 %v492, %v489
        %v595 = vpack.c.bf16 %v500, %v497
        %v596 = vpack.c.bf16 %v508, %v505
        %v597 = vpack.c.bf16 %v516, %v513
        %v598 = vpack.c.bf16 %v524, %v521
        %v599 = vpack.c.bf16 %v532, %v529
        %v600 = vpack.c.bf16 %v540, %v537
        %v601 = vpack.c.bf16 %v548, %v545
        %v602 = vpack.c.bf16 %v556, %v553
        %v603 = vpack.c.bf16 %v564, %v561
        %v604 = vpack.c.bf16 %v572, %v569
        %v605 = vpack.c.bf16 %v580, %v577
        %v606 = vpack.c.bf16 %v588, %v585
        %v623 = vunpack.c.l.b16 %v591
        %v624 = vunpack.c.h.b16 %v591
        %v625 = vunpack.c.l.b16 %v592
        %v626 = vunpack.c.h.b16 %v592
        %v627 = vunpack.c.l.b16 %v593
        %v628 = vunpack.c.h.b16 %v593
        %v629 = vunpack.c.l.b16 %v594
        %v630 = vunpack.c.h.b16 %v594
        %v631 = vunpack.c.l.b16 %v595
        %v632 = vunpack.c.h.b16 %v595
        %v633 = vunpack.c.l.b16 %v596
        %v634 = vunpack.c.h.b16 %v596
        %v635 = vunpack.c.l.b16 %v597
        %v636 = vunpack.c.h.b16 %v597
        %v637 = vunpack.c.l.b16 %v598
        %v638 = vunpack.c.h.b16 %v598
        %v639 = vunpack.c.l.b16 %v599
        %v640 = vunpack.c.h.b16 %v599
        %v641 = vunpack.c.l.b16 %v600
        %v642 = vunpack.c.h.b16 %v600
        %v643 = vunpack.c.l.b16 %v601
        %v644 = vunpack.c.h.b16 %v601
        %v645 = vunpack.c.l.b16 %v602
        %v646 = vunpack.c.h.b16 %v602
        %v647 = vunpack.c.l.b16 %v603
        %v648 = vunpack.c.h.b16 %v603
        %v649 = vunpack.c.l.b16 %v604
        %v650 = vunpack.c.h.b16 %v604
        %v651 = vunpack.c.l.b16 %v605
        %v652 = vunpack.c.h.b16 %v605
        %v653 = vunpack.c.l.b16 %v606
        %v654 = vunpack.c.h.b16 %v606
        %v655 = vpack.c.b16 %v623, %v623
        %v656 = vpack.c.b16 %v624, %v624
        %v657 = vpack.c.b16 %v625, %v625
        %v658 = vpack.c.b16 %v626, %v626
        %v659 = vpack.c.b16 %v627, %v627
        %v660 = vpack.c.b16 %v628, %v628
        %v661 = vpack.c.b16 %v629, %v629
        %v662 = vpack.c.b16 %v630, %v630
        %v663 = vpack.c.b16 %v631, %v631
        %v664 = vpack.c.b16 %v632, %v632
        %v665 = vpack.c.b16 %v633, %v633
        %v666 = vpack.c.b16 %v634, %v634
        %v667 = vpack.c.b16 %v635, %v635
        %v668 = vpack.c.b16 %v636, %v636
        %v669 = vpack.c.b16 %v637, %v637
        %v670 = vpack.c.b16 %v638, %v638
        %v671 = vpack.c.b16 %v639, %v639
        %v672 = vpack.c.b16 %v640, %v640
        %v673 = vpack.c.b16 %v641, %v641
        %v674 = vpack.c.b16 %v642, %v642
        %v675 = vpack.c.b16 %v643, %v643
        %v676 = vpack.c.b16 %v644, %v644
        %v677 = vpack.c.b16 %v645, %v645
        %v678 = vpack.c.b16 %v646, %v646
        %v679 = vpack.c.b16 %v647, %v647
        %v680 = vpack.c.b16 %v648, %v648
        %v681 = vpack.c.b16 %v649, %v649
        %v682 = vpack.c.b16 %v650, %v650
        %v683 = vpack.c.b16 %v651, %v651
        %v684 = vpack.c.b16 %v652, %v652
        %v685 = vpack.c.b16 %v653, %v653
        %v686 = vpack.c.b16 %v654, %v654
        %vm719 = vcmask 257024
        %720 = vst.msk [vmem:[%s210] sm:$0xf] %vm719, %v655
        %721 = vst.msk [vmem:[%s210 + $0x4] sm:$0xf] %vm719, %v656
        %722 = vst.msk [vmem:[%s210 + $0x8] sm:$0xf] %vm719, %v657
        %723 = vst.msk [vmem:[%s210 + $0xc] sm:$0xf] %vm719, %v658
        %724 = vst.msk [vmem:[%s210 + $0x10] sm:$0xf] %vm719, %v659
        %725 = vst.msk [vmem:[%s210 + $0x14] sm:$0xf] %vm719, %v660
        %726 = vst.msk [vmem:[%s210 + $0x18] sm:$0xf] %vm719, %v661
        %727 = vst.msk [vmem:[%s210 + $0x1c] sm:$0xf] %vm719, %v662
        %728 = vst.msk [vmem:[%s210 + $0x20] sm:$0xf] %vm719, %v663
        %729 = vst.msk [vmem:[%s210 + $0x24] sm:$0xf] %vm719, %v664
        %730 = vst.msk [vmem:[%s210 + $0x28] sm:$0xf] %vm719, %v665
        %731 = vst.msk [vmem:[%s210 + $0x2c] sm:$0xf] %vm719, %v666
        %732 = vst.msk [vmem:[%s210 + $0x30] sm:$0xf] %vm719, %v667
        %733 = vst.msk [vmem:[%s210 + $0x34] sm:$0xf] %vm719, %v668
        %734 = vst.msk [vmem:[%s210 + $0x38] sm:$0xf] %vm719, %v669
        %735 = vst.msk [vmem:[%s210 + $0x3c] sm:$0xf] %vm719, %v670
        %736 = vst.msk [vmem:[%s210 + $0x40] sm:$0xf] %vm719, %v671
        %737 = vst.msk [vmem:[%s210 + $0x44] sm:$0xf] %vm719, %v672
        %738 = vst.msk [vmem:[%s210 + $0x48] sm:$0xf] %vm719, %v673
        %739 = vst.msk [vmem:[%s210 + $0x4c] sm:$0xf] %vm719, %v674
        %740 = vst.msk [vmem:[%s210 + $0x50] sm:$0xf] %vm719, %v675
        %741 = vst.msk [vmem:[%s210 + $0x54] sm:$0xf] %vm719, %v676
        %742 = vst.msk [vmem:[%s210 + $0x58] sm:$0xf] %vm719, %v677
        %743 = vst.msk [vmem:[%s210 + $0x5c] sm:$0xf] %vm719, %v678
        %744 = vst.msk [vmem:[%s210 + $0x60] sm:$0xf] %vm719, %v679
        %745 = vst.msk [vmem:[%s210 + $0x64] sm:$0xf] %vm719, %v680
        %746 = vst.msk [vmem:[%s210 + $0x68] sm:$0xf] %vm719, %v681
        %747 = vst.msk [vmem:[%s210 + $0x6c] sm:$0xf] %vm719, %v682
        %748 = vst.msk [vmem:[%s210 + $0x70] sm:$0xf] %vm719, %v683
        %749 = vst.msk [vmem:[%s210 + $0x74] sm:$0xf] %vm719, %v684
        %750 = vst.msk [vmem:[%s210 + $0x78] sm:$0xf] %vm719, %v685
        %751 = vst.msk [vmem:[%s210 + $0x7c] sm:$0xf] %vm719, %v686
        %s752 = sand.u32 %s114, 1
        %s753 = sand.u32 %s114, 1
        %s754 = smul.addr %s753, 128
        %s755 = scalar_lea.vmem [#allocation2], %s754
        // Predicated region
        $region33: #{csa_sr_forward.7} parent=31 // pred_check
          %p756 = pneg %p124
        $region34: #{csa_sr_forward.7} parent=31 // pred_check_branch
          %758 = sbr.rel (%p756) target = $region36
        $region35: #{csa_sr_forward.7} parent=31 // pred_region
          %s759 = smul.u32 32, %s18
          %s760 = ssub.s32 112, %s759
          %p761 = scmp.lt.s32.totalorder %s760, 32
          %s762 = scalar_select %p761, %s760, 32
          %s763 = smul.u32 64, %s762
          %p764 = scmp.ne.s32.totalorder 0, %s763
          %s765 = sadd.s32 %s19, %s759
          %s766 = smul.addr %s765, 4
          %s767 = scalar_lea.vmem %s3, %s766
          // Predicated region
          $region37: #{csa_sr_forward.7} parent=35 // pred_check
            %p768 = pneg %p764
          $region38: #{csa_sr_forward.7} parent=35 // pred_check_branch
            %770 = sbr.rel (%p768) target = $region40
          $region39: #{csa_sr_forward.7} parent=35 // pred_region
            // Predicated region
            $region41: #{csa_sr_forward.7} parent=39 // pred_check
              _
            $region42: #{csa_sr_forward.7} parent=39 // pred_check_branch
              %772 = sbr.rel target = $region44
            $region43: #{csa_sr_forward.7} parent=39 // pred_region
              // Predicated region
              $region63: #{csa_sr_forward.7} parent=43 // pred_check
                _
              $region64: #{csa_sr_forward.7} parent=43 // pred_check_branch
                %883 = sbr.rel (0) target = $region66
              $region65: #{csa_sr_forward.7} parent=43 // pred_region
                %s885 = sshrl.u32 %s762, 5
                // While loop
                $region67: #{csa_sr_forward.7} parent=65 // loop_pre_header
                  _
                $region68: #{csa_sr_forward.7} parent=65 // loop_header
                  %s887 = sphi 0, %s889
                  %p888 = scmp.ge.s32.totalorder %s887, %s885
                  %s892 = sphi 0, %s961
                  %s893 = sphi %s755, %s964
                  %s894 = sphi %s767, %s965
                $region69: #{csa_sr_forward.7} parent=65 // loop_header_branch
                  %891 = sbr.rel (%p888) target = $region73
                $region70: #{csa_sr_forward.7} parent=65 // loop_body
                  %v895 = vld [vmem:[%s893] sm:$0xf]
                  %896 = vst [vmem:[%s894] sm:$0xf] %v895
                  %v897 = vld [vmem:[%s893 + $0x4] sm:$0xf]
                  %898 = vst [vmem:[%s894 + $0x4] sm:$0xf] %v897
                  %v899 = vld [vmem:[%s893 + $0x8] sm:$0xf]
                  %900 = vst [vmem:[%s894 + $0x8] sm:$0xf] %v899
                  %v901 = vld [vmem:[%s893 + $0xc] sm:$0xf]
                  %902 = vst [vmem:[%s894 + $0xc] sm:$0xf] %v901
                  %v903 = vld [vmem:[%s893 + $0x10] sm:$0xf]
                  %904 = vst [vmem:[%s894 + $0x10] sm:$0xf] %v903
                  %v905 = vld [vmem:[%s893 + $0x14] sm:$0xf]
                  %906 = vst [vmem:[%s894 + $0x14] sm:$0xf] %v905
                  %v907 = vld [vmem:[%s893 + $0x18] sm:$0xf]
                  %908 = vst [vmem:[%s894 + $0x18] sm:$0xf] %v907
                  %v909 = vld [vmem:[%s893 + $0x1c] sm:$0xf]
                  %910 = vst [vmem:[%s894 + $0x1c] sm:$0xf] %v909
                  %v911 = vld [vmem:[%s893 + $0x20] sm:$0xf]
                  %912 = vst [vmem:[%s894 + $0x20] sm:$0xf] %v911
                  %v913 = vld [vmem:[%s893 + $0x24] sm:$0xf]
                  %914 = vst [vmem:[%s894 + $0x24] sm:$0xf] %v913
                  %v915 = vld [vmem:[%s893 + $0x28] sm:$0xf]
                  %916 = vst [vmem:[%s894 + $0x28] sm:$0xf] %v915
                  %v917 = vld [vmem:[%s893 + $0x2c] sm:$0xf]
                  %918 = vst [vmem:[%s894 + $0x2c] sm:$0xf] %v917
                  %v919 = vld [vmem:[%s893 + $0x30] sm:$0xf]
                  %920 = vst [vmem:[%s894 + $0x30] sm:$0xf] %v919
                  %v921 = vld [vmem:[%s893 + $0x34] sm:$0xf]
                  %922 = vst [vmem:[%s894 + $0x34] sm:$0xf] %v921
                  %v923 = vld [vmem:[%s893 + $0x38] sm:$0xf]
                  %924 = vst [vmem:[%s894 + $0x38] sm:$0xf] %v923
                  %v925 = vld [vmem:[%s893 + $0x3c] sm:$0xf]
                  %926 = vst [vmem:[%s894 + $0x3c] sm:$0xf] %v925
                  %v927 = vld [vmem:[%s893 + $0x40] sm:$0xf]
                  %928 = vst [vmem:[%s894 + $0x40] sm:$0xf] %v927
                  %v929 = vld [vmem:[%s893 + $0x44] sm:$0xf]
                  %930 = vst [vmem:[%s894 + $0x44] sm:$0xf] %v929
                  %v931 = vld [vmem:[%s893 + $0x48] sm:$0xf]
                  %932 = vst [vmem:[%s894 + $0x48] sm:$0xf] %v931
                  %v933 = vld [vmem:[%s893 + $0x4c] sm:$0xf]
                  %934 = vst [vmem:[%s894 + $0x4c] sm:$0xf] %v933
                  %v935 = vld [vmem:[%s893 + $0x50] sm:$0xf]
                  %936 = vst [vmem:[%s894 + $0x50] sm:$0xf] %v935
                  %v937 = vld [vmem:[%s893 + $0x54] sm:$0xf]
                  %938 = vst [vmem:[%s894 + $0x54] sm:$0xf] %v937
                  %v939 = vld [vmem:[%s893 + $0x58] sm:$0xf]
                  %940 = vst [vmem:[%s894 + $0x58] sm:$0xf] %v939
                  %v941 = vld [vmem:[%s893 + $0x5c] sm:$0xf]
                  %942 = vst [vmem:[%s894 + $0x5c] sm:$0xf] %v941
                  %v943 = vld [vmem:[%s893 + $0x60] sm:$0xf]
                  %944 = vst [vmem:[%s894 + $0x60] sm:$0xf] %v943
                  %v945 = vld [vmem:[%s893 + $0x64] sm:$0xf]
                  %946 = vst [vmem:[%s894 + $0x64] sm:$0xf] %v945
                  %v947 = vld [vmem:[%s893 + $0x68] sm:$0xf]
                  %948 = vst [vmem:[%s894 + $0x68] sm:$0xf] %v947
                  %v949 = vld [vmem:[%s893 + $0x6c] sm:$0xf]
                  %950 = vst [vmem:[%s894 + $0x6c] sm:$0xf] %v949
                  %v951 = vld [vmem:[%s893 + $0x70] sm:$0xf]
                  %952 = vst [vmem:[%s894 + $0x70] sm:$0xf] %v951
                  %v953 = vld [vmem:[%s893 + $0x74] sm:$0xf]
                  %954 = vst [vmem:[%s894 + $0x74] sm:$0xf] %v953
                  %v955 = vld [vmem:[%s893 + $0x78] sm:$0xf]
                  %956 = vst [vmem:[%s894 + $0x78] sm:$0xf] %v955
                  %v957 = vld [vmem:[%s893 + $0x7c] sm:$0xf]
                  %958 = vst [vmem:[%s894 + $0x7c] sm:$0xf] %v957
                  %s959 = sadd.s32 1, %s892
                  %p960 = scmp.ge.s32.totalorder %s959, %s885
                  %s961 = scalar_select %p960, 0, %s959
                  %s962 = smul.u32 %s961, 128
                  %s963 = smul.u32 %s961, 128
                  %s964 = scalar_lea.vmem %s755, %s962 [#allocation2]
                  %s965 = scalar_lea.vmem %s767, %s963
                $region71: #{csa_sr_forward.7} parent=65 // loop_footer
                  %s889 = sadd.s32 %s887, 1
                $region72: #{csa_sr_forward.7} parent=65 // loop_footer_branch
                  %886 = sbr.rel target = $region68
                $region73: #{csa_sr_forward.7} parent=65 // loop_exit
                  _
                %s966 = sshrl.u32 %s762, 5
                %s967 = sand.u32 %s762, 31
                %s968 = smul.u32 %s966, 32
                %s969 = smul.u32 4, %s968
                %s970 = scalar_lea.vmem %s755, %s969 [#allocation2]
                %s971 = smul.u32 4, %s968
                %s972 = scalar_lea.vmem %s767, %s971
                // While loop
                $region74: #{csa_sr_forward.7} parent=65 // loop_pre_header
                  _
                $region75: #{csa_sr_forward.7} parent=65 // loop_header
                  %s974 = sphi 0, %s976
                  %p975 = scmp.ge.s32.totalorder %s974, %s967
                  %s979 = sphi 0, %s986
                  %s980 = sphi %s970, %s989
                  %s981 = sphi %s972, %s990
                $region76: #{csa_sr_forward.7} parent=65 // loop_header_branch
                  %978 = sbr.rel (%p975) target = $region80
                $region77: #{csa_sr_forward.7} parent=65 // loop_body
                  %v982 = vld [vmem:[%s980] sm:$0xf]
                  %983 = vst [vmem:[%s981] sm:$0xf] %v982
                  %s984 = sadd.s32 1, %s979
                  %p985 = scmp.ge.s32.totalorder %s984, %s967
                  %s986 = scalar_select %p985, 0, %s984
                  %s987 = smul.u32 %s986, 4
                  %s988 = smul.u32 %s986, 4
                  %s989 = scalar_lea.vmem %s970, %s987 [#allocation2]
                  %s990 = scalar_lea.vmem %s972, %s988
                $region78: #{csa_sr_forward.7} parent=65 // loop_footer
                  %s976 = sadd.s32 %s974, 1
                $region79: #{csa_sr_forward.7} parent=65 // loop_footer_branch
                  %973 = sbr.rel target = $region75
                $region80: #{csa_sr_forward.7} parent=65 // loop_exit
                  _
              $region66: #{csa_sr_forward.7} parent=43 // pred_fallthru
                _
            $region44: #{csa_sr_forward.7} parent=39 // pred_fallthru
              _
            // Predicated region
            $region45: #{csa_sr_forward.7} parent=39 // pred_check
              _
            $region46: #{csa_sr_forward.7} parent=39 // pred_check_branch
              %774 = sbr.rel (0) target = $region48
            $region47: #{csa_sr_forward.7} parent=39 // pred_region
              %s776 = sshrl.u32 %s762, 5
              // While loop
              $region49: #{csa_sr_forward.7} parent=47 // loop_pre_header
                _
              $region50: #{csa_sr_forward.7} parent=47 // loop_header
                %s778 = sphi 0, %s780
                %p779 = scmp.ge.s32.totalorder %s778, %s776
                %s783 = sphi 0, %s852
                %s784 = sphi %s755, %s855
                %s785 = sphi %s767, %s856
              $region51: #{csa_sr_forward.7} parent=47 // loop_header_branch
                %782 = sbr.rel (%p779) target = $region55
              $region52: #{csa_sr_forward.7} parent=47 // loop_body
                %v786 = vld [vmem:[%s784] sm:$0xf]
                %787 = vst [vmem:[%s785] sm:$0xf] %v786
                %v788 = vld [vmem:[%s784 + $0x4] sm:$0xf]
                %789 = vst [vmem:[%s785 + $0x4] sm:$0xf] %v788
                %v790 = vld [vmem:[%s784 + $0x8] sm:$0xf]
                %791 = vst [vmem:[%s785 + $0x8] sm:$0xf] %v790
                %v792 = vld [vmem:[%s784 + $0xc] sm:$0xf]
                %793 = vst [vmem:[%s785 + $0xc] sm:$0xf] %v792
                %v794 = vld [vmem:[%s784 + $0x10] sm:$0xf]
                %795 = vst [vmem:[%s785 + $0x10] sm:$0xf] %v794
                %v796 = vld [vmem:[%s784 + $0x14] sm:$0xf]
                %797 = vst [vmem:[%s785 + $0x14] sm:$0xf] %v796
                %v798 = vld [vmem:[%s784 + $0x18] sm:$0xf]
                %799 = vst [vmem:[%s785 + $0x18] sm:$0xf] %v798
                %v800 = vld [vmem:[%s784 + $0x1c] sm:$0xf]
                %801 = vst [vmem:[%s785 + $0x1c] sm:$0xf] %v800
                %v802 = vld [vmem:[%s784 + $0x20] sm:$0xf]
                %803 = vst [vmem:[%s785 + $0x20] sm:$0xf] %v802
                %v804 = vld [vmem:[%s784 + $0x24] sm:$0xf]
                %805 = vst [vmem:[%s785 + $0x24] sm:$0xf] %v804
                %v806 = vld [vmem:[%s784 + $0x28] sm:$0xf]
                %807 = vst [vmem:[%s785 + $0x28] sm:$0xf] %v806
                %v808 = vld [vmem:[%s784 + $0x2c] sm:$0xf]
                %809 = vst [vmem:[%s785 + $0x2c] sm:$0xf] %v808
                %v810 = vld [vmem:[%s784 + $0x30] sm:$0xf]
                %811 = vst [vmem:[%s785 + $0x30] sm:$0xf] %v810
                %v812 = vld [vmem:[%s784 + $0x34] sm:$0xf]
                %813 = vst [vmem:[%s785 + $0x34] sm:$0xf] %v812
                %v814 = vld [vmem:[%s784 + $0x38] sm:$0xf]
                %815 = vst [vmem:[%s785 + $0x38] sm:$0xf] %v814
                %v816 = vld [vmem:[%s784 + $0x3c] sm:$0xf]
                %817 = vst [vmem:[%s785 + $0x3c] sm:$0xf] %v816
                %v818 = vld [vmem:[%s784 + $0x40] sm:$0xf]
                %819 = vst [vmem:[%s785 + $0x40] sm:$0xf] %v818
                %v820 = vld [vmem:[%s784 + $0x44] sm:$0xf]
                %821 = vst [vmem:[%s785 + $0x44] sm:$0xf] %v820
                %v822 = vld [vmem:[%s784 + $0x48] sm:$0xf]
                %823 = vst [vmem:[%s785 + $0x48] sm:$0xf] %v822
                %v824 = vld [vmem:[%s784 + $0x4c] sm:$0xf]
                %825 = vst [vmem:[%s785 + $0x4c] sm:$0xf] %v824
                %v826 = vld [vmem:[%s784 + $0x50] sm:$0xf]
                %827 = vst [vmem:[%s785 + $0x50] sm:$0xf] %v826
                %v828 = vld [vmem:[%s784 + $0x54] sm:$0xf]
                %829 = vst [vmem:[%s785 + $0x54] sm:$0xf] %v828
                %v830 = vld [vmem:[%s784 + $0x58] sm:$0xf]
                %831 = vst [vmem:[%s785 + $0x58] sm:$0xf] %v830
                %v832 = vld [vmem:[%s784 + $0x5c] sm:$0xf]
                %833 = vst [vmem:[%s785 + $0x5c] sm:$0xf] %v832
                %v834 = vld [vmem:[%s784 + $0x60] sm:$0xf]
                %835 = vst [vmem:[%s785 + $0x60] sm:$0xf] %v834
                %v836 = vld [vmem:[%s784 + $0x64] sm:$0xf]
                %837 = vst [vmem:[%s785 + $0x64] sm:$0xf] %v836
                %v838 = vld [vmem:[%s784 + $0x68] sm:$0xf]
                %839 = vst [vmem:[%s785 + $0x68] sm:$0xf] %v838
                %v840 = vld [vmem:[%s784 + $0x6c] sm:$0xf]
                %841 = vst [vmem:[%s785 + $0x6c] sm:$0xf] %v840
                %v842 = vld [vmem:[%s784 + $0x70] sm:$0xf]
                %843 = vst [vmem:[%s785 + $0x70] sm:$0xf] %v842
                %v844 = vld [vmem:[%s784 + $0x74] sm:$0xf]
                %845 = vst [vmem:[%s785 + $0x74] sm:$0xf] %v844
                %v846 = vld [vmem:[%s784 + $0x78] sm:$0xf]
                %847 = vst [vmem:[%s785 + $0x78] sm:$0xf] %v846
                %v848 = vld [vmem:[%s784 + $0x7c] sm:$0xf]
                %849 = vst [vmem:[%s785 + $0x7c] sm:$0xf] %v848
                %s850 = sadd.s32 1, %s783
                %p851 = scmp.ge.s32.totalorder %s850, %s776
                %s852 = scalar_select %p851, 0, %s850
                %s853 = smul.u32 %s852, 128
                %s854 = smul.u32 %s852, 128
                %s855 = scalar_lea.vmem %s755, %s853 [#allocation2]
                %s856 = scalar_lea.vmem %s767, %s854
              $region53: #{csa_sr_forward.7} parent=47 // loop_footer
                %s780 = sadd.s32 %s778, 1
              $region54: #{csa_sr_forward.7} parent=47 // loop_footer_branch
                %777 = sbr.rel target = $region50
              $region55: #{csa_sr_forward.7} parent=47 // loop_exit
                _
              %s857 = sshrl.u32 %s762, 5
              %s858 = sand.u32 %s762, 31
              %s859 = smul.u32 %s857, 32
              %s860 = smul.u32 4, %s859
              %s861 = scalar_lea.vmem %s755, %s860 [#allocation2]
              %s862 = smul.u32 4, %s859
              %s863 = scalar_lea.vmem %s767, %s862
              // While loop
              $region56: #{csa_sr_forward.7} parent=47 // loop_pre_header
                _
              $region57: #{csa_sr_forward.7} parent=47 // loop_header
                %s865 = sphi 0, %s867
                %p866 = scmp.ge.s32.totalorder %s865, %s858
                %s870 = sphi 0, %s877
                %s871 = sphi %s861, %s880
                %s872 = sphi %s863, %s881
              $region58: #{csa_sr_forward.7} parent=47 // loop_header_branch
                %869 = sbr.rel (%p866) target = $region62
              $region59: #{csa_sr_forward.7} parent=47 // loop_body
                %v873 = vld [vmem:[%s871] sm:$0xf]
                %874 = vst [vmem:[%s872] sm:$0xf] %v873
                %s875 = sadd.s32 1, %s870
                %p876 = scmp.ge.s32.totalorder %s875, %s858
                %s877 = scalar_select %p876, 0, %s875
                %s878 = smul.u32 %s877, 4
                %s879 = smul.u32 %s877, 4
                %s880 = scalar_lea.vmem %s861, %s878 [#allocation2]
                %s881 = scalar_lea.vmem %s863, %s879
              $region60: #{csa_sr_forward.7} parent=47 // loop_footer
                %s867 = sadd.s32 %s865, 1
              $region61: #{csa_sr_forward.7} parent=47 // loop_footer_branch
                %864 = sbr.rel target = $region57
              $region62: #{csa_sr_forward.7} parent=47 // loop_exit
                _
            $region48: #{csa_sr_forward.7} parent=39 // pred_fallthru
              _
          $region40: #{csa_sr_forward.7} parent=35 // pred_fallthru
            _
          %991 = vnop
        $region36: #{csa_sr_forward.7} parent=31 // pred_fallthru
          _
      $region32: #{csa_sr_forward.7} parent=5 // pred_fallthru
        _
      %p992 = scmp.le.s32.totalorder 2, %s9
      // Predicated region
      $region81: #{csa_sr_forward.7} parent=5 // pred_check
        %p993 = pneg %p992
      $region82: #{csa_sr_forward.7} parent=5 // pred_check_branch
        %995 = sbr.rel (%p993) target = $region84
      $region83: #{csa_sr_forward.7} parent=5 // pred_region
        %s996 = ssub.s32 %s9, 2
        // Predicated region
        $region85: #{csa_sr_forward.7} parent=83 // pred_check
          %p997 = pneg %p130
        $region86: #{csa_sr_forward.7} parent=83 // pred_check_branch
          %999 = sbr.rel (%p997) target = $region88
        $region87: #{csa_sr_forward.7} parent=83 // pred_region
          %s1000 = sand.u32 %s115, 1
          %s1001 = sand.u32 %s115, 1
          %s1002 = smul.addr %s1001, 128
          %s1003 = scalar_lea.vmem [#allocation2], %s1002
        $region88: #{csa_sr_forward.7} parent=83 // pred_fallthru
          _
      $region84: #{csa_sr_forward.7} parent=5 // pred_fallthru
        _
    $region6: #{csa_sr_forward.7} parent=1 // loop_footer
      %s13 = sadd.s32 1, %s9
    $region7: #{csa_sr_forward.7} parent=1 // loop_footer_branch
      %8 = sbr.rel target = $region3
    $region8: #{csa_sr_forward.7} parent=1 // loop_exit
      _

// kernel: csa_sr_forward.9
$region0: #{csa_sr_forward.9}
  #allocation0 [shape = 'u32[]', space=smem, size = 0x4, offset = 0x4, fixed_abs, tag = 'smem constant byte address 0x4 - core index']
  #allocation1 [shape = 'u32[144,128]{1,0:T(1,128)}', space=vmem, size = 0x12000, scoped, tag = 'internal scratch']
  #allocation2 [shape = 'f32[100,8]{1,0:T(8,128)}', space=vmem, size = 0xd000, scoped, tag = 'scratch operand']
  #allocation3 [shape = 'f32[100,8]{1,0:T(8,128)}', space=vmem, size = 0xd000, scoped, tag = 'scratch operand']
  %s0 = inlined_call_operand.vmem [shape: bf16[2,7,100,8], index: 0, kind: input, shape index: {}]
  %s1 = inlined_call_operand.vmem [shape: f32[78,1], index: 1, kind: input, shape index: {}]
  %s2 = inlined_call_operand.vmem [shape: bf16[72,16], index: 2, kind: input, shape index: {}]
  %s3 = inlined_call_operand.vmem [shape: bf16[72,8], index: 3, kind: input, shape index: {}]
  %s4 = inlined_call_operand.vmem [shape: bf16[2,7,100,8], index: 4, kind: output, shape index: {}]
  %s5 = sld [smem:[#allocation0]]
  $region53: #{csa_sr_forward.9} parent=0
    _
  %s7 = ssub.s32 1, %s5
  %s8 = scalar_select 0, %s7, %s5
  loop: start=0, step=1, limit=16
  $region2: #{csa_sr_forward.9} parent=0 // loop_pre_header
    _
  $region3: #{csa_sr_forward.9} parent=0 // loop_header
    %s10 = sphi 0, %s14
    %p11 = scmp.ge.s32.totalorder %s10, 16
    %s17 = sphi 0, %s29
    %s18 = sphi 0, %s25
    %s19 = sphi 0, %s17
    %s20 = sphi 0, %s18
    %s21 = sphi 0, %s19
    %s22 = sphi 0, %s20
    %s34 = sphi 0, %s36
    %s37 = sphi 0, %s34
    %s38 = sphi 0, %s37
    %s54 = sphi 0, %s38
    %s58 = sphi 0, %s58
    %s60 = sphi 0, %s58
    %s61 = sphi 0, %s60
    %s75 = sphi 0, %s61
    %s79 = sphi 0, %s79
    %s81 = sphi 0, %s79
    %s82 = sphi 0, %s81
    %s96 = sphi 0, %s82
    %s100 = sphi 0, %s100
    %s102 = sphi 0, %s100
    %s103 = sphi 0, %s102
    %s117 = sphi 0, %s103
    %s125 = sphi 0, %s127
    %s128 = sphi 0, %s125
    %s129 = sphi 0, %s128
    %s145 = sphi 0, %s129
  $region4: #{csa_sr_forward.9} parent=0 // loop_header_branch
    %13 = sbr.rel (%p11) target = $region8
  $region5: #{csa_sr_forward.9} parent=0 // loop_body
    %s15 = ssub.s32 %s10, 1
    %s16 = ssub.s32 %s10, 2
    %s23 = sadd.s32 1, %s18
    %p24 = scmp.ge.s32.totalorder %s23, 7
    %s25 = scalar_select %p24, 0, %s23
    %s26 = sadd.s32 1, %s17
    %s27 = scalar_select %p24, %s26, %s17
    %p28 = scmp.ge.s32.totalorder %s27, 2
    %s29 = scalar_select %p28, 0, %s27
    %s30 = ssub.s32 %s17, %s29
    %s31 = ssub.s32 %s18, %s25
    %s32 = sor.u32 %s30, %s31
    %p33 = scmp.eq.s32.totalorder %s32, 0
    %s35 = sadd.s32 %s34, 1
    %s36 = scalar_select %p33, %s34, %s35
    %p39 = pneg %p33
    %p40 = scmp.eq.s32.totalorder %s10, 13
    %p41 = por %p39, %p40
    %p42 = scmp.ne.s32.totalorder %s34, %s37
    %p43 = scmp.eq.s32.totalorder %s10, 0
    %p44 = por %p42, %p43
    %p45 = scmp.ne.s32.totalorder %s34, %s37
    %p46 = scmp.eq.s32.totalorder %s15, 13
    %p47 = por %p45, %p46
    %p48 = scmp.ne.s32.totalorder %s37, %s38
    %p49 = scmp.eq.s32.totalorder %s15, 0
    %p50 = por %p48, %p49
    %p51 = scmp.ne.s32.totalorder %s37, %s38
    %p52 = scmp.eq.s32.totalorder %s16, 13
    %p53 = por %p51, %p52
    %p55 = scmp.ne.s32.totalorder %s38, %s54
    %p56 = scmp.eq.s32.totalorder %s16, 0
    %p57 = por %p55, %p56
    %s59 = sadd.s32 %s58, 1
    %p62 = scmp.eq.s32.totalorder %s10, 13
    %p63 = scmp.ne.s32.totalorder %s58, %s60
    %p64 = scmp.eq.s32.totalorder %s10, 0
    %p65 = por %p63, %p64
    %p66 = scmp.ne.s32.totalorder %s58, %s60
    %p67 = scmp.eq.s32.totalorder %s15, 13
    %p68 = por %p66, %p67
    %p69 = scmp.ne.s32.totalorder %s60, %s61
    %p70 = scmp.eq.s32.totalorder %s15, 0
    %p71 = por %p69, %p70
    %p72 = scmp.ne.s32.totalorder %s60, %s61
    %p73 = scmp.eq.s32.totalorder %s16, 13
    %p74 = por %p72, %p73
    %p76 = scmp.ne.s32.totalorder %s61, %s75
    %p77 = scmp.eq.s32.totalorder %s16, 0
    %p78 = por %p76, %p77
    %s80 = sadd.s32 %s79, 1
    %p83 = scmp.eq.s32.totalorder %s10, 13
    %p84 = scmp.ne.s32.totalorder %s79, %s81
    %p85 = scmp.eq.s32.totalorder %s10, 0
    %p86 = por %p84, %p85
    %p87 = scmp.ne.s32.totalorder %s79, %s81
    %p88 = scmp.eq.s32.totalorder %s15, 13
    %p89 = por %p87, %p88
    %p90 = scmp.ne.s32.totalorder %s81, %s82
    %p91 = scmp.eq.s32.totalorder %s15, 0
    %p92 = por %p90, %p91
    %p93 = scmp.ne.s32.totalorder %s81, %s82
    %p94 = scmp.eq.s32.totalorder %s16, 13
    %p95 = por %p93, %p94
    %p97 = scmp.ne.s32.totalorder %s82, %s96
    %p98 = scmp.eq.s32.totalorder %s16, 0
    %p99 = por %p97, %p98
    %s101 = sadd.s32 %s100, 1
    %p104 = scmp.eq.s32.totalorder %s10, 13
    %p105 = scmp.ne.s32.totalorder %s100, %s102
    %p106 = scmp.eq.s32.totalorder %s10, 0
    %p107 = por %p105, %p106
    %p108 = scmp.ne.s32.totalorder %s100, %s102
    %p109 = scmp.eq.s32.totalorder %s15, 13
    %p110 = por %p108, %p109
    %p111 = scmp.ne.s32.totalorder %s102, %s103
    %p112 = scmp.eq.s32.totalorder %s15, 0
    %p113 = por %p111, %p112
    %p114 = scmp.ne.s32.totalorder %s102, %s103
    %p115 = scmp.eq.s32.totalorder %s16, 13
    %p116 = por %p114, %p115
    %p118 = scmp.ne.s32.totalorder %s103, %s117
    %p119 = scmp.eq.s32.totalorder %s16, 0
    %p120 = por %p118, %p119
    %s121 = ssub.s32 %s17, %s29
    %s122 = ssub.s32 %s18, %s25
    %s123 = sor.u32 %s121, %s122
    %p124 = scmp.eq.s32.totalorder %s123, 0
    %s126 = sadd.s32 %s125, 1
    %s127 = scalar_select %p124, %s125, %s126
    %p130 = pneg %p124
    %p131 = scmp.eq.s32.totalorder %s10, 13
    %p132 = por %p130, %p131
    %p133 = scmp.ne.s32.totalorder %s125, %s128
    %p134 = scmp.eq.s32.totalorder %s10, 0
    %p135 = por %p133, %p134
    %p136 = scmp.ne.s32.totalorder %s125, %s128
    %p137 = scmp.eq.s32.totalorder %s15, 13
    %p138 = por %p136, %p137
    %p139 = scmp.ne.s32.totalorder %s128, %s129
    %p140 = scmp.eq.s32.totalorder %s15, 0
    %p141 = por %p139, %p140
    %p142 = scmp.ne.s32.totalorder %s128, %s129
    %p143 = scmp.eq.s32.totalorder %s16, 13
    %p144 = por %p142, %p143
    %p146 = scmp.ne.s32.totalorder %s129, %s145
    %p147 = scmp.eq.s32.totalorder %s16, 0
    %p148 = por %p146, %p147
    %p149 = scmp.le.s32.totalorder 1, %s10
    %p150 = scmp.lt.s32.totalorder %s10, 15
    %p151 = pnand %p149, %p150
    %p152 = pneg %p151
    // Predicated region
    $region9: #{csa_sr_forward.9} parent=5 // pred_check
      _
    $region10: #{csa_sr_forward.9} parent=5 // pred_check_branch
      %154 = sbr.rel (%p151) target = $region12
    $region11: #{csa_sr_forward.9} parent=5 // pred_region
      %s155 = ssub.s32 %s10, 1
      // Predicated region
      $region13: #{csa_sr_forward.9} parent=11 // pred_check
        %p156 = pneg %p71
      $region14: #{csa_sr_forward.9} parent=11 // pred_check_branch
        %158 = sbr.rel (%p156) target = $region16
      $region15: #{csa_sr_forward.9} parent=11 // pred_region
        _
      $region16: #{csa_sr_forward.9} parent=11 // pred_fallthru
        _
      // Predicated region
      $region17: #{csa_sr_forward.9} parent=11 // pred_check
        %p159 = pneg %p92
      $region18: #{csa_sr_forward.9} parent=11 // pred_check_branch
        %161 = sbr.rel (%p159) target = $region20
      $region19: #{csa_sr_forward.9} parent=11 // pred_region
        _
      $region20: #{csa_sr_forward.9} parent=11 // pred_fallthru
        _
      // Predicated region
      $region21: #{csa_sr_forward.9} parent=11 // pred_check
        %p162 = pneg %p113
      $region22: #{csa_sr_forward.9} parent=11 // pred_check_branch
        %164 = sbr.rel (%p162) target = $region24
      $region23: #{csa_sr_forward.9} parent=11 // pred_region
        _
      $region24: #{csa_sr_forward.9} parent=11 // pred_fallthru
        _
    $region12: #{csa_sr_forward.9} parent=5 // pred_fallthru
      _
    %p165 = scmp.lt.s32.totalorder %s10, 14
    // Predicated region
    $region25: #{csa_sr_forward.9} parent=5 // pred_check
      %p166 = pneg %p165
    $region26: #{csa_sr_forward.9} parent=5 // pred_check_branch
      %168 = sbr.rel (%p166) target = $region28
    $region27: #{csa_sr_forward.9} parent=5 // pred_region
      // Predicated region
      $region29: #{csa_sr_forward.9} parent=27 // pred_check
        %p169 = pneg %p44
      $region30: #{csa_sr_forward.9} parent=27 // pred_check_branch
        %171 = sbr.rel (%p169) target = $region32
      $region31: #{csa_sr_forward.9} parent=27 // pred_region
        %p172 = scmp.lt.s32.totalorder %s17, 1
        %s173 = scalar_select %p172, %s17, 1
        %p174 = scmp.lt.s32.totalorder %s18, 6
        %s175 = scalar_select %p174, %s18, 6
        %s176 = smul.addr %s175, 13
        %s177 = smul.addr %s173, 91
        %s178 = sadd.s32 %s176, %s177
        %s179 = smul.addr %s178, 4
        %s180 = scalar_lea.vmem %s0, %s179
      $region32: #{csa_sr_forward.9} parent=27 // pred_fallthru
        _
    $region28: #{csa_sr_forward.9} parent=5 // pred_fallthru
      _
    %p181 = scmp.le.s32.totalorder 1, %s10
    %p182 = scmp.lt.s32.totalorder %s10, 15
    %p183 = pnand %p181, %p182
    %p184 = pneg %p183
    // Predicated region
    $region33: #{csa_sr_forward.9} parent=5 // pred_check
      _
    $region34: #{csa_sr_forward.9} parent=5 // pred_check_branch
      %186 = sbr.rel (%p183) target = $region36
    $region35: #{csa_sr_forward.9} parent=5 // pred_region
      %s187 = ssub.s32 %s10, 1
      %p188 = scmp.lt.s32.totalorder %s19, 1
      %s189 = scalar_select %p188, %s19, 1
      %p190 = scmp.lt.s32.totalorder %s20, 6
      %s191 = scalar_select %p190, %s20, 6
      %s192 = smul.addr %s191, 13
      %s193 = smul.addr %s189, 91
      %s194 = sadd.s32 %s192, %s193
      %s195 = smul.addr %s194, 4
      %s196 = scalar_lea.vmem %s0, %s195
      %p197 = pneg %p50
      %p198 = pneg %p47
      %p199 = pneg %p71
      %p200 = pneg %p68
      %p201 = pneg %p92
      %p202 = pneg %p89
      %p203 = pneg %p113
      %p204 = pneg %p110
      %p205 = pneg %p141
      %p206 = pneg %p138
      %p207 = scmp.lt.s32.totalorder %s19, 1
      %s208 = scalar_select %p207, %s19, 1
      %p209 = scmp.lt.s32.totalorder %s20, 6
      %s210 = scalar_select %p209, %s20, 6
      %s211 = smul.addr %s210, 13
      %s212 = smul.addr %s208, 91
      %s213 = sadd.s32 %s211, %s212
      %s214 = smul.addr %s213, 4
      %s215 = scalar_lea.vmem %s4, %s214
      %p216 = scmp.lt.s32.totalorder %s19, 1
      %s217 = scalar_select %p216, %s19, 1
      %p218 = scmp.lt.s32.totalorder %s20, 6
      %s219 = scalar_select %p218, %s20, 6
      %s220 = smul.addr %s219, 13
      %s221 = smul.addr %s217, 91
      %s222 = sadd.s32 %s220, %s221
      %s223 = smul.addr %s222, 4
      %s224 = scalar_lea.vmem %s0, %s223
      %p225 = scmp.lt.s32.totalorder %s19, 1
      %s226 = scalar_select %p225, %s19, 1
      %p227 = scmp.lt.s32.totalorder %s20, 6
      %s228 = scalar_select %p227, %s20, 6
      %s229 = smul.addr %s228, 13
      %s230 = smul.addr %s226, 91
      %s231 = sadd.s32 %s229, %s230
      %s232 = smul.addr %s231, 4
      %s233 = scalar_lea.vmem %s4, %s232
      %p235 = scmp.eq.s32.totalorder %s20, 0
      // Predicated region
      $region37: #{csa_sr_forward.9} parent=35 // pred_check
        %p236 = pneg %p235
      $region38: #{csa_sr_forward.9} parent=35 // pred_check_branch
        %238 = sbr.rel (%p236) target = $region40
      $region39: #{csa_sr_forward.9} parent=35 // pred_region
        %vm239 = vcmask 64512
        %240 = vst.msk [vmem:[#allocation2] sm:$0xff] %vm239, 0.0
        %241 = vst.msk [vmem:[#allocation2 + $0x8] sm:$0xff] %vm239, 0.0
        %242 = vst.msk [vmem:[#allocation2 + $0x10] sm:$0xff] %vm239, 0.0
        %243 = vst.msk [vmem:[#allocation2 + $0x18] sm:$0xff] %vm239, 0.0
        %244 = vst.msk [vmem:[#allocation2 + $0x20] sm:$0xff] %vm239, 0.0
        %245 = vst.msk [vmem:[#allocation2 + $0x28] sm:$0xff] %vm239, 0.0
        %246 = vst.msk [vmem:[#allocation2 + $0x30] sm:$0xff] %vm239, 0.0
        %247 = vst.msk [vmem:[#allocation2 + $0x38] sm:$0xff] %vm239, 0.0
        %248 = vst.msk [vmem:[#allocation2 + $0x40] sm:$0xff] %vm239, 0.0
        %249 = vst.msk [vmem:[#allocation2 + $0x48] sm:$0xff] %vm239, 0.0
        %250 = vst.msk [vmem:[#allocation2 + $0x50] sm:$0xff] %vm239, 0.0
        %251 = vst.msk [vmem:[#allocation2 + $0x58] sm:$0xff] %vm239, 0.0
        %vm252 = vcmask 60416
        %253 = vst.msk [vmem:[#allocation2 + $0x60] sm:$0xf] %vm252, 0.0
        %254 = vst.msk [vmem:[#allocation3] sm:$0xff] %vm239, 0.0
        %255 = vst.msk [vmem:[#allocation3 + $0x8] sm:$0xff] %vm239, 0.0
        %256 = vst.msk [vmem:[#allocation3 + $0x10] sm:$0xff] %vm239, 0.0
        %257 = vst.msk [vmem:[#allocation3 + $0x18] sm:$0xff] %vm239, 0.0
        %258 = vst.msk [vmem:[#allocation3 + $0x20] sm:$0xff] %vm239, 0.0
        %259 = vst.msk [vmem:[#allocation3 + $0x28] sm:$0xff] %vm239, 0.0
        %260 = vst.msk [vmem:[#allocation3 + $0x30] sm:$0xff] %vm239, 0.0
        %261 = vst.msk [vmem:[#allocation3 + $0x38] sm:$0xff] %vm239, 0.0
        %262 = vst.msk [vmem:[#allocation3 + $0x40] sm:$0xff] %vm239, 0.0
        %263 = vst.msk [vmem:[#allocation3 + $0x48] sm:$0xff] %vm239, 0.0
        %264 = vst.msk [vmem:[#allocation3 + $0x50] sm:$0xff] %vm239, 0.0
        %265 = vst.msk [vmem:[#allocation3 + $0x58] sm:$0xff] %vm239, 0.0
        %266 = vst.msk [vmem:[#allocation3 + $0x60] sm:$0xf] %vm252, 0.0
      $region40: #{csa_sr_forward.9} parent=35 // pred_fallthru
        _
      %v267 = vld [vmem:[%s224 + $0x4] sm:$0xf]
      %v268 = vld [vmem:[%s224 + $0x8] sm:$0xf]
      %v269 = vld [vmem:[%s224 + $0xc] sm:$0xf]
      %v270 = vld [vmem:[%s224 + $0x10] sm:$0xf]
      %v271 = vld [vmem:[%s224 + $0x14] sm:$0xf]
      %v272 = vld [vmem:[%s224 + $0x18] sm:$0xf]
      %v273 = vld [vmem:[%s224 + $0x1c] sm:$0xf]
      %v274 = vld [vmem:[%s224 + $0x20] sm:$0xf]
      %v275 = vld [vmem:[%s224 + $0x24] sm:$0xf]
      %v276 = vld [vmem:[%s224 + $0x28] sm:$0xf]
      %v277 = vld [vmem:[%s224 + $0x2c] sm:$0xf]
      %v278 = vunpack.c.l.bf16 %v267
      %v279 = vunpack.c.l.bf16 %v268
      %v280 = vunpack.c.l.bf16 %v269
      %v281 = vunpack.c.l.bf16 %v270
      %v282 = vunpack.c.l.bf16 %v271
      %v283 = vunpack.c.l.bf16 %v272
      %v284 = vunpack.c.l.bf16 %v273
      %v285 = vunpack.c.l.bf16 %v274
      %v286 = vunpack.c.l.bf16 %v275
      %v287 = vunpack.c.l.bf16 %v276
      %v288 = vunpack.c.l.bf16 %v277
      %v289 = vld [vmem:[%s1] sm:$0xff]
      %v290 = vld [vmem:[%s1 + $0x8] sm:$0xff]
      %v291 = vld [vmem:[%s1 + $0x10] sm:$0xff]
      %v292 = vld [vmem:[%s1 + $0x18] sm:$0xff]
      %v293 = vld [vmem:[%s1 + $0x20] sm:$0xff]
      %v294 = vld [vmem:[%s1 + $0x28] sm:$0xff]
      %v295 = vld [vmem:[%s1 + $0x30] sm:$0xff]
      %v296 = vld [vmem:[%s1 + $0x38] sm:$0xff]
      %v297 = vld [vmem:[%s1 + $0x40] sm:$0xff]
      %v298 = vld [vmem:[%s1 + $0x48] sm:$0x3f]
      %v299 = vld [vmem:[#allocation2 + $0xb] sm:$0xff]
      %v300 = vld [vmem:[#allocation2 + $0x13] sm:$0xff]
      %v301 = vld [vmem:[#allocation2 + $0x1b] sm:$0xff]
      %v302 = vld [vmem:[#allocation2 + $0x23] sm:$0xff]
      %v303 = vld [vmem:[#allocation2 + $0x2b] sm:$0xff]
      %v304 = vld [vmem:[#allocation2 + $0x33] sm:$0xff]
      %v305 = vld [vmem:[#allocation2 + $0x3b] sm:$0xff]
      %v306 = vld [vmem:[#allocation2 + $0x43] sm:$0xff]
      %v307 = vld [vmem:[#allocation2 + $0x4b] sm:$0xff]
      %v308 = vld [vmem:[#allocation2 + $0x53] sm:$0x3f]
      %v309 = vld [vmem:[#allocation2] sm:$0xff]
      %v310 = vld [vmem:[#allocation2 + $0x8] sm:$0xff]
      %v311 = vld [vmem:[#allocation2 + $0x10] sm:$0xff]
      %v312 = vld [vmem:[#allocation2 + $0x18] sm:$0xff]
      %v313 = vld [vmem:[#allocation2 + $0x20] sm:$0xff]
      %v314 = vld [vmem:[#allocation2 + $0x28] sm:$0xff]
      %v315 = vld [vmem:[#allocation2 + $0x30] sm:$0xff]
      %v316 = vld [vmem:[#allocation2 + $0x38] sm:$0xff]
      %v317 = vld [vmem:[#allocation2 + $0x40] sm:$0xff]
      %v318 = vld [vmem:[#allocation2 + $0x48] sm:$0x3f]
      %v319 = vpack.c.bf16 %v310, %v309
      %v320 = vpack.c.bf16 %v312, %v311
      %v321 = vpack.c.bf16 %v314, %v313
      %v322 = vpack.c.bf16 %v316, %v315
      %v323 = vpack.c.bf16 %v318, %v317
      %v324 = vld [vmem:[#allocation2 + $0x1] sm:$0xff]
      %v325 = vld [vmem:[#allocation2 + $0x9] sm:$0xff]
      %v326 = vld [vmem:[#allocation2 + $0x11] sm:$0xff]
      %v327 = vld [vmem:[#allocation2 + $0x19] sm:$0xff]
      %v328 = vld [vmem:[#allocation2 + $0x21] sm:$0xff]
      %v329 = vld [vmem:[#allocation2 + $0x29] sm:$0xff]
      %v330 = vld [vmem:[#allocation2 + $0x31] sm:$0xff]
      %v331 = vld [vmem:[#allocation2 + $0x39] sm:$0xff]
      %v332 = vld [vmem:[#allocation2 + $0x41] sm:$0xff]
      %v333 = vld [vmem:[#allocation2 + $0x49] sm:$0x3f]
      %v334 = vpack.c.bf16 %v325, %v324
      %v335 = vpack.c.bf16 %v327, %v326
      %v336 = vpack.c.bf16 %v329, %v328
      %v337 = vpack.c.bf16 %v331, %v330
      %v338 = vpack.c.bf16 %v333, %v332
      %v339 = vld [vmem:[#allocation2 + $0x2] sm:$0xff]
      %v340 = vld [vmem:[#allocation2 + $0xa] sm:$0xff]
      %v341 = vld [vmem:[#allocation2 + $0x12] sm:$0xff]
      %v342 = vld [vmem:[#allocation2 + $0x1a] sm:$0xff]
      %v343 = vld [vmem:[#allocation2 + $0x22] sm:$0xff]
      %v344 = vld [vmem:[#allocation2 + $0x2a] sm:$0xff]
      %v345 = vld [vmem:[#allocation2 + $0x32] sm:$0xff]
      %v346 = vld [vmem:[#allocation2 + $0x3a] sm:$0xff]
      %v347 = vld [vmem:[#allocation2 + $0x42] sm:$0xff]
      %v348 = vld [vmem:[#allocation2 + $0x4a] sm:$0x3f]
      %v349 = vpack.c.bf16 %v340, %v339
      %v350 = vpack.c.bf16 %v342, %v341
      %v351 = vpack.c.bf16 %v344, %v343
      %v352 = vpack.c.bf16 %v346, %v345
      %v353 = vpack.c.bf16 %v348, %v347
      %v354 = vld [vmem:[#allocation2 + $0x4a] sm:$0xff]
      %v355 = vld [vmem:[#allocation2 + $0x52] sm:$0x3f]
      %v356 = vpack.c.bf16 %v341, %v340
      %v357 = vpack.c.bf16 %v343, %v342
      %v358 = vpack.c.bf16 %v345, %v344
      %v359 = vpack.c.bf16 %v347, %v346
      %v360 = vpack.c.bf16 %v355, %v354
      %v361 = vpack.c.bf16 %v300, %v299
      %v362 = vpack.c.bf16 %v302, %v301
      %v363 = vpack.c.bf16 %v304, %v303
      %v364 = vpack.c.bf16 %v306, %v305
      %v365 = vpack.c.bf16 %v308, %v307
      %v366 = vld [vmem:[#allocation2 + $0xc] sm:$0xff]
      %v367 = vld [vmem:[#allocation2 + $0x14] sm:$0xff]
      %v368 = vld [vmem:[#allocation2 + $0x1c] sm:$0xff]
      %v369 = vld [vmem:[#allocation2 + $0x24] sm:$0xff]
      %v370 = vld [vmem:[#allocation2 + $0x2c] sm:$0xff]
      %v371 = vld [vmem:[#allocation2 + $0x34] sm:$0xff]
      %v372 = vld [vmem:[#allocation2 + $0x3c] sm:$0xff]
      %v373 = vld [vmem:[#allocation2 + $0x44] sm:$0xff]
      %v374 = vld [vmem:[#allocation2 + $0x4c] sm:$0xff]
      %v375 = vld [vmem:[#allocation2 + $0x54] sm:$0x3f]
      %v376 = vpack.c.bf16 %v367, %v366
      %v377 = vpack.c.bf16 %v369, %v368
      %v378 = vpack.c.bf16 %v371, %v370
      %v379 = vpack.c.bf16 %v373, %v372
      %v380 = vpack.c.bf16 %v375, %v374
      %v381 = vld [vmem:[#allocation2 + $0x54] sm:$0xff]
      %v382 = vld [vmem:[#allocation2 + $0x5c] sm:$0x3f]
      %v383 = vpack.c.bf16 %v368, %v367
      %v384 = vpack.c.bf16 %v370, %v369
      %v385 = vpack.c.bf16 %v372, %v371
      %v386 = vpack.c.bf16 %v374, %v373
      %v387 = vpack.c.bf16 %v382, %v381
      %v388 = vld [vmem:[#allocation2 + $0x15] sm:$0xff]
      %v389 = vld [vmem:[#allocation2 + $0x1d] sm:$0xff]
      %v390 = vld [vmem:[#allocation2 + $0x25] sm:$0xff]
      %v391 = vld [vmem:[#allocation2 + $0x2d] sm:$0xff]
      %v392 = vld [vmem:[#allocation2 + $0x35] sm:$0xff]
      %v393 = vld [vmem:[#allocation2 + $0x3d] sm:$0xff]
      %v394 = vld [vmem:[#allocation2 + $0x45] sm:$0xff]
      %v395 = vld [vmem:[#allocation2 + $0x4d] sm:$0xff]
      %v396 = vld [vmem:[#allocation2 + $0x55] sm:$0xff]
      %v397 = vld [vmem:[#allocation2 + $0x5d] sm:$0x3f]
      %v398 = vpack.c.bf16 %v389, %v388
      %v399 = vpack.c.bf16 %v391, %v390
      %v400 = vpack.c.bf16 %v393, %v392
      %v401 = vpack.c.bf16 %v395, %v394
      %v402 = vpack.c.bf16 %v397, %v396
      %v403 = vld [vmem:[#allocation2 + $0x16] sm:$0xff]
      %v404 = vld [vmem:[#allocation2 + $0x1e] sm:$0xff]
      %v405 = vld [vmem:[#allocation2 + $0x26] sm:$0xff]
      %v406 = vld [vmem:[#allocation2 + $0x2e] sm:$0xff]
      %v407 = vld [vmem:[#allocation2 + $0x36] sm:$0xff]
      %v408 = vld [vmem:[#allocation2 + $0x3e] sm:$0xff]
      %v409 = vld [vmem:[#allocation2 + $0x46] sm:$0xff]
      %v410 = vld [vmem:[#allocation2 + $0x4e] sm:$0xff]
      %v411 = vld [vmem:[#allocation2 + $0x56] sm:$0xff]
      %v412 = vld [vmem:[#allocation2 + $0x5e] sm:$0x3f]
      %v413 = vpack.c.bf16 %v404, %v403
      %v414 = vpack.c.bf16 %v406, %v405
      %v415 = vpack.c.bf16 %v408, %v407
      %v416 = vpack.c.bf16 %v410, %v409
      %v417 = vpack.c.bf16 %v412, %v411
      %423 = vrot.lane.b32.xlu0 %v334, 8
      %v424 = vpop.permute.xlu0 %423
      %425 = vrot.lane.b32.xlu0 %v335, 8
      %v426 = vpop.permute.xlu0 %425
      %427 = vrot.lane.b32.xlu0 %v336, 8
      %v428 = vpop.permute.xlu0 %427
      %429 = vrot.lane.b32.xlu0 %v337, 8
      %v430 = vpop.permute.xlu0 %429
      %431 = vrot.lane.b32.xlu0 %v338, 8
      %v432 = vpop.permute.xlu0 %431
      %438 = vrot.lane.b32.xlu0 %v349, 16
      %v439 = vpop.permute.xlu0 %438
      %440 = vrot.lane.b32.xlu0 %v350, 16
      %v441 = vpop.permute.xlu0 %440
      %442 = vrot.lane.b32.xlu0 %v351, 16
      %v443 = vpop.permute.xlu0 %442
      %444 = vrot.lane.b32.xlu0 %v352, 16
      %v445 = vpop.permute.xlu0 %444
      %446 = vrot.lane.b32.xlu0 %v353, 16
      %v447 = vpop.permute.xlu0 %446
      %453 = vrot.lane.b32.xlu0 %v356, 24
      %v454 = vpop.permute.xlu0 %453
      %455 = vrot.lane.b32.xlu0 %v357, 24
      %v456 = vpop.permute.xlu0 %455
      %457 = vrot.lane.b32.xlu0 %v358, 24
      %v458 = vpop.permute.xlu0 %457
      %459 = vrot.lane.b32.xlu0 %v359, 24
      %v460 = vpop.permute.xlu0 %459
      %461 = vrot.lane.b32.xlu0 %v360, 24
      %v462 = vpop.permute.xlu0 %461
      %468 = vrot.lane.b32.xlu0 %v361, 32
      %v469 = vpop.permute.xlu0 %468
      %470 = vrot.lane.b32.xlu0 %v362, 32
      %v471 = vpop.permute.xlu0 %470
      %472 = vrot.lane.b32.xlu0 %v363, 32
      %v473 = vpop.permute.xlu0 %472
      %474 = vrot.lane.b32.xlu0 %v364, 32
      %v475 = vpop.permute.xlu0 %474
      %476 = vrot.lane.b32.xlu0 %v365, 32
      %v477 = vpop.permute.xlu0 %476
      %483 = vrot.lane.b32.xlu0 %v376, 40
      %v484 = vpop.permute.xlu0 %483
      %485 = vrot.lane.b32.xlu0 %v377, 40
      %v486 = vpop.permute.xlu0 %485
      %487 = vrot.lane.b32.xlu0 %v378, 40
      %v488 = vpop.permute.xlu0 %487
      %489 = vrot.lane.b32.xlu0 %v379, 40
      %v490 = vpop.permute.xlu0 %489
      %491 = vrot.lane.b32.xlu0 %v380, 40
      %v492 = vpop.permute.xlu0 %491
      %498 = vrot.lane.b32.xlu0 %v383, 48
      %v499 = vpop.permute.xlu0 %498
      %500 = vrot.lane.b32.xlu0 %v384, 48
      %v501 = vpop.permute.xlu0 %500
      %502 = vrot.lane.b32.xlu0 %v385, 48
      %v503 = vpop.permute.xlu0 %502
      %504 = vrot.lane.b32.xlu0 %v386, 48
      %v505 = vpop.permute.xlu0 %504
      %506 = vrot.lane.b32.xlu0 %v387, 48
      %v507 = vpop.permute.xlu0 %506
      %513 = vrot.lane.b32.xlu0 %v398, 56
      %v514 = vpop.permute.xlu0 %513
      %515 = vrot.lane.b32.xlu0 %v399, 56
      %v516 = vpop.permute.xlu0 %515
      %517 = vrot.lane.b32.xlu0 %v400, 56
      %v518 = vpop.permute.xlu0 %517
      %519 = vrot.lane.b32.xlu0 %v401, 56
      %v520 = vpop.permute.xlu0 %519
      %521 = vrot.lane.b32.xlu0 %v402, 56
      %v522 = vpop.permute.xlu0 %521
      %528 = vrot.lane.b32.xlu0 %v413, 64
      %v529 = vpop.permute.xlu0 %528
      %530 = vrot.lane.b32.xlu0 %v414, 64
      %v531 = vpop.permute.xlu0 %530
      %532 = vrot.lane.b32.xlu0 %v415, 64
      %v533 = vpop.permute.xlu0 %532
      %534 = vrot.lane.b32.xlu0 %v416, 64
      %v535 = vpop.permute.xlu0 %534
      %536 = vrot.lane.b32.xlu0 %v417, 64
      %v537 = vpop.permute.xlu0 %536
      %vm538 = vcmask 64512
      %v541 = vsel %vm538, %v319, %v424
      %v544 = vsel %vm538, %v320, %v426
      %v547 = vsel %vm538, %v321, %v428
      %v550 = vsel %vm538, %v322, %v430
      %v553 = vsel %vm538, %v323, %v432
      %vm554 = vcmask 130048
      %v556 = vsel %vm554, %v541, %v439
      %v558 = vsel %vm554, %v544, %v441
      %v560 = vsel %vm554, %v547, %v443
      %v562 = vsel %vm554, %v550, %v445
      %v564 = vsel %vm554, %v553, %v447
      %vm565 = vcmask 195584
      %v567 = vsel %vm565, %v556, %v454
      %v569 = vsel %vm565, %v558, %v456
      %v571 = vsel %vm565, %v560, %v458
      %v573 = vsel %vm565, %v562, %v460
      %v575 = vsel %vm565, %v564, %v462
      %vm576 = vcmask 261120
      %v578 = vsel %vm576, %v567, %v469
      %v580 = vsel %vm576, %v569, %v471
      %v582 = vsel %vm576, %v571, %v473
      %v584 = vsel %vm576, %v573, %v475
      %v586 = vsel %vm576, %v575, %v477
      %vm587 = vcmask 326656
      %v589 = vsel %vm587, %v578, %v484
      %v591 = vsel %vm587, %v580, %v486
      %v593 = vsel %vm587, %v582, %v488
      %v595 = vsel %vm587, %v584, %v490
      %v597 = vsel %vm587, %v586, %v492
      %vm598 = vcmask 392192
      %v600 = vsel %vm598, %v589, %v499
      %v602 = vsel %vm598, %v591, %v501
      %v604 = vsel %vm598, %v593, %v503
      %v606 = vsel %vm598, %v595, %v505
      %v608 = vsel %vm598, %v597, %v507
      %vm609 = vcmask 457728
      %v611 = vsel %vm609, %v600, %v514
      %v613 = vsel %vm609, %v602, %v516
      %v615 = vsel %vm609, %v604, %v518
      %v617 = vsel %vm609, %v606, %v520
      %v619 = vsel %vm609, %v608, %v522
      %vm620 = vcmask 523264
      %v622 = vsel %vm620, %v611, %v529
      %v624 = vsel %vm620, %v613, %v531
      %v626 = vsel %vm620, %v615, %v533
      %v628 = vsel %vm620, %v617, %v535
      %v630 = vsel %vm620, %v619, %v537
      %v631 = vld [vmem:[%s2] sm:$0xf]
      %v632 = vld [vmem:[%s2 + $0x4] sm:$0xf]
      %v633 = vld [vmem:[%s2 + $0x8] sm:$0xf]
      %v634 = vld [vmem:[%s2 + $0xc] sm:$0xf]
      %v635 = vld [vmem:[%s2 + $0x10] sm:$0xf]
      %v636 = vld [vmem:[%s2 + $0x14] sm:$0xf]
      %v637 = vld [vmem:[%s2 + $0x18] sm:$0xf]
      %v638 = vld [vmem:[%s2 + $0x1c] sm:$0xf]
      %v639 = vld [vmem:[%s2 + $0x20] sm:$0xf]
      %v649 = vunpack.c.l.b16 %v631
      %v650 = vunpack.c.l.b16 %v632
      %v651 = vunpack.c.l.b16 %v633
      %v652 = vunpack.c.l.b16 %v634
      %v653 = vunpack.c.l.b16 %v635
      %v654 = vunpack.c.l.b16 %v636
      %v655 = vunpack.c.l.b16 %v637
      %v656 = vunpack.c.l.b16 %v638
      %v657 = vunpack.c.l.b16 %v639
      %v658 = vpack.c.b16 %v650, %v649
      %v659 = vpack.c.b16 %v652, %v651
      %v660 = vpack.c.b16 %v654, %v653
      %v661 = vpack.c.b16 %v656, %v655
      %v662 = vpack.c.b16 %v657, %v657
      %vm667 = vcmask 588800
      %v668 = vsel %vm667, %v622, 0
      %v670 = vsel %vm667, %v624, 0
      %v672 = vsel %vm667, %v626, 0
      %v674 = vsel %vm667, %v628, 0
      %v676 = vsel %vm667, %v630, 0
      %vm678 = vcmask 1043456
      %v680 = vsel %vm678, %v662, 0
      %682 = vmatprep.subr.bf16.mxu0 0
      %683 = vmatpush1.bf16.msra.mxu0 %v658
      %684 = vmatprep.subr.bf16.mxu0 0
      %685 = vmatpush1.bf16.msra.mxu0 %v659
      %686 = vmatprep.subr.bf16.mxu0 0
      %687 = vmatpush1.bf16.msra.mxu0 %v660
      %688 = vmatprep.subr.bf16.mxu0 0
      %689 = vmatpush1.bf16.msra.mxu0 %v661
      %690 = vmatprep.subr.bf16.mxu0 0
      %691 = vmatpush1.bf16.msra.mxu0 %v680
      %692 = vmatprep.subr.bf16.mxu0 0
      %693 = vmatpush1.bf16.msra.mxu0 0
      %694 = vmatprep.subr.bf16.mxu0 0
      %695 = vmatpush1.bf16.msra.mxu0 0
      %696 = vmatprep.subr.bf16.mxu0 0
      %697 = vmatpush1.bf16.msra.mxu0 0
      %698 = vmatprep.subr.bf16.mxu0 0
      %699 = vmatpush1.bf16.msra.mxu0 0
      %700 = vmatprep.subr.bf16.mxu0 0
      %701 = vmatpush1.bf16.msra.mxu0 0
      %702 = vmatprep.subr.bf16.mxu0 0
      %703 = vmatpush1.bf16.msra.mxu0 0
      %704 = vmatprep.subr.bf16.mxu0 0
      %705 = vmatpush1.bf16.msra.mxu0 0
      %706 = vmatprep.subr.bf16.mxu0 0
      %707 = vmatpush1.bf16.msra.mxu0 0
      %708 = vmatprep.subr.bf16.mxu0 0
      %709 = vmatpush1.bf16.msra.mxu0 0
      %710 = vmatprep.subr.bf16.mxu0 0
      %711 = vmatpush1.bf16.msra.mxu0 0
      %712 = vmatprep.subr.bf16.mxu0 0
      %713 = vmatpush1.bf16.msra.mxu0 0
      %714 = vmatprep.mubr.bf16.mxu0 0
      %715 = vmatmul.mubr.bf16.gmra.mrb[0].mxu0 %v668
      %v716 = vpop.f32.mrb[0].mxu0
      %v717 = vadd.f32 0.0, %v716
      %v718 = vpop.f32.mrb[0].mxu0
      %v719 = vpop.f32.mrb[0].mxu0
      %v720 = vadd.f32 0.0, %v719
      %v721 = vpop.f32.mrb[0].mxu0
      %722 = vmatprep.mubr.bf16.mxu0 0
      %723 = vmatmul.mubr.bf16.gmra.mrb[0].mxu0 %v670
      %v724 = vpop.f32.mrb[0].mxu0
      %v725 = vadd.f32 0.0, %v724
      %v726 = vpop.f32.mrb[0].mxu0
      %v727 = vpop.f32.mrb[0].mxu0
      %v728 = vadd.f32 0.0, %v727
      %v729 = vpop.f32.mrb[0].mxu0
      %730 = vmatprep.mubr.bf16.mxu0 0
      %731 = vmatmul.mubr.bf16.gmra.mrb[0].mxu0 %v672
      %v732 = vpop.f32.mrb[0].mxu0
      %v733 = vadd.f32 0.0, %v732
      %v734 = vpop.f32.mrb[0].mxu0
      %v735 = vpop.f32.mrb[0].mxu0
      %v736 = vadd.f32 0.0, %v735
      %v737 = vpop.f32.mrb[0].mxu0
      %738 = vmatprep.mubr.bf16.mxu0 0
      %739 = vmatmul.mubr.bf16.gmra.mrb[0].mxu0 %v674
      %v740 = vpop.f32.mrb[0].mxu0
      %v741 = vadd.f32 0.0, %v740
      %v742 = vpop.f32.mrb[0].mxu0
      %v743 = vpop.f32.mrb[0].mxu0
      %v744 = vadd.f32 0.0, %v743
      %v745 = vpop.f32.mrb[0].mxu0
      %746 = vmatprep.mubr.bf16.mxu0 0
      %747 = vmatmul.mubr.bf16.gmra.mrb[0].mxu0 %v676
      %v748 = vpop.f32.mrb[0].mxu0
      %v749 = vadd.f32 0.0, %v748
      %v750 = vpop.f32.mrb[0].mxu0
      %v751 = vpop.f32.mrb[0].mxu0
      %v752 = vadd.f32 0.0, %v751
      %v753 = vpop.f32.mrb[0].mxu0
      %754 = vdwg.mxu0
      %vm765 = vcmask 1042432
      %v766 = vrot.slane %v717, 5
      %v767 = vrot.slane %v720, 5
      %v768 = vsel %vm765, %v766, %v767
      %v769 = vrot.slane %v725, 5
      %v770 = vsel %vm765, %v767, %v769
      %v771 = vrot.slane %v728, 5
      %v772 = vsel %vm765, %v769, %v771
      %v773 = vrot.slane %v733, 5
      %v774 = vsel %vm765, %v771, %v773
      %v775 = vrot.slane %v736, 5
      %v776 = vsel %vm765, %v773, %v775
      %v777 = vrot.slane %v741, 5
      %v778 = vsel %vm765, %v775, %v777
      %v779 = vrot.slane %v744, 5
      %v780 = vsel %vm765, %v777, %v779
      %v781 = vrot.slane %v749, 5
      %v782 = vsel %vm765, %v779, %v781
      %v783 = vrot.slane %v752, 5
      %v784 = vsel %vm765, %v781, %v783
      %v796 = vadd.f32 %v278, %v766
      %v797 = vadd.f32 %v279, %v768
      %v798 = vadd.f32 %v280, %v770
      %v799 = vadd.f32 %v281, %v772
      %v800 = vadd.f32 %v282, %v774
      %v801 = vadd.f32 %v283, %v776
      %v802 = vadd.f32 %v284, %v778
      %v803 = vadd.f32 %v285, %v780
      %v804 = vadd.f32 %v286, %v782
      %v805 = vadd.f32 %v287, %v784
      %v806 = vadd.f32 %v288, %v783
      %v807 = vxor.u32 %v796, 2147483648
      %v808 = vxor.u32 %v797, 2147483648
      %v809 = vxor.u32 %v798, 2147483648
      %v810 = vxor.u32 %v799, 2147483648
      %v811 = vxor.u32 %v800, 2147483648
      %v812 = vxor.u32 %v801, 2147483648
      %v813 = vxor.u32 %v802, 2147483648
      %v814 = vxor.u32 %v803, 2147483648
      %v815 = vxor.u32 %v804, 2147483648
      %v816 = vxor.u32 %v805, 2147483648
      %v817 = vxor.u32 %v806, 2147483648
      %v818 = vmul.f32 %v807, 1.442695
      %v819 = vpow.pop %v818
      %v820 = vmul.f32 %v808, 1.442695
      %v821 = vpow.pop %v820
      %v822 = vmul.f32 %v809, 1.442695
      %v823 = vpow.pop %v822
      %v824 = vmul.f32 %v810, 1.442695
      %v825 = vpow.pop %v824
      %v826 = vmul.f32 %v811, 1.442695
      %v827 = vpow.pop %v826
      %v828 = vmul.f32 %v812, 1.442695
      %v829 = vpow.pop %v828
      %v830 = vmul.f32 %v813, 1.442695
      %v831 = vpow.pop %v830
      %v832 = vmul.f32 %v814, 1.442695
      %v833 = vpow.pop %v832
      %v834 = vmul.f32 %v815, 1.442695
      %v835 = vpow.pop %v834
      %v836 = vmul.f32 %v816, 1.442695
      %v837 = vpow.pop %v836
      %v838 = vmul.f32 %v817, 1.442695
      %v839 = vpow.pop %v838
      %v840 = vadd.f32 %v819, 1.0
      %v841 = vadd.f32 %v821, 1.0
      %v842 = vadd.f32 %v823, 1.0
      %v843 = vadd.f32 %v825, 1.0
      %v844 = vadd.f32 %v827, 1.0
      %v845 = vadd.f32 %v829, 1.0
      %v846 = vadd.f32 %v831, 1.0
      %v847 = vadd.f32 %v833, 1.0
      %v848 = vadd.f32 %v835, 1.0
      %v849 = vadd.f32 %v837, 1.0
      %v850 = vadd.f32 %v839, 1.0
      %v851 = vrcp.pop %v840
      %v852 = vmul.f32 1.0, %v851
      %v853 = vrcp.pop %v841
      %v854 = vmul.f32 1.0, %v853
      %v855 = vrcp.pop %v842
      %v856 = vmul.f32 1.0, %v855
      %v857 = vrcp.pop %v843
      %v858 = vmul.f32 1.0, %v857
      %v859 = vrcp.pop %v844
      %v860 = vmul.f32 1.0, %v859
      %v861 = vrcp.pop %v845
      %v862 = vmul.f32 1.0, %v861
      %v863 = vrcp.pop %v846
      %v864 = vmul.f32 1.0, %v863
      %v865 = vrcp.pop %v847
      %v866 = vmul.f32 1.0, %v865
      %v867 = vrcp.pop %v848
      %v868 = vmul.f32 1.0, %v867
      %v869 = vrcp.pop %v849
      %v870 = vmul.f32 1.0, %v869
      %v871 = vrcp.pop %v850
      %v872 = vmul.f32 1.0, %v871
      %873 = vrot.lane.b32.xlu0 %v766, 120
      %v874 = vpop.permute.xlu0 %873
      %875 = vrot.lane.b32.xlu0 %v768, 120
      %v876 = vpop.permute.xlu0 %875
      %877 = vrot.lane.b32.xlu0 %v770, 120
      %v878 = vpop.permute.xlu0 %877
      %879 = vrot.lane.b32.xlu0 %v772, 120
      %v880 = vpop.permute.xlu0 %879
      %881 = vrot.lane.b32.xlu0 %v774, 120
      %v882 = vpop.permute.xlu0 %881
      %883 = vrot.lane.b32.xlu0 %v776, 120
      %v884 = vpop.permute.xlu0 %883
      %885 = vrot.lane.b32.xlu0 %v778, 120
      %v886 = vpop.permute.xlu0 %885
      %887 = vrot.lane.b32.xlu0 %v780, 120
      %v888 = vpop.permute.xlu0 %887
      %889 = vrot.lane.b32.xlu0 %v782, 120
      %v890 = vpop.permute.xlu0 %889
      %891 = vrot.lane.b32.xlu0 %v784, 120
      %v892 = vpop.permute.xlu0 %891
      %893 = vrot.lane.b32.xlu0 %v783, 120
      %v894 = vpop.permute.xlu0 %893
      %v906 = vadd.f32 %v278, %v874
      %v907 = vadd.f32 %v279, %v876
      %v908 = vadd.f32 %v280, %v878
      %v909 = vadd.f32 %v281, %v880
      %v910 = vadd.f32 %v282, %v882
      %v911 = vadd.f32 %v283, %v884
      %v912 = vadd.f32 %v284, %v886
      %v913 = vadd.f32 %v285, %v888
      %v914 = vadd.f32 %v286, %v890
      %v915 = vadd.f32 %v287, %v892
      %v916 = vadd.f32 %v288, %v894
      %v917 = vxor.u32 %v906, 2147483648
      %v918 = vxor.u32 %v907, 2147483648
      %v919 = vxor.u32 %v908, 2147483648
      %v920 = vxor.u32 %v909, 2147483648
      %v921 = vxor.u32 %v910, 2147483648
      %v922 = vxor.u32 %v911, 2147483648
      %v923 = vxor.u32 %v912, 2147483648
      %v924 = vxor.u32 %v913, 2147483648
      %v925 = vxor.u32 %v914, 2147483648
      %v926 = vxor.u32 %v915, 2147483648
      %v927 = vxor.u32 %v916, 2147483648
      %v928 = vmul.f32 %v917, 1.442695
      %v929 = vpow.pop %v928
      %v930 = vmul.f32 %v918, 1.442695
      %v931 = vpow.pop %v930
      %v932 = vmul.f32 %v919, 1.442695
      %v933 = vpow.pop %v932
      %v934 = vmul.f32 %v920, 1.442695
      %v935 = vpow.pop %v934
      %v936 = vmul.f32 %v921, 1.442695
      %v937 = vpow.pop %v936
      %v938 = vmul.f32 %v922, 1.442695
      %v939 = vpow.pop %v938
      %v940 = vmul.f32 %v923, 1.442695
      %v941 = vpow.pop %v940
      %v942 = vmul.f32 %v924, 1.442695
      %v943 = vpow.pop %v942
      %v944 = vmul.f32 %v925, 1.442695
      %v945 = vpow.pop %v944
      %v946 = vmul.f32 %v926, 1.442695
      %v947 = vpow.pop %v946
      %v948 = vmul.f32 %v927, 1.442695
      %v949 = vpow.pop %v948
      %v950 = vadd.f32 %v929, 1.0
      %v951 = vadd.f32 %v931, 1.0
      %v952 = vadd.f32 %v933, 1.0
      %v953 = vadd.f32 %v935, 1.0
      %v954 = vadd.f32 %v937, 1.0
      %v955 = vadd.f32 %v939, 1.0
      %v956 = vadd.f32 %v941, 1.0
      %v957 = vadd.f32 %v943, 1.0
      %v958 = vadd.f32 %v945, 1.0
      %v959 = vadd.f32 %v947, 1.0
      %v960 = vadd.f32 %v949, 1.0
      %v961 = vrcp.pop %v950
      %v962 = vmul.f32 1.0, %v961
      %v963 = vrcp.pop %v951
      %v964 = vmul.f32 1.0, %v963
      %v965 = vrcp.pop %v952
      %v966 = vmul.f32 1.0, %v965
      %v967 = vrcp.pop %v953
      %v968 = vmul.f32 1.0, %v967
      %v969 = vrcp.pop %v954
      %v970 = vmul.f32 1.0, %v969
      %v971 = vrcp.pop %v955
      %v972 = vmul.f32 1.0, %v971
      %v973 = vrcp.pop %v956
      %v974 = vmul.f32 1.0, %v973
      %v975 = vrcp.pop %v957
      %v976 = vmul.f32 1.0, %v975
      %v977 = vrcp.pop %v958
      %v978 = vmul.f32 1.0, %v977
      %v979 = vrcp.pop %v959
      %v980 = vmul.f32 1.0, %v979
      %v981 = vrcp.pop %v960
      %v982 = vmul.f32 1.0, %v981
      %v993 = vrot.slane %v299, 5
      %v994 = vrot.slane %v300, 5
      %v995 = vsel %vm765, %v993, %v994
      %v996 = vrot.slane %v301, 5
      %v997 = vsel %vm765, %v994, %v996
      %v998 = vrot.slane %v302, 5
      %v999 = vsel %vm765, %v996, %v998
      %v1000 = vrot.slane %v303, 5
      %v1001 = vsel %vm765, %v998, %v1000
      %v1002 = vrot.slane %v304, 5
      %v1003 = vsel %vm765, %v1000, %v1002
      %v1004 = vrot.slane %v305, 5
      %v1005 = vsel %vm765, %v1002, %v1004
      %v1006 = vrot.slane %v306, 5
      %v1007 = vsel %vm765, %v1004, %v1006
      %v1008 = vrot.slane %v307, 5
      %v1009 = vsel %vm765, %v1006, %v1008
      %v1010 = vrot.slane %v308, 5
      %v1011 = vsel %vm765, %v1008, %v1010
      %v1023 = vmul.f32 %v962, %v993
      %v1024 = vmul.f32 %v964, %v995
      %v1025 = vmul.f32 %v966, %v997
      %v1026 = vmul.f32 %v968, %v999
      %v1027 = vmul.f32 %v970, %v1001
      %v1028 = vmul.f32 %v972, %v1003
      %v1029 = vmul.f32 %v974, %v1005
      %v1030 = vmul.f32 %v976, %v1007
      %v1031 = vmul.f32 %v978, %v1009
      %v1032 = vmul.f32 %v980, %v1011
      %v1033 = vmul.f32 %v982, %v1010
      %vm1034 = vcmask 64515
      %1035 = vst.msk [vmem:[#allocation3 + $0x8] sm:$0xf8] %vm1034, %v1023
      %1036 = vst.msk [vmem:[#allocation3 + $0x10] sm:$0xff] %vm538, %v1024
      %1037 = vst.msk [vmem:[#allocation3 + $0x18] sm:$0xff] %vm538, %v1025
      %1038 = vst.msk [vmem:[#allocation3 + $0x20] sm:$0xff] %vm538, %v1026
      %1039 = vst.msk [vmem:[#allocation3 + $0x28] sm:$0xff] %vm538, %v1027
      %1040 = vst.msk [vmem:[#allocation3 + $0x30] sm:$0xff] %vm538, %v1028
      %1041 = vst.msk [vmem:[#allocation3 + $0x38] sm:$0xff] %vm538, %v1029
      %1042 = vst.msk [vmem:[#allocation3 + $0x40] sm:$0xff] %vm538, %v1030
      %1043 = vst.msk [vmem:[#allocation3 + $0x48] sm:$0xff] %vm538, %v1031
      %1044 = vst.msk [vmem:[#allocation3 + $0x50] sm:$0xff] %vm538, %v1032
      %vm1045 = vcmask 57344
      %1046 = vst.msk [vmem:[#allocation3 + $0x58] sm:$0x1] %vm1045, %v1033
      %v1047 = vld [vmem:[#allocation3] sm:$0xff]
      %v1048 = vld [vmem:[#allocation3 + $0x8] sm:$0xff]
      %v1049 = vld [vmem:[#allocation3 + $0x10] sm:$0xff]
      %v1050 = vld [vmem:[#allocation3 + $0x18] sm:$0xff]
      %v1051 = vld [vmem:[#allocation3 + $0x20] sm:$0xff]
      %v1052 = vld [vmem:[#allocation3 + $0x28] sm:$0xff]
      %v1053 = vld [vmem:[#allocation3 + $0x30] sm:$0xff]
      %v1054 = vld [vmem:[#allocation3 + $0x38] sm:$0xff]
      %v1055 = vld [vmem:[#allocation3 + $0x40] sm:$0xff]
      %v1056 = vld [vmem:[#allocation3 + $0x48] sm:$0x3f]
      %v1057 = vpack.c.bf16 %v1048, %v1047
      %v1058 = vpack.c.bf16 %v1050, %v1049
      %v1059 = vpack.c.bf16 %v1052, %v1051
      %v1060 = vpack.c.bf16 %v1054, %v1053
      %v1061 = vpack.c.bf16 %v1056, %v1055
      %v1062 = vld [vmem:[#allocation3 + $0x1] sm:$0xff]
      %v1063 = vld [vmem:[#allocation3 + $0x9] sm:$0xff]
      %v1064 = vld [vmem:[#allocation3 + $0x11] sm:$0xff]
      %v1065 = vld [vmem:[#allocation3 + $0x19] sm:$0xff]
      %v1066 = vld [vmem:[#allocation3 + $0x21] sm:$0xff]
      %v1067 = vld [vmem:[#allocation3 + $0x29] sm:$0xff]
      %v1068 = vld [vmem:[#allocation3 + $0x31] sm:$0xff]
      %v1069 = vld [vmem:[#allocation3 + $0x39] sm:$0xff]
      %v1070 = vld [vmem:[#allocation3 + $0x41] sm:$0xff]
      %v1071 = vld [vmem:[#allocation3 + $0x49] sm:$0x3f]
      %v1072 = vpack.c.bf16 %v1063, %v1062
      %v1073 = vpack.c.bf16 %v1065, %v1064
      %v1074 = vpack.c.bf16 %v1067, %v1066
      %v1075 = vpack.c.bf16 %v1069, %v1068
      %v1076 = vpack.c.bf16 %v1071, %v1070
      %v1077 = vld [vmem:[#allocation3 + $0x2] sm:$0xff]
      %v1078 = vld [vmem:[#allocation3 + $0xa] sm:$0xff]
      %v1079 = vld [vmem:[#allocation3 + $0x12] sm:$0xff]
      %v1080 = vld [vmem:[#allocation3 + $0x1a] sm:$0xff]
      %v1081 = vld [vmem:[#allocation3 + $0x22] sm:$0xff]
      %v1082 = vld [vmem:[#allocation3 + $0x2a] sm:$0xff]
      %v1083 = vld [vmem:[#allocation3 + $0x32] sm:$0xff]
      %v1084 = vld [vmem:[#allocation3 + $0x3a] sm:$0xff]
      %v1085 = vld [vmem:[#allocation3 + $0x42] sm:$0xff]
      %v1086 = vld [vmem:[#allocation3 + $0x4a] sm:$0x3f]
      %v1087 = vpack.c.bf16 %v1078, %v1077
      %v1088 = vpack.c.bf16 %v1080, %v1079
      %v1089 = vpack.c.bf16 %v1082, %v1081
      %v1090 = vpack.c.bf16 %v1084, %v1083
      %v1091 = vpack.c.bf16 %v1086, %v1085
      %v1092 = vld [vmem:[#allocation3 + $0x4a] sm:$0xff]
      %v1093 = vld [vmem:[#allocation3 + $0x52] sm:$0x3f]
      %v1094 = vpack.c.bf16 %v1079, %v1078
      %v1095 = vpack.c.bf16 %v1081, %v1080
      %v1096 = vpack.c.bf16 %v1083, %v1082
      %v1097 = vpack.c.bf16 %v1085, %v1084
      %v1098 = vpack.c.bf16 %v1093, %v1092
      %v1099 = vld [vmem:[#allocation3 + $0xb] sm:$0xff]
      %v1100 = vld [vmem:[#allocation3 + $0x13] sm:$0xff]
      %v1101 = vld [vmem:[#allocation3 + $0x1b] sm:$0xff]
      %v1102 = vld [vmem:[#allocation3 + $0x23] sm:$0xff]
      %v1103 = vld [vmem:[#allocation3 + $0x2b] sm:$0xff]
      %v1104 = vld [vmem:[#allocation3 + $0x33] sm:$0xff]
      %v1105 = vld [vmem:[#allocation3 + $0x3b] sm:$0xff]
      %v1106 = vld [vmem:[#allocation3 + $0x43] sm:$0xff]
      %v1107 = vld [vmem:[#allocation3 + $0x4b] sm:$0xff]
      %v1108 = vld [vmem:[#allocation3 + $0x53] sm:$0x3f]
      %v1109 = vpack.c.bf16 %v1100, %v1099
      %v1110 = vpack.c.bf16 %v1102, %v1101
      %v1111 = vpack.c.bf16 %v1104, %v1103
      %v1112 = vpack.c.bf16 %v1106, %v1105
      %v1113 = vpack.c.bf16 %v1108, %v1107
      %v1114 = vld [vmem:[#allocation3 + $0xc] sm:$0xff]
      %v1115 = vld [vmem:[#allocation3 + $0x14] sm:$0xff]
      %v1116 = vld [vmem:[#allocation3 + $0x1c] sm:$0xff]
      %v1117 = vld [vmem:[#allocation3 + $0x24] sm:$0xff]
      %v1118 = vld [vmem:[#allocation3 + $0x2c] sm:$0xff]
      %v1119 = vld [vmem:[#allocation3 + $0x34] sm:$0xff]
      %v1120 = vld [vmem:[#allocation3 + $0x3c] sm:$0xff]
      %v1121 = vld [vmem:[#allocation3 + $0x44] sm:$0xff]
      %v1122 = vld [vmem:[#allocation3 + $0x4c] sm:$0xff]
      %v1123 = vld [vmem:[#allocation3 + $0x54] sm:$0x3f]
      %v1124 = vpack.c.bf16 %v1115, %v1114
      %v1125 = vpack.c.bf16 %v1117, %v1116
      %v1126 = vpack.c.bf16 %v1119, %v1118
      %v1127 = vpack.c.bf16 %v1121, %v1120
      %v1128 = vpack.c.bf16 %v1123, %v1122
      %v1129 = vld [vmem:[#allocation3 + $0x54] sm:$0xff]
      %v1130 = vld [vmem:[#allocation3 + $0x5c] sm:$0x3f]
      %v1131 = vpack.c.bf16 %v1116, %v1115
      %v1132 = vpack.c.bf16 %v1118, %v1117
      %v1133 = vpack.c.bf16 %v1120, %v1119
      %v1134 = vpack.c.bf16 %v1122, %v1121
      %v1135 = vpack.c.bf16 %v1130, %v1129
      %v1136 = vld [vmem:[#allocation3 + $0x15] sm:$0xff]
      %v1137 = vld [vmem:[#allocation3 + $0x1d] sm:$0xff]
      %v1138 = vld [vmem:[#allocation3 + $0x25] sm:$0xff]
      %v1139 = vld [vmem:[#allocation3 + $0x2d] sm:$0xff]
      %v1140 = vld [vmem:[#allocation3 + $0x35] sm:$0xff]
      %v1141 = vld [vmem:[#allocation3 + $0x3d] sm:$0xff]
      %v1142 = vld [vmem:[#allocation3 + $0x45] sm:$0xff]
      %v1143 = vld [vmem:[#allocation3 + $0x4d] sm:$0xff]
      %v1144 = vld [vmem:[#allocation3 + $0x55] sm:$0xff]
      %v1145 = vld [vmem:[#allocation3 + $0x5d] sm:$0x3f]
      %v1146 = vpack.c.bf16 %v1137, %v1136
      %v1147 = vpack.c.bf16 %v1139, %v1138
      %v1148 = vpack.c.bf16 %v1141, %v1140
      %v1149 = vpack.c.bf16 %v1143, %v1142
      %v1150 = vpack.c.bf16 %v1145, %v1144
      %v1151 = vld [vmem:[#allocation3 + $0x16] sm:$0xff]
      %v1152 = vld [vmem:[#allocation3 + $0x1e] sm:$0xff]
      %v1153 = vld [vmem:[#allocation3 + $0x26] sm:$0xff]
      %v1154 = vld [vmem:[#allocation3 + $0x2e] sm:$0xff]
      %v1155 = vld [vmem:[#allocation3 + $0x36] sm:$0xff]
      %v1156 = vld [vmem:[#allocation3 + $0x3e] sm:$0xff]
      %v1157 = vld [vmem:[#allocation3 + $0x46] sm:$0xff]
      %v1158 = vld [vmem:[#allocation3 + $0x4e] sm:$0xff]
      %v1159 = vld [vmem:[#allocation3 + $0x56] sm:$0xff]
      %v1160 = vld [vmem:[#allocation3 + $0x5e] sm:$0x3f]
      %v1161 = vpack.c.bf16 %v1152, %v1151
      %v1162 = vpack.c.bf16 %v1154, %v1153
      %v1163 = vpack.c.bf16 %v1156, %v1155
      %v1164 = vpack.c.bf16 %v1158, %v1157
      %v1165 = vpack.c.bf16 %v1160, %v1159
      %1171 = vrot.lane.b32.xlu0 %v1072, 8
      %v1172 = vpop.permute.xlu0 %1171
      %1173 = vrot.lane.b32.xlu0 %v1073, 8
      %v1174 = vpop.permute.xlu0 %1173
      %1175 = vrot.lane.b32.xlu0 %v1074, 8
      %v1176 = vpop.permute.xlu0 %1175
      %1177 = vrot.lane.b32.xlu0 %v1075, 8
      %v1178 = vpop.permute.xlu0 %1177
      %1179 = vrot.lane.b32.xlu0 %v1076, 8
      %v1180 = vpop.permute.xlu0 %1179
      %1186 = vrot.lane.b32.xlu0 %v1087, 16
      %v1187 = vpop.permute.xlu0 %1186
      %1188 = vrot.lane.b32.xlu0 %v1088, 16
      %v1189 = vpop.permute.xlu0 %1188
      %1190 = vrot.lane.b32.xlu0 %v1089, 16
      %v1191 = vpop.permute.xlu0 %1190
      %1192 = vrot.lane.b32.xlu0 %v1090, 16
      %v1193 = vpop.permute.xlu0 %1192
      %1194 = vrot.lane.b32.xlu0 %v1091, 16
      %v1195 = vpop.permute.xlu0 %1194
      %1201 = vrot.lane.b32.xlu0 %v1094, 24
      %v1202 = vpop.permute.xlu0 %1201
      %1203 = vrot.lane.b32.xlu0 %v1095, 24
      %v1204 = vpop.permute.xlu0 %1203
      %1205 = vrot.lane.b32.xlu0 %v1096, 24
      %v1206 = vpop.permute.xlu0 %1205
      %1207 = vrot.lane.b32.xlu0 %v1097, 24
      %v1208 = vpop.permute.xlu0 %1207
      %1209 = vrot.lane.b32.xlu0 %v1098, 24
      %v1210 = vpop.permute.xlu0 %1209
      %1216 = vrot.lane.b32.xlu0 %v1109, 32
      %v1217 = vpop.permute.xlu0 %1216
      %1218 = vrot.lane.b32.xlu0 %v1110, 32
      %v1219 = vpop.permute.xlu0 %1218
      %1220 = vrot.lane.b32.xlu0 %v1111, 32
      %v1221 = vpop.permute.xlu0 %1220
      %1222 = vrot.lane.b32.xlu0 %v1112, 32
      %v1223 = vpop.permute.xlu0 %1222
      %1224 = vrot.lane.b32.xlu0 %v1113, 32
      %v1225 = vpop.permute.xlu0 %1224
      %1231 = vrot.lane.b32.xlu0 %v1124, 40
      %v1232 = vpop.permute.xlu0 %1231
      %1233 = vrot.lane.b32.xlu0 %v1125, 40
      %v1234 = vpop.permute.xlu0 %1233
      %1235 = vrot.lane.b32.xlu0 %v1126, 40
      %v1236 = vpop.permute.xlu0 %1235
      %1237 = vrot.lane.b32.xlu0 %v1127, 40
      %v1238 = vpop.permute.xlu0 %1237
      %1239 = vrot.lane.b32.xlu0 %v1128, 40
      %v1240 = vpop.permute.xlu0 %1239
      %1246 = vrot.lane.b32.xlu0 %v1131, 48
      %v1247 = vpop.permute.xlu0 %1246
      %1248 = vrot.lane.b32.xlu0 %v1132, 48
      %v1249 = vpop.permute.xlu0 %1248
      %1250 = vrot.lane.b32.xlu0 %v1133, 48
      %v1251 = vpop.permute.xlu0 %1250
      %1252 = vrot.lane.b32.xlu0 %v1134, 48
      %v1253 = vpop.permute.xlu0 %1252
      %1254 = vrot.lane.b32.xlu0 %v1135, 48
      %v1255 = vpop.permute.xlu0 %1254
      %1261 = vrot.lane.b32.xlu0 %v1146, 56
      %v1262 = vpop.permute.xlu0 %1261
      %1263 = vrot.lane.b32.xlu0 %v1147, 56
      %v1264 = vpop.permute.xlu0 %1263
      %1265 = vrot.lane.b32.xlu0 %v1148, 56
      %v1266 = vpop.permute.xlu0 %1265
      %1267 = vrot.lane.b32.xlu0 %v1149, 56
      %v1268 = vpop.permute.xlu0 %1267
      %1269 = vrot.lane.b32.xlu0 %v1150, 56
      %v1270 = vpop.permute.xlu0 %1269
      %1276 = vrot.lane.b32.xlu0 %v1161, 64
      %v1277 = vpop.permute.xlu0 %1276
      %1278 = vrot.lane.b32.xlu0 %v1162, 64
      %v1279 = vpop.permute.xlu0 %1278
      %1280 = vrot.lane.b32.xlu0 %v1163, 64
      %v1281 = vpop.permute.xlu0 %1280
      %1282 = vrot.lane.b32.xlu0 %v1164, 64
      %v1283 = vpop.permute.xlu0 %1282
      %1284 = vrot.lane.b32.xlu0 %v1165, 64
      %v1285 = vpop.permute.xlu0 %1284
      %v1288 = vsel %vm538, %v1057, %v1172
      %v1291 = vsel %vm538, %v1058, %v1174
      %v1294 = vsel %vm538, %v1059, %v1176
      %v1297 = vsel %vm538, %v1060, %v1178
      %v1300 = vsel %vm538, %v1061, %v1180
      %v1302 = vsel %vm554, %v1288, %v1187
      %v1304 = vsel %vm554, %v1291, %v1189
      %v1306 = vsel %vm554, %v1294, %v1191
      %v1308 = vsel %vm554, %v1297, %v1193
      %v1310 = vsel %vm554, %v1300, %v1195
      %v1312 = vsel %vm565, %v1302, %v1202
      %v1314 = vsel %vm565, %v1304, %v1204
      %v1316 = vsel %vm565, %v1306, %v1206
      %v1318 = vsel %vm565, %v1308, %v1208
      %v1320 = vsel %vm565, %v1310, %v1210
      %v1322 = vsel %vm576, %v1312, %v1217
      %v1324 = vsel %vm576, %v1314, %v1219
      %v1326 = vsel %vm576, %v1316, %v1221
      %v1328 = vsel %vm576, %v1318, %v1223
      %v1330 = vsel %vm576, %v1320, %v1225
      %v1332 = vsel %vm587, %v1322, %v1232
      %v1334 = vsel %vm587, %v1324, %v1234
      %v1336 = vsel %vm587, %v1326, %v1236
      %v1338 = vsel %vm587, %v1328, %v1238
      %v1340 = vsel %vm587, %v1330, %v1240
      %v1342 = vsel %vm598, %v1332, %v1247
      %v1344 = vsel %vm598, %v1334, %v1249
      %v1346 = vsel %vm598, %v1336, %v1251
      %v1348 = vsel %vm598, %v1338, %v1253
      %v1350 = vsel %vm598, %v1340, %v1255
      %v1352 = vsel %vm609, %v1342, %v1262
      %v1354 = vsel %vm609, %v1344, %v1264
      %v1356 = vsel %vm609, %v1346, %v1266
      %v1358 = vsel %vm609, %v1348, %v1268
      %v1360 = vsel %vm609, %v1350, %v1270
      %v1362 = vsel %vm620, %v1352, %v1277
      %v1364 = vsel %vm620, %v1354, %v1279
      %v1366 = vsel %vm620, %v1356, %v1281
      %v1368 = vsel %vm620, %v1358, %v1283
      %v1370 = vsel %vm620, %v1360, %v1285
      %v1371 = vld [vmem:[%s3] sm:$0xf]
      %v1372 = vld [vmem:[%s3 + $0x4] sm:$0xf]
      %v1373 = vld [vmem:[%s3 + $0x8] sm:$0xf]
      %v1374 = vld [vmem:[%s3 + $0xc] sm:$0xf]
      %v1375 = vld [vmem:[%s3 + $0x10] sm:$0xf]
      %v1376 = vld [vmem:[%s3 + $0x14] sm:$0xf]
      %v1377 = vld [vmem:[%s3 + $0x18] sm:$0xf]
      %v1378 = vld [vmem:[%s3 + $0x1c] sm:$0xf]
      %v1379 = vld [vmem:[%s3 + $0x20] sm:$0xf]
      %v1389 = vunpack.c.l.b16 %v1371
      %v1390 = vunpack.c.l.b16 %v1372
      %v1391 = vunpack.c.l.b16 %v1373
      %v1392 = vunpack.c.l.b16 %v1374
      %v1393 = vunpack.c.l.b16 %v1375
      %v1394 = vunpack.c.l.b16 %v1376
      %v1395 = vunpack.c.l.b16 %v1377
      %v1396 = vunpack.c.l.b16 %v1378
      %v1397 = vunpack.c.l.b16 %v1379
      %v1398 = vpack.c.b16 %v1390, %v1389
      %v1399 = vpack.c.b16 %v1392, %v1391
      %v1400 = vpack.c.b16 %v1394, %v1393
      %v1401 = vpack.c.b16 %v1396, %v1395
      %v1402 = vpack.c.b16 %v1397, %v1397
      %v1407 = vsel %vm667, %v1362, 0
      %v1409 = vsel %vm667, %v1364, 0
      %v1411 = vsel %vm667, %v1366, 0
      %v1413 = vsel %vm667, %v1368, 0
      %v1415 = vsel %vm667, %v1370, 0
      %v1418 = vsel %vm678, %v1402, 0
      %1420 = vmatprep.subr.bf16.mxu0 0
      %1421 = vmatpush1.bf16.msra.mxu0 %v1398
      %1422 = vmatprep.subr.bf16.mxu0 0
      %1423 = vmatpush1.bf16.msra.mxu0 %v1399
      %1424 = vmatprep.subr.bf16.mxu0 0
      %1425 = vmatpush1.bf16.msra.mxu0 %v1400
      %1426 = vmatprep.subr.bf16.mxu0 0
      %1427 = vmatpush1.bf16.msra.mxu0 %v1401
      %1428 = vmatprep.subr.bf16.mxu0 0
      %1429 = vmatpush1.bf16.msra.mxu0 %v1418
      %1430 = vmatprep.subr.bf16.mxu0 0
      %1431 = vmatpush1.bf16.msra.mxu0 0
      %1432 = vmatprep.subr.bf16.mxu0 0
      %1433 = vmatpush1.bf16.msra.mxu0 0
      %1434 = vmatprep.subr.bf16.mxu0 0
      %1435 = vmatpush1.bf16.msra.mxu0 0
      %1436 = vmatprep.subr.bf16.mxu0 0
      %1437 = vmatpush1.bf16.msra.mxu0 0
      %1438 = vmatprep.subr.bf16.mxu0 0
      %1439 = vmatpush1.bf16.msra.mxu0 0
      %1440 = vmatprep.subr.bf16.mxu0 0
      %1441 = vmatpush1.bf16.msra.mxu0 0
      %1442 = vmatprep.subr.bf16.mxu0 0
      %1443 = vmatpush1.bf16.msra.mxu0 0
      %1444 = vmatprep.subr.bf16.mxu0 0
      %1445 = vmatpush1.bf16.msra.mxu0 0
      %1446 = vmatprep.subr.bf16.mxu0 0
      %1447 = vmatpush1.bf16.msra.mxu0 0
      %1448 = vmatprep.subr.bf16.mxu0 0
      %1449 = vmatpush1.bf16.msra.mxu0 0
      %1450 = vmatprep.subr.bf16.mxu0 0
      %1451 = vmatpush1.bf16.msra.mxu0 0
      %1452 = vmatprep.mubr.bf16.mxu0 0
      %1453 = vmatmul.mubr.bf16.gmra.mrb[0].mxu0 %v1407
      %v1454 = vpop.f32.mrb[0].mxu0
      %v1455 = vadd.f32 0.0, %v1454
      %v1456 = vpop.f32.mrb[0].mxu0
      %v1457 = vpop.f32.mrb[0].mxu0
      %v1458 = vadd.f32 0.0, %v1457
      %v1459 = vpop.f32.mrb[0].mxu0
      %1460 = vmatprep.mubr.bf16.mxu0 0
      %1461 = vmatmul.mubr.bf16.gmra.mrb[0].mxu0 %v1409
      %v1462 = vpop.f32.mrb[0].mxu0
      %v1463 = vadd.f32 0.0, %v1462
      %v1464 = vpop.f32.mrb[0].mxu0
      %v1465 = vpop.f32.mrb[0].mxu0
      %v1466 = vadd.f32 0.0, %v1465
      %v1467 = vpop.f32.mrb[0].mxu0
      %1468 = vmatprep.mubr.bf16.mxu0 0
      %1469 = vmatmul.mubr.bf16.gmra.mrb[0].mxu0 %v1411
      %v1470 = vpop.f32.mrb[0].mxu0
      %v1471 = vadd.f32 0.0, %v1470
      %v1472 = vpop.f32.mrb[0].mxu0
      %v1473 = vpop.f32.mrb[0].mxu0
      %v1474 = vadd.f32 0.0, %v1473
      %v1475 = vpop.f32.mrb[0].mxu0
      %1476 = vmatprep.mubr.bf16.mxu0 0
      %1477 = vmatmul.mubr.bf16.gmra.mrb[0].mxu0 %v1413
      %v1478 = vpop.f32.mrb[0].mxu0
      %v1479 = vadd.f32 0.0, %v1478
      %v1480 = vpop.f32.mrb[0].mxu0
      %v1481 = vpop.f32.mrb[0].mxu0
      %v1482 = vadd.f32 0.0, %v1481
      %v1483 = vpop.f32.mrb[0].mxu0
      %1484 = vmatprep.mubr.bf16.mxu0 0
      %1485 = vmatmul.mubr.bf16.gmra.mrb[0].mxu0 %v1415
      %v1486 = vpop.f32.mrb[0].mxu0
      %v1487 = vadd.f32 0.0, %v1486
      %v1488 = vpop.f32.mrb[0].mxu0
      %v1489 = vpop.f32.mrb[0].mxu0
      %v1490 = vadd.f32 0.0, %v1489
      %v1491 = vpop.f32.mrb[0].mxu0
      %1492 = vdwg.mxu0
      %v1503 = vrot.slane %v1455, 5
      %v1504 = vrot.slane %v1458, 5
      %v1505 = vsel %vm765, %v1503, %v1504
      %v1506 = vrot.slane %v1463, 5
      %v1507 = vsel %vm765, %v1504, %v1506
      %v1508 = vrot.slane %v1466, 5
      %v1509 = vsel %vm765, %v1506, %v1508
      %v1510 = vrot.slane %v1471, 5
      %v1511 = vsel %vm765, %v1508, %v1510
      %v1512 = vrot.slane %v1474, 5
      %v1513 = vsel %vm765, %v1510, %v1512
      %v1514 = vrot.slane %v1479, 5
      %v1515 = vsel %vm765, %v1512, %v1514
      %v1516 = vrot.slane %v1482, 5
      %v1517 = vsel %vm765, %v1514, %v1516
      %v1518 = vrot.slane %v1487, 5
      %v1519 = vsel %vm765, %v1516, %v1518
      %v1520 = vrot.slane %v1490, 5
      %v1521 = vsel %vm765, %v1518, %v1520
      %v1533 = vadd.f32 %v278, %v1503
      %v1534 = vadd.f32 %v279, %v1505
      %v1535 = vadd.f32 %v280, %v1507
      %v1536 = vadd.f32 %v281, %v1509
      %v1537 = vadd.f32 %v282, %v1511
      %v1538 = vadd.f32 %v283, %v1513
      %v1539 = vadd.f32 %v284, %v1515
      %v1540 = vadd.f32 %v285, %v1517
      %v1541 = vadd.f32 %v286, %v1519
      %v1542 = vadd.f32 %v287, %v1521
      %v1543 = vadd.f32 %v288, %v1520
      %v1544 = vtanh.pop %v1533
      %v1545 = vtanh.pop %v1534
      %v1546 = vtanh.pop %v1535
      %v1547 = vtanh.pop %v1536
      %v1548 = vtanh.pop %v1537
      %v1549 = vtanh.pop %v1538
      %v1550 = vtanh.pop %v1539
      %v1551 = vtanh.pop %v1540
      %v1552 = vtanh.pop %v1541
      %v1553 = vtanh.pop %v1542
      %v1554 = vtanh.pop %v1543
      %v1555 = vsub.f32 1.0, %v852
      %v1556 = vsub.f32 1.0, %v854
      %v1557 = vsub.f32 1.0, %v856
      %v1558 = vsub.f32 1.0, %v858
      %v1559 = vsub.f32 1.0, %v860
      %v1560 = vsub.f32 1.0, %v862
      %v1561 = vsub.f32 1.0, %v864
      %v1562 = vsub.f32 1.0, %v866
      %v1563 = vsub.f32 1.0, %v868
      %v1564 = vsub.f32 1.0, %v870
      %v1565 = vsub.f32 1.0, %v872
      %v1566 = vmul.f32 %v1555, %v993
      %v1567 = vmul.f32 %v1556, %v995
      %v1568 = vmul.f32 %v1557, %v997
      %v1569 = vmul.f32 %v1558, %v999
      %v1570 = vmul.f32 %v1559, %v1001
      %v1571 = vmul.f32 %v1560, %v1003
      %v1572 = vmul.f32 %v1561, %v1005
      %v1573 = vmul.f32 %v1562, %v1007
      %v1574 = vmul.f32 %v1563, %v1009
      %v1575 = vmul.f32 %v1564, %v1011
      %v1576 = vmul.f32 %v1565, %v1010
      %v1577 = vmul.f32 %v852, %v1544
      %v1578 = vmul.f32 %v854, %v1545
      %v1579 = vmul.f32 %v856, %v1546
      %v1580 = vmul.f32 %v858, %v1547
      %v1581 = vmul.f32 %v860, %v1548
      %v1582 = vmul.f32 %v862, %v1549
      %v1583 = vmul.f32 %v864, %v1550
      %v1584 = vmul.f32 %v866, %v1551
      %v1585 = vmul.f32 %v868, %v1552
      %v1586 = vmul.f32 %v870, %v1553
      %v1587 = vmul.f32 %v872, %v1554
      %v1588 = vadd.f32 %v1566, %v1577
      %v1589 = vadd.f32 %v1567, %v1578
      %v1590 = vadd.f32 %v1568, %v1579
      %v1591 = vadd.f32 %v1569, %v1580
      %v1592 = vadd.f32 %v1570, %v1581
      %v1593 = vadd.f32 %v1571, %v1582
      %v1594 = vadd.f32 %v1572, %v1583
      %v1595 = vadd.f32 %v1573, %v1584
      %v1596 = vadd.f32 %v1574, %v1585
      %v1597 = vadd.f32 %v1575, %v1586
      %v1598 = vadd.f32 %v1576, %v1587
      %1600 = vset.pattern.permute.xlu0 0
      %1601 = vperm.xlu0 %1600, %v289
      %v1602 = vpop.permute.xlu0 %1601
      %1604 = vset.pattern.permute.xlu0 0
      %1605 = vperm.xlu0 %1604, %v290
      %v1606 = vpop.permute.xlu0 %1605
      %1608 = vset.pattern.permute.xlu0 0
      %1609 = vperm.xlu0 %1608, %v291
      %v1610 = vpop.permute.xlu0 %1609
      %1612 = vset.pattern.permute.xlu0 0
      %1613 = vperm.xlu0 %1612, %v292
      %v1614 = vpop.permute.xlu0 %1613
      %1616 = vset.pattern.permute.xlu0 0
      %1617 = vperm.xlu0 %1616, %v293
      %v1618 = vpop.permute.xlu0 %1617
      %1620 = vset.pattern.permute.xlu0 0
      %1621 = vperm.xlu0 %1620, %v294
      %v1622 = vpop.permute.xlu0 %1621
      %1624 = vset.pattern.permute.xlu0 0
      %1625 = vperm.xlu0 %1624, %v295
      %v1626 = vpop.permute.xlu0 %1625
      %1628 = vset.pattern.permute.xlu0 0
      %1629 = vperm.xlu0 %1628, %v296
      %v1630 = vpop.permute.xlu0 %1629
      %1632 = vset.pattern.permute.xlu0 0
      %1633 = vperm.xlu0 %1632, %v297
      %v1634 = vpop.permute.xlu0 %1633
      %1636 = vset.pattern.permute.xlu0 0
      %1637 = vperm.xlu0 %1636, %v298
      %v1638 = vpop.permute.xlu0 %1637
      %v1639 = vrot.slane %v1602, 5
      %v1640 = vrot.slane %v1606, 5
      %v1641 = vsel %vm765, %v1639, %v1640
      %v1642 = vrot.slane %v1610, 5
      %v1643 = vsel %vm765, %v1640, %v1642
      %v1644 = vrot.slane %v1614, 5
      %v1645 = vsel %vm765, %v1642, %v1644
      %v1646 = vrot.slane %v1618, 5
      %v1647 = vsel %vm765, %v1644, %v1646
      %v1648 = vrot.slane %v1622, 5
      %v1649 = vsel %vm765, %v1646, %v1648
      %v1650 = vrot.slane %v1626, 5
      %v1651 = vsel %vm765, %v1648, %v1650
      %v1652 = vrot.slane %v1630, 5
      %v1653 = vsel %vm765, %v1650, %v1652
      %v1654 = vrot.slane %v1634, 5
      %v1655 = vsel %vm765, %v1652, %v1654
      %v1656 = vrot.slane %v1638, 5
      %v1657 = vsel %vm765, %v1654, %v1656
      %v1669 = vmul.f32 %v1588, %v1639
      %v1670 = vmul.f32 %v1589, %v1641
      %v1671 = vmul.f32 %v1590, %v1643
      %v1672 = vmul.f32 %v1591, %v1645
      %v1673 = vmul.f32 %v1592, %v1647
      %v1674 = vmul.f32 %v1593, %v1649
      %v1675 = vmul.f32 %v1594, %v1651
      %v1676 = vmul.f32 %v1595, %v1653
      %v1677 = vmul.f32 %v1596, %v1655
      %v1678 = vmul.f32 %v1597, %v1657
      %v1679 = vmul.f32 %v1598, %v1656
      %1680 = vst.msk [vmem:[#allocation2 + $0x8] sm:$0xf8] %vm1034, %v1669
      %1681 = vst.msk [vmem:[#allocation2 + $0x10] sm:$0xff] %vm538, %v1670
      %1682 = vst.msk [vmem:[#allocation2 + $0x18] sm:$0xff] %vm538, %v1671
      %1683 = vst.msk [vmem:[#allocation2 + $0x20] sm:$0xff] %vm538, %v1672
      %1684 = vst.msk [vmem:[#allocation2 + $0x28] sm:$0xff] %vm538, %v1673
      %1685 = vst.msk [vmem:[#allocation2 + $0x30] sm:$0xff] %vm538, %v1674
      %1686 = vst.msk [vmem:[#allocation2 + $0x38] sm:$0xff] %vm538, %v1675
      %1687 = vst.msk [vmem:[#allocation2 + $0x40] sm:$0xff] %vm538, %v1676
      %1688 = vst.msk [vmem:[#allocation2 + $0x48] sm:$0xff] %vm538, %v1677
      %1689 = vst.msk [vmem:[#allocation2 + $0x50] sm:$0xff] %vm538, %v1678
      %1690 = vst.msk [vmem:[#allocation2 + $0x58] sm:$0x1] %vm1045, %v1679
      %v1691 = vld [vmem:[#allocation2] sm:$0xff]
      %v1692 = vld [vmem:[#allocation2 + $0x8] sm:$0xff]
      %v1693 = vld [vmem:[#allocation2 + $0x10] sm:$0xff]
      %v1694 = vld [vmem:[#allocation2 + $0x18] sm:$0xff]
      %v1695 = vld [vmem:[#allocation2 + $0x20] sm:$0xff]
      %v1696 = vld [vmem:[#allocation2 + $0x28] sm:$0xff]
      %v1697 = vld [vmem:[#allocation2 + $0x30] sm:$0xff]
      %v1698 = vld [vmem:[#allocation2 + $0x38] sm:$0xff]
      %v1699 = vld [vmem:[#allocation2 + $0x40] sm:$0xff]
      %v1700 = vld [vmem:[#allocation2 + $0x48] sm:$0xff]
      %v1701 = vld [vmem:[#allocation2 + $0x50] sm:$0xff]
      %v1702 = vld [vmem:[#allocation2 + $0x58] sm:$0xff]
      %v1703 = vld [vmem:[#allocation2 + $0x60] sm:$0xf]
      %v1704 = vpack.c.bf16 %v1692, %v1691
      %v1705 = vpack.c.bf16 %v1694, %v1693
      %v1706 = vpack.c.bf16 %v1696, %v1695
      %v1707 = vpack.c.bf16 %v1698, %v1697
      %v1708 = vpack.c.bf16 %v1700, %v1699
      %v1709 = vpack.c.bf16 %v1702, %v1701
      %v1710 = vpack.c.bf16 %v1703, %v1703
      %v1718 = vunpack.c.l.b16 %v1704
      %v1719 = vunpack.c.h.b16 %v1704
      %v1720 = vunpack.c.l.b16 %v1705
      %v1721 = vunpack.c.h.b16 %v1705
      %v1722 = vunpack.c.l.b16 %v1706
      %v1723 = vunpack.c.h.b16 %v1706
      %v1724 = vunpack.c.l.b16 %v1707
      %v1725 = vunpack.c.h.b16 %v1707
      %v1726 = vunpack.c.l.b16 %v1708
      %v1727 = vunpack.c.h.b16 %v1708
      %v1728 = vunpack.c.l.b16 %v1709
      %v1729 = vunpack.c.h.b16 %v1709
      %v1730 = vunpack.c.l.b16 %v1710
      %v1731 = vpack.c.b16 %v1718, %v1718
      %v1732 = vpack.c.b16 %v1719, %v1719
      %v1733 = vpack.c.b16 %v1720, %v1720
      %v1734 = vpack.c.b16 %v1721, %v1721
      %v1735 = vpack.c.b16 %v1722, %v1722
      %v1736 = vpack.c.b16 %v1723, %v1723
      %v1737 = vpack.c.b16 %v1724, %v1724
      %v1738 = vpack.c.b16 %v1725, %v1725
      %v1739 = vpack.c.b16 %v1726, %v1726
      %v1740 = vpack.c.b16 %v1727, %v1727
      %v1741 = vpack.c.b16 %v1728, %v1728
      %v1742 = vpack.c.b16 %v1729, %v1729
      %v1743 = vpack.c.b16 %v1730, %v1730
      %vm1757 = vcmask 60416
      %1758 = vst.msk [vmem:[%s233] sm:$0xf] %vm1757, %v1731
      %1759 = vst.msk [vmem:[%s233 + $0x4] sm:$0xf] %vm1757, %v1732
      %1760 = vst.msk [vmem:[%s233 + $0x8] sm:$0xf] %vm1757, %v1733
      %1761 = vst.msk [vmem:[%s233 + $0xc] sm:$0xf] %vm1757, %v1734
      %1762 = vst.msk [vmem:[%s233 + $0x10] sm:$0xf] %vm1757, %v1735
      %1763 = vst.msk [vmem:[%s233 + $0x14] sm:$0xf] %vm1757, %v1736
      %1764 = vst.msk [vmem:[%s233 + $0x18] sm:$0xf] %vm1757, %v1737
      %1765 = vst.msk [vmem:[%s233 + $0x1c] sm:$0xf] %vm1757, %v1738
      %1766 = vst.msk [vmem:[%s233 + $0x20] sm:$0xf] %vm1757, %v1739
      %1767 = vst.msk [vmem:[%s233 + $0x24] sm:$0xf] %vm1757, %v1740
      %1768 = vst.msk [vmem:[%s233 + $0x28] sm:$0xf] %vm1757, %v1741
      %1769 = vst.msk [vmem:[%s233 + $0x2c] sm:$0xf] %vm1757, %v1742
      %vm1770 = vcmask 58368
      %1771 = vst.msk [vmem:[%s233 + $0x30] sm:$0x3] %vm1770, %v1743
      %p1772 = scmp.lt.s32.totalorder %s19, 1
      %s1773 = scalar_select %p1772, %s19, 1
      %p1774 = scmp.lt.s32.totalorder %s20, 6
      %s1775 = scalar_select %p1774, %s20, 6
      %s1776 = smul.addr %s1775, 13
      %s1777 = smul.addr %s1773, 91
      %s1778 = sadd.s32 %s1776, %s1777
      %s1779 = smul.addr %s1778, 4
      %s1780 = scalar_lea.vmem %s4, %s1779
      // Predicated region
      $region41: #{csa_sr_forward.9} parent=35 // pred_check
        %p1781 = pneg %p138
      $region42: #{csa_sr_forward.9} parent=35 // pred_check_branch
        %1783 = sbr.rel (%p1781) target = $region44
      $region43: #{csa_sr_forward.9} parent=35 // pred_region
        _
      $region44: #{csa_sr_forward.9} parent=35 // pred_fallthru
        _
    $region36: #{csa_sr_forward.9} parent=5 // pred_fallthru
      _
    %p1784 = scmp.le.s32.totalorder 2, %s10
    // Predicated region
    $region45: #{csa_sr_forward.9} parent=5 // pred_check
      %p1785 = pneg %p1784
    $region46: #{csa_sr_forward.9} parent=5 // pred_check_branch
      %1787 = sbr.rel (%p1785) target = $region48
    $region47: #{csa_sr_forward.9} parent=5 // pred_region
      %s1788 = ssub.s32 %s10, 2
      // Predicated region
      $region49: #{csa_sr_forward.9} parent=47 // pred_check
        %p1789 = pneg %p144
      $region50: #{csa_sr_forward.9} parent=47 // pred_check_branch
        %1791 = sbr.rel (%p1789) target = $region52
      $region51: #{csa_sr_forward.9} parent=47 // pred_region
        %p1792 = scmp.lt.s32.totalorder %s21, 1
        %s1793 = scalar_select %p1792, %s21, 1
        %p1794 = scmp.lt.s32.totalorder %s22, 6
        %s1795 = scalar_select %p1794, %s22, 6
        %s1796 = smul.addr %s1795, 13
        %s1797 = smul.addr %s1793, 91
        %s1798 = sadd.s32 %s1796, %s1797
        %s1799 = smul.addr %s1798, 4
        %s1800 = scalar_lea.vmem %s4, %s1799
      $region52: #{csa_sr_forward.9} parent=47 // pred_fallthru
        _
    $region48: #{csa_sr_forward.9} parent=5 // pred_fallthru
      _
  $region6: #{csa_sr_forward.9} parent=0 // loop_footer
    %s14 = sadd.s32 1, %s10
  $region7: #{csa_sr_forward.9} parent=0 // loop_footer_branch
    %9 = sbr.rel target = $region3
  $region8: #{csa_sr_forward.9} parent=0 // loop_exit
    _

// kernel: csa_sr_forward.11
$region0: #{csa_sr_forward.11}
  #allocation0 [shape = 'u32[]', space=smem, size = 0x4, offset = 0x4, fixed_abs, tag = 'smem constant byte address 0x4 - core index']
  #allocation1 [shape = 'u32[144,128]{1,0:T(1,128)}', space=vmem, size = 0x12000, scoped, tag = 'internal scratch']
  %s0 = inlined_call_operand.vmem [shape: f32[14,64], index: 0, kind: input, shape index: {}]
  %s1 = inlined_call_operand.vmem [shape: bf16[64,128], index: 1, kind: input, shape index: {}]
  %s2 = inlined_call_operand.vmem [shape: f32[1,128], index: 2, kind: input, shape index: {}]
  %s3 = inlined_call_operand.vmem [shape: f32[14,128], index: 3, kind: output, shape index: {}]
  %s4 = sld [smem:[#allocation0]]
  $region22: #{csa_sr_forward.11} parent=0
    _
  %s6 = ssub.s32 1, %s4
  %s7 = scalar_select 0, %s6, %s4
  // Predicated region
  $region2: #{csa_sr_forward.11} parent=0 // pred_check
    _
  $region3: #{csa_sr_forward.11} parent=0 // pred_check_branch
    %9 = sbr.rel (0) target = $region5
  $region4: #{csa_sr_forward.11} parent=0 // pred_region
    _
  $region5: #{csa_sr_forward.11} parent=0 // pred_fallthru
    _
  // Predicated region
  $region6: #{csa_sr_forward.11} parent=0 // pred_check
    _
  $region7: #{csa_sr_forward.11} parent=0 // pred_check_branch
    %11 = sbr.rel (0) target = $region9
  $region8: #{csa_sr_forward.11} parent=0 // pred_region
    _
  $region9: #{csa_sr_forward.11} parent=0 // pred_fallthru
    _
  // Predicated region
  $region10: #{csa_sr_forward.11} parent=0 // pred_check
    _
  $region11: #{csa_sr_forward.11} parent=0 // pred_check_branch
    %13 = sbr.rel (0) target = $region13
  $region12: #{csa_sr_forward.11} parent=0 // pred_region
    _
  $region13: #{csa_sr_forward.11} parent=0 // pred_fallthru
    _
  %v15 = vld [vmem:[%s0] sm:$0xff]
  %v16 = vld [vmem:[%s0 + $0x8] sm:$0x3f]
  %v17 = vpack.c.bf16 %v16, %v15
  %v18 = vld [vmem:[%s1] sm:$0xf]
  %v19 = vld [vmem:[%s1 + $0x4] sm:$0xf]
  %v20 = vld [vmem:[%s1 + $0x8] sm:$0xf]
  %v21 = vld [vmem:[%s1 + $0xc] sm:$0xf]
  %v22 = vld [vmem:[%s1 + $0x10] sm:$0xf]
  %v23 = vld [vmem:[%s1 + $0x14] sm:$0xf]
  %v24 = vld [vmem:[%s1 + $0x18] sm:$0xf]
  %v25 = vld [vmem:[%s1 + $0x1c] sm:$0xf]
  %v26 = vld [vmem:[%s2] sm:$0x1]
  %v28 = vlaneseq
  %v29 = vshrl.u32 %v28, 7
  %v30 = vsub.s32 0, %v29
  %v31 = vrot.slane %v26, %v30
  %v41 = vunpack.c.l.b16 %v18
  %v42 = vunpack.c.l.b16 %v19
  %v43 = vunpack.c.l.b16 %v20
  %v44 = vunpack.c.l.b16 %v21
  %v45 = vunpack.c.l.b16 %v22
  %v46 = vunpack.c.l.b16 %v23
  %v47 = vunpack.c.l.b16 %v24
  %v48 = vunpack.c.l.b16 %v25
  %v49 = vpack.c.b16 %v42, %v41
  %v50 = vpack.c.b16 %v44, %v43
  %v51 = vpack.c.b16 %v46, %v45
  %v52 = vpack.c.b16 %v48, %v47
  %vm57 = vcmask 523264
  %v59 = vsel %vm57, %v17, 0
  %61 = vmatprep.subr.bf16.mxu0 0
  %62 = vmatpush1.bf16.msra.mxu0 %v49
  %63 = vmatprep.subr.bf16.mxu0 0
  %64 = vmatpush1.bf16.msra.mxu0 %v50
  %65 = vmatprep.subr.bf16.mxu0 0
  %66 = vmatpush1.bf16.msra.mxu0 %v51
  %67 = vmatprep.subr.bf16.mxu0 0
  %68 = vmatpush1.bf16.msra.mxu0 %v52
  %69 = vmatprep.subr.bf16.mxu0 0
  %70 = vmatpush1.bf16.msra.mxu0 0
  %71 = vmatprep.subr.bf16.mxu0 0
  %72 = vmatpush1.bf16.msra.mxu0 0
  %73 = vmatprep.subr.bf16.mxu0 0
  %74 = vmatpush1.bf16.msra.mxu0 0
  %75 = vmatprep.subr.bf16.mxu0 0
  %76 = vmatpush1.bf16.msra.mxu0 0
  %77 = vmatprep.subr.bf16.mxu0 0
  %78 = vmatpush1.bf16.msra.mxu0 0
  %79 = vmatprep.subr.bf16.mxu0 0
  %80 = vmatpush1.bf16.msra.mxu0 0
  %81 = vmatprep.subr.bf16.mxu0 0
  %82 = vmatpush1.bf16.msra.mxu0 0
  %83 = vmatprep.subr.bf16.mxu0 0
  %84 = vmatpush1.bf16.msra.mxu0 0
  %85 = vmatprep.subr.bf16.mxu0 0
  %86 = vmatpush1.bf16.msra.mxu0 0
  %87 = vmatprep.subr.bf16.mxu0 0
  %88 = vmatpush1.bf16.msra.mxu0 0
  %89 = vmatprep.subr.bf16.mxu0 0
  %90 = vmatpush1.bf16.msra.mxu0 0
  %91 = vmatprep.subr.bf16.mxu0 0
  %92 = vmatpush1.bf16.msra.mxu0 0
  %93 = vmatprep.mubr.bf16.mxu0 0
  %94 = vmatmul.mubr.bf16.gmra.mrb[0].mxu0 %v59
  %v95 = vpop.f32.mrb[0].mxu0
  %v96 = vadd.f32 %v31, %v95
  %v97 = vpop.f32.mrb[0].mxu0
  %v98 = vpop.f32.mrb[0].mxu0
  %v99 = vadd.f32 %v31, %v98
  %v100 = vpop.f32.mrb[0].mxu0
  %101 = vdwg.mxu0
  %102 = vst [vmem:[%s3] sm:$0xff] %v96
  %103 = vst [vmem:[%s3 + $0x8] sm:$0x3f] %v99
  // Predicated region
  $region14: #{csa_sr_forward.11} parent=0 // pred_check
    _
  $region15: #{csa_sr_forward.11} parent=0 // pred_check_branch
    %105 = sbr.rel (0) target = $region17
  $region16: #{csa_sr_forward.11} parent=0 // pred_region
    _
  $region17: #{csa_sr_forward.11} parent=0 // pred_fallthru
    _
  // Predicated region
  $region18: #{csa_sr_forward.11} parent=0 // pred_check
    _
  $region19: #{csa_sr_forward.11} parent=0 // pred_check_branch
    %107 = sbr.rel (0) target = $region21
  $region20: #{csa_sr_forward.11} parent=0 // pred_region
    _
  $region21: #{csa_sr_forward.11} parent=0 // pred_fallthru
    _

// kernel: csa_sr_forward.13
$region0: #{csa_sr_forward.13}
  #allocation0 [shape = 'u32[]', space=smem, size = 0x4, offset = 0x4, fixed_abs, tag = 'smem constant byte address 0x4 - core index']
  #allocation1 [shape = 'u32[144,128]{1,0:T(1,128)}', space=vmem, size = 0x12000, scoped, tag = 'internal scratch']
  %s0 = inlined_call_operand.vmem [shape: f32[6,32], index: 0, kind: input, shape index: {}]
  %s1 = inlined_call_operand.vmem [shape: bf16[32,64], index: 1, kind: input, shape index: {}]
  %s2 = inlined_call_operand.vmem [shape: f32[1,64], index: 2, kind: input, shape index: {}]
  %s3 = inlined_call_operand.hbm [shape: f32[6,64], index: 3, kind: output, shape index: {}]
  %s4 = sld [smem:[#allocation0]]
  $region22: #{csa_sr_forward.13} parent=0
    _
  %s6 = ssub.s32 1, %s4
  %s7 = scalar_select 0, %s6, %s4
  $region1: #{csa_sr_forward.13} parent=0
    #allocation2 [shape = 'u8[4096]{0}', space=vmem, size = 0x1000, scoped, tag = 'output window, operand 0, single buffered']
    #allocation3 [shape = 's32[1]{0}', space=sflag, size = 0x4, scoped, tag = 'scoped memory for csa_sr_forward.13']
    %8 = vsyncpa [#allocation3], 0
    // Predicated region
    $region2: #{csa_sr_forward.13} parent=1 // pred_check
      _
    $region3: #{csa_sr_forward.13} parent=1 // pred_check_branch
      %10 = sbr.rel (0) target = $region5
    $region4: #{csa_sr_forward.13} parent=1 // pred_region
      _
    $region5: #{csa_sr_forward.13} parent=1 // pred_fallthru
      _
    // Predicated region
    $region6: #{csa_sr_forward.13} parent=1 // pred_check
      _
    $region7: #{csa_sr_forward.13} parent=1 // pred_check_branch
      %12 = sbr.rel (0) target = $region9
    $region8: #{csa_sr_forward.13} parent=1 // pred_region
      _
    $region9: #{csa_sr_forward.13} parent=1 // pred_fallthru
      _
    // Predicated region
    $region10: #{csa_sr_forward.13} parent=1 // pred_check
      _
    $region11: #{csa_sr_forward.13} parent=1 // pred_check_branch
      %14 = sbr.rel (0) target = $region13
    $region12: #{csa_sr_forward.13} parent=1 // pred_region
      _
    $region13: #{csa_sr_forward.13} parent=1 // pred_fallthru
      _
    %v16 = vld [vmem:[%s0] sm:$0x3f]
    %v17 = vpack.c.bf16 %v16, %v16
    %v18 = vld [vmem:[%s1] sm:$0xf]
    %v19 = vld [vmem:[%s1 + $0x4] sm:$0xf]
    %v20 = vld [vmem:[%s1 + $0x8] sm:$0xf]
    %v21 = vld [vmem:[%s1 + $0xc] sm:$0xf]
    %v22 = vld [vmem:[%s2] sm:$0x1]
    %v24 = vlaneseq
    %v25 = vshrl.u32 %v24, 7
    %v26 = vsub.s32 0, %v25
    %v27 = vrot.slane %v22, %v26
    %v33 = vunpack.c.l.b16 %v18
    %v34 = vunpack.c.l.b16 %v19
    %v35 = vunpack.c.l.b16 %v20
    %v36 = vunpack.c.l.b16 %v21
    %v37 = vpack.c.b16 %v34, %v33
    %v38 = vpack.c.b16 %v36, %v35
    %vm41 = vcmask 261120
    %v43 = vsel %vm41, %v17, 0
    %45 = vmatprep.subr.bf16.mxu0 0
    %46 = vmatpush1.bf16.msra.mxu0 %v37
    %47 = vmatprep.subr.bf16.mxu0 0
    %48 = vmatpush1.bf16.msra.mxu0 %v38
    %49 = vmatprep.subr.bf16.mxu0 0
    %50 = vmatpush1.bf16.msra.mxu0 0
    %51 = vmatprep.subr.bf16.mxu0 0
    %52 = vmatpush1.bf16.msra.mxu0 0
    %53 = vmatprep.subr.bf16.mxu0 0
    %54 = vmatpush1.bf16.msra.mxu0 0
    %55 = vmatprep.subr.bf16.mxu0 0
    %56 = vmatpush1.bf16.msra.mxu0 0
    %57 = vmatprep.subr.bf16.mxu0 0
    %58 = vmatpush1.bf16.msra.mxu0 0
    %59 = vmatprep.subr.bf16.mxu0 0
    %60 = vmatpush1.bf16.msra.mxu0 0
    %61 = vmatprep.subr.bf16.mxu0 0
    %62 = vmatpush1.bf16.msra.mxu0 0
    %63 = vmatprep.subr.bf16.mxu0 0
    %64 = vmatpush1.bf16.msra.mxu0 0
    %65 = vmatprep.subr.bf16.mxu0 0
    %66 = vmatpush1.bf16.msra.mxu0 0
    %67 = vmatprep.subr.bf16.mxu0 0
    %68 = vmatpush1.bf16.msra.mxu0 0
    %69 = vmatprep.subr.bf16.mxu0 0
    %70 = vmatpush1.bf16.msra.mxu0 0
    %71 = vmatprep.subr.bf16.mxu0 0
    %72 = vmatpush1.bf16.msra.mxu0 0
    %73 = vmatprep.subr.bf16.mxu0 0
    %74 = vmatpush1.bf16.msra.mxu0 0
    %75 = vmatprep.subr.bf16.mxu0 0
    %76 = vmatpush1.bf16.msra.mxu0 0
    %77 = vmatprep.mubr.bf16.mxu0 0
    %78 = vmatmul.mubr.bf16.gmra.mrb[0].mxu0 %v43
    %v79 = vpop.f32.mrb[0].mxu0
    %v80 = vadd.f32 %v27, %v79
    %v81 = vpop.f32.mrb[0].mxu0
    %v82 = vpop.f32.mrb[0].mxu0
    %v83 = vpop.f32.mrb[0].mxu0
    %84 = vdwg.mxu0
    %vm85 = vcmask 521216
    %86 = vst.msk [vmem:[#allocation2] sm:$0x3f] %vm85, %v80
    // Predicated region
    $region14: #{csa_sr_forward.13} parent=1 // pred_check
      _
    $region15: #{csa_sr_forward.13} parent=1 // pred_check_branch
      %88 = sbr.rel (0) target = $region17
    $region16: #{csa_sr_forward.13} parent=1 // pred_region
      %s90 = ssub.s32 128, 128
      %91 = vsyncadd [#allocation3], %s90
      %s93 = sshll.u32 [#allocation2], 4
      %s94 = int_to_ptr.vmem [resolvable:$true] %s93
      %96 = dma.vmem_to_hbm [thread:$0]  %s94, 128, %s3, [#allocation3]
    $region17: #{csa_sr_forward.13} parent=1 // pred_fallthru
      _
    // Predicated region
    $region18: #{csa_sr_forward.13} parent=1 // pred_check
      _
    $region19: #{csa_sr_forward.13} parent=1 // pred_check_branch
      %98 = sbr.rel (0) target = $region21
    $region20: #{csa_sr_forward.13} parent=1 // pred_region
      %99 = dma.done [#allocation3], 128
    $region21: #{csa_sr_forward.13} parent=1 // pred_fallthru
      _
    %100 = vsyncpa [#allocation3], 1

// kernel: csa_sr_forward.10
$region0: #{csa_sr_forward.10}
  #allocation0 [shape = 'u32[]', space=smem, size = 0x4, offset = 0x4, fixed_abs, tag = 'smem constant byte address 0x4 - core index']
  #allocation1 [shape = 'u32[144,128]{1,0:T(1,128)}', space=vmem, size = 0x12000, scoped, tag = 'internal scratch']
  %s0 = inlined_call_operand.vmem [shape: bf16[14,8,64], index: 0, kind: input, shape index: {}]
  %s1 = inlined_call_operand.vmem [shape: bf16[14,64,32], index: 1, kind: input, shape index: {}]
  %s2 = inlined_call_operand.vmem [shape: f32[8,32], index: 2, kind: input, shape index: {}]
  %s3 = inlined_call_operand.vmem [shape: f32[8,1], index: 3, kind: input, shape index: {}]
  %s4 = inlined_call_operand.vmem [shape: f32[14,32], index: 4, kind: output, shape index: {}]
  %s5 = sld [smem:[#allocation0]]
  $region26: #{csa_sr_forward.10} parent=0
    _
  %s7 = ssub.s32 1, %s5
  %s8 = scalar_select 0, %s7, %s5
  // Predicated region
  $region2: #{csa_sr_forward.10} parent=0 // pred_check
    _
  $region3: #{csa_sr_forward.10} parent=0 // pred_check_branch
    %10 = sbr.rel (0) target = $region5
  $region4: #{csa_sr_forward.10} parent=0 // pred_region
    _
  $region5: #{csa_sr_forward.10} parent=0 // pred_fallthru
    _
  // Predicated region
  $region6: #{csa_sr_forward.10} parent=0 // pred_check
    _
  $region7: #{csa_sr_forward.10} parent=0 // pred_check_branch
    %12 = sbr.rel (0) target = $region9
  $region8: #{csa_sr_forward.10} parent=0 // pred_region
    _
  $region9: #{csa_sr_forward.10} parent=0 // pred_fallthru
    _
  // Predicated region
  $region10: #{csa_sr_forward.10} parent=0 // pred_check
    _
  $region11: #{csa_sr_forward.10} parent=0 // pred_check_branch
    %14 = sbr.rel (0) target = $region13
  $region12: #{csa_sr_forward.10} parent=0 // pred_region
    _
  $region13: #{csa_sr_forward.10} parent=0 // pred_fallthru
    _
  // Predicated region
  $region14: #{csa_sr_forward.10} parent=0 // pred_check
    _
  $region15: #{csa_sr_forward.10} parent=0 // pred_check_branch
    %16 = sbr.rel (0) target = $region17
  $region16: #{csa_sr_forward.10} parent=0 // pred_region
    _
  $region17: #{csa_sr_forward.10} parent=0 // pred_fallthru
    _
  %v18 = vld [vmem:[%s0] sm:$0xf]
  %v19 = vld [vmem:[%s0 + $0x4] sm:$0xf]
  %v20 = vld [vmem:[%s0 + $0x8] sm:$0xf]
  %v21 = vld [vmem:[%s0 + $0xc] sm:$0xf]
  %v22 = vld [vmem:[%s0 + $0x10] sm:$0xf]
  %v23 = vld [vmem:[%s0 + $0x14] sm:$0xf]
  %v24 = vld [vmem:[%s0 + $0x18] sm:$0xf]
  %v25 = vld [vmem:[%s0 + $0x1c] sm:$0xf]
  %v26 = vld [vmem:[%s0 + $0x20] sm:$0xf]
  %v27 = vld [vmem:[%s0 + $0x24] sm:$0xf]
  %v28 = vld [vmem:[%s0 + $0x28] sm:$0xf]
  %v29 = vld [vmem:[%s0 + $0x2c] sm:$0xf]
  %v30 = vld [vmem:[%s0 + $0x30] sm:$0xf]
  %v31 = vld [vmem:[%s0 + $0x34] sm:$0xf]
  %v32 = vunpack.c.l.bf16 %v18
  %v33 = vunpack.c.l.bf16 %v19
  %v34 = vunpack.c.l.bf16 %v20
  %v35 = vunpack.c.l.bf16 %v21
  %v36 = vunpack.c.l.bf16 %v22
  %v37 = vunpack.c.l.bf16 %v23
  %v38 = vunpack.c.l.bf16 %v24
  %v39 = vunpack.c.l.bf16 %v25
  %v40 = vunpack.c.l.bf16 %v26
  %v41 = vunpack.c.l.bf16 %v27
  %v42 = vunpack.c.l.bf16 %v28
  %v43 = vunpack.c.l.bf16 %v29
  %v44 = vunpack.c.l.bf16 %v30
  %v45 = vunpack.c.l.bf16 %v31
  %vm46 = vcmask 523264
  %v47 = vsel %vm46, %v32, -inf
  %v48 = vrot.slane %v47, 4
  %v49 = vmax.f32 %v47, %v48
  %v50 = vrot.slane %v49, 2
  %v51 = vmax.f32 %v49, %v50
  %v52 = vrot.slane %v51, 1
  %v53 = vmax.f32 %v51, %v52
  %v54 = vsel %vm46, %v33, -inf
  %v55 = vrot.slane %v54, 4
  %v56 = vmax.f32 %v54, %v55
  %v57 = vrot.slane %v56, 2
  %v58 = vmax.f32 %v56, %v57
  %v59 = vrot.slane %v58, 1
  %v60 = vmax.f32 %v58, %v59
  %v61 = vsel %vm46, %v34, -inf
  %v62 = vrot.slane %v61, 4
  %v63 = vmax.f32 %v61, %v62
  %v64 = vrot.slane %v63, 2
  %v65 = vmax.f32 %v63, %v64
  %v66 = vrot.slane %v65, 1
  %v67 = vmax.f32 %v65, %v66
  %v68 = vsel %vm46, %v35, -inf
  %v69 = vrot.slane %v68, 4
  %v70 = vmax.f32 %v68, %v69
  %v71 = vrot.slane %v70, 2
  %v72 = vmax.f32 %v70, %v71
  %v73 = vrot.slane %v72, 1
  %v74 = vmax.f32 %v72, %v73
  %v75 = vsel %vm46, %v36, -inf
  %v76 = vrot.slane %v75, 4
  %v77 = vmax.f32 %v75, %v76
  %v78 = vrot.slane %v77, 2
  %v79 = vmax.f32 %v77, %v78
  %v80 = vrot.slane %v79, 1
  %v81 = vmax.f32 %v79, %v80
  %v82 = vsel %vm46, %v37, -inf
  %v83 = vrot.slane %v82, 4
  %v84 = vmax.f32 %v82, %v83
  %v85 = vrot.slane %v84, 2
  %v86 = vmax.f32 %v84, %v85
  %v87 = vrot.slane %v86, 1
  %v88 = vmax.f32 %v86, %v87
  %v89 = vsel %vm46, %v38, -inf
  %v90 = vrot.slane %v89, 4
  %v91 = vmax.f32 %v89, %v90
  %v92 = vrot.slane %v91, 2
  %v93 = vmax.f32 %v91, %v92
  %v94 = vrot.slane %v93, 1
  %v95 = vmax.f32 %v93, %v94
  %v96 = vsel %vm46, %v39, -inf
  %v97 = vrot.slane %v96, 4
  %v98 = vmax.f32 %v96, %v97
  %v99 = vrot.slane %v98, 2
  %v100 = vmax.f32 %v98, %v99
  %v101 = vrot.slane %v100, 1
  %v102 = vmax.f32 %v100, %v101
  %v103 = vsel %vm46, %v40, -inf
  %v104 = vrot.slane %v103, 4
  %v105 = vmax.f32 %v103, %v104
  %v106 = vrot.slane %v105, 2
  %v107 = vmax.f32 %v105, %v106
  %v108 = vrot.slane %v107, 1
  %v109 = vmax.f32 %v107, %v108
  %v110 = vsel %vm46, %v41, -inf
  %v111 = vrot.slane %v110, 4
  %v112 = vmax.f32 %v110, %v111
  %v113 = vrot.slane %v112, 2
  %v114 = vmax.f32 %v112, %v113
  %v115 = vrot.slane %v114, 1
  %v116 = vmax.f32 %v114, %v115
  %v117 = vsel %vm46, %v42, -inf
  %v118 = vrot.slane %v117, 4
  %v119 = vmax.f32 %v117, %v118
  %v120 = vrot.slane %v119, 2
  %v121 = vmax.f32 %v119, %v120
  %v122 = vrot.slane %v121, 1
  %v123 = vmax.f32 %v121, %v122
  %v124 = vsel %vm46, %v43, -inf
  %v125 = vrot.slane %v124, 4
  %v126 = vmax.f32 %v124, %v125
  %v127 = vrot.slane %v126, 2
  %v128 = vmax.f32 %v126, %v127
  %v129 = vrot.slane %v128, 1
  %v130 = vmax.f32 %v128, %v129
  %v131 = vsel %vm46, %v44, -inf
  %v132 = vrot.slane %v131, 4
  %v133 = vmax.f32 %v131, %v132
  %v134 = vrot.slane %v133, 2
  %v135 = vmax.f32 %v133, %v134
  %v136 = vrot.slane %v135, 1
  %v137 = vmax.f32 %v135, %v136
  %v138 = vsel %vm46, %v45, -inf
  %v139 = vrot.slane %v138, 4
  %v140 = vmax.f32 %v138, %v139
  %v141 = vrot.slane %v140, 2
  %v142 = vmax.f32 %v140, %v141
  %v143 = vrot.slane %v142, 1
  %v144 = vmax.f32 %v142, %v143
  %v145 = vsub.f32 %v32, %v53
  %v146 = vsub.f32 %v33, %v60
  %v147 = vsub.f32 %v34, %v67
  %v148 = vsub.f32 %v35, %v74
  %v149 = vsub.f32 %v36, %v81
  %v150 = vsub.f32 %v37, %v88
  %v151 = vsub.f32 %v38, %v95
  %v152 = vsub.f32 %v39, %v102
  %v153 = vsub.f32 %v40, %v109
  %v154 = vsub.f32 %v41, %v116
  %v155 = vsub.f32 %v42, %v123
  %v156 = vsub.f32 %v43, %v130
  %v157 = vsub.f32 %v44, %v137
  %v158 = vsub.f32 %v45, %v144
  %v159 = vmul.f32 %v145, 1.442695
  %v160 = vpow.pop %v159
  %v161 = vmul.f32 %v146, 1.442695
  %v162 = vpow.pop %v161
  %v163 = vmul.f32 %v147, 1.442695
  %v164 = vpow.pop %v163
  %v165 = vmul.f32 %v148, 1.442695
  %v166 = vpow.pop %v165
  %v167 = vmul.f32 %v149, 1.442695
  %v168 = vpow.pop %v167
  %v169 = vmul.f32 %v150, 1.442695
  %v170 = vpow.pop %v169
  %v171 = vmul.f32 %v151, 1.442695
  %v172 = vpow.pop %v171
  %v173 = vmul.f32 %v152, 1.442695
  %v174 = vpow.pop %v173
  %v175 = vmul.f32 %v153, 1.442695
  %v176 = vpow.pop %v175
  %v177 = vmul.f32 %v154, 1.442695
  %v178 = vpow.pop %v177
  %v179 = vmul.f32 %v155, 1.442695
  %v180 = vpow.pop %v179
  %v181 = vmul.f32 %v156, 1.442695
  %v182 = vpow.pop %v181
  %v183 = vmul.f32 %v157, 1.442695
  %v184 = vpow.pop %v183
  %v185 = vmul.f32 %v158, 1.442695
  %v186 = vpow.pop %v185
  %v187 = vsel %vm46, %v160, 0.0
  %v188 = vrot.slane %v187, 4
  %v189 = vadd.f32 %v187, %v188
  %v190 = vrot.slane %v189, 2
  %v191 = vadd.f32 %v189, %v190
  %v192 = vrot.slane %v191, 1
  %v193 = vadd.f32 %v191, %v192
  %v194 = vsel %vm46, %v162, 0.0
  %v195 = vrot.slane %v194, 4
  %v196 = vadd.f32 %v194, %v195
  %v197 = vrot.slane %v196, 2
  %v198 = vadd.f32 %v196, %v197
  %v199 = vrot.slane %v198, 1
  %v200 = vadd.f32 %v198, %v199
  %v201 = vsel %vm46, %v164, 0.0
  %v202 = vrot.slane %v201, 4
  %v203 = vadd.f32 %v201, %v202
  %v204 = vrot.slane %v203, 2
  %v205 = vadd.f32 %v203, %v204
  %v206 = vrot.slane %v205, 1
  %v207 = vadd.f32 %v205, %v206
  %v208 = vsel %vm46, %v166, 0.0
  %v209 = vrot.slane %v208, 4
  %v210 = vadd.f32 %v208, %v209
  %v211 = vrot.slane %v210, 2
  %v212 = vadd.f32 %v210, %v211
  %v213 = vrot.slane %v212, 1
  %v214 = vadd.f32 %v212, %v213
  %v215 = vsel %vm46, %v168, 0.0
  %v216 = vrot.slane %v215, 4
  %v217 = vadd.f32 %v215, %v216
  %v218 = vrot.slane %v217, 2
  %v219 = vadd.f32 %v217, %v218
  %v220 = vrot.slane %v219, 1
  %v221 = vadd.f32 %v219, %v220
  %v222 = vsel %vm46, %v170, 0.0
  %v223 = vrot.slane %v222, 4
  %v224 = vadd.f32 %v222, %v223
  %v225 = vrot.slane %v224, 2
  %v226 = vadd.f32 %v224, %v225
  %v227 = vrot.slane %v226, 1
  %v228 = vadd.f32 %v226, %v227
  %v229 = vsel %vm46, %v172, 0.0
  %v230 = vrot.slane %v229, 4
  %v231 = vadd.f32 %v229, %v230
  %v232 = vrot.slane %v231, 2
  %v233 = vadd.f32 %v231, %v232
  %v234 = vrot.slane %v233, 1
  %v235 = vadd.f32 %v233, %v234
  %v236 = vsel %vm46, %v174, 0.0
  %v237 = vrot.slane %v236, 4
  %v238 = vadd.f32 %v236, %v237
  %v239 = vrot.slane %v238, 2
  %v240 = vadd.f32 %v238, %v239
  %v241 = vrot.slane %v240, 1
  %v242 = vadd.f32 %v240, %v241
  %v243 = vsel %vm46, %v176, 0.0
  %v244 = vrot.slane %v243, 4
  %v245 = vadd.f32 %v243, %v244
  %v246 = vrot.slane %v245, 2
  %v247 = vadd.f32 %v245, %v246
  %v248 = vrot.slane %v247, 1
  %v249 = vadd.f32 %v247, %v248
  %v250 = vsel %vm46, %v178, 0.0
  %v251 = vrot.slane %v250, 4
  %v252 = vadd.f32 %v250, %v251
  %v253 = vrot.slane %v252, 2
  %v254 = vadd.f32 %v252, %v253
  %v255 = vrot.slane %v254, 1
  %v256 = vadd.f32 %v254, %v255
  %v257 = vsel %vm46, %v180, 0.0
  %v258 = vrot.slane %v257, 4
  %v259 = vadd.f32 %v257, %v258
  %v260 = vrot.slane %v259, 2
  %v261 = vadd.f32 %v259, %v260
  %v262 = vrot.slane %v261, 1
  %v263 = vadd.f32 %v261, %v262
  %v264 = vsel %vm46, %v182, 0.0
  %v265 = vrot.slane %v264, 4
  %v266 = vadd.f32 %v264, %v265
  %v267 = vrot.slane %v266, 2
  %v268 = vadd.f32 %v266, %v267
  %v269 = vrot.slane %v268, 1
  %v270 = vadd.f32 %v268, %v269
  %v271 = vsel %vm46, %v184, 0.0
  %v272 = vrot.slane %v271, 4
  %v273 = vadd.f32 %v271, %v272
  %v274 = vrot.slane %v273, 2
  %v275 = vadd.f32 %v273, %v274
  %v276 = vrot.slane %v275, 1
  %v277 = vadd.f32 %v275, %v276
  %v278 = vsel %vm46, %v186, 0.0
  %v279 = vrot.slane %v278, 4
  %v280 = vadd.f32 %v278, %v279
  %v281 = vrot.slane %v280, 2
  %v282 = vadd.f32 %v280, %v281
  %v283 = vrot.slane %v282, 1
  %v284 = vadd.f32 %v282, %v283
  %v285 = vrcp.pop %v193
  %v286 = vrcp.pop %v200
  %v287 = vrcp.pop %v207
  %v288 = vrcp.pop %v214
  %v289 = vrcp.pop %v221
  %v290 = vrcp.pop %v228
  %v291 = vrcp.pop %v235
  %v292 = vrcp.pop %v242
  %v293 = vrcp.pop %v249
  %v294 = vrcp.pop %v256
  %v295 = vrcp.pop %v263
  %v296 = vrcp.pop %v270
  %v297 = vrcp.pop %v277
  %v298 = vrcp.pop %v284
  %v299 = vmul.f32 %v160, %v285
  %v300 = vmul.f32 %v162, %v286
  %v301 = vmul.f32 %v164, %v287
  %v302 = vmul.f32 %v166, %v288
  %v303 = vmul.f32 %v168, %v289
  %v304 = vmul.f32 %v170, %v290
  %v305 = vmul.f32 %v172, %v291
  %v306 = vmul.f32 %v174, %v292
  %v307 = vmul.f32 %v176, %v293
  %v308 = vmul.f32 %v178, %v294
  %v309 = vmul.f32 %v180, %v295
  %v310 = vmul.f32 %v182, %v296
  %v311 = vmul.f32 %v184, %v297
  %v312 = vmul.f32 %v186, %v298
  %v313 = vsel %vm46, %v299, 0.0
  %314 = vadd.xlane.f32.xlu0 %v313
  %v315 = vpop.xlane.xlu0 %314
  %v316 = vsel %vm46, %v300, 0.0
  %317 = vadd.xlane.f32.xlu0 %v316
  %v318 = vpop.xlane.xlu0 %317
  %v319 = vsel %vm46, %v301, 0.0
  %320 = vadd.xlane.f32.xlu0 %v319
  %v321 = vpop.xlane.xlu0 %320
  %v322 = vsel %vm46, %v302, 0.0
  %323 = vadd.xlane.f32.xlu0 %v322
  %v324 = vpop.xlane.xlu0 %323
  %v325 = vsel %vm46, %v303, 0.0
  %326 = vadd.xlane.f32.xlu0 %v325
  %v327 = vpop.xlane.xlu0 %326
  %v328 = vsel %vm46, %v304, 0.0
  %329 = vadd.xlane.f32.xlu0 %v328
  %v330 = vpop.xlane.xlu0 %329
  %v331 = vsel %vm46, %v305, 0.0
  %332 = vadd.xlane.f32.xlu0 %v331
  %v333 = vpop.xlane.xlu0 %332
  %v334 = vsel %vm46, %v306, 0.0
  %335 = vadd.xlane.f32.xlu0 %v334
  %v336 = vpop.xlane.xlu0 %335
  %v337 = vsel %vm46, %v307, 0.0
  %338 = vadd.xlane.f32.xlu0 %v337
  %v339 = vpop.xlane.xlu0 %338
  %v340 = vsel %vm46, %v308, 0.0
  %341 = vadd.xlane.f32.xlu0 %v340
  %v342 = vpop.xlane.xlu0 %341
  %v343 = vsel %vm46, %v309, 0.0
  %344 = vadd.xlane.f32.xlu0 %v343
  %v345 = vpop.xlane.xlu0 %344
  %v346 = vsel %vm46, %v310, 0.0
  %347 = vadd.xlane.f32.xlu0 %v346
  %v348 = vpop.xlane.xlu0 %347
  %v349 = vsel %vm46, %v311, 0.0
  %350 = vadd.xlane.f32.xlu0 %v349
  %v351 = vpop.xlane.xlu0 %350
  %v352 = vsel %vm46, %v312, 0.0
  %353 = vadd.xlane.f32.xlu0 %v352
  %v354 = vpop.xlane.xlu0 %353
  %v355 = vpack.c.bf16 %v299, %v299
  %v356 = vpack.c.bf16 %v300, %v300
  %v357 = vpack.c.bf16 %v301, %v301
  %v358 = vpack.c.bf16 %v302, %v302
  %v359 = vpack.c.bf16 %v303, %v303
  %v360 = vpack.c.bf16 %v304, %v304
  %v361 = vpack.c.bf16 %v305, %v305
  %v362 = vpack.c.bf16 %v306, %v306
  %v363 = vpack.c.bf16 %v307, %v307
  %v364 = vpack.c.bf16 %v308, %v308
  %v365 = vpack.c.bf16 %v309, %v309
  %v366 = vpack.c.bf16 %v310, %v310
  %v367 = vpack.c.bf16 %v311, %v311
  %v368 = vpack.c.bf16 %v312, %v312
  %v369 = vld [vmem:[%s1] sm:$0xf]
  %v370 = vld [vmem:[%s1 + $0x4] sm:$0xf]
  %v371 = vld [vmem:[%s1 + $0x8] sm:$0xf]
  %v372 = vld [vmem:[%s1 + $0xc] sm:$0xf]
  %v373 = vld [vmem:[%s1 + $0x10] sm:$0xf]
  %v374 = vld [vmem:[%s1 + $0x14] sm:$0xf]
  %v375 = vld [vmem:[%s1 + $0x18] sm:$0xf]
  %v376 = vld [vmem:[%s1 + $0x1c] sm:$0xf]
  %v377 = vld [vmem:[%s1 + $0x20] sm:$0xf]
  %v378 = vld [vmem:[%s1 + $0x24] sm:$0xf]
  %v379 = vld [vmem:[%s1 + $0x28] sm:$0xf]
  %v380 = vld [vmem:[%s1 + $0x2c] sm:$0xf]
  %v381 = vld [vmem:[%s1 + $0x30] sm:$0xf]
  %v382 = vld [vmem:[%s1 + $0x34] sm:$0xf]
  %v383 = vld [vmem:[%s1 + $0x38] sm:$0xf]
  %v384 = vld [vmem:[%s1 + $0x3c] sm:$0xf]
  %v385 = vld [vmem:[%s1 + $0x40] sm:$0xf]
  %v386 = vld [vmem:[%s1 + $0x44] sm:$0xf]
  %v387 = vld [vmem:[%s1 + $0x48] sm:$0xf]
  %v388 = vld [vmem:[%s1 + $0x4c] sm:$0xf]
  %v389 = vld [vmem:[%s1 + $0x50] sm:$0xf]
  %v390 = vld [vmem:[%s1 + $0x54] sm:$0xf]
  %v391 = vld [vmem:[%s1 + $0x58] sm:$0xf]
  %v392 = vld [vmem:[%s1 + $0x5c] sm:$0xf]
  %v393 = vld [vmem:[%s1 + $0x60] sm:$0xf]
  %v394 = vld [vmem:[%s1 + $0x64] sm:$0xf]
  %v395 = vld [vmem:[%s1 + $0x68] sm:$0xf]
  %v396 = vld [vmem:[%s1 + $0x6c] sm:$0xf]
  %v397 = vld [vmem:[%s1 + $0x70] sm:$0xf]
  %v398 = vld [vmem:[%s1 + $0x74] sm:$0xf]
  %v399 = vld [vmem:[%s1 + $0x78] sm:$0xf]
  %v400 = vld [vmem:[%s1 + $0x7c] sm:$0xf]
  %v401 = vld [vmem:[%s1 + $0x80] sm:$0xf]
  %v402 = vld [vmem:[%s1 + $0x84] sm:$0xf]
  %v403 = vld [vmem:[%s1 + $0x88] sm:$0xf]
  %v404 = vld [vmem:[%s1 + $0x8c] sm:$0xf]
  %v405 = vld [vmem:[%s1 + $0x90] sm:$0xf]
  %v406 = vld [vmem:[%s1 + $0x94] sm:$0xf]
  %v407 = vld [vmem:[%s1 + $0x98] sm:$0xf]
  %v408 = vld [vmem:[%s1 + $0x9c] sm:$0xf]
  %v409 = vld [vmem:[%s1 + $0xa0] sm:$0xf]
  %v410 = vld [vmem:[%s1 + $0xa4] sm:$0xf]
  %v411 = vld [vmem:[%s1 + $0xa8] sm:$0xf]
  %v412 = vld [vmem:[%s1 + $0xac] sm:$0xf]
  %v413 = vld [vmem:[%s1 + $0xb0] sm:$0xf]
  %v414 = vld [vmem:[%s1 + $0xb4] sm:$0xf]
  %v415 = vld [vmem:[%s1 + $0xb8] sm:$0xf]
  %v416 = vld [vmem:[%s1 + $0xbc] sm:$0xf]
  %v417 = vld [vmem:[%s1 + $0xc0] sm:$0xf]
  %v418 = vld [vmem:[%s1 + $0xc4] sm:$0xf]
  %v419 = vld [vmem:[%s1 + $0xc8] sm:$0xf]
  %v420 = vld [vmem:[%s1 + $0xcc] sm:$0xf]
  %v421 = vld [vmem:[%s1 + $0xd0] sm:$0xf]
  %v422 = vld [vmem:[%s1 + $0xd4] sm:$0xf]
  %v423 = vld [vmem:[%s1 + $0xd8] sm:$0xf]
  %v424 = vld [vmem:[%s1 + $0xdc] sm:$0xf]
  %v425 = vld [vmem:[%s1 + $0xe0] sm:$0xf]
  %v426 = vld [vmem:[%s1 + $0xe4] sm:$0xf]
  %v427 = vld [vmem:[%s1 + $0xe8] sm:$0xf]
  %v428 = vld [vmem:[%s1 + $0xec] sm:$0xf]
  %v429 = vld [vmem:[%s1 + $0xf0] sm:$0xf]
  %v430 = vld [vmem:[%s1 + $0xf4] sm:$0xf]
  %v431 = vld [vmem:[%s1 + $0xf8] sm:$0xf]
  %v432 = vld [vmem:[%s1 + $0xfc] sm:$0xf]
  %v433 = vld [vmem:[%s1 + $0x100] sm:$0xf]
  %v434 = vld [vmem:[%s1 + $0x104] sm:$0xf]
  %v435 = vld [vmem:[%s1 + $0x108] sm:$0xf]
  %v436 = vld [vmem:[%s1 + $0x10c] sm:$0xf]
  %v437 = vld [vmem:[%s1 + $0x110] sm:$0xf]
  %v438 = vld [vmem:[%s1 + $0x114] sm:$0xf]
  %v439 = vld [vmem:[%s1 + $0x118] sm:$0xf]
  %v440 = vld [vmem:[%s1 + $0x11c] sm:$0xf]
  %v441 = vld [vmem:[%s1 + $0x120] sm:$0xf]
  %v442 = vld [vmem:[%s1 + $0x124] sm:$0xf]
  %v443 = vld [vmem:[%s1 + $0x128] sm:$0xf]
  %v444 = vld [vmem:[%s1 + $0x12c] sm:$0xf]
  %v445 = vld [vmem:[%s1 + $0x130] sm:$0xf]
  %v446 = vld [vmem:[%s1 + $0x134] sm:$0xf]
  %v447 = vld [vmem:[%s1 + $0x138] sm:$0xf]
  %v448 = vld [vmem:[%s1 + $0x13c] sm:$0xf]
  %v449 = vld [vmem:[%s1 + $0x140] sm:$0xf]
  %v450 = vld [vmem:[%s1 + $0x144] sm:$0xf]
  %v451 = vld [vmem:[%s1 + $0x148] sm:$0xf]
  %v452 = vld [vmem:[%s1 + $0x14c] sm:$0xf]
  %v453 = vld [vmem:[%s1 + $0x150] sm:$0xf]
  %v454 = vld [vmem:[%s1 + $0x154] sm:$0xf]
  %v455 = vld [vmem:[%s1 + $0x158] sm:$0xf]
  %v456 = vld [vmem:[%s1 + $0x15c] sm:$0xf]
  %v457 = vld [vmem:[%s1 + $0x160] sm:$0xf]
  %v458 = vld [vmem:[%s1 + $0x164] sm:$0xf]
  %v459 = vld [vmem:[%s1 + $0x168] sm:$0xf]
  %v460 = vld [vmem:[%s1 + $0x16c] sm:$0xf]
  %v461 = vld [vmem:[%s1 + $0x170] sm:$0xf]
  %v462 = vld [vmem:[%s1 + $0x174] sm:$0xf]
  %v463 = vld [vmem:[%s1 + $0x178] sm:$0xf]
  %v464 = vld [vmem:[%s1 + $0x17c] sm:$0xf]
  %v465 = vld [vmem:[%s1 + $0x180] sm:$0xf]
  %v466 = vld [vmem:[%s1 + $0x184] sm:$0xf]
  %v467 = vld [vmem:[%s1 + $0x188] sm:$0xf]
  %v468 = vld [vmem:[%s1 + $0x18c] sm:$0xf]
  %v469 = vld [vmem:[%s1 + $0x190] sm:$0xf]
  %v470 = vld [vmem:[%s1 + $0x194] sm:$0xf]
  %v471 = vld [vmem:[%s1 + $0x198] sm:$0xf]
  %v472 = vld [vmem:[%s1 + $0x19c] sm:$0xf]
  %v473 = vld [vmem:[%s1 + $0x1a0] sm:$0xf]
  %v474 = vld [vmem:[%s1 + $0x1a4] sm:$0xf]
  %v475 = vld [vmem:[%s1 + $0x1a8] sm:$0xf]
  %v476 = vld [vmem:[%s1 + $0x1ac] sm:$0xf]
  %v477 = vld [vmem:[%s1 + $0x1b0] sm:$0xf]
  %v478 = vld [vmem:[%s1 + $0x1b4] sm:$0xf]
  %v479 = vld [vmem:[%s1 + $0x1b8] sm:$0xf]
  %v480 = vld [vmem:[%s1 + $0x1bc] sm:$0xf]
  %v489 = vunpack.c.l.b16 %v369
  %v490 = vunpack.c.l.b16 %v370
  %v491 = vunpack.c.l.b16 %v371
  %v492 = vunpack.c.l.b16 %v372
  %v493 = vunpack.c.l.b16 %v373
  %v494 = vunpack.c.l.b16 %v374
  %v495 = vunpack.c.l.b16 %v375
  %v496 = vunpack.c.l.b16 %v376
  %v497 = vpack.c.b16 %v490, %v489
  %v498 = vpack.c.b16 %v492, %v491
  %v499 = vpack.c.b16 %v494, %v493
  %v500 = vpack.c.b16 %v496, %v495
  %v506 = vsel %vm46, %v355, 0
  %508 = vmatprep.subr.bf16.mxu0 0
  %509 = vmatpush1.bf16.msra.mxu0 %v497
  %510 = vmatprep.subr.bf16.mxu0 0
  %511 = vmatpush1.bf16.msra.mxu0 %v498
  %512 = vmatprep.subr.bf16.mxu0 0
  %513 = vmatpush1.bf16.msra.mxu0 %v499
  %514 = vmatprep.subr.bf16.mxu0 0
  %515 = vmatpush1.bf16.msra.mxu0 %v500
  %516 = vmatprep.subr.bf16.mxu0 0
  %517 = vmatpush1.bf16.msra.mxu0 0
  %518 = vmatprep.subr.bf16.mxu0 0
  %519 = vmatpush1.bf16.msra.mxu0 0
  %520 = vmatprep.subr.bf16.mxu0 0
  %521 = vmatpush1.bf16.msra.mxu0 0
  %522 = vmatprep.subr.bf16.mxu0 0
  %523 = vmatpush1.bf16.msra.mxu0 0
  %524 = vmatprep.subr.bf16.mxu0 0
  %525 = vmatpush1.bf16.msra.mxu0 0
  %526 = vmatprep.subr.bf16.mxu0 0
  %527 = vmatpush1.bf16.msra.mxu0 0
  %528 = vmatprep.subr.bf16.mxu0 0
  %529 = vmatpush1.bf16.msra.mxu0 0
  %530 = vmatprep.subr.bf16.mxu0 0
  %531 = vmatpush1.bf16.msra.mxu0 0
  %532 = vmatprep.subr.bf16.mxu0 0
  %533 = vmatpush1.bf16.msra.mxu0 0
  %534 = vmatprep.subr.bf16.mxu0 0
  %535 = vmatpush1.bf16.msra.mxu0 0
  %536 = vmatprep.subr.bf16.mxu0 0
  %537 = vmatpush1.bf16.msra.mxu0 0
  %538 = vmatprep.subr.bf16.mxu0 0
  %539 = vmatpush1.bf16.msra.mxu0 0
  %540 = vmatprep.mubr.bf16.mxu0 0
  %541 = vmatmul.mubr.bf16.gmra.mrb[0].mxu0 %v506
  %v542 = vpop.f32.mrb[0].mxu0
  %v543 = vadd.f32 0.0, %v542
  %v544 = vpop.f32.mrb[0].mxu0
  %v545 = vpop.f32.mrb[0].mxu0
  %v546 = vpop.f32.mrb[0].mxu0
  %547 = vdwg.mxu0
  %v556 = vunpack.c.l.b16 %v377
  %v557 = vunpack.c.l.b16 %v378
  %v558 = vunpack.c.l.b16 %v379
  %v559 = vunpack.c.l.b16 %v380
  %v560 = vunpack.c.l.b16 %v381
  %v561 = vunpack.c.l.b16 %v382
  %v562 = vunpack.c.l.b16 %v383
  %v563 = vunpack.c.l.b16 %v384
  %v564 = vpack.c.b16 %v557, %v556
  %v565 = vpack.c.b16 %v559, %v558
  %v566 = vpack.c.b16 %v561, %v560
  %v567 = vpack.c.b16 %v563, %v562
  %v573 = vsel %vm46, %v356, 0
  %575 = vmatprep.subr.bf16.mxu0 0
  %576 = vmatpush1.bf16.msra.mxu0 %v564
  %577 = vmatprep.subr.bf16.mxu0 0
  %578 = vmatpush1.bf16.msra.mxu0 %v565
  %579 = vmatprep.subr.bf16.mxu0 0
  %580 = vmatpush1.bf16.msra.mxu0 %v566
  %581 = vmatprep.subr.bf16.mxu0 0
  %582 = vmatpush1.bf16.msra.mxu0 %v567
  %583 = vmatprep.subr.bf16.mxu0 0
  %584 = vmatpush1.bf16.msra.mxu0 0
  %585 = vmatprep.subr.bf16.mxu0 0
  %586 = vmatpush1.bf16.msra.mxu0 0
  %587 = vmatprep.subr.bf16.mxu0 0
  %588 = vmatpush1.bf16.msra.mxu0 0
  %589 = vmatprep.subr.bf16.mxu0 0
  %590 = vmatpush1.bf16.msra.mxu0 0
  %591 = vmatprep.subr.bf16.mxu0 0
  %592 = vmatpush1.bf16.msra.mxu0 0
  %593 = vmatprep.subr.bf16.mxu0 0
  %594 = vmatpush1.bf16.msra.mxu0 0
  %595 = vmatprep.subr.bf16.mxu0 0
  %596 = vmatpush1.bf16.msra.mxu0 0
  %597 = vmatprep.subr.bf16.mxu0 0
  %598 = vmatpush1.bf16.msra.mxu0 0
  %599 = vmatprep.subr.bf16.mxu0 0
  %600 = vmatpush1.bf16.msra.mxu0 0
  %601 = vmatprep.subr.bf16.mxu0 0
  %602 = vmatpush1.bf16.msra.mxu0 0
  %603 = vmatprep.subr.bf16.mxu0 0
  %604 = vmatpush1.bf16.msra.mxu0 0
  %605 = vmatprep.subr.bf16.mxu0 0
  %606 = vmatpush1.bf16.msra.mxu0 0
  %607 = vmatprep.mubr.bf16.mxu0 0
  %608 = vmatmul.mubr.bf16.gmra.mrb[0].mxu0 %v573
  %v609 = vpop.f32.mrb[0].mxu0
  %v610 = vadd.f32 0.0, %v609
  %v611 = vpop.f32.mrb[0].mxu0
  %v612 = vpop.f32.mrb[0].mxu0
  %v613 = vpop.f32.mrb[0].mxu0
  %614 = vdwg.mxu0
  %v623 = vunpack.c.l.b16 %v385
  %v624 = vunpack.c.l.b16 %v386
  %v625 = vunpack.c.l.b16 %v387
  %v626 = vunpack.c.l.b16 %v388
  %v627 = vunpack.c.l.b16 %v389
  %v628 = vunpack.c.l.b16 %v390
  %v629 = vunpack.c.l.b16 %v391
  %v630 = vunpack.c.l.b16 %v392
  %v631 = vpack.c.b16 %v624, %v623
  %v632 = vpack.c.b16 %v626, %v625
  %v633 = vpack.c.b16 %v628, %v627
  %v634 = vpack.c.b16 %v630, %v629
  %v640 = vsel %vm46, %v357, 0
  %642 = vmatprep.subr.bf16.mxu0 0
  %643 = vmatpush1.bf16.msra.mxu0 %v631
  %644 = vmatprep.subr.bf16.mxu0 0
  %645 = vmatpush1.bf16.msra.mxu0 %v632
  %646 = vmatprep.subr.bf16.mxu0 0
  %647 = vmatpush1.bf16.msra.mxu0 %v633
  %648 = vmatprep.subr.bf16.mxu0 0
  %649 = vmatpush1.bf16.msra.mxu0 %v634
  %650 = vmatprep.subr.bf16.mxu0 0
  %651 = vmatpush1.bf16.msra.mxu0 0
  %652 = vmatprep.subr.bf16.mxu0 0
  %653 = vmatpush1.bf16.msra.mxu0 0
  %654 = vmatprep.subr.bf16.mxu0 0
  %655 = vmatpush1.bf16.msra.mxu0 0
  %656 = vmatprep.subr.bf16.mxu0 0
  %657 = vmatpush1.bf16.msra.mxu0 0
  %658 = vmatprep.subr.bf16.mxu0 0
  %659 = vmatpush1.bf16.msra.mxu0 0
  %660 = vmatprep.subr.bf16.mxu0 0
  %661 = vmatpush1.bf16.msra.mxu0 0
  %662 = vmatprep.subr.bf16.mxu0 0
  %663 = vmatpush1.bf16.msra.mxu0 0
  %664 = vmatprep.subr.bf16.mxu0 0
  %665 = vmatpush1.bf16.msra.mxu0 0
  %666 = vmatprep.subr.bf16.mxu0 0
  %667 = vmatpush1.bf16.msra.mxu0 0
  %668 = vmatprep.subr.bf16.mxu0 0
  %669 = vmatpush1.bf16.msra.mxu0 0
  %670 = vmatprep.subr.bf16.mxu0 0
  %671 = vmatpush1.bf16.msra.mxu0 0
  %672 = vmatprep.subr.bf16.mxu0 0
  %673 = vmatpush1.bf16.msra.mxu0 0
  %674 = vmatprep.mubr.bf16.mxu0 0
  %675 = vmatmul.mubr.bf16.gmra.mrb[0].mxu0 %v640
  %v676 = vpop.f32.mrb[0].mxu0
  %v677 = vadd.f32 0.0, %v676
  %v678 = vpop.f32.mrb[0].mxu0
  %v679 = vpop.f32.mrb[0].mxu0
  %v680 = vpop.f32.mrb[0].mxu0
  %681 = vdwg.mxu0
  %v690 = vunpack.c.l.b16 %v393
  %v691 = vunpack.c.l.b16 %v394
  %v692 = vunpack.c.l.b16 %v395
  %v693 = vunpack.c.l.b16 %v396
  %v694 = vunpack.c.l.b16 %v397
  %v695 = vunpack.c.l.b16 %v398
  %v696 = vunpack.c.l.b16 %v399
  %v697 = vunpack.c.l.b16 %v400
  %v698 = vpack.c.b16 %v691, %v690
  %v699 = vpack.c.b16 %v693, %v692
  %v700 = vpack.c.b16 %v695, %v694
  %v701 = vpack.c.b16 %v697, %v696
  %v707 = vsel %vm46, %v358, 0
  %709 = vmatprep.subr.bf16.mxu0 0
  %710 = vmatpush1.bf16.msra.mxu0 %v698
  %711 = vmatprep.subr.bf16.mxu0 0
  %712 = vmatpush1.bf16.msra.mxu0 %v699
  %713 = vmatprep.subr.bf16.mxu0 0
  %714 = vmatpush1.bf16.msra.mxu0 %v700
  %715 = vmatprep.subr.bf16.mxu0 0
  %716 = vmatpush1.bf16.msra.mxu0 %v701
  %717 = vmatprep.subr.bf16.mxu0 0
  %718 = vmatpush1.bf16.msra.mxu0 0
  %719 = vmatprep.subr.bf16.mxu0 0
  %720 = vmatpush1.bf16.msra.mxu0 0
  %721 = vmatprep.subr.bf16.mxu0 0
  %722 = vmatpush1.bf16.msra.mxu0 0
  %723 = vmatprep.subr.bf16.mxu0 0
  %724 = vmatpush1.bf16.msra.mxu0 0
  %725 = vmatprep.subr.bf16.mxu0 0
  %726 = vmatpush1.bf16.msra.mxu0 0
  %727 = vmatprep.subr.bf16.mxu0 0
  %728 = vmatpush1.bf16.msra.mxu0 0
  %729 = vmatprep.subr.bf16.mxu0 0
  %730 = vmatpush1.bf16.msra.mxu0 0
  %731 = vmatprep.subr.bf16.mxu0 0
  %732 = vmatpush1.bf16.msra.mxu0 0
  %733 = vmatprep.subr.bf16.mxu0 0
  %734 = vmatpush1.bf16.msra.mxu0 0
  %735 = vmatprep.subr.bf16.mxu0 0
  %736 = vmatpush1.bf16.msra.mxu0 0
  %737 = vmatprep.subr.bf16.mxu0 0
  %738 = vmatpush1.bf16.msra.mxu0 0
  %739 = vmatprep.subr.bf16.mxu0 0
  %740 = vmatpush1.bf16.msra.mxu0 0
  %741 = vmatprep.mubr.bf16.mxu0 0
  %742 = vmatmul.mubr.bf16.gmra.mrb[0].mxu0 %v707
  %v743 = vpop.f32.mrb[0].mxu0
  %v744 = vadd.f32 0.0, %v743
  %v745 = vpop.f32.mrb[0].mxu0
  %v746 = vpop.f32.mrb[0].mxu0
  %v747 = vpop.f32.mrb[0].mxu0
  %748 = vdwg.mxu0
  %v757 = vunpack.c.l.b16 %v401
  %v758 = vunpack.c.l.b16 %v402
  %v759 = vunpack.c.l.b16 %v403
  %v760 = vunpack.c.l.b16 %v404
  %v761 = vunpack.c.l.b16 %v405
  %v762 = vunpack.c.l.b16 %v406
  %v763 = vunpack.c.l.b16 %v407
  %v764 = vunpack.c.l.b16 %v408
  %v765 = vpack.c.b16 %v758, %v757
  %v766 = vpack.c.b16 %v760, %v759
  %v767 = vpack.c.b16 %v762, %v761
  %v768 = vpack.c.b16 %v764, %v763
  %v774 = vsel %vm46, %v359, 0
  %776 = vmatprep.subr.bf16.mxu0 0
  %777 = vmatpush1.bf16.msra.mxu0 %v765
  %778 = vmatprep.subr.bf16.mxu0 0
  %779 = vmatpush1.bf16.msra.mxu0 %v766
  %780 = vmatprep.subr.bf16.mxu0 0
  %781 = vmatpush1.bf16.msra.mxu0 %v767
  %782 = vmatprep.subr.bf16.mxu0 0
  %783 = vmatpush1.bf16.msra.mxu0 %v768
  %784 = vmatprep.subr.bf16.mxu0 0
  %785 = vmatpush1.bf16.msra.mxu0 0
  %786 = vmatprep.subr.bf16.mxu0 0
  %787 = vmatpush1.bf16.msra.mxu0 0
  %788 = vmatprep.subr.bf16.mxu0 0
  %789 = vmatpush1.bf16.msra.mxu0 0
  %790 = vmatprep.subr.bf16.mxu0 0
  %791 = vmatpush1.bf16.msra.mxu0 0
  %792 = vmatprep.subr.bf16.mxu0 0
  %793 = vmatpush1.bf16.msra.mxu0 0
  %794 = vmatprep.subr.bf16.mxu0 0
  %795 = vmatpush1.bf16.msra.mxu0 0
  %796 = vmatprep.subr.bf16.mxu0 0
  %797 = vmatpush1.bf16.msra.mxu0 0
  %798 = vmatprep.subr.bf16.mxu0 0
  %799 = vmatpush1.bf16.msra.mxu0 0
  %800 = vmatprep.subr.bf16.mxu0 0
  %801 = vmatpush1.bf16.msra.mxu0 0
  %802 = vmatprep.subr.bf16.mxu0 0
  %803 = vmatpush1.bf16.msra.mxu0 0
  %804 = vmatprep.subr.bf16.mxu0 0
  %805 = vmatpush1.bf16.msra.mxu0 0
  %806 = vmatprep.subr.bf16.mxu0 0
  %807 = vmatpush1.bf16.msra.mxu0 0
  %808 = vmatprep.mubr.bf16.mxu0 0
  %809 = vmatmul.mubr.bf16.gmra.mrb[0].mxu0 %v774
  %v810 = vpop.f32.mrb[0].mxu0
  %v811 = vadd.f32 0.0, %v810
  %v812 = vpop.f32.mrb[0].mxu0
  %v813 = vpop.f32.mrb[0].mxu0
  %v814 = vpop.f32.mrb[0].mxu0
  %815 = vdwg.mxu0
  %v824 = vunpack.c.l.b16 %v409
  %v825 = vunpack.c.l.b16 %v410
  %v826 = vunpack.c.l.b16 %v411
  %v827 = vunpack.c.l.b16 %v412
  %v828 = vunpack.c.l.b16 %v413
  %v829 = vunpack.c.l.b16 %v414
  %v830 = vunpack.c.l.b16 %v415
  %v831 = vunpack.c.l.b16 %v416
  %v832 = vpack.c.b16 %v825, %v824
  %v833 = vpack.c.b16 %v827, %v826
  %v834 = vpack.c.b16 %v829, %v828
  %v835 = vpack.c.b16 %v831, %v830
  %v841 = vsel %vm46, %v360, 0
  %843 = vmatprep.subr.bf16.mxu0 0
  %844 = vmatpush1.bf16.msra.mxu0 %v832
  %845 = vmatprep.subr.bf16.mxu0 0
  %846 = vmatpush1.bf16.msra.mxu0 %v833
  %847 = vmatprep.subr.bf16.mxu0 0
  %848 = vmatpush1.bf16.msra.mxu0 %v834
  %849 = vmatprep.subr.bf16.mxu0 0
  %850 = vmatpush1.bf16.msra.mxu0 %v835
  %851 = vmatprep.subr.bf16.mxu0 0
  %852 = vmatpush1.bf16.msra.mxu0 0
  %853 = vmatprep.subr.bf16.mxu0 0
  %854 = vmatpush1.bf16.msra.mxu0 0
  %855 = vmatprep.subr.bf16.mxu0 0
  %856 = vmatpush1.bf16.msra.mxu0 0
  %857 = vmatprep.subr.bf16.mxu0 0
  %858 = vmatpush1.bf16.msra.mxu0 0
  %859 = vmatprep.subr.bf16.mxu0 0
  %860 = vmatpush1.bf16.msra.mxu0 0
  %861 = vmatprep.subr.bf16.mxu0 0
  %862 = vmatpush1.bf16.msra.mxu0 0
  %863 = vmatprep.subr.bf16.mxu0 0
  %864 = vmatpush1.bf16.msra.mxu0 0
  %865 = vmatprep.subr.bf16.mxu0 0
  %866 = vmatpush1.bf16.msra.mxu0 0
  %867 = vmatprep.subr.bf16.mxu0 0
  %868 = vmatpush1.bf16.msra.mxu0 0
  %869 = vmatprep.subr.bf16.mxu0 0
  %870 = vmatpush1.bf16.msra.mxu0 0
  %871 = vmatprep.subr.bf16.mxu0 0
  %872 = vmatpush1.bf16.msra.mxu0 0
  %873 = vmatprep.subr.bf16.mxu0 0
  %874 = vmatpush1.bf16.msra.mxu0 0
  %875 = vmatprep.mubr.bf16.mxu0 0
  %876 = vmatmul.mubr.bf16.gmra.mrb[0].mxu0 %v841
  %v877 = vpop.f32.mrb[0].mxu0
  %v878 = vadd.f32 0.0, %v877
  %v879 = vpop.f32.mrb[0].mxu0
  %v880 = vpop.f32.mrb[0].mxu0
  %v881 = vpop.f32.mrb[0].mxu0
  %882 = vdwg.mxu0
  %v891 = vunpack.c.l.b16 %v417
  %v892 = vunpack.c.l.b16 %v418
  %v893 = vunpack.c.l.b16 %v419
  %v894 = vunpack.c.l.b16 %v420
  %v895 = vunpack.c.l.b16 %v421
  %v896 = vunpack.c.l.b16 %v422
  %v897 = vunpack.c.l.b16 %v423
  %v898 = vunpack.c.l.b16 %v424
  %v899 = vpack.c.b16 %v892, %v891
  %v900 = vpack.c.b16 %v894, %v893
  %v901 = vpack.c.b16 %v896, %v895
  %v902 = vpack.c.b16 %v898, %v897
  %v908 = vsel %vm46, %v361, 0
  %910 = vmatprep.subr.bf16.mxu0 0
  %911 = vmatpush1.bf16.msra.mxu0 %v899
  %912 = vmatprep.subr.bf16.mxu0 0
  %913 = vmatpush1.bf16.msra.mxu0 %v900
  %914 = vmatprep.subr.bf16.mxu0 0
  %915 = vmatpush1.bf16.msra.mxu0 %v901
  %916 = vmatprep.subr.bf16.mxu0 0
  %917 = vmatpush1.bf16.msra.mxu0 %v902
  %918 = vmatprep.subr.bf16.mxu0 0
  %919 = vmatpush1.bf16.msra.mxu0 0
  %920 = vmatprep.subr.bf16.mxu0 0
  %921 = vmatpush1.bf16.msra.mxu0 0
  %922 = vmatprep.subr.bf16.mxu0 0
  %923 = vmatpush1.bf16.msra.mxu0 0
  %924 = vmatprep.subr.bf16.mxu0 0
  %925 = vmatpush1.bf16.msra.mxu0 0
  %926 = vmatprep.subr.bf16.mxu0 0
  %927 = vmatpush1.bf16.msra.mxu0 0
  %928 = vmatprep.subr.bf16.mxu0 0
  %929 = vmatpush1.bf16.msra.mxu0 0
  %930 = vmatprep.subr.bf16.mxu0 0
  %931 = vmatpush1.bf16.msra.mxu0 0
  %932 = vmatprep.subr.bf16.mxu0 0
  %933 = vmatpush1.bf16.msra.mxu0 0
  %934 = vmatprep.subr.bf16.mxu0 0
  %935 = vmatpush1.bf16.msra.mxu0 0
  %936 = vmatprep.subr.bf16.mxu0 0
  %937 = vmatpush1.bf16.msra.mxu0 0
  %938 = vmatprep.subr.bf16.mxu0 0
  %939 = vmatpush1.bf16.msra.mxu0 0
  %940 = vmatprep.subr.bf16.mxu0 0
  %941 = vmatpush1.bf16.msra.mxu0 0
  %942 = vmatprep.mubr.bf16.mxu0 0
  %943 = vmatmul.mubr.bf16.gmra.mrb[0].mxu0 %v908
  %v944 = vpop.f32.mrb[0].mxu0
  %v945 = vadd.f32 0.0, %v944
  %v946 = vpop.f32.mrb[0].mxu0
  %v947 = vpop.f32.mrb[0].mxu0
  %v948 = vpop.f32.mrb[0].mxu0
  %949 = vdwg.mxu0
  %v958 = vunpack.c.l.b16 %v425
  %v959 = vunpack.c.l.b16 %v426
  %v960 = vunpack.c.l.b16 %v427
  %v961 = vunpack.c.l.b16 %v428
  %v962 = vunpack.c.l.b16 %v429
  %v963 = vunpack.c.l.b16 %v430
  %v964 = vunpack.c.l.b16 %v431
  %v965 = vunpack.c.l.b16 %v432
  %v966 = vpack.c.b16 %v959, %v958
  %v967 = vpack.c.b16 %v961, %v960
  %v968 = vpack.c.b16 %v963, %v962
  %v969 = vpack.c.b16 %v965, %v964
  %v975 = vsel %vm46, %v362, 0
  %977 = vmatprep.subr.bf16.mxu0 0
  %978 = vmatpush1.bf16.msra.mxu0 %v966
  %979 = vmatprep.subr.bf16.mxu0 0
  %980 = vmatpush1.bf16.msra.mxu0 %v967
  %981 = vmatprep.subr.bf16.mxu0 0
  %982 = vmatpush1.bf16.msra.mxu0 %v968
  %983 = vmatprep.subr.bf16.mxu0 0
  %984 = vmatpush1.bf16.msra.mxu0 %v969
  %985 = vmatprep.subr.bf16.mxu0 0
  %986 = vmatpush1.bf16.msra.mxu0 0
  %987 = vmatprep.subr.bf16.mxu0 0
  %988 = vmatpush1.bf16.msra.mxu0 0
  %989 = vmatprep.subr.bf16.mxu0 0
  %990 = vmatpush1.bf16.msra.mxu0 0
  %991 = vmatprep.subr.bf16.mxu0 0
  %992 = vmatpush1.bf16.msra.mxu0 0
  %993 = vmatprep.subr.bf16.mxu0 0
  %994 = vmatpush1.bf16.msra.mxu0 0
  %995 = vmatprep.subr.bf16.mxu0 0
  %996 = vmatpush1.bf16.msra.mxu0 0
  %997 = vmatprep.subr.bf16.mxu0 0
  %998 = vmatpush1.bf16.msra.mxu0 0
  %999 = vmatprep.subr.bf16.mxu0 0
  %1000 = vmatpush1.bf16.msra.mxu0 0
  %1001 = vmatprep.subr.bf16.mxu0 0
  %1002 = vmatpush1.bf16.msra.mxu0 0
  %1003 = vmatprep.subr.bf16.mxu0 0
  %1004 = vmatpush1.bf16.msra.mxu0 0
  %1005 = vmatprep.subr.bf16.mxu0 0
  %1006 = vmatpush1.bf16.msra.mxu0 0
  %1007 = vmatprep.subr.bf16.mxu0 0
  %1008 = vmatpush1.bf16.msra.mxu0 0
  %1009 = vmatprep.mubr.bf16.mxu0 0
  %1010 = vmatmul.mubr.bf16.gmra.mrb[0].mxu0 %v975
  %v1011 = vpop.f32.mrb[0].mxu0
  %v1012 = vadd.f32 0.0, %v1011
  %v1013 = vpop.f32.mrb[0].mxu0
  %v1014 = vpop.f32.mrb[0].mxu0
  %v1015 = vpop.f32.mrb[0].mxu0
  %1016 = vdwg.mxu0
  %v1025 = vunpack.c.l.b16 %v433
  %v1026 = vunpack.c.l.b16 %v434
  %v1027 = vunpack.c.l.b16 %v435
  %v1028 = vunpack.c.l.b16 %v436
  %v1029 = vunpack.c.l.b16 %v437
  %v1030 = vunpack.c.l.b16 %v438
  %v1031 = vunpack.c.l.b16 %v439
  %v1032 = vunpack.c.l.b16 %v440
  %v1033 = vpack.c.b16 %v1026, %v1025
  %v1034 = vpack.c.b16 %v1028, %v1027
  %v1035 = vpack.c.b16 %v1030, %v1029
  %v1036 = vpack.c.b16 %v1032, %v1031
  %v1042 = vsel %vm46, %v363, 0
  %1044 = vmatprep.subr.bf16.mxu0 0
  %1045 = vmatpush1.bf16.msra.mxu0 %v1033
  %1046 = vmatprep.subr.bf16.mxu0 0
  %1047 = vmatpush1.bf16.msra.mxu0 %v1034
  %1048 = vmatprep.subr.bf16.mxu0 0
  %1049 = vmatpush1.bf16.msra.mxu0 %v1035
  %1050 = vmatprep.subr.bf16.mxu0 0
  %1051 = vmatpush1.bf16.msra.mxu0 %v1036
  %1052 = vmatprep.subr.bf16.mxu0 0
  %1053 = vmatpush1.bf16.msra.mxu0 0
  %1054 = vmatprep.subr.bf16.mxu0 0
  %1055 = vmatpush1.bf16.msra.mxu0 0
  %1056 = vmatprep.subr.bf16.mxu0 0
  %1057 = vmatpush1.bf16.msra.mxu0 0
  %1058 = vmatprep.subr.bf16.mxu0 0
  %1059 = vmatpush1.bf16.msra.mxu0 0
  %1060 = vmatprep.subr.bf16.mxu0 0
  %1061 = vmatpush1.bf16.msra.mxu0 0
  %1062 = vmatprep.subr.bf16.mxu0 0
  %1063 = vmatpush1.bf16.msra.mxu0 0
  %1064 = vmatprep.subr.bf16.mxu0 0
  %1065 = vmatpush1.bf16.msra.mxu0 0
  %1066 = vmatprep.subr.bf16.mxu0 0
  %1067 = vmatpush1.bf16.msra.mxu0 0
  %1068 = vmatprep.subr.bf16.mxu0 0
  %1069 = vmatpush1.bf16.msra.mxu0 0
  %1070 = vmatprep.subr.bf16.mxu0 0
  %1071 = vmatpush1.bf16.msra.mxu0 0
  %1072 = vmatprep.subr.bf16.mxu0 0
  %1073 = vmatpush1.bf16.msra.mxu0 0
  %1074 = vmatprep.subr.bf16.mxu0 0
  %1075 = vmatpush1.bf16.msra.mxu0 0
  %1076 = vmatprep.mubr.bf16.mxu0 0
  %1077 = vmatmul.mubr.bf16.gmra.mrb[0].mxu0 %v1042
  %v1078 = vpop.f32.mrb[0].mxu0
  %v1079 = vadd.f32 0.0, %v1078
  %v1080 = vpop.f32.mrb[0].mxu0
  %v1081 = vpop.f32.mrb[0].mxu0
  %v1082 = vpop.f32.mrb[0].mxu0
  %1083 = vdwg.mxu0
  %v1092 = vunpack.c.l.b16 %v441
  %v1093 = vunpack.c.l.b16 %v442
  %v1094 = vunpack.c.l.b16 %v443
  %v1095 = vunpack.c.l.b16 %v444
  %v1096 = vunpack.c.l.b16 %v445
  %v1097 = vunpack.c.l.b16 %v446
  %v1098 = vunpack.c.l.b16 %v447
  %v1099 = vunpack.c.l.b16 %v448
  %v1100 = vpack.c.b16 %v1093, %v1092
  %v1101 = vpack.c.b16 %v1095, %v1094
  %v1102 = vpack.c.b16 %v1097, %v1096
  %v1103 = vpack.c.b16 %v1099, %v1098
  %v1109 = vsel %vm46, %v364, 0
  %1111 = vmatprep.subr.bf16.mxu0 0
  %1112 = vmatpush1.bf16.msra.mxu0 %v1100
  %1113 = vmatprep.subr.bf16.mxu0 0
  %1114 = vmatpush1.bf16.msra.mxu0 %v1101
  %1115 = vmatprep.subr.bf16.mxu0 0
  %1116 = vmatpush1.bf16.msra.mxu0 %v1102
  %1117 = vmatprep.subr.bf16.mxu0 0
  %1118 = vmatpush1.bf16.msra.mxu0 %v1103
  %1119 = vmatprep.subr.bf16.mxu0 0
  %1120 = vmatpush1.bf16.msra.mxu0 0
  %1121 = vmatprep.subr.bf16.mxu0 0
  %1122 = vmatpush1.bf16.msra.mxu0 0
  %1123 = vmatprep.subr.bf16.mxu0 0
  %1124 = vmatpush1.bf16.msra.mxu0 0
  %1125 = vmatprep.subr.bf16.mxu0 0
  %1126 = vmatpush1.bf16.msra.mxu0 0
  %1127 = vmatprep.subr.bf16.mxu0 0
  %1128 = vmatpush1.bf16.msra.mxu0 0
  %1129 = vmatprep.subr.bf16.mxu0 0
  %1130 = vmatpush1.bf16.msra.mxu0 0
  %1131 = vmatprep.subr.bf16.mxu0 0
  %1132 = vmatpush1.bf16.msra.mxu0 0
  %1133 = vmatprep.subr.bf16.mxu0 0
  %1134 = vmatpush1.bf16.msra.mxu0 0
  %1135 = vmatprep.subr.bf16.mxu0 0
  %1136 = vmatpush1.bf16.msra.mxu0 0
  %1137 = vmatprep.subr.bf16.mxu0 0
  %1138 = vmatpush1.bf16.msra.mxu0 0
  %1139 = vmatprep.subr.bf16.mxu0 0
  %1140 = vmatpush1.bf16.msra.mxu0 0
  %1141 = vmatprep.subr.bf16.mxu0 0
  %1142 = vmatpush1.bf16.msra.mxu0 0
  %1143 = vmatprep.mubr.bf16.mxu0 0
  %1144 = vmatmul.mubr.bf16.gmra.mrb[0].mxu0 %v1109
  %v1145 = vpop.f32.mrb[0].mxu0
  %v1146 = vadd.f32 0.0, %v1145
  %v1147 = vpop.f32.mrb[0].mxu0
  %v1148 = vpop.f32.mrb[0].mxu0
  %v1149 = vpop.f32.mrb[0].mxu0
  %1150 = vdwg.mxu0
  %v1159 = vunpack.c.l.b16 %v449
  %v1160 = vunpack.c.l.b16 %v450
  %v1161 = vunpack.c.l.b16 %v451
  %v1162 = vunpack.c.l.b16 %v452
  %v1163 = vunpack.c.l.b16 %v453
  %v1164 = vunpack.c.l.b16 %v454
  %v1165 = vunpack.c.l.b16 %v455
  %v1166 = vunpack.c.l.b16 %v456
  %v1167 = vpack.c.b16 %v1160, %v1159
  %v1168 = vpack.c.b16 %v1162, %v1161
  %v1169 = vpack.c.b16 %v1164, %v1163
  %v1170 = vpack.c.b16 %v1166, %v1165
  %v1176 = vsel %vm46, %v365, 0
  %1178 = vmatprep.subr.bf16.mxu0 0
  %1179 = vmatpush1.bf16.msra.mxu0 %v1167
  %1180 = vmatprep.subr.bf16.mxu0 0
  %1181 = vmatpush1.bf16.msra.mxu0 %v1168
  %1182 = vmatprep.subr.bf16.mxu0 0
  %1183 = vmatpush1.bf16.msra.mxu0 %v1169
  %1184 = vmatprep.subr.bf16.mxu0 0
  %1185 = vmatpush1.bf16.msra.mxu0 %v1170
  %1186 = vmatprep.subr.bf16.mxu0 0
  %1187 = vmatpush1.bf16.msra.mxu0 0
  %1188 = vmatprep.subr.bf16.mxu0 0
  %1189 = vmatpush1.bf16.msra.mxu0 0
  %1190 = vmatprep.subr.bf16.mxu0 0
  %1191 = vmatpush1.bf16.msra.mxu0 0
  %1192 = vmatprep.subr.bf16.mxu0 0
  %1193 = vmatpush1.bf16.msra.mxu0 0
  %1194 = vmatprep.subr.bf16.mxu0 0
  %1195 = vmatpush1.bf16.msra.mxu0 0
  %1196 = vmatprep.subr.bf16.mxu0 0
  %1197 = vmatpush1.bf16.msra.mxu0 0
  %1198 = vmatprep.subr.bf16.mxu0 0
  %1199 = vmatpush1.bf16.msra.mxu0 0
  %1200 = vmatprep.subr.bf16.mxu0 0
  %1201 = vmatpush1.bf16.msra.mxu0 0
  %1202 = vmatprep.subr.bf16.mxu0 0
  %1203 = vmatpush1.bf16.msra.mxu0 0
  %1204 = vmatprep.subr.bf16.mxu0 0
  %1205 = vmatpush1.bf16.msra.mxu0 0
  %1206 = vmatprep.subr.bf16.mxu0 0
  %1207 = vmatpush1.bf16.msra.mxu0 0
  %1208 = vmatprep.subr.bf16.mxu0 0
  %1209 = vmatpush1.bf16.msra.mxu0 0
  %1210 = vmatprep.mubr.bf16.mxu0 0
  %1211 = vmatmul.mubr.bf16.gmra.mrb[0].mxu0 %v1176
  %v1212 = vpop.f32.mrb[0].mxu0
  %v1213 = vadd.f32 0.0, %v1212
  %v1214 = vpop.f32.mrb[0].mxu0
  %v1215 = vpop.f32.mrb[0].mxu0
  %v1216 = vpop.f32.mrb[0].mxu0
  %1217 = vdwg.mxu0
  %v1226 = vunpack.c.l.b16 %v457
  %v1227 = vunpack.c.l.b16 %v458
  %v1228 = vunpack.c.l.b16 %v459
  %v1229 = vunpack.c.l.b16 %v460
  %v1230 = vunpack.c.l.b16 %v461
  %v1231 = vunpack.c.l.b16 %v462
  %v1232 = vunpack.c.l.b16 %v463
  %v1233 = vunpack.c.l.b16 %v464
  %v1234 = vpack.c.b16 %v1227, %v1226
  %v1235 = vpack.c.b16 %v1229, %v1228
  %v1236 = vpack.c.b16 %v1231, %v1230
  %v1237 = vpack.c.b16 %v1233, %v1232
  %v1243 = vsel %vm46, %v366, 0
  %1245 = vmatprep.subr.bf16.mxu0 0
  %1246 = vmatpush1.bf16.msra.mxu0 %v1234
  %1247 = vmatprep.subr.bf16.mxu0 0
  %1248 = vmatpush1.bf16.msra.mxu0 %v1235
  %1249 = vmatprep.subr.bf16.mxu0 0
  %1250 = vmatpush1.bf16.msra.mxu0 %v1236
  %1251 = vmatprep.subr.bf16.mxu0 0
  %1252 = vmatpush1.bf16.msra.mxu0 %v1237
  %1253 = vmatprep.subr.bf16.mxu0 0
  %1254 = vmatpush1.bf16.msra.mxu0 0
  %1255 = vmatprep.subr.bf16.mxu0 0
  %1256 = vmatpush1.bf16.msra.mxu0 0
  %1257 = vmatprep.subr.bf16.mxu0 0
  %1258 = vmatpush1.bf16.msra.mxu0 0
  %1259 = vmatprep.subr.bf16.mxu0 0
  %1260 = vmatpush1.bf16.msra.mxu0 0
  %1261 = vmatprep.subr.bf16.mxu0 0
  %1262 = vmatpush1.bf16.msra.mxu0 0
  %1263 = vmatprep.subr.bf16.mxu0 0
  %1264 = vmatpush1.bf16.msra.mxu0 0
  %1265 = vmatprep.subr.bf16.mxu0 0
  %1266 = vmatpush1.bf16.msra.mxu0 0
  %1267 = vmatprep.subr.bf16.mxu0 0
  %1268 = vmatpush1.bf16.msra.mxu0 0
  %1269 = vmatprep.subr.bf16.mxu0 0
  %1270 = vmatpush1.bf16.msra.mxu0 0
  %1271 = vmatprep.subr.bf16.mxu0 0
  %1272 = vmatpush1.bf16.msra.mxu0 0
  %1273 = vmatprep.subr.bf16.mxu0 0
  %1274 = vmatpush1.bf16.msra.mxu0 0
  %1275 = vmatprep.subr.bf16.mxu0 0
  %1276 = vmatpush1.bf16.msra.mxu0 0
  %1277 = vmatprep.mubr.bf16.mxu0 0
  %1278 = vmatmul.mubr.bf16.gmra.mrb[0].mxu0 %v1243
  %v1279 = vpop.f32.mrb[0].mxu0
  %v1280 = vadd.f32 0.0, %v1279
  %v1281 = vpop.f32.mrb[0].mxu0
  %v1282 = vpop.f32.mrb[0].mxu0
  %v1283 = vpop.f32.mrb[0].mxu0
  %1284 = vdwg.mxu0
  %v1293 = vunpack.c.l.b16 %v465
  %v1294 = vunpack.c.l.b16 %v466
  %v1295 = vunpack.c.l.b16 %v467
  %v1296 = vunpack.c.l.b16 %v468
  %v1297 = vunpack.c.l.b16 %v469
  %v1298 = vunpack.c.l.b16 %v470
  %v1299 = vunpack.c.l.b16 %v471
  %v1300 = vunpack.c.l.b16 %v472
  %v1301 = vpack.c.b16 %v1294, %v1293
  %v1302 = vpack.c.b16 %v1296, %v1295
  %v1303 = vpack.c.b16 %v1298, %v1297
  %v1304 = vpack.c.b16 %v1300, %v1299
  %v1310 = vsel %vm46, %v367, 0
  %1312 = vmatprep.subr.bf16.mxu0 0
  %1313 = vmatpush1.bf16.msra.mxu0 %v1301
  %1314 = vmatprep.subr.bf16.mxu0 0
  %1315 = vmatpush1.bf16.msra.mxu0 %v1302
  %1316 = vmatprep.subr.bf16.mxu0 0
  %1317 = vmatpush1.bf16.msra.mxu0 %v1303
  %1318 = vmatprep.subr.bf16.mxu0 0
  %1319 = vmatpush1.bf16.msra.mxu0 %v1304
  %1320 = vmatprep.subr.bf16.mxu0 0
  %1321 = vmatpush1.bf16.msra.mxu0 0
  %1322 = vmatprep.subr.bf16.mxu0 0
  %1323 = vmatpush1.bf16.msra.mxu0 0
  %1324 = vmatprep.subr.bf16.mxu0 0
  %1325 = vmatpush1.bf16.msra.mxu0 0
  %1326 = vmatprep.subr.bf16.mxu0 0
  %1327 = vmatpush1.bf16.msra.mxu0 0
  %1328 = vmatprep.subr.bf16.mxu0 0
  %1329 = vmatpush1.bf16.msra.mxu0 0
  %1330 = vmatprep.subr.bf16.mxu0 0
  %1331 = vmatpush1.bf16.msra.mxu0 0
  %1332 = vmatprep.subr.bf16.mxu0 0
  %1333 = vmatpush1.bf16.msra.mxu0 0
  %1334 = vmatprep.subr.bf16.mxu0 0
  %1335 = vmatpush1.bf16.msra.mxu0 0
  %1336 = vmatprep.subr.bf16.mxu0 0
  %1337 = vmatpush1.bf16.msra.mxu0 0
  %1338 = vmatprep.subr.bf16.mxu0 0
  %1339 = vmatpush1.bf16.msra.mxu0 0
  %1340 = vmatprep.subr.bf16.mxu0 0
  %1341 = vmatpush1.bf16.msra.mxu0 0
  %1342 = vmatprep.subr.bf16.mxu0 0
  %1343 = vmatpush1.bf16.msra.mxu0 0
  %1344 = vmatprep.mubr.bf16.mxu0 0
  %1345 = vmatmul.mubr.bf16.gmra.mrb[0].mxu0 %v1310
  %v1346 = vpop.f32.mrb[0].mxu0
  %v1347 = vadd.f32 0.0, %v1346
  %v1348 = vpop.f32.mrb[0].mxu0
  %v1349 = vpop.f32.mrb[0].mxu0
  %v1350 = vpop.f32.mrb[0].mxu0
  %1351 = vdwg.mxu0
  %v1360 = vunpack.c.l.b16 %v473
  %v1361 = vunpack.c.l.b16 %v474
  %v1362 = vunpack.c.l.b16 %v475
  %v1363 = vunpack.c.l.b16 %v476
  %v1364 = vunpack.c.l.b16 %v477
  %v1365 = vunpack.c.l.b16 %v478
  %v1366 = vunpack.c.l.b16 %v479
  %v1367 = vunpack.c.l.b16 %v480
  %v1368 = vpack.c.b16 %v1361, %v1360
  %v1369 = vpack.c.b16 %v1363, %v1362
  %v1370 = vpack.c.b16 %v1365, %v1364
  %v1371 = vpack.c.b16 %v1367, %v1366
  %v1377 = vsel %vm46, %v368, 0
  %1379 = vmatprep.subr.bf16.mxu0 0
  %1380 = vmatpush1.bf16.msra.mxu0 %v1368
  %1381 = vmatprep.subr.bf16.mxu0 0
  %1382 = vmatpush1.bf16.msra.mxu0 %v1369
  %1383 = vmatprep.subr.bf16.mxu0 0
  %1384 = vmatpush1.bf16.msra.mxu0 %v1370
  %1385 = vmatprep.subr.bf16.mxu0 0
  %1386 = vmatpush1.bf16.msra.mxu0 %v1371
  %1387 = vmatprep.subr.bf16.mxu0 0
  %1388 = vmatpush1.bf16.msra.mxu0 0
  %1389 = vmatprep.subr.bf16.mxu0 0
  %1390 = vmatpush1.bf16.msra.mxu0 0
  %1391 = vmatprep.subr.bf16.mxu0 0
  %1392 = vmatpush1.bf16.msra.mxu0 0
  %1393 = vmatprep.subr.bf16.mxu0 0
  %1394 = vmatpush1.bf16.msra.mxu0 0
  %1395 = vmatprep.subr.bf16.mxu0 0
  %1396 = vmatpush1.bf16.msra.mxu0 0
  %1397 = vmatprep.subr.bf16.mxu0 0
  %1398 = vmatpush1.bf16.msra.mxu0 0
  %1399 = vmatprep.subr.bf16.mxu0 0
  %1400 = vmatpush1.bf16.msra.mxu0 0
  %1401 = vmatprep.subr.bf16.mxu0 0
  %1402 = vmatpush1.bf16.msra.mxu0 0
  %1403 = vmatprep.subr.bf16.mxu0 0
  %1404 = vmatpush1.bf16.msra.mxu0 0
  %1405 = vmatprep.subr.bf16.mxu0 0
  %1406 = vmatpush1.bf16.msra.mxu0 0
  %1407 = vmatprep.subr.bf16.mxu0 0
  %1408 = vmatpush1.bf16.msra.mxu0 0
  %1409 = vmatprep.subr.bf16.mxu0 0
  %1410 = vmatpush1.bf16.msra.mxu0 0
  %1411 = vmatprep.mubr.bf16.mxu0 0
  %1412 = vmatmul.mubr.bf16.gmra.mrb[0].mxu0 %v1377
  %v1413 = vpop.f32.mrb[0].mxu0
  %v1414 = vadd.f32 0.0, %v1413
  %v1415 = vpop.f32.mrb[0].mxu0
  %v1416 = vpop.f32.mrb[0].mxu0
  %v1417 = vpop.f32.mrb[0].mxu0
  %1418 = vdwg.mxu0
  %v1419 = vld [vmem:[%s2] sm:$0xff]
  %v1420 = vmul.f32 %v315, %v1419
  %v1421 = vmul.f32 %v318, %v1419
  %v1422 = vmul.f32 %v321, %v1419
  %v1423 = vmul.f32 %v324, %v1419
  %v1424 = vmul.f32 %v327, %v1419
  %v1425 = vmul.f32 %v330, %v1419
  %v1426 = vmul.f32 %v333, %v1419
  %v1427 = vmul.f32 %v336, %v1419
  %v1428 = vmul.f32 %v339, %v1419
  %v1429 = vmul.f32 %v342, %v1419
  %v1430 = vmul.f32 %v345, %v1419
  %v1431 = vmul.f32 %v348, %v1419
  %v1432 = vmul.f32 %v351, %v1419
  %v1433 = vmul.f32 %v354, %v1419
  %v1434 = vsub.f32 %v543, %v1420
  %v1435 = vsub.f32 %v610, %v1421
  %v1436 = vsub.f32 %v677, %v1422
  %v1437 = vsub.f32 %v744, %v1423
  %v1438 = vsub.f32 %v811, %v1424
  %v1439 = vsub.f32 %v878, %v1425
  %v1440 = vsub.f32 %v945, %v1426
  %v1441 = vsub.f32 %v1012, %v1427
  %v1442 = vsub.f32 %v1079, %v1428
  %v1443 = vsub.f32 %v1146, %v1429
  %v1444 = vsub.f32 %v1213, %v1430
  %v1445 = vsub.f32 %v1280, %v1431
  %v1446 = vsub.f32 %v1347, %v1432
  %v1447 = vsub.f32 %v1414, %v1433
  %v1448 = vmul.f32 %v1434, %v1434
  %v1449 = vmul.f32 %v1435, %v1435
  %v1450 = vmul.f32 %v1436, %v1436
  %v1451 = vmul.f32 %v1437, %v1437
  %v1452 = vmul.f32 %v1438, %v1438
  %v1453 = vmul.f32 %v1439, %v1439
  %v1454 = vmul.f32 %v1440, %v1440
  %v1455 = vmul.f32 %v1441, %v1441
  %v1456 = vmul.f32 %v1442, %v1442
  %v1457 = vmul.f32 %v1443, %v1443
  %v1458 = vmul.f32 %v1444, %v1444
  %v1459 = vmul.f32 %v1445, %v1445
  %v1460 = vmul.f32 %v1446, %v1446
  %v1461 = vmul.f32 %v1447, %v1447
  %vm1462 = vcmask 261120
  %v1463 = vsel %vm1462, %v1448, 0.0
  %1464 = vadd.xlane.f32.xlu0 %v1463
  %v1465 = vpop.xlane.xlu0 %1464
  %v1466 = vsel %vm1462, %v1449, 0.0
  %1467 = vadd.xlane.f32.xlu0 %v1466
  %v1468 = vpop.xlane.xlu0 %1467
  %v1469 = vsel %vm1462, %v1450, 0.0
  %1470 = vadd.xlane.f32.xlu0 %v1469
  %v1471 = vpop.xlane.xlu0 %1470
  %v1472 = vsel %vm1462, %v1451, 0.0
  %1473 = vadd.xlane.f32.xlu0 %v1472
  %v1474 = vpop.xlane.xlu0 %1473
  %v1475 = vsel %vm1462, %v1452, 0.0
  %1476 = vadd.xlane.f32.xlu0 %v1475
  %v1477 = vpop.xlane.xlu0 %1476
  %v1478 = vsel %vm1462, %v1453, 0.0
  %1479 = vadd.xlane.f32.xlu0 %v1478
  %v1480 = vpop.xlane.xlu0 %1479
  %v1481 = vsel %vm1462, %v1454, 0.0
  %1482 = vadd.xlane.f32.xlu0 %v1481
  %v1483 = vpop.xlane.xlu0 %1482
  %v1484 = vsel %vm1462, %v1455, 0.0
  %1485 = vadd.xlane.f32.xlu0 %v1484
  %v1486 = vpop.xlane.xlu0 %1485
  %v1487 = vsel %vm1462, %v1456, 0.0
  %1488 = vadd.xlane.f32.xlu0 %v1487
  %v1489 = vpop.xlane.xlu0 %1488
  %v1490 = vsel %vm1462, %v1457, 0.0
  %1491 = vadd.xlane.f32.xlu0 %v1490
  %v1492 = vpop.xlane.xlu0 %1491
  %v1493 = vsel %vm1462, %v1458, 0.0
  %1494 = vadd.xlane.f32.xlu0 %v1493
  %v1495 = vpop.xlane.xlu0 %1494
  %v1496 = vsel %vm1462, %v1459, 0.0
  %1497 = vadd.xlane.f32.xlu0 %v1496
  %v1498 = vpop.xlane.xlu0 %1497
  %v1499 = vsel %vm1462, %v1460, 0.0
  %1500 = vadd.xlane.f32.xlu0 %v1499
  %v1501 = vpop.xlane.xlu0 %1500
  %v1502 = vsel %vm1462, %v1461, 0.0
  %1503 = vadd.xlane.f32.xlu0 %v1502
  %v1504 = vpop.xlane.xlu0 %1503
  %v1505 = vadd.f32 %v1465, 1e-12
  %v1506 = vadd.f32 %v1468, 1e-12
  %v1507 = vadd.f32 %v1471, 1e-12
  %v1508 = vadd.f32 %v1474, 1e-12
  %v1509 = vadd.f32 %v1477, 1e-12
  %v1510 = vadd.f32 %v1480, 1e-12
  %v1511 = vadd.f32 %v1483, 1e-12
  %v1512 = vadd.f32 %v1486, 1e-12
  %v1513 = vadd.f32 %v1489, 1e-12
  %v1514 = vadd.f32 %v1492, 1e-12
  %v1515 = vadd.f32 %v1495, 1e-12
  %v1516 = vadd.f32 %v1498, 1e-12
  %v1517 = vadd.f32 %v1501, 1e-12
  %v1518 = vadd.f32 %v1504, 1e-12
  %v1519 = vrsqrt.pop %v1505
  %v1520 = vrsqrt.pop %v1506
  %v1521 = vrsqrt.pop %v1507
  %v1522 = vrsqrt.pop %v1508
  %v1523 = vrsqrt.pop %v1509
  %v1524 = vrsqrt.pop %v1510
  %v1525 = vrsqrt.pop %v1511
  %v1526 = vrsqrt.pop %v1512
  %v1527 = vrsqrt.pop %v1513
  %v1528 = vrsqrt.pop %v1514
  %v1529 = vrsqrt.pop %v1515
  %v1530 = vrsqrt.pop %v1516
  %v1531 = vrsqrt.pop %v1517
  %v1532 = vrsqrt.pop %v1518
  %v1533 = vmul.f32 %v1434, %v1519
  %v1534 = vmul.f32 %v1435, %v1520
  %v1535 = vmul.f32 %v1436, %v1521
  %v1536 = vmul.f32 %v1437, %v1522
  %v1537 = vmul.f32 %v1438, %v1523
  %v1538 = vmul.f32 %v1439, %v1524
  %v1539 = vmul.f32 %v1440, %v1525
  %v1540 = vmul.f32 %v1441, %v1526
  %v1541 = vmul.f32 %v1442, %v1527
  %v1542 = vmul.f32 %v1443, %v1528
  %v1543 = vmul.f32 %v1444, %v1529
  %v1544 = vmul.f32 %v1445, %v1530
  %v1545 = vmul.f32 %v1446, %v1531
  %v1546 = vmul.f32 %v1447, %v1532
  %v1547 = vld [vmem:[%s3] sm:$0xff]
  %1549 = vset.pattern.permute.xlu0 0
  %1550 = vperm.xlu0 %1549, %v1547
  %v1551 = vpop.permute.xlu0 %1550
  %v1553 = vmul.f32 %v1533, %v1551
  %v1554 = vmul.f32 %v1534, %v1551
  %v1555 = vmul.f32 %v1535, %v1551
  %v1556 = vmul.f32 %v1536, %v1551
  %v1557 = vmul.f32 %v1537, %v1551
  %v1558 = vmul.f32 %v1538, %v1551
  %v1559 = vmul.f32 %v1539, %v1551
  %v1560 = vmul.f32 %v1540, %v1551
  %v1561 = vmul.f32 %v1541, %v1551
  %v1562 = vmul.f32 %v1542, %v1551
  %v1563 = vmul.f32 %v1543, %v1551
  %v1564 = vmul.f32 %v1544, %v1551
  %v1565 = vmul.f32 %v1545, %v1551
  %v1566 = vmul.f32 %v1546, %v1551
  %v1567 = vsel %vm1462, %v1553, 0.0
  %v1568 = vrot.slane %v1567, 4
  %v1569 = vadd.f32 %v1567, %v1568
  %v1570 = vrot.slane %v1569, 2
  %v1571 = vadd.f32 %v1569, %v1570
  %v1572 = vrot.slane %v1571, 1
  %v1573 = vadd.f32 %v1571, %v1572
  %v1574 = vsel %vm1462, %v1554, 0.0
  %v1575 = vrot.slane %v1574, 4
  %v1576 = vadd.f32 %v1574, %v1575
  %v1577 = vrot.slane %v1576, 2
  %v1578 = vadd.f32 %v1576, %v1577
  %v1579 = vrot.slane %v1578, 1
  %v1580 = vadd.f32 %v1578, %v1579
  %v1581 = vsel %vm1462, %v1555, 0.0
  %v1582 = vrot.slane %v1581, 4
  %v1583 = vadd.f32 %v1581, %v1582
  %v1584 = vrot.slane %v1583, 2
  %v1585 = vadd.f32 %v1583, %v1584
  %v1586 = vrot.slane %v1585, 1
  %v1587 = vadd.f32 %v1585, %v1586
  %v1588 = vsel %vm1462, %v1556, 0.0
  %v1589 = vrot.slane %v1588, 4
  %v1590 = vadd.f32 %v1588, %v1589
  %v1591 = vrot.slane %v1590, 2
  %v1592 = vadd.f32 %v1590, %v1591
  %v1593 = vrot.slane %v1592, 1
  %v1594 = vadd.f32 %v1592, %v1593
  %v1595 = vsel %vm1462, %v1557, 0.0
  %v1596 = vrot.slane %v1595, 4
  %v1597 = vadd.f32 %v1595, %v1596
  %v1598 = vrot.slane %v1597, 2
  %v1599 = vadd.f32 %v1597, %v1598
  %v1600 = vrot.slane %v1599, 1
  %v1601 = vadd.f32 %v1599, %v1600
  %v1602 = vsel %vm1462, %v1558, 0.0
  %v1603 = vrot.slane %v1602, 4
  %v1604 = vadd.f32 %v1602, %v1603
  %v1605 = vrot.slane %v1604, 2
  %v1606 = vadd.f32 %v1604, %v1605
  %v1607 = vrot.slane %v1606, 1
  %v1608 = vadd.f32 %v1606, %v1607
  %v1609 = vsel %vm1462, %v1559, 0.0
  %v1610 = vrot.slane %v1609, 4
  %v1611 = vadd.f32 %v1609, %v1610
  %v1612 = vrot.slane %v1611, 2
  %v1613 = vadd.f32 %v1611, %v1612
  %v1614 = vrot.slane %v1613, 1
  %v1615 = vadd.f32 %v1613, %v1614
  %v1616 = vsel %vm1462, %v1560, 0.0
  %v1617 = vrot.slane %v1616, 4
  %v1618 = vadd.f32 %v1616, %v1617
  %v1619 = vrot.slane %v1618, 2
  %v1620 = vadd.f32 %v1618, %v1619
  %v1621 = vrot.slane %v1620, 1
  %v1622 = vadd.f32 %v1620, %v1621
  %v1623 = vsel %vm1462, %v1561, 0.0
  %v1624 = vrot.slane %v1623, 4
  %v1625 = vadd.f32 %v1623, %v1624
  %v1626 = vrot.slane %v1625, 2
  %v1627 = vadd.f32 %v1625, %v1626
  %v1628 = vrot.slane %v1627, 1
  %v1629 = vadd.f32 %v1627, %v1628
  %v1630 = vsel %vm1462, %v1562, 0.0
  %v1631 = vrot.slane %v1630, 4
  %v1632 = vadd.f32 %v1630, %v1631
  %v1633 = vrot.slane %v1632, 2
  %v1634 = vadd.f32 %v1632, %v1633
  %v1635 = vrot.slane %v1634, 1
  %v1636 = vadd.f32 %v1634, %v1635
  %v1637 = vsel %vm1462, %v1563, 0.0
  %v1638 = vrot.slane %v1637, 4
  %v1639 = vadd.f32 %v1637, %v1638
  %v1640 = vrot.slane %v1639, 2
  %v1641 = vadd.f32 %v1639, %v1640
  %v1642 = vrot.slane %v1641, 1
  %v1643 = vadd.f32 %v1641, %v1642
  %v1644 = vsel %vm1462, %v1564, 0.0
  %v1645 = vrot.slane %v1644, 4
  %v1646 = vadd.f32 %v1644, %v1645
  %v1647 = vrot.slane %v1646, 2
  %v1648 = vadd.f32 %v1646, %v1647
  %v1649 = vrot.slane %v1648, 1
  %v1650 = vadd.f32 %v1648, %v1649
  %v1651 = vsel %vm1462, %v1565, 0.0
  %v1652 = vrot.slane %v1651, 4
  %v1653 = vadd.f32 %v1651, %v1652
  %v1654 = vrot.slane %v1653, 2
  %v1655 = vadd.f32 %v1653, %v1654
  %v1656 = vrot.slane %v1655, 1
  %v1657 = vadd.f32 %v1655, %v1656
  %v1658 = vsel %vm1462, %v1566, 0.0
  %v1659 = vrot.slane %v1658, 4
  %v1660 = vadd.f32 %v1658, %v1659
  %v1661 = vrot.slane %v1660, 2
  %v1662 = vadd.f32 %v1660, %v1661
  %v1663 = vrot.slane %v1662, 1
  %v1664 = vadd.f32 %v1662, %v1663
  %vm1679 = vcmask 1041409
  %v1680 = vsel %vm1679, %v1580, %v1573
  %vm1681 = vcmask 1042434
  %v1682 = vsel %vm1681, %v1587, %v1680
  %vm1683 = vcmask 1043459
  %v1684 = vsel %vm1683, %v1594, %v1682
  %vm1685 = vcmask 1044484
  %v1686 = vsel %vm1685, %v1601, %v1684
  %vm1687 = vcmask 1045509
  %v1688 = vsel %vm1687, %v1608, %v1686
  %vm1689 = vcmask 1046534
  %v1690 = vsel %vm1689, %v1615, %v1688
  %vm1691 = vcmask 1047559
  %v1692 = vsel %vm1691, %v1622, %v1690
  %v1693 = vsel %vm1679, %v1636, %v1629
  %v1694 = vsel %vm1681, %v1643, %v1693
  %v1695 = vsel %vm1683, %v1650, %v1694
  %v1696 = vsel %vm1685, %v1657, %v1695
  %v1697 = vsel %vm1687, %v1664, %v1696
  %1700 = vst.msk [vmem:[%s4] sm:$0xff] %vm1462, %v1692
  %vm1701 = vcmask 259072
  %1702 = vst.msk [vmem:[%s4 + $0x8] sm:$0x3f] %vm1701, %v1697
  // Predicated region
  $region18: #{csa_sr_forward.10} parent=0 // pred_check
    _
  $region19: #{csa_sr_forward.10} parent=0 // pred_check_branch
    %1704 = sbr.rel (0) target = $region21
  $region20: #{csa_sr_forward.10} parent=0 // pred_region
    _
  $region21: #{csa_sr_forward.10} parent=0 // pred_fallthru
    _
  // Predicated region
  $region22: #{csa_sr_forward.10} parent=0 // pred_check
    _
  $region23: #{csa_sr_forward.10} parent=0 // pred_check_branch
    %1706 = sbr.rel (0) target = $region25
  $region24: #{csa_sr_forward.10} parent=0 // pred_region
    _
  $region25: #{csa_sr_forward.10} parent=0 // pred_fallthru
    _

// kernel: csa_sr_forward.12
$region0: #{csa_sr_forward.12}
  #allocation0 [shape = 'u32[]', space=smem, size = 0x4, offset = 0x4, fixed_abs, tag = 'smem constant byte address 0x4 - core index']
  #allocation1 [shape = 'u32[144,128]{1,0:T(1,128)}', space=vmem, size = 0x12000, scoped, tag = 'internal scratch']
  #allocation2 [shape = 'f32[2,32]{1,0:T(2,128)}', space=vmem, size = 0x400, scoped, tag = 'scratch operand']
  #allocation3 [shape = 'f32[2,32]{1,0:T(2,128)}', space=vmem, size = 0x400, scoped, tag = 'scratch operand']
  %s0 = inlined_call_operand.vmem [shape: f32[7,2,128], index: 0, kind: input, shape index: {}]
  %s1 = inlined_call_operand.vmem [shape: f32[2,32], index: 1, kind: input, shape index: {}]
  %s2 = inlined_call_operand.vmem [shape: bf16[32,128], index: 2, kind: input, shape index: {}]
  %s3 = inlined_call_operand.vmem [shape: f32[7,2,32], index: 3, kind: output, shape index: {}]
  %s4 = sld [smem:[#allocation0]]
  $region49: #{csa_sr_forward.12} parent=0
    _
  %s6 = ssub.s32 1, %s4
  %s7 = scalar_select 0, %s6, %s4
  loop: start=0, step=1, limit=9
  $region2: #{csa_sr_forward.12} parent=0 // loop_pre_header
    _
  $region3: #{csa_sr_forward.12} parent=0 // loop_header
    %s9 = sphi 0, %s13
    %p10 = scmp.ge.s32.totalorder %s9, 9
    %s19 = sphi 0, %s21
    %s22 = sphi 0, %s19
    %s23 = sphi 0, %s22
    %s39 = sphi 0, %s23
    %s43 = sphi 0, %s43
    %s45 = sphi 0, %s43
    %s46 = sphi 0, %s45
    %s60 = sphi 0, %s46
    %s64 = sphi 0, %s64
    %s66 = sphi 0, %s64
    %s67 = sphi 0, %s66
    %s81 = sphi 0, %s67
    %s87 = sphi 0, %s89
    %s90 = sphi 0, %s87
    %s91 = sphi 0, %s90
    %s107 = sphi 0, %s91
  $region4: #{csa_sr_forward.12} parent=0 // loop_header_branch
    %12 = sbr.rel (%p10) target = $region8
  $region5: #{csa_sr_forward.12} parent=0 // loop_body
    %s14 = ssub.s32 %s9, 1
    %s15 = ssub.s32 %s9, 2
    %s16 = sadd.s32 %s9, 1
    %s17 = ssub.s32 %s9, %s16
    %p18 = scmp.eq.s32.totalorder %s17, 0
    %s20 = sadd.s32 %s19, 1
    %s21 = scalar_select %p18, %s19, %s20
    %p24 = pneg %p18
    %p25 = scmp.eq.s32.totalorder %s9, 6
    %p26 = por %p24, %p25
    %p27 = scmp.ne.s32.totalorder %s19, %s22
    %p28 = scmp.eq.s32.totalorder %s9, 0
    %p29 = por %p27, %p28
    %p30 = scmp.ne.s32.totalorder %s19, %s22
    %p31 = scmp.eq.s32.totalorder %s14, 6
    %p32 = por %p30, %p31
    %p33 = scmp.ne.s32.totalorder %s22, %s23
    %p34 = scmp.eq.s32.totalorder %s14, 0
    %p35 = por %p33, %p34
    %p36 = scmp.ne.s32.totalorder %s22, %s23
    %p37 = scmp.eq.s32.totalorder %s15, 6
    %p38 = por %p36, %p37
    %p40 = scmp.ne.s32.totalorder %s23, %s39
    %p41 = scmp.eq.s32.totalorder %s15, 0
    %p42 = por %p40, %p41
    %s44 = sadd.s32 %s43, 1
    %p47 = scmp.eq.s32.totalorder %s9, 6
    %p48 = scmp.ne.s32.totalorder %s43, %s45
    %p49 = scmp.eq.s32.totalorder %s9, 0
    %p50 = por %p48, %p49
    %p51 = scmp.ne.s32.totalorder %s43, %s45
    %p52 = scmp.eq.s32.totalorder %s14, 6
    %p53 = por %p51, %p52
    %p54 = scmp.ne.s32.totalorder %s45, %s46
    %p55 = scmp.eq.s32.totalorder %s14, 0
    %p56 = por %p54, %p55
    %p57 = scmp.ne.s32.totalorder %s45, %s46
    %p58 = scmp.eq.s32.totalorder %s15, 6
    %p59 = por %p57, %p58
    %p61 = scmp.ne.s32.totalorder %s46, %s60
    %p62 = scmp.eq.s32.totalorder %s15, 0
    %p63 = por %p61, %p62
    %s65 = sadd.s32 %s64, 1
    %p68 = scmp.eq.s32.totalorder %s9, 6
    %p69 = scmp.ne.s32.totalorder %s64, %s66
    %p70 = scmp.eq.s32.totalorder %s9, 0
    %p71 = por %p69, %p70
    %p72 = scmp.ne.s32.totalorder %s64, %s66
    %p73 = scmp.eq.s32.totalorder %s14, 6
    %p74 = por %p72, %p73
    %p75 = scmp.ne.s32.totalorder %s66, %s67
    %p76 = scmp.eq.s32.totalorder %s14, 0
    %p77 = por %p75, %p76
    %p78 = scmp.ne.s32.totalorder %s66, %s67
    %p79 = scmp.eq.s32.totalorder %s15, 6
    %p80 = por %p78, %p79
    %p82 = scmp.ne.s32.totalorder %s67, %s81
    %p83 = scmp.eq.s32.totalorder %s15, 0
    %p84 = por %p82, %p83
    %s85 = ssub.s32 %s9, %s16
    %p86 = scmp.eq.s32.totalorder %s85, 0
    %s88 = sadd.s32 %s87, 1
    %s89 = scalar_select %p86, %s87, %s88
    %p92 = pneg %p86
    %p93 = scmp.eq.s32.totalorder %s9, 6
    %p94 = por %p92, %p93
    %p95 = scmp.ne.s32.totalorder %s87, %s90
    %p96 = scmp.eq.s32.totalorder %s9, 0
    %p97 = por %p95, %p96
    %p98 = scmp.ne.s32.totalorder %s87, %s90
    %p99 = scmp.eq.s32.totalorder %s14, 6
    %p100 = por %p98, %p99
    %p101 = scmp.ne.s32.totalorder %s90, %s91
    %p102 = scmp.eq.s32.totalorder %s14, 0
    %p103 = por %p101, %p102
    %p104 = scmp.ne.s32.totalorder %s90, %s91
    %p105 = scmp.eq.s32.totalorder %s15, 6
    %p106 = por %p104, %p105
    %p108 = scmp.ne.s32.totalorder %s91, %s107
    %p109 = scmp.eq.s32.totalorder %s15, 0
    %p110 = por %p108, %p109
    %p111 = scmp.le.s32.totalorder 1, %s9
    %p112 = scmp.lt.s32.totalorder %s9, 8
    %p113 = pnand %p111, %p112
    %p114 = pneg %p113
    // Predicated region
    $region9: #{csa_sr_forward.12} parent=5 // pred_check
      _
    $region10: #{csa_sr_forward.12} parent=5 // pred_check_branch
      %116 = sbr.rel (%p113) target = $region12
    $region11: #{csa_sr_forward.12} parent=5 // pred_region
      %s117 = ssub.s32 %s9, 1
      // Predicated region
      $region13: #{csa_sr_forward.12} parent=11 // pred_check
        %p118 = pneg %p56
      $region14: #{csa_sr_forward.12} parent=11 // pred_check_branch
        %120 = sbr.rel (%p118) target = $region16
      $region15: #{csa_sr_forward.12} parent=11 // pred_region
        _
      $region16: #{csa_sr_forward.12} parent=11 // pred_fallthru
        _
      // Predicated region
      $region17: #{csa_sr_forward.12} parent=11 // pred_check
        %p121 = pneg %p77
      $region18: #{csa_sr_forward.12} parent=11 // pred_check_branch
        %123 = sbr.rel (%p121) target = $region20
      $region19: #{csa_sr_forward.12} parent=11 // pred_region
        _
      $region20: #{csa_sr_forward.12} parent=11 // pred_fallthru
        _
    $region12: #{csa_sr_forward.12} parent=5 // pred_fallthru
      _
    %p124 = scmp.lt.s32.totalorder %s9, 7
    // Predicated region
    $region21: #{csa_sr_forward.12} parent=5 // pred_check
      %p125 = pneg %p124
    $region22: #{csa_sr_forward.12} parent=5 // pred_check_branch
      %127 = sbr.rel (%p125) target = $region24
    $region23: #{csa_sr_forward.12} parent=5 // pred_region
      // Predicated region
      $region25: #{csa_sr_forward.12} parent=23 // pred_check
        %p128 = pneg %p29
      $region26: #{csa_sr_forward.12} parent=23 // pred_check_branch
        %130 = sbr.rel (%p128) target = $region28
      $region27: #{csa_sr_forward.12} parent=23 // pred_region
        %p131 = scmp.lt.s32.totalorder %s9, 6
        %s132 = scalar_select %p131, %s9, 6
        %s133 = smul.addr %s132, 2
        %s134 = scalar_lea.vmem %s0, %s133
      $region28: #{csa_sr_forward.12} parent=23 // pred_fallthru
        _
    $region24: #{csa_sr_forward.12} parent=5 // pred_fallthru
      _
    %p135 = scmp.le.s32.totalorder 1, %s9
    %p136 = scmp.lt.s32.totalorder %s9, 8
    %p137 = pnand %p135, %p136
    %p138 = pneg %p137
    // Predicated region
    $region29: #{csa_sr_forward.12} parent=5 // pred_check
      _
    $region30: #{csa_sr_forward.12} parent=5 // pred_check_branch
      %140 = sbr.rel (%p137) target = $region32
    $region31: #{csa_sr_forward.12} parent=5 // pred_region
      %s141 = ssub.s32 %s9, 1
      %p142 = scmp.lt.s32.totalorder %s14, 6
      %s143 = scalar_select %p142, %s14, 6
      %s144 = smul.addr %s143, 2
      %s145 = scalar_lea.vmem %s0, %s144
      %p146 = pneg %p35
      %p147 = pneg %p32
      %p148 = pneg %p56
      %p149 = pneg %p53
      %p150 = pneg %p77
      %p151 = pneg %p74
      %p152 = pneg %p103
      %p153 = pneg %p100
      %p154 = scmp.lt.s32.totalorder %s14, 6
      %s155 = scalar_select %p154, %s14, 6
      %s156 = smul.addr %s155, 2
      %s157 = scalar_lea.vmem %s3, %s156
      %p158 = scmp.lt.s32.totalorder %s14, 6
      %s159 = scalar_select %p158, %s14, 6
      %s160 = smul.addr %s159, 2
      %s161 = scalar_lea.vmem %s0, %s160
      %p162 = scmp.lt.s32.totalorder %s14, 6
      %s163 = scalar_select %p162, %s14, 6
      %s164 = smul.addr %s163, 2
      %s165 = scalar_lea.vmem %s3, %s164
      %p167 = scmp.eq.s32.totalorder %s14, 0
      // Predicated region
      $region33: #{csa_sr_forward.12} parent=31 // pred_check
        %p168 = pneg %p167
      $region34: #{csa_sr_forward.12} parent=31 // pred_check_branch
        %170 = sbr.rel (%p168) target = $region36
      $region35: #{csa_sr_forward.12} parent=31 // pred_region
        %v171 = vld [vmem:[%s1] sm:$0x3]
        %vm172 = vcmask 254976
        %173 = vst.msk [vmem:[#allocation2] sm:$0x3] %vm172, %v171
        %174 = vst.msk [vmem:[#allocation3] sm:$0x3] %vm172, 0.0
      $region36: #{csa_sr_forward.12} parent=31 // pred_fallthru
        _
      %v175 = vld [vmem:[#allocation2] sm:$0x3]
      %v176 = vld [vmem:[%s161] sm:$0x3]
      %v177 = vpack.c.bf16 %v175, %v175
      %v178 = vld [vmem:[%s2] sm:$0xf]
      %v179 = vld [vmem:[%s2 + $0x4] sm:$0xf]
      %v180 = vld [vmem:[%s2 + $0x8] sm:$0xf]
      %v181 = vld [vmem:[%s2 + $0xc] sm:$0xf]
      %v186 = vunpack.c.l.b16 %v178
      %v187 = vunpack.c.l.b16 %v179
      %v188 = vunpack.c.l.b16 %v180
      %v189 = vunpack.c.l.b16 %v181
      %v190 = vpack.c.b16 %v187, %v186
      %v191 = vpack.c.b16 %v189, %v188
      %vm194 = vcmask 261120
      %v196 = vsel %vm194, %v177, 0
      %198 = vmatprep.subr.bf16.mxu0 0
      %199 = vmatpush1.bf16.msra.mxu0 %v190
      %200 = vmatprep.subr.bf16.mxu0 0
      %201 = vmatpush1.bf16.msra.mxu0 %v191
      %202 = vmatprep.subr.bf16.mxu0 0
      %203 = vmatpush1.bf16.msra.mxu0 0
      %204 = vmatprep.subr.bf16.mxu0 0
      %205 = vmatpush1.bf16.msra.mxu0 0
      %206 = vmatprep.subr.bf16.mxu0 0
      %207 = vmatpush1.bf16.msra.mxu0 0
      %208 = vmatprep.subr.bf16.mxu0 0
      %209 = vmatpush1.bf16.msra.mxu0 0
      %210 = vmatprep.subr.bf16.mxu0 0
      %211 = vmatpush1.bf16.msra.mxu0 0
      %212 = vmatprep.subr.bf16.mxu0 0
      %213 = vmatpush1.bf16.msra.mxu0 0
      %214 = vmatprep.subr.bf16.mxu0 0
      %215 = vmatpush1.bf16.msra.mxu0 0
      %216 = vmatprep.subr.bf16.mxu0 0
      %217 = vmatpush1.bf16.msra.mxu0 0
      %218 = vmatprep.subr.bf16.mxu0 0
      %219 = vmatpush1.bf16.msra.mxu0 0
      %220 = vmatprep.subr.bf16.mxu0 0
      %221 = vmatpush1.bf16.msra.mxu0 0
      %222 = vmatprep.subr.bf16.mxu0 0
      %223 = vmatpush1.bf16.msra.mxu0 0
      %224 = vmatprep.subr.bf16.mxu0 0
      %225 = vmatpush1.bf16.msra.mxu0 0
      %226 = vmatprep.subr.bf16.mxu0 0
      %227 = vmatpush1.bf16.msra.mxu0 0
      %228 = vmatprep.subr.bf16.mxu0 0
      %229 = vmatpush1.bf16.msra.mxu0 0
      %230 = vmatprep.mubr.bf16.mxu0 0
      %231 = vmatmul.mubr.bf16.gmra.mrb[0].mxu0 %v196
      %v232 = vpop.f32.mrb[0].mxu0
      %v233 = vadd.f32 0.0, %v232
      %v234 = vpop.f32.mrb[0].mxu0
      %v235 = vpop.f32.mrb[0].mxu0
      %v236 = vpop.f32.mrb[0].mxu0
      %237 = vdwg.mxu0
      %v238 = vadd.f32 %v176, %v233
      %v239 = vxor.u32 %v238, 2147483648
      %v240 = vmul.f32 %v239, 1.442695
      %v241 = vpow.pop %v240
      %v242 = vadd.f32 %v241, 1.0
      %v243 = vrcp.pop %v242
      %v244 = vmul.f32 1.0, %v243
      %v245 = vtanh.pop %v238
      %v246 = vld [vmem:[#allocation3] sm:$0x3]
      %248 = vrot.lane.b32.xlu0 %v246, 32
      %v249 = vpop.permute.xlu0 %248
      %v251 = vmul.f32 %v244, %v249
      %253 = vrot.lane.b32.xlu0 %v245, 64
      %v254 = vpop.permute.xlu0 %253
      %v256 = vmul.f32 %v244, %v254
      %258 = vrot.lane.b32.xlu0 %v256, 32
      %v259 = vpop.permute.xlu0 %258
      %v261 = vadd.f32 %v251, %v259
      %v262 = vtanh.pop %v261
      %264 = vrot.lane.b32.xlu0 %v262, 64
      %v265 = vpop.permute.xlu0 %264
      %v267 = vmul.f32 %v244, %v265
      %269 = vrot.lane.b32.xlu0 %v261, 96
      %v270 = vpop.permute.xlu0 %269
      %vm272 = vcmask 254976
      %273 = vst.msk [vmem:[#allocation3] sm:$0x3] %vm272, %v270
      %275 = vrot.lane.b32.xlu0 %v267, 32
      %v276 = vpop.permute.xlu0 %275
      %278 = vst.msk [vmem:[#allocation2] sm:$0x3] %vm272, %v276
      %279 = vst.msk [vmem:[%s165] sm:$0x3] %vm272, %v276
      %p280 = scmp.lt.s32.totalorder %s14, 6
      %s281 = scalar_select %p280, %s14, 6
      %s282 = smul.addr %s281, 2
      %s283 = scalar_lea.vmem %s3, %s282
      // Predicated region
      $region37: #{csa_sr_forward.12} parent=31 // pred_check
        %p284 = pneg %p100
      $region38: #{csa_sr_forward.12} parent=31 // pred_check_branch
        %286 = sbr.rel (%p284) target = $region40
      $region39: #{csa_sr_forward.12} parent=31 // pred_region
        _
      $region40: #{csa_sr_forward.12} parent=31 // pred_fallthru
        _
    $region32: #{csa_sr_forward.12} parent=5 // pred_fallthru
      _
    %p287 = scmp.le.s32.totalorder 2, %s9
    // Predicated region
    $region41: #{csa_sr_forward.12} parent=5 // pred_check
      %p288 = pneg %p287
    $region42: #{csa_sr_forward.12} parent=5 // pred_check_branch
      %290 = sbr.rel (%p288) target = $region44
    $region43: #{csa_sr_forward.12} parent=5 // pred_region
      %s291 = ssub.s32 %s9, 2
      // Predicated region
      $region45: #{csa_sr_forward.12} parent=43 // pred_check
        %p292 = pneg %p106
      $region46: #{csa_sr_forward.12} parent=43 // pred_check_branch
        %294 = sbr.rel (%p292) target = $region48
      $region47: #{csa_sr_forward.12} parent=43 // pred_region
        %p295 = scmp.lt.s32.totalorder %s15, 6
        %s296 = scalar_select %p295, %s15, 6
        %s297 = smul.addr %s296, 2
        %s298 = scalar_lea.vmem %s3, %s297
      $region48: #{csa_sr_forward.12} parent=43 // pred_fallthru
        _
    $region44: #{csa_sr_forward.12} parent=5 // pred_fallthru
      _
  $region6: #{csa_sr_forward.12} parent=0 // loop_footer
    %s13 = sadd.s32 1, %s9
  $region7: #{csa_sr_forward.12} parent=0 // loop_footer_branch
    %8 = sbr.rel target = $region3
  $region8: #{csa_sr_forward.12} parent=0 // loop_exit
    _

</llo_original>
